<compile_context>
chip_gen: v7x
topology: tpu7x:2x2x1
jax: 0.10.0
libtpu: 0.0.40
codegen_flags: <defaults>
</compile_context>

<pallas_src>
import math

import jax
import jax.numpy as jnp
from jax.experimental import pallas as pl
from jax.experimental.pallas import tpu as pltpu

# Reference cfg from the PyTorch file (kept for reference; a reduced cfg with the same
# block types is used in __main__ so the demo runs quickly at small shapes).
cfg = {
    'genet_small': [['conv', 1, 13, 2, 3, 1], ['xx', 1, 48, 2, 3, 1], ['xx', 3, 48, 2, 3, 1],
                    ['bl', 7, 384, 2, 3, 0.25], ['dw', 2, 560, 2, 3, 3], ['dw', 1, 256, 1, 3, 3],
                    ['conv', 1, 1920, 1, 1, 1]],
    'genet_normal': [['conv', 1, 32, 2, 3, 1], ['xx', 1, 128, 2, 3, 1], ['xx', 2, 192, 2, 3, 1],
                     ['bl', 6, 640, 2, 3, 0.25], ['dw', 4, 640, 2, 3, 3], ['dw', 1, 640, 1, 3, 3],
                     ['conv', 1, 2560, 1, 1, 1]],
    'genet_large': [['conv', 1, 32, 2, 3, 1], ['xx', 1, 128, 2, 3, 1], ['xx', 2, 192, 2, 3, 1],
                    ['bl', 6, 640, 2, 3, 0.25], ['dw', 5, 640, 2, 3, 3], ['dw', 4, 640, 1, 3, 3],
                    ['conv', 1, 2560, 1, 1, 1]],
}

# Tiling limits (per-layer tiles are chosen adaptively below, capped by these).
MAX_TM = 512          # rows of the patches matrix per tile
MAX_TN = 256          # output channels per tile (256-aligned for the v6e/v7x MXU)
MAX_FULL_K = 2048     # use a single full-K block (no reduction grid axis) up to this K
TK_TILED = 512        # K tile when K > MAX_FULL_K (zero-padded)


def _round_up(x, m):
    return (x + m - 1) // m * m


# ----------------------------- Pallas matmul kernel ------------------------------------

def _mm_body(x_ref, w_ref, s_ref, b_ref, r_ref, o_ref, acc_ref, relu):
    k = pl.program_id(2)

    @pl.when(k == 0)
    def _():
        acc_ref[...] = jnp.zeros_like(acc_ref)

    acc_ref[...] += jnp.dot(x_ref[...], w_ref[...],
                            preferred_element_type=jnp.float32)

    @pl.when(k == pl.num_programs(2) - 1)
    def _():
        y = acc_ref[...] * s_ref[...] + b_ref[...]
        if r_ref is not None:          # static (Python) branch
            y = y + r_ref[...].astype(jnp.float32)
        if relu:                       # static (Python) branch
            y = jnp.maximum(y, 0.0)
        o_ref[...] = y.astype(o_ref.dtype)


def _make_mm_kernel(relu, has_res):
    if has_res:
        def kernel(x_ref, w_ref, s_ref, b_ref, r_ref, o_ref, acc_ref):
            _mm_body(x_ref, w_ref, s_ref, b_ref, r_ref, o_ref, acc_ref, relu)
    else:
        def kernel(x_ref, w_ref, s_ref, b_ref, o_ref, acc_ref):
            _mm_body(x_ref, w_ref, s_ref, b_ref, None, o_ref, acc_ref, relu)
    return kernel


def matmul_bn_act(x, w, scale, shift, residual=None, relu=True,
                  out_dtype=jnp.bfloat16):
    """act((x @ w) * scale + shift [+ residual]) with a tiled Pallas TPU kernel.

    x:(M,K) bf16-cast, w:(K,N) bf16-cast, scale/shift:(N,) f32, residual:(M,N).
    The f32 accumulator lives in VMEM scratch; BN/residual/ReLU are fused in the epilogue.
    """
    M, K = x.shape
    K2, N = w.shape
    assert K == K2

    x = x.astype(jnp.bfloat16)
    w = w.astype(jnp.bfloat16)

    # --- K: full-K block when it fits (no padding, no reduction axis), else 512-tiles.
    if K <= MAX_FULL_K:
        TK = K
    else:
        TK = TK_TILED
        Kpad = _round_up(K, TK)
        x = jnp.pad(x, ((0, 0), (0, Kpad - K)))
        w = jnp.pad(w, ((0, Kpad - K), (0, 0)))
    Kp = x.shape[1]

    # --- N: pad to a lane-aligned width only when needed (weights/scale/shift are tiny).
    if N < 128 or N % 128 == 0:
        Np = N
    else:
        Np = _round_up(N, 128)
    if Np != N:
        w = jnp.pad(w, ((0, 0), (0, Np - N)))
        scale = jnp.pad(scale, (0, Np - N))
        shift = jnp.pad(shift, (0, Np - N))
        if residual is not None:
            residual = jnp.pad(residual, ((0, 0), (0, Np - N)))
    TN = Np if Np <= MAX_TN else MAX_TN

    # --- M: never padded. Full-array block when small; trailing partial tile is masked.
    TM = M if M <= MAX_TM else MAX_TM

    sp = scale.reshape(1, Np).astype(jnp.float32)
    bp = shift.reshape(1, Np).astype(jnp.float32)

    in_arrays = [x, w, sp, bp]
    in_specs = [
        pl.BlockSpec((TM, TK), lambda i, j, k: (i, k)),
        pl.BlockSpec((TK, TN), lambda i, j, k: (k, j)),
        pl.BlockSpec((1, TN), lambda i, j, k: (0, j)),
        pl.BlockSpec((1, TN), lambda i, j, k: (0, j)),
    ]
    has_res = residual is not None
    if has_res:
        in_arrays.append(residual.astype(jnp.bfloat16))
        in_specs.append(pl.BlockSpec((TM, TN), lambda i, j, k: (i, j)))

    grid = (pl.cdiv(M, TM), pl.cdiv(Np, TN), pl.cdiv(Kp, TK))

    out = pl.pallas_call(
        _make_mm_kernel(relu, has_res),
        out_shape=jax.ShapeDtypeStruct((M, Np), out_dtype),
        grid_spec=pltpu.PrefetchScalarGridSpec(
            num_scalar_prefetch=0,
            grid=grid,
            in_specs=in_specs,
            out_specs=pl.BlockSpec((TM, TN), lambda i, j, k: (i, j)),
            scratch_shapes=[pltpu.VMEM((TM, TN), jnp.float32)],
        ),
        compiler_params=pltpu.CompilerParams(
            dimension_semantics=("parallel", "parallel", "arbitrary")),
    )(*in_arrays)

    if Np != N:
        out = out[:, :N]
    return out


# ----------------------------- fused global-avg-pool + linear --------------------------

def _gap_linear_kernel(x_ref, w_ref, b_ref, o_ref):
    inv_s = 1.0 / x_ref.shape[1]
    pooled = jnp.sum(x_ref[...].astype(jnp.float32), axis=1) * inv_s      # (Nb, C)
    o_ref[...] = (jnp.dot(pooled, w_ref[...],
                          preferred_element_type=jnp.float32) + b_ref[...])


def gap_linear(x_nhwc, w, b):
    """AdaptiveAvgPool2d(1) + Flatten + Linear fused into one Pallas kernel."""
    Nb, H, W, C = x_nhwc.shape
    S = H * W
    num_classes = w.shape[1]
    x3 = x_nhwc.reshape(Nb, S, C)
    w32 = w.astype(jnp.float32)
    b2 = b.reshape(1, num_classes).astype(jnp.float32)
    return pl.pallas_call(
        _gap_linear_kernel,
        out_shape=jax.ShapeDtypeStruct((Nb, num_classes), jnp.float32),
        grid_spec=pltpu.PrefetchScalarGridSpec(
            num_scalar_prefetch=0,
            grid=(1,),
            in_specs=[pl.BlockSpec((Nb, S, C), lambda i: (0, 0, 0)),
                      pl.BlockSpec((C, num_classes), lambda i: (0, 0)),
                      pl.BlockSpec((1, num_classes), lambda i: (0, 0))],
            out_specs=pl.BlockSpec((Nb, num_classes), lambda i: (0, 0)),
        ),
    )(x3, w32, b2)


# ----------------------------- conv = im2col + Pallas matmul ---------------------------

def conv_bn_act(x, w, scale, shift, stride, padding, residual=None, relu=True):
    """x: (N, H, W, Cin) bf16, w: (KH, KW, Cin, Cout). BN folded into scale/shift."""
    Nb, H, W, Cin = x.shape
    KH, KW, _, Cout = w.shape
    if padding > 0:
        x = jnp.pad(x, ((0, 0), (padding, padding), (padding, padding), (0, 0)))
    Hp, Wp = H + 2 * padding, W + 2 * padding
    OH = (Hp - KH) // stride + 1
    OW = (Wp - KW) // stride + 1
    if KH == 1 and KW == 1 and stride == 1:
        patches = x.reshape(Nb * OH * OW, Cin)            # free reshape, no copy
    else:
        cols = [x[:, kh:kh + stride * OH:stride, kw:kw + stride * OW:stride, :]
                for kh in range(KH) for kw in range(KW)]
        patches = jnp.concatenate(cols, axis=-1).reshape(Nb * OH * OW, KH * KW * Cin)
    wm = w.reshape(KH * KW * Cin, Cout)
    res = residual.reshape(Nb * OH * OW, Cout) if residual is not None else None
    y = matmul_bn_act(patches, wm, scale, shift, residual=res, relu=relu)
    return y.reshape(Nb, OH, OW, Cout)


def avg_pool2d(x, ksize, stride, padding):
    """AvgPool2d(ksize, stride, padding, count_include_pad=True) on NHWC (wrapper glue)."""
    Nb, H, W, C = x.shape
    if padding > 0:
        x = jnp.pad(x, ((0, 0), (padding, padding), (padding, padding), (0, 0)))
    Hp, Wp = H + 2 * padding, W + 2 * padding
    OH = (Hp - ksize) // stride + 1
    OW = (Wp - ksize) // stride + 1
    acc = jnp.zeros((Nb, OH, OW, C), jnp.float32)
    for i in range(ksize):
        for j in range(ksize):
            acc = acc + x[:, i:i + stride * OH:stride,
                          j:j + stride * OW:stride, :].astype(jnp.float32)
    return (acc / float(ksize * ksize)).astype(x.dtype)


# ----------------------------- deterministic parameter construction --------------------

class ParamGen:
    def __init__(self, seed=0):
        self.key = jax.random.PRNGKey(seed)

    def normal(self, shape, std=1.0):
        self.key, sub = jax.random.split(self.key)
        return std * jax.random.normal(sub, shape, dtype=jnp.float32)


def make_conv_bn(pg, in_ch, out_ch, ksize, stride, padding, conv_bias, relu):
    fan_in = ksize * ksize * in_ch
    w = pg.normal((ksize, ksize, in_ch, out_ch), std=1.0 / math.sqrt(fan_in))
    bias = pg.normal((out_ch,), std=0.05) if conv_bias else None
    gamma = 1.0 + pg.normal((out_ch,), std=0.05)
    beta = pg.normal((out_ch,), std=0.05)
    mean = pg.normal((out_ch,), std=0.05)
    var = 1.0 + jnp.abs(pg.normal((out_ch,), std=0.05))
    eps = 1e-5
    scale = gamma / jnp.sqrt(var + eps)
    shift = beta - mean * scale
    if bias is not None:
        shift = shift + scale * bias   # fold conv bias into BN shift
    return dict(w=w, scale=scale, shift=shift, stride=stride,
                padding=padding, relu=relu)


def apply_conv_bn(x, p, residual=None, relu=None):
    return conv_bn_act(x, p["w"], p["scale"], p["shift"], p["stride"], p["padding"],
                       residual=residual, relu=p["relu"] if relu is None else relu)


def make_shortcut(pg, in_ch, out_ch, stride):
    if stride == 1 and in_ch == out_ch:
        return None  # identity shortcut
    p = make_conv_bn(pg, in_ch, out_ch, 1, 1, 0, conv_bias=False, relu=False)
    return dict(p, pool=stride if stride > 1 else 0)


def apply_shortcut(x, p):
    if p.get("pool", 0) > 1:
        s = p["pool"]
        # AvgPool2d(kernel=stride+1, stride=stride, padding=stride//2) then 1x1 conv + BN.
        x = avg_pool2d(x, ksize=s + 1, stride=s, padding=s // 2)
    return apply_conv_bn(x, p)


def make_residual_block(block_type, pg, in_ch, out_ch, ksize, stride, expansion):
    e = int(round(out_ch * expansion))
    convs = []
    if block_type == 'xx':
        convs.append(make_conv_bn(pg, in_ch, e, ksize, stride, ksize // 2, True, True))
        convs.append(make_conv_bn(pg, e, out_ch, ksize, 1, (ksize - 1) // 2, False, False))
    elif block_type == 'bl':
        convs.append(make_conv_bn(pg, in_ch, e, 1, 1, 0, True, True))
        convs.append(make_conv_bn(pg, e, e, ksize, stride, (ksize - 1) // 2, False, True))
        convs.append(make_conv_bn(pg, e, out_ch, 1, 1, 0, True, False))
    elif block_type == 'dw':
        # NOTE: the reference "dw" block is a plain conv (no groups=), reproduced as such.
        convs.append(make_conv_bn(pg, in_ch, e, 1, 1, 0, True, True))
        convs.append(make_conv_bn(pg, e, e, ksize, stride, ksize // 2, False, True))
        convs.append(make_conv_bn(pg, e, out_ch, 1, 1, 0, True, False))
    else:
        raise ValueError(block_type)
    shortcut = make_shortcut(pg, in_ch, out_ch, stride)
    return dict(kind='res', convs=convs, shortcut=shortcut)


def build_genet(pg, net_cfg, in_chs=3, num_classes=10):
    blocks = []
    ch = in_chs
    for layer_cfg in net_cfg:
        btype, n_sub, out_ch, stride, ksize, exp = layer_cfg
        for i in range(n_sub):
            s = stride if i < 1 else 1
            if btype.lower() == 'conv':
                # ConvBlock: ksize conv, stride s, NO padding, bias=False, BN, ReLU.
                p = make_conv_bn(pg, ch, int(round(out_ch * exp)), ksize, s, 0, False, True)
                blocks.append(dict(kind='conv', convs=[p]))
            else:
                blocks.append(make_residual_block(btype.lower(), pg, ch, out_ch, ksize, s, exp))
            ch = out_ch
    w_cls = pg.normal((ch, num_classes), std=1.0 / math.sqrt(ch))
    b_cls = pg.normal((num_classes,), std=0.05)
    return dict(blocks=blocks, w_cls=w_cls, b_cls=b_cls, feat_ch=ch,
                num_classes=num_classes)


# ----------------------------- forward ------------------------------------------------

def apply_block(x, blk):
    if blk['kind'] == 'conv':
        return apply_conv_bn(x, blk['convs'][0])
    # residual block: net = conv_block(x); net = net + shortcut(x); net = relu(net)
    sc = x if blk['shortcut'] is None else apply_shortcut(x, blk['shortcut'])
    h = x
    for p in blk['convs'][:-1]:
        h = apply_conv_bn(h, p)
    # last conv's BN output + shortcut + ReLU, fused into the Pallas matmul epilogue
    return apply_conv_bn(h, blk['convs'][-1], residual=sc, relu=True)


def genet_forward(x_nchw, model):
    # NCHW f32 -> NHWC bf16 (activations stay bf16 end-to-end; accumulation is f32).
    x = jnp.transpose(x_nchw, (0, 2, 3, 1)).astype(jnp.bfloat16)
    for blk in model['blocks']:
        x = apply_block(x, blk)
    # AdaptiveAvgPool2d(1) + Flatten + Linear fused into one Pallas kernel.
    return gap_linear(x, model['w_cls'], model['b_cls'])


# ----------------------------- demo ---------------------------------------------------

if __name__ == "__main__":
    # Reduced cfg using every block type of GENet, at small shapes.
    cfg_test = [
        ['conv', 1, 8, 2, 3, 1],
        ['xx', 1, 16, 2, 3, 1],
        ['bl', 1, 32, 2, 3, 0.25],
        ['dw', 1, 32, 1, 3, 3],
        ['conv', 1, 64, 1, 1, 1],
    ]
    pg = ParamGen(seed=0)
    model = build_genet(pg, cfg_test, in_chs=3, num_classes=10)

    key = jax.random.PRNGKey(0)
    x = jax.random.normal(key, (2, 3, 32, 32), dtype=jnp.float32)  # NCHW, like PyTorch

    forward = jax.jit(lambda inp: genet_forward(inp, model))
    out = forward(x)
    out = jax.block_until_ready(out)
    assert out.shape == (2, 10), out.shape
    assert bool(jnp.all(jnp.isfinite(out)))
    print("KERNEL_OK")
</pallas_src>

<mosaic_0001>
module attributes {stable_mosaic.version = 11 : i64} {
  func.func @kernel(%arg0: i32, %arg1: i32, %arg2: i32, %arg3: memref<450x27xbf16, #tpu.memory_space<vmem>>, %arg4: memref<27x8xbf16, #tpu.memory_space<vmem>>, %arg5: memref<1x8xf32, #tpu.memory_space<vmem>>, %arg6: memref<1x8xf32, #tpu.memory_space<vmem>>, %arg7: memref<450x8xbf16, #tpu.memory_space<vmem>>, %arg8: memref<450x8xf32, #tpu.memory_space<vmem>>) attributes {dimension_semantics = [#tpu.dimension_semantics<parallel>, #tpu.dimension_semantics<parallel>, #tpu.dimension_semantics<arbitrary>], iteration_bounds = array<i64: 1, 1, 1>, scalar_prefetch = 0 : i64, scratch_operands = 1 : i64, tpu.core_type = #tpu.core_type<tc>, window_params = [{transform_indices = @transform_0, window_bounds = array<i64: 450, 27>}, {transform_indices = @transform_1, window_bounds = array<i64: 27, 8>}, {transform_indices = @transform_2, window_bounds = array<i64: 1, 8>}, {transform_indices = @transform_3, window_bounds = array<i64: 1, 8>}, {transform_indices = @transform_4, window_bounds = array<i64: 450, 8>}]} {
    %c0_i32 = arith.constant 0 : i32
    %0 = arith.cmpi eq, %arg2, %c0_i32 : i32
    %1 = arith.extui %0 : i1 to i32
    %c0_i32_0 = arith.constant 0 : i32
    %2 = arith.cmpi ne, %1, %c0_i32_0 : i32
    scf.if %2 {
      %cst_10 = arith.constant 0.000000e+00 : f32
      %12 = vector.broadcast %cst_10 : f32 to vector<450x8xf32>
      %c0_11 = arith.constant 0 : index
      %c0_12 = arith.constant 0 : index
      %13 = vector.load %arg8[%c0_11, %c0_12] : memref<450x8xf32, #tpu.memory_space<vmem>>, vector<450x8xf32>
      tpu.vector_store %arg8[%c0_11, %c0_12], %12 {strides = array<i32>} : memref<450x8xf32, #tpu.memory_space<vmem>>, vector<450x8xf32>,
    } else {
    }
    %c0 = arith.constant 0 : index
    %c0_1 = arith.constant 0 : index
    %3 = vector.load %arg8[%c0, %c0_1] : memref<450x8xf32, #tpu.memory_space<vmem>>, vector<450x8xf32>
    %c0_2 = arith.constant 0 : index
    %c0_3 = arith.constant 0 : index
    %4 = vector.load %arg3[%c0_2, %c0_3] : memref<450x27xbf16, #tpu.memory_space<vmem>>, vector<450x27xbf16>
    %c0_4 = arith.constant 0 : index
    %c0_5 = arith.constant 0 : index
    %5 = vector.load %arg4[%c0_4, %c0_5] : memref<27x8xbf16, #tpu.memory_space<vmem>>, vector<27x8xbf16>
    %cst = arith.constant dense<0.000000e+00> : vector<450x8xf32>
    %6 = tpu.matmul %4, %5, %cst {dimension_numbers = #tpu.dot_dimension_numbers<[1], [0], [0], [1], [0, 0, 1, 1], [], []>} : vector<450x27xbf16>, vector<27x8xbf16>, vector<450x8xf32> -> vector<450x8xf32>
    %7 = arith.addf %3, %6 : vector<450x8xf32>
    %c0_6 = arith.constant 0 : index
    %c0_7 = arith.constant 0 : index
    %8 = vector.load %arg8[%c0_6, %c0_7] : memref<450x8xf32, #tpu.memory_space<vmem>>, vector<450x8xf32>
    tpu.vector_store %arg8[%c0_6, %c0_7], %7 {strides = array<i32>} : memref<450x8xf32, #tpu.memory_space<vmem>>, vector<450x8xf32>,
    %c0_i32_8 = arith.constant 0 : i32
    %9 = arith.cmpi eq, %arg2, %c0_i32_8 : i32
    %10 = arith.extui %9 : i1 to i32
    %c0_i32_9 = arith.constant 0 : i32
    %11 = arith.cmpi ne, %10, %c0_i32_9 : i32
    scf.if %11 {
      %c0_10 = arith.constant 0 : index
      %c0_11 = arith.constant 0 : index
      %12 = vector.load %arg8[%c0_10, %c0_11] : memref<450x8xf32, #tpu.memory_space<vmem>>, vector<450x8xf32>
      %c0_12 = arith.constant 0 : index
      %c0_13 = arith.constant 0 : index
      %13 = vector.load %arg5[%c0_12, %c0_13] : memref<1x8xf32, #tpu.memory_space<vmem>>, vector<1x8xf32>
      %14 = vector.broadcast %13 : vector<1x8xf32> to vector<450x8xf32>
      %15 = arith.mulf %12, %14 : vector<450x8xf32>
      %c0_14 = arith.constant 0 : index
      %c0_15 = arith.constant 0 : index
      %16 = vector.load %arg6[%c0_14, %c0_15] : memref<1x8xf32, #tpu.memory_space<vmem>>, vector<1x8xf32>
      %17 = vector.broadcast %16 : vector<1x8xf32> to vector<450x8xf32>
      %18 = arith.addf %15, %17 : vector<450x8xf32>
      %cst_16 = arith.constant 0.000000e+00 : f32
      %19 = vector.broadcast %cst_16 : f32 to vector<450x8xf32>
      %20 = arith.maximumf %18, %19 : vector<450x8xf32>
      %21 = arith.truncf %20 : vector<450x8xf32> to vector<450x8xbf16>
      %c0_17 = arith.constant 0 : index
      %c0_18 = arith.constant 0 : index
      %22 = vector.load %arg7[%c0_17, %c0_18] : memref<450x8xbf16, #tpu.memory_space<vmem>>, vector<450x8xbf16>
      tpu.vector_store %arg7[%c0_17, %c0_18], %21 {strides = array<i32>} : memref<450x8xbf16, #tpu.memory_space<vmem>>, vector<450x8xbf16>,
    } else {
    }
    return
  }
  func.func @transform_0(%arg0: i32, %arg1: i32, %arg2: i32) -> (i32, i32) {
    %c0_i32 = arith.constant 0 : i32
    return %arg0, %arg2 : i32, i32
  }
  func.func @transform_1(%arg0: i32, %arg1: i32, %arg2: i32) -> (i32, i32) {
    %c0_i32 = arith.constant 0 : i32
    return %arg2, %arg1 : i32, i32
  }
  func.func @transform_2(%arg0: i32, %arg1: i32, %arg2: i32) -> (i32, i32) {
    %c0_i32 = arith.constant 0 : i32
    %c0_i32_0 = arith.constant 0 : i32
    return %c0_i32, %arg1 : i32, i32
  }
  func.func @transform_3(%arg0: i32, %arg1: i32, %arg2: i32) -> (i32, i32) {
    %c0_i32 = arith.constant 0 : i32
    %c0_i32_0 = arith.constant 0 : i32
    return %c0_i32, %arg1 : i32, i32
  }
  func.func @transform_4(%arg0: i32, %arg1: i32, %arg2: i32) -> (i32, i32) {
    %c0_i32 = arith.constant 0 : i32
    return %arg0, %arg1 : i32, i32
  }
}

module attributes {stable_mosaic.version = 11 : i64} {
  func.func @kernel(%arg0: i32, %arg1: i32, %arg2: i32, %arg3: memref<128x8xbf16, #tpu.memory_space<vmem>>, %arg4: memref<8x16xbf16, #tpu.memory_space<vmem>>, %arg5: memref<1x16xf32, #tpu.memory_space<vmem>>, %arg6: memref<1x16xf32, #tpu.memory_space<vmem>>, %arg7: memref<128x16xbf16, #tpu.memory_space<vmem>>, %arg8: memref<128x16xf32, #tpu.memory_space<vmem>>) attributes {dimension_semantics = [#tpu.dimension_semantics<parallel>, #tpu.dimension_semantics<parallel>, #tpu.dimension_semantics<arbitrary>], iteration_bounds = array<i64: 1, 1, 1>, scalar_prefetch = 0 : i64, scratch_operands = 1 : i64, tpu.core_type = #tpu.core_type<tc>, window_params = [{transform_indices = @transform_0, window_bounds = array<i64: 128, 8>}, {transform_indices = @transform_1, window_bounds = array<i64: 8, 16>}, {transform_indices = @transform_2, window_bounds = array<i64: 1, 16>}, {transform_indices = @transform_3, window_bounds = array<i64: 1, 16>}, {transform_indices = @transform_4, window_bounds = array<i64: 128, 16>}]} {
    %c0_i32 = arith.constant 0 : i32
    %0 = arith.cmpi eq, %arg2, %c0_i32 : i32
    %1 = arith.extui %0 : i1 to i32
    %c0_i32_0 = arith.constant 0 : i32
    %2 = arith.cmpi ne, %1, %c0_i32_0 : i32
    scf.if %2 {
      %cst_10 = arith.constant 0.000000e+00 : f32
      %12 = vector.broadcast %cst_10 : f32 to vector<128x16xf32>
      %c0_11 = arith.constant 0 : index
      %c0_12 = arith.constant 0 : index
      %13 = vector.load %arg8[%c0_11, %c0_12] : memref<128x16xf32, #tpu.memory_space<vmem>>, vector<128x16xf32>
      tpu.vector_store %arg8[%c0_11, %c0_12], %12 {strides = array<i32>} : memref<128x16xf32, #tpu.memory_space<vmem>>, vector<128x16xf32>,
    } else {
    }
    %c0 = arith.constant 0 : index
    %c0_1 = arith.constant 0 : index
    %3 = vector.load %arg8[%c0, %c0_1] : memref<128x16xf32, #tpu.memory_space<vmem>>, vector<128x16xf32>
    %c0_2 = arith.constant 0 : index
    %c0_3 = arith.constant 0 : index
    %4 = vector.load %arg3[%c0_2, %c0_3] : memref<128x8xbf16, #tpu.memory_space<vmem>>, vector<128x8xbf16>
    %c0_4 = arith.constant 0 : index
    %c0_5 = arith.constant 0 : index
    %5 = vector.load %arg4[%c0_4, %c0_5] : memref<8x16xbf16, #tpu.memory_space<vmem>>, vector<8x16xbf16>
    %cst = arith.constant dense<0.000000e+00> : vector<128x16xf32>
    %6 = tpu.matmul %4, %5, %cst {dimension_numbers = #tpu.dot_dimension_numbers<[1], [0], [0], [1], [0, 0, 1, 1], [], []>} : vector<128x8xbf16>, vector<8x16xbf16>, vector<128x16xf32> -> vector<128x16xf32>
    %7 = arith.addf %3, %6 : vector<128x16xf32>
    %c0_6 = arith.constant 0 : index
    %c0_7 = arith.constant 0 : index
    %8 = vector.load %arg8[%c0_6, %c0_7] : memref<128x16xf32, #tpu.memory_space<vmem>>, vector<128x16xf32>
    tpu.vector_store %arg8[%c0_6, %c0_7], %7 {strides = array<i32>} : memref<128x16xf32, #tpu.memory_space<vmem>>, vector<128x16xf32>,
    %c0_i32_8 = arith.constant 0 : i32
    %9 = arith.cmpi eq, %arg2, %c0_i32_8 : i32
    %10 = arith.extui %9 : i1 to i32
    %c0_i32_9 = arith.constant 0 : i32
    %11 = arith.cmpi ne, %10, %c0_i32_9 : i32
    scf.if %11 {
      %c0_10 = arith.constant 0 : index
      %c0_11 = arith.constant 0 : index
      %12 = vector.load %arg8[%c0_10, %c0_11] : memref<128x16xf32, #tpu.memory_space<vmem>>, vector<128x16xf32>
      %c0_12 = arith.constant 0 : index
      %c0_13 = arith.constant 0 : index
      %13 = vector.load %arg5[%c0_12, %c0_13] : memref<1x16xf32, #tpu.memory_space<vmem>>, vector<1x16xf32>
      %14 = vector.broadcast %13 : vector<1x16xf32> to vector<128x16xf32>
      %15 = arith.mulf %12, %14 : vector<128x16xf32>
      %c0_14 = arith.constant 0 : index
      %c0_15 = arith.constant 0 : index
      %16 = vector.load %arg6[%c0_14, %c0_15] : memref<1x16xf32, #tpu.memory_space<vmem>>, vector<1x16xf32>
      %17 = vector.broadcast %16 : vector<1x16xf32> to vector<128x16xf32>
      %18 = arith.addf %15, %17 : vector<128x16xf32>
      %19 = arith.truncf %18 : vector<128x16xf32> to vector<128x16xbf16>
      %c0_16 = arith.constant 0 : index
      %c0_17 = arith.constant 0 : index
      %20 = vector.load %arg7[%c0_16, %c0_17] : memref<128x16xbf16, #tpu.memory_space<vmem>>, vector<128x16xbf16>
      tpu.vector_store %arg7[%c0_16, %c0_17], %19 {strides = array<i32>} : memref<128x16xbf16, #tpu.memory_space<vmem>>, vector<128x16xbf16>,
    } else {
    }
    return
  }
  func.func @transform_0(%arg0: i32, %arg1: i32, %arg2: i32) -> (i32, i32) {
    %c0_i32 = arith.constant 0 : i32
    return %arg0, %arg2 : i32, i32
  }
  func.func @transform_1(%arg0: i32, %arg1: i32, %arg2: i32) -> (i32, i32) {
    %c0_i32 = arith.constant 0 : i32
    return %arg2, %arg1 : i32, i32
  }
  func.func @transform_2(%arg0: i32, %arg1: i32, %arg2: i32) -> (i32, i32) {
    %c0_i32 = arith.constant 0 : i32
    %c0_i32_0 = arith.constant 0 : i32
    return %c0_i32, %arg1 : i32, i32
  }
  func.func @transform_3(%arg0: i32, %arg1: i32, %arg2: i32) -> (i32, i32) {
    %c0_i32 = arith.constant 0 : i32
    %c0_i32_0 = arith.constant 0 : i32
    return %c0_i32, %arg1 : i32, i32
  }
  func.func @transform_4(%arg0: i32, %arg1: i32, %arg2: i32) -> (i32, i32) {
    %c0_i32 = arith.constant 0 : i32
    return %arg0, %arg1 : i32, i32
  }
}

module attributes {stable_mosaic.version = 11 : i64} {
  func.func @kernel(%arg0: i32, %arg1: i32, %arg2: i32, %arg3: memref<128x72xbf16, #tpu.memory_space<vmem>>, %arg4: memref<72x16xbf16, #tpu.memory_space<vmem>>, %arg5: memref<1x16xf32, #tpu.memory_space<vmem>>, %arg6: memref<1x16xf32, #tpu.memory_space<vmem>>, %arg7: memref<128x16xbf16, #tpu.memory_space<vmem>>, %arg8: memref<128x16xf32, #tpu.memory_space<vmem>>) attributes {dimension_semantics = [#tpu.dimension_semantics<parallel>, #tpu.dimension_semantics<parallel>, #tpu.dimension_semantics<arbitrary>], iteration_bounds = array<i64: 1, 1, 1>, scalar_prefetch = 0 : i64, scratch_operands = 1 : i64, tpu.core_type = #tpu.core_type<tc>, window_params = [{transform_indices = @transform_0, window_bounds = array<i64: 128, 72>}, {transform_indices = @transform_1, window_bounds = array<i64: 72, 16>}, {transform_indices = @transform_2, window_bounds = array<i64: 1, 16>}, {transform_indices = @transform_3, window_bounds = array<i64: 1, 16>}, {transform_indices = @transform_4, window_bounds = array<i64: 128, 16>}]} {
    %c0_i32 = arith.constant 0 : i32
    %0 = arith.cmpi eq, %arg2, %c0_i32 : i32
    %1 = arith.extui %0 : i1 to i32
    %c0_i32_0 = arith.constant 0 : i32
    %2 = arith.cmpi ne, %1, %c0_i32_0 : i32
    scf.if %2 {
      %cst_10 = arith.constant 0.000000e+00 : f32
      %12 = vector.broadcast %cst_10 : f32 to vector<128x16xf32>
      %c0_11 = arith.constant 0 : index
      %c0_12 = arith.constant 0 : index
      %13 = vector.load %arg8[%c0_11, %c0_12] : memref<128x16xf32, #tpu.memory_space<vmem>>, vector<128x16xf32>
      tpu.vector_store %arg8[%c0_11, %c0_12], %12 {strides = array<i32>} : memref<128x16xf32, #tpu.memory_space<vmem>>, vector<128x16xf32>,
    } else {
    }
    %c0 = arith.constant 0 : index
    %c0_1 = arith.constant 0 : index
    %3 = vector.load %arg8[%c0, %c0_1] : memref<128x16xf32, #tpu.memory_space<vmem>>, vector<128x16xf32>
    %c0_2 = arith.constant 0 : index
    %c0_3 = arith.constant 0 : index
    %4 = vector.load %arg3[%c0_2, %c0_3] : memref<128x72xbf16, #tpu.memory_space<vmem>>, vector<128x72xbf16>
    %c0_4 = arith.constant 0 : index
    %c0_5 = arith.constant 0 : index
    %5 = vector.load %arg4[%c0_4, %c0_5] : memref<72x16xbf16, #tpu.memory_space<vmem>>, vector<72x16xbf16>
    %cst = arith.constant dense<0.000000e+00> : vector<128x16xf32>
    %6 = tpu.matmul %4, %5, %cst {dimension_numbers = #tpu.dot_dimension_numbers<[1], [0], [0], [1], [0, 0, 1, 1], [], []>} : vector<128x72xbf16>, vector<72x16xbf16>, vector<128x16xf32> -> vector<128x16xf32>
    %7 = arith.addf %3, %6 : vector<128x16xf32>
    %c0_6 = arith.constant 0 : index
    %c0_7 = arith.constant 0 : index
    %8 = vector.load %arg8[%c0_6, %c0_7] : memref<128x16xf32, #tpu.memory_space<vmem>>, vector<128x16xf32>
    tpu.vector_store %arg8[%c0_6, %c0_7], %7 {strides = array<i32>} : memref<128x16xf32, #tpu.memory_space<vmem>>, vector<128x16xf32>,
    %c0_i32_8 = arith.constant 0 : i32
    %9 = arith.cmpi eq, %arg2, %c0_i32_8 : i32
    %10 = arith.extui %9 : i1 to i32
    %c0_i32_9 = arith.constant 0 : i32
    %11 = arith.cmpi ne, %10, %c0_i32_9 : i32
    scf.if %11 {
      %c0_10 = arith.constant 0 : index
      %c0_11 = arith.constant 0 : index
      %12 = vector.load %arg8[%c0_10, %c0_11] : memref<128x16xf32, #tpu.memory_space<vmem>>, vector<128x16xf32>
      %c0_12 = arith.constant 0 : index
      %c0_13 = arith.constant 0 : index
      %13 = vector.load %arg5[%c0_12, %c0_13] : memref<1x16xf32, #tpu.memory_space<vmem>>, vector<1x16xf32>
      %14 = vector.broadcast %13 : vector<1x16xf32> to vector<128x16xf32>
      %15 = arith.mulf %12, %14 : vector<128x16xf32>
      %c0_14 = arith.constant 0 : index
      %c0_15 = arith.constant 0 : index
      %16 = vector.load %arg6[%c0_14, %c0_15] : memref<1x16xf32, #tpu.memory_space<vmem>>, vector<1x16xf32>
      %17 = vector.broadcast %16 : vector<1x16xf32> to vector<128x16xf32>
      %18 = arith.addf %15, %17 : vector<128x16xf32>
      %cst_16 = arith.constant 0.000000e+00 : f32
      %19 = vector.broadcast %cst_16 : f32 to vector<128x16xf32>
      %20 = arith.maximumf %18, %19 : vector<128x16xf32>
      %21 = arith.truncf %20 : vector<128x16xf32> to vector<128x16xbf16>
      %c0_17 = arith.constant 0 : index
      %c0_18 = arith.constant 0 : index
      %22 = vector.load %arg7[%c0_17, %c0_18] : memref<128x16xbf16, #tpu.memory_space<vmem>>, vector<128x16xbf16>
      tpu.vector_store %arg7[%c0_17, %c0_18], %21 {strides = array<i32>} : memref<128x16xbf16, #tpu.memory_space<vmem>>, vector<128x16xbf16>,
    } else {
    }
    return
  }
  func.func @transform_0(%arg0: i32, %arg1: i32, %arg2: i32) -> (i32, i32) {
    %c0_i32 = arith.constant 0 : i32
    return %arg0, %arg2 : i32, i32
  }
  func.func @transform_1(%arg0: i32, %arg1: i32, %arg2: i32) -> (i32, i32) {
    %c0_i32 = arith.constant 0 : i32
    return %arg2, %arg1 : i32, i32
  }
  func.func @transform_2(%arg0: i32, %arg1: i32, %arg2: i32) -> (i32, i32) {
    %c0_i32 = arith.constant 0 : i32
    %c0_i32_0 = arith.constant 0 : i32
    return %c0_i32, %arg1 : i32, i32
  }
  func.func @transform_3(%arg0: i32, %arg1: i32, %arg2: i32) -> (i32, i32) {
    %c0_i32 = arith.constant 0 : i32
    %c0_i32_0 = arith.constant 0 : i32
    return %c0_i32, %arg1 : i32, i32
  }
  func.func @transform_4(%arg0: i32, %arg1: i32, %arg2: i32) -> (i32, i32) {
    %c0_i32 = arith.constant 0 : i32
    return %arg0, %arg1 : i32, i32
  }
}

module attributes {stable_mosaic.version = 11 : i64} {
  func.func @kernel(%arg0: i32, %arg1: i32, %arg2: i32, %arg3: memref<128x144xbf16, #tpu.memory_space<vmem>>, %arg4: memref<144x16xbf16, #tpu.memory_space<vmem>>, %arg5: memref<1x16xf32, #tpu.memory_space<vmem>>, %arg6: memref<1x16xf32, #tpu.memory_space<vmem>>, %arg7: memref<128x16xbf16, #tpu.memory_space<vmem>>, %arg8: memref<128x16xbf16, #tpu.memory_space<vmem>>, %arg9: memref<128x16xf32, #tpu.memory_space<vmem>>) attributes {dimension_semantics = [#tpu.dimension_semantics<parallel>, #tpu.dimension_semantics<parallel>, #tpu.dimension_semantics<arbitrary>], iteration_bounds = array<i64: 1, 1, 1>, scalar_prefetch = 0 : i64, scratch_operands = 1 : i64, tpu.core_type = #tpu.core_type<tc>, window_params = [{transform_indices = @transform_0, window_bounds = array<i64: 128, 144>}, {transform_indices = @transform_1, window_bounds = array<i64: 144, 16>}, {transform_indices = @transform_2, window_bounds = array<i64: 1, 16>}, {transform_indices = @transform_3, window_bounds = array<i64: 1, 16>}, {transform_indices = @transform_4, window_bounds = array<i64: 128, 16>}, {transform_indices = @transform_5, window_bounds = array<i64: 128, 16>}]} {
    %c0_i32 = arith.constant 0 : i32
    %0 = arith.cmpi eq, %arg2, %c0_i32 : i32
    %1 = arith.extui %0 : i1 to i32
    %c0_i32_0 = arith.constant 0 : i32
    %2 = arith.cmpi ne, %1, %c0_i32_0 : i32
    scf.if %2 {
      %cst_10 = arith.constant 0.000000e+00 : f32
      %12 = vector.broadcast %cst_10 : f32 to vector<128x16xf32>
      %c0_11 = arith.constant 0 : index
      %c0_12 = arith.constant 0 : index
      %13 = vector.load %arg9[%c0_11, %c0_12] : memref<128x16xf32, #tpu.memory_space<vmem>>, vector<128x16xf32>
      tpu.vector_store %arg9[%c0_11, %c0_12], %12 {strides = array<i32>} : memref<128x16xf32, #tpu.memory_space<vmem>>, vector<128x16xf32>,
    } else {
    }
    %c0 = arith.constant 0 : index
    %c0_1 = arith.constant 0 : index
    %3 = vector.load %arg9[%c0, %c0_1] : memref<128x16xf32, #tpu.memory_space<vmem>>, vector<128x16xf32>
    %c0_2 = arith.constant 0 : index
    %c0_3 = arith.constant 0 : index
    %4 = vector.load %arg3[%c0_2, %c0_3] : memref<128x144xbf16, #tpu.memory_space<vmem>>, vector<128x144xbf16>
    %c0_4 = arith.constant 0 : index
    %c0_5 = arith.constant 0 : index
    %5 = vector.load %arg4[%c0_4, %c0_5] : memref<144x16xbf16, #tpu.memory_space<vmem>>, vector<144x16xbf16>
    %cst = arith.constant dense<0.000000e+00> : vector<128x16xf32>
    %6 = tpu.matmul %4, %5, %cst {dimension_numbers = #tpu.dot_dimension_numbers<[1], [0], [0], [1], [0, 0, 1, 1], [], []>} : vector<128x144xbf16>, vector<144x16xbf16>, vector<128x16xf32> -> vector<128x16xf32>
    %7 = arith.addf %3, %6 : vector<128x16xf32>
    %c0_6 = arith.constant 0 : index
    %c0_7 = arith.constant 0 : index
    %8 = vector.load %arg9[%c0_6, %c0_7] : memref<128x16xf32, #tpu.memory_space<vmem>>, vector<128x16xf32>
    tpu.vector_store %arg9[%c0_6, %c0_7], %7 {strides = array<i32>} : memref<128x16xf32, #tpu.memory_space<vmem>>, vector<128x16xf32>,
    %c0_i32_8 = arith.constant 0 : i32
    %9 = arith.cmpi eq, %arg2, %c0_i32_8 : i32
    %10 = arith.extui %9 : i1 to i32
    %c0_i32_9 = arith.constant 0 : i32
    %11 = arith.cmpi ne, %10, %c0_i32_9 : i32
    scf.if %11 {
      %c0_10 = arith.constant 0 : index
      %c0_11 = arith.constant 0 : index
      %12 = vector.load %arg9[%c0_10, %c0_11] : memref<128x16xf32, #tpu.memory_space<vmem>>, vector<128x16xf32>
      %c0_12 = arith.constant 0 : index
      %c0_13 = arith.constant 0 : index
      %13 = vector.load %arg5[%c0_12, %c0_13] : memref<1x16xf32, #tpu.memory_space<vmem>>, vector<1x16xf32>
      %14 = vector.broadcast %13 : vector<1x16xf32> to vector<128x16xf32>
      %15 = arith.mulf %12, %14 : vector<128x16xf32>
      %c0_14 = arith.constant 0 : index
      %c0_15 = arith.constant 0 : index
      %16 = vector.load %arg6[%c0_14, %c0_15] : memref<1x16xf32, #tpu.memory_space<vmem>>, vector<1x16xf32>
      %17 = vector.broadcast %16 : vector<1x16xf32> to vector<128x16xf32>
      %18 = arith.addf %15, %17 : vector<128x16xf32>
      %c0_16 = arith.constant 0 : index
      %c0_17 = arith.constant 0 : index
      %19 = vector.load %arg7[%c0_16, %c0_17] : memref<128x16xbf16, #tpu.memory_space<vmem>>, vector<128x16xbf16>
      %20 = arith.extf %19 : vector<128x16xbf16> to vector<128x16xf32>
      %21 = arith.addf %18, %20 : vector<128x16xf32>
      %cst_18 = arith.constant 0.000000e+00 : f32
      %22 = vector.broadcast %cst_18 : f32 to vector<128x16xf32>
      %23 = arith.maximumf %21, %22 : vector<128x16xf32>
      %24 = arith.truncf %23 : vector<128x16xf32> to vector<128x16xbf16>
      %c0_19 = arith.constant 0 : index
      %c0_20 = arith.constant 0 : index
      %25 = vector.load %arg8[%c0_19, %c0_20] : memref<128x16xbf16, #tpu.memory_space<vmem>>, vector<128x16xbf16>
      tpu.vector_store %arg8[%c0_19, %c0_20], %24 {strides = array<i32>} : memref<128x16xbf16, #tpu.memory_space<vmem>>, vector<128x16xbf16>,
    } else {
    }
    return
  }
  func.func @transform_0(%arg0: i32, %arg1: i32, %arg2: i32) -> (i32, i32) {
    %c0_i32 = arith.constant 0 : i32
    return %arg0, %arg2 : i32, i32
  }
  func.func @transform_1(%arg0: i32, %arg1: i32, %arg2: i32) -> (i32, i32) {
    %c0_i32 = arith.constant 0 : i32
    return %arg2, %arg1 : i32, i32
  }
  func.func @transform_2(%arg0: i32, %arg1: i32, %arg2: i32) -> (i32, i32) {
    %c0_i32 = arith.constant 0 : i32
    %c0_i32_0 = arith.constant 0 : i32
    return %c0_i32, %arg1 : i32, i32
  }
  func.func @transform_3(%arg0: i32, %arg1: i32, %arg2: i32) -> (i32, i32) {
    %c0_i32 = arith.constant 0 : i32
    %c0_i32_0 = arith.constant 0 : i32
    return %c0_i32, %arg1 : i32, i32
  }
  func.func @transform_4(%arg0: i32, %arg1: i32, %arg2: i32) -> (i32, i32) {
    %c0_i32 = arith.constant 0 : i32
    return %arg0, %arg1 : i32, i32
  }
  func.func @transform_5(%arg0: i32, %arg1: i32, %arg2: i32) -> (i32, i32) {
    %c0_i32 = arith.constant 0 : i32
    return %arg0, %arg1 : i32, i32
  }
}

module attributes {stable_mosaic.version = 11 : i64} {
  func.func @kernel(%arg0: i32, %arg1: i32, %arg2: i32, %arg3: memref<32x16xbf16, #tpu.memory_space<vmem>>, %arg4: memref<16x32xbf16, #tpu.memory_space<vmem>>, %arg5: memref<1x32xf32, #tpu.memory_space<vmem>>, %arg6: memref<1x32xf32, #tpu.memory_space<vmem>>, %arg7: memref<32x32xbf16, #tpu.memory_space<vmem>>, %arg8: memref<32x32xf32, #tpu.memory_space<vmem>>) attributes {dimension_semantics = [#tpu.dimension_semantics<parallel>, #tpu.dimension_semantics<parallel>, #tpu.dimension_semantics<arbitrary>], iteration_bounds = array<i64: 1, 1, 1>, scalar_prefetch = 0 : i64, scratch_operands = 1 : i64, tpu.core_type = #tpu.core_type<tc>, window_params = [{transform_indices = @transform_0, window_bounds = array<i64: 32, 16>}, {transform_indices = @transform_1, window_bounds = array<i64: 16, 32>}, {transform_indices = @transform_2, window_bounds = array<i64: 1, 32>}, {transform_indices = @transform_3, window_bounds = array<i64: 1, 32>}, {transform_indices = @transform_4, window_bounds = array<i64: 32, 32>}]} {
    %c0_i32 = arith.constant 0 : i32
    %0 = arith.cmpi eq, %arg2, %c0_i32 : i32
    %1 = arith.extui %0 : i1 to i32
    %c0_i32_0 = arith.constant 0 : i32
    %2 = arith.cmpi ne, %1, %c0_i32_0 : i32
    scf.if %2 {
      %cst_10 = arith.constant 0.000000e+00 : f32
      %12 = vector.broadcast %cst_10 : f32 to vector<32x32xf32>
      %c0_11 = arith.constant 0 : index
      %c0_12 = arith.constant 0 : index
      %13 = vector.load %arg8[%c0_11, %c0_12] : memref<32x32xf32, #tpu.memory_space<vmem>>, vector<32x32xf32>
      tpu.vector_store %arg8[%c0_11, %c0_12], %12 {strides = array<i32>} : memref<32x32xf32, #tpu.memory_space<vmem>>, vector<32x32xf32>,
    } else {
    }
    %c0 = arith.constant 0 : index
    %c0_1 = arith.constant 0 : index
    %3 = vector.load %arg8[%c0, %c0_1] : memref<32x32xf32, #tpu.memory_space<vmem>>, vector<32x32xf32>
    %c0_2 = arith.constant 0 : index
    %c0_3 = arith.constant 0 : index
    %4 = vector.load %arg3[%c0_2, %c0_3] : memref<32x16xbf16, #tpu.memory_space<vmem>>, vector<32x16xbf16>
    %c0_4 = arith.constant 0 : index
    %c0_5 = arith.constant 0 : index
    %5 = vector.load %arg4[%c0_4, %c0_5] : memref<16x32xbf16, #tpu.memory_space<vmem>>, vector<16x32xbf16>
    %cst = arith.constant dense<0.000000e+00> : vector<32x32xf32>
    %6 = tpu.matmul %4, %5, %cst {dimension_numbers = #tpu.dot_dimension_numbers<[1], [0], [0], [1], [0, 0, 1, 1], [], []>} : vector<32x16xbf16>, vector<16x32xbf16>, vector<32x32xf32> -> vector<32x32xf32>
    %7 = arith.addf %3, %6 : vector<32x32xf32>
    %c0_6 = arith.constant 0 : index
    %c0_7 = arith.constant 0 : index
    %8 = vector.load %arg8[%c0_6, %c0_7] : memref<32x32xf32, #tpu.memory_space<vmem>>, vector<32x32xf32>
    tpu.vector_store %arg8[%c0_6, %c0_7], %7 {strides = array<i32>} : memref<32x32xf32, #tpu.memory_space<vmem>>, vector<32x32xf32>,
    %c0_i32_8 = arith.constant 0 : i32
    %9 = arith.cmpi eq, %arg2, %c0_i32_8 : i32
    %10 = arith.extui %9 : i1 to i32
    %c0_i32_9 = arith.constant 0 : i32
    %11 = arith.cmpi ne, %10, %c0_i32_9 : i32
    scf.if %11 {
      %c0_10 = arith.constant 0 : index
      %c0_11 = arith.constant 0 : index
      %12 = vector.load %arg8[%c0_10, %c0_11] : memref<32x32xf32, #tpu.memory_space<vmem>>, vector<32x32xf32>
      %c0_12 = arith.constant 0 : index
      %c0_13 = arith.constant 0 : index
      %13 = vector.load %arg5[%c0_12, %c0_13] : memref<1x32xf32, #tpu.memory_space<vmem>>, vector<1x32xf32>
      %14 = vector.broadcast %13 : vector<1x32xf32> to vector<32x32xf32>
      %15 = arith.mulf %12, %14 : vector<32x32xf32>
      %c0_14 = arith.constant 0 : index
      %c0_15 = arith.constant 0 : index
      %16 = vector.load %arg6[%c0_14, %c0_15] : memref<1x32xf32, #tpu.memory_space<vmem>>, vector<1x32xf32>
      %17 = vector.broadcast %16 : vector<1x32xf32> to vector<32x32xf32>
      %18 = arith.addf %15, %17 : vector<32x32xf32>
      %19 = arith.truncf %18 : vector<32x32xf32> to vector<32x32xbf16>
      %c0_16 = arith.constant 0 : index
      %c0_17 = arith.constant 0 : index
      %20 = vector.load %arg7[%c0_16, %c0_17] : memref<32x32xbf16, #tpu.memory_space<vmem>>, vector<32x32xbf16>
      tpu.vector_store %arg7[%c0_16, %c0_17], %19 {strides = array<i32>} : memref<32x32xbf16, #tpu.memory_space<vmem>>, vector<32x32xbf16>,
    } else {
    }
    return
  }
  func.func @transform_0(%arg0: i32, %arg1: i32, %arg2: i32) -> (i32, i32) {
    %c0_i32 = arith.constant 0 : i32
    return %arg0, %arg2 : i32, i32
  }
  func.func @transform_1(%arg0: i32, %arg1: i32, %arg2: i32) -> (i32, i32) {
    %c0_i32 = arith.constant 0 : i32
    return %arg2, %arg1 : i32, i32
  }
  func.func @transform_2(%arg0: i32, %arg1: i32, %arg2: i32) -> (i32, i32) {
    %c0_i32 = arith.constant 0 : i32
    %c0_i32_0 = arith.constant 0 : i32
    return %c0_i32, %arg1 : i32, i32
  }
  func.func @transform_3(%arg0: i32, %arg1: i32, %arg2: i32) -> (i32, i32) {
    %c0_i32 = arith.constant 0 : i32
    %c0_i32_0 = arith.constant 0 : i32
    return %c0_i32, %arg1 : i32, i32
  }
  func.func @transform_4(%arg0: i32, %arg1: i32, %arg2: i32) -> (i32, i32) {
    %c0_i32 = arith.constant 0 : i32
    return %arg0, %arg1 : i32, i32
  }
}

module attributes {stable_mosaic.version = 11 : i64} {
  func.func @kernel(%arg0: i32, %arg1: i32, %arg2: i32, %arg3: memref<128x16xbf16, #tpu.memory_space<vmem>>, %arg4: memref<16x8xbf16, #tpu.memory_space<vmem>>, %arg5: memref<1x8xf32, #tpu.memory_space<vmem>>, %arg6: memref<1x8xf32, #tpu.memory_space<vmem>>, %arg7: memref<128x8xbf16, #tpu.memory_space<vmem>>, %arg8: memref<128x8xf32, #tpu.memory_space<vmem>>) attributes {dimension_semantics = [#tpu.dimension_semantics<parallel>, #tpu.dimension_semantics<parallel>, #tpu.dimension_semantics<arbitrary>], iteration_bounds = array<i64: 1, 1, 1>, scalar_prefetch = 0 : i64, scratch_operands = 1 : i64, tpu.core_type = #tpu.core_type<tc>, window_params = [{transform_indices = @transform_0, window_bounds = array<i64: 128, 16>}, {transform_indices = @transform_1, window_bounds = array<i64: 16, 8>}, {transform_indices = @transform_2, window_bounds = array<i64: 1, 8>}, {transform_indices = @transform_3, window_bounds = array<i64: 1, 8>}, {transform_indices = @transform_4, window_bounds = array<i64: 128, 8>}]} {
    %c0_i32 = arith.constant 0 : i32
    %0 = arith.cmpi eq, %arg2, %c0_i32 : i32
    %1 = arith.extui %0 : i1 to i32
    %c0_i32_0 = arith.constant 0 : i32
    %2 = arith.cmpi ne, %1, %c0_i32_0 : i32
    scf.if %2 {
      %cst_10 = arith.constant 0.000000e+00 : f32
      %12 = vector.broadcast %cst_10 : f32 to vector<128x8xf32>
      %c0_11 = arith.constant 0 : index
      %c0_12 = arith.constant 0 : index
      %13 = vector.load %arg8[%c0_11, %c0_12] : memref<128x8xf32, #tpu.memory_space<vmem>>, vector<128x8xf32>
      tpu.vector_store %arg8[%c0_11, %c0_12], %12 {strides = array<i32>} : memref<128x8xf32, #tpu.memory_space<vmem>>, vector<128x8xf32>,
    } else {
    }
    %c0 = arith.constant 0 : index
    %c0_1 = arith.constant 0 : index
    %3 = vector.load %arg8[%c0, %c0_1] : memref<128x8xf32, #tpu.memory_space<vmem>>, vector<128x8xf32>
    %c0_2 = arith.constant 0 : index
    %c0_3 = arith.constant 0 : index
    %4 = vector.load %arg3[%c0_2, %c0_3] : memref<128x16xbf16, #tpu.memory_space<vmem>>, vector<128x16xbf16>
    %c0_4 = arith.constant 0 : index
    %c0_5 = arith.constant 0 : index
    %5 = vector.load %arg4[%c0_4, %c0_5] : memref<16x8xbf16, #tpu.memory_space<vmem>>, vector<16x8xbf16>
    %cst = arith.constant dense<0.000000e+00> : vector<128x8xf32>
    %6 = tpu.matmul %4, %5, %cst {dimension_numbers = #tpu.dot_dimension_numbers<[1], [0], [0], [1], [0, 0, 1, 1], [], []>} : vector<128x16xbf16>, vector<16x8xbf16>, vector<128x8xf32> -> vector<128x8xf32>
    %7 = arith.addf %3, %6 : vector<128x8xf32>
    %c0_6 = arith.constant 0 : index
    %c0_7 = arith.constant 0 : index
    %8 = vector.load %arg8[%c0_6, %c0_7] : memref<128x8xf32, #tpu.memory_space<vmem>>, vector<128x8xf32>
    tpu.vector_store %arg8[%c0_6, %c0_7], %7 {strides = array<i32>} : memref<128x8xf32, #tpu.memory_space<vmem>>, vector<128x8xf32>,
    %c0_i32_8 = arith.constant 0 : i32
    %9 = arith.cmpi eq, %arg2, %c0_i32_8 : i32
    %10 = arith.extui %9 : i1 to i32
    %c0_i32_9 = arith.constant 0 : i32
    %11 = arith.cmpi ne, %10, %c0_i32_9 : i32
    scf.if %11 {
      %c0_10 = arith.constant 0 : index
      %c0_11 = arith.constant 0 : index
      %12 = vector.load %arg8[%c0_10, %c0_11] : memref<128x8xf32, #tpu.memory_space<vmem>>, vector<128x8xf32>
      %c0_12 = arith.constant 0 : index
      %c0_13 = arith.constant 0 : index
      %13 = vector.load %arg5[%c0_12, %c0_13] : memref<1x8xf32, #tpu.memory_space<vmem>>, vector<1x8xf32>
      %14 = vector.broadcast %13 : vector<1x8xf32> to vector<128x8xf32>
      %15 = arith.mulf %12, %14 : vector<128x8xf32>
      %c0_14 = arith.constant 0 : index
      %c0_15 = arith.constant 0 : index
      %16 = vector.load %arg6[%c0_14, %c0_15] : memref<1x8xf32, #tpu.memory_space<vmem>>, vector<1x8xf32>
      %17 = vector.broadcast %16 : vector<1x8xf32> to vector<128x8xf32>
      %18 = arith.addf %15, %17 : vector<128x8xf32>
      %cst_16 = arith.constant 0.000000e+00 : f32
      %19 = vector.broadcast %cst_16 : f32 to vector<128x8xf32>
      %20 = arith.maximumf %18, %19 : vector<128x8xf32>
      %21 = arith.truncf %20 : vector<128x8xf32> to vector<128x8xbf16>
      %c0_17 = arith.constant 0 : index
      %c0_18 = arith.constant 0 : index
      %22 = vector.load %arg7[%c0_17, %c0_18] : memref<128x8xbf16, #tpu.memory_space<vmem>>, vector<128x8xbf16>
      tpu.vector_store %arg7[%c0_17, %c0_18], %21 {strides = array<i32>} : memref<128x8xbf16, #tpu.memory_space<vmem>>, vector<128x8xbf16>,
    } else {
    }
    return
  }
  func.func @transform_0(%arg0: i32, %arg1: i32, %arg2: i32) -> (i32, i32) {
    %c0_i32 = arith.constant 0 : i32
    return %arg0, %arg2 : i32, i32
  }
  func.func @transform_1(%arg0: i32, %arg1: i32, %arg2: i32) -> (i32, i32) {
    %c0_i32 = arith.constant 0 : i32
    return %arg2, %arg1 : i32, i32
  }
  func.func @transform_2(%arg0: i32, %arg1: i32, %arg2: i32) -> (i32, i32) {
    %c0_i32 = arith.constant 0 : i32
    %c0_i32_0 = arith.constant 0 : i32
    return %c0_i32, %arg1 : i32, i32
  }
  func.func @transform_3(%arg0: i32, %arg1: i32, %arg2: i32) -> (i32, i32) {
    %c0_i32 = arith.constant 0 : i32
    %c0_i32_0 = arith.constant 0 : i32
    return %c0_i32, %arg1 : i32, i32
  }
  func.func @transform_4(%arg0: i32, %arg1: i32, %arg2: i32) -> (i32, i32) {
    %c0_i32 = arith.constant 0 : i32
    return %arg0, %arg1 : i32, i32
  }
}

module attributes {stable_mosaic.version = 11 : i64} {
  func.func @kernel(%arg0: i32, %arg1: i32, %arg2: i32, %arg3: memref<32x72xbf16, #tpu.memory_space<vmem>>, %arg4: memref<72x8xbf16, #tpu.memory_space<vmem>>, %arg5: memref<1x8xf32, #tpu.memory_space<vmem>>, %arg6: memref<1x8xf32, #tpu.memory_space<vmem>>, %arg7: memref<32x8xbf16, #tpu.memory_space<vmem>>, %arg8: memref<32x8xf32, #tpu.memory_space<vmem>>) attributes {dimension_semantics = [#tpu.dimension_semantics<parallel>, #tpu.dimension_semantics<parallel>, #tpu.dimension_semantics<arbitrary>], iteration_bounds = array<i64: 1, 1, 1>, scalar_prefetch = 0 : i64, scratch_operands = 1 : i64, tpu.core_type = #tpu.core_type<tc>, window_params = [{transform_indices = @transform_0, window_bounds = array<i64: 32, 72>}, {transform_indices = @transform_1, window_bounds = array<i64: 72, 8>}, {transform_indices = @transform_2, window_bounds = array<i64: 1, 8>}, {transform_indices = @transform_3, window_bounds = array<i64: 1, 8>}, {transform_indices = @transform_4, window_bounds = array<i64: 32, 8>}]} {
    %c0_i32 = arith.constant 0 : i32
    %0 = arith.cmpi eq, %arg2, %c0_i32 : i32
    %1 = arith.extui %0 : i1 to i32
    %c0_i32_0 = arith.constant 0 : i32
    %2 = arith.cmpi ne, %1, %c0_i32_0 : i32
    scf.if %2 {
      %cst_10 = arith.constant 0.000000e+00 : f32
      %12 = vector.broadcast %cst_10 : f32 to vector<32x8xf32>
      %c0_11 = arith.constant 0 : index
      %c0_12 = arith.constant 0 : index
      %13 = vector.load %arg8[%c0_11, %c0_12] : memref<32x8xf32, #tpu.memory_space<vmem>>, vector<32x8xf32>
      tpu.vector_store %arg8[%c0_11, %c0_12], %12 {strides = array<i32>} : memref<32x8xf32, #tpu.memory_space<vmem>>, vector<32x8xf32>,
    } else {
    }
    %c0 = arith.constant 0 : index
    %c0_1 = arith.constant 0 : index
    %3 = vector.load %arg8[%c0, %c0_1] : memref<32x8xf32, #tpu.memory_space<vmem>>, vector<32x8xf32>
    %c0_2 = arith.constant 0 : index
    %c0_3 = arith.constant 0 : index
    %4 = vector.load %arg3[%c0_2, %c0_3] : memref<32x72xbf16, #tpu.memory_space<vmem>>, vector<32x72xbf16>
    %c0_4 = arith.constant 0 : index
    %c0_5 = arith.constant 0 : index
    %5 = vector.load %arg4[%c0_4, %c0_5] : memref<72x8xbf16, #tpu.memory_space<vmem>>, vector<72x8xbf16>
    %cst = arith.constant dense<0.000000e+00> : vector<32x8xf32>
    %6 = tpu.matmul %4, %5, %cst {dimension_numbers = #tpu.dot_dimension_numbers<[1], [0], [0], [1], [0, 0, 1, 1], [], []>} : vector<32x72xbf16>, vector<72x8xbf16>, vector<32x8xf32> -> vector<32x8xf32>
    %7 = arith.addf %3, %6 : vector<32x8xf32>
    %c0_6 = arith.constant 0 : index
    %c0_7 = arith.constant 0 : index
    %8 = vector.load %arg8[%c0_6, %c0_7] : memref<32x8xf32, #tpu.memory_space<vmem>>, vector<32x8xf32>
    tpu.vector_store %arg8[%c0_6, %c0_7], %7 {strides = array<i32>} : memref<32x8xf32, #tpu.memory_space<vmem>>, vector<32x8xf32>,
    %c0_i32_8 = arith.constant 0 : i32
    %9 = arith.cmpi eq, %arg2, %c0_i32_8 : i32
    %10 = arith.extui %9 : i1 to i32
    %c0_i32_9 = arith.constant 0 : i32
    %11 = arith.cmpi ne, %10, %c0_i32_9 : i32
    scf.if %11 {
      %c0_10 = arith.constant 0 : index
      %c0_11 = arith.constant 0 : index
      %12 = vector.load %arg8[%c0_10, %c0_11] : memref<32x8xf32, #tpu.memory_space<vmem>>, vector<32x8xf32>
      %c0_12 = arith.constant 0 : index
      %c0_13 = arith.constant 0 : index
      %13 = vector.load %arg5[%c0_12, %c0_13] : memref<1x8xf32, #tpu.memory_space<vmem>>, vector<1x8xf32>
      %14 = vector.broadcast %13 : vector<1x8xf32> to vector<32x8xf32>
      %15 = arith.mulf %12, %14 : vector<32x8xf32>
      %c0_14 = arith.constant 0 : index
      %c0_15 = arith.constant 0 : index
      %16 = vector.load %arg6[%c0_14, %c0_15] : memref<1x8xf32, #tpu.memory_space<vmem>>, vector<1x8xf32>
      %17 = vector.broadcast %16 : vector<1x8xf32> to vector<32x8xf32>
      %18 = arith.addf %15, %17 : vector<32x8xf32>
      %cst_16 = arith.constant 0.000000e+00 : f32
      %19 = vector.broadcast %cst_16 : f32 to vector<32x8xf32>
      %20 = arith.maximumf %18, %19 : vector<32x8xf32>
      %21 = arith.truncf %20 : vector<32x8xf32> to vector<32x8xbf16>
      %c0_17 = arith.constant 0 : index
      %c0_18 = arith.constant 0 : index
      %22 = vector.load %arg7[%c0_17, %c0_18] : memref<32x8xbf16, #tpu.memory_space<vmem>>, vector<32x8xbf16>
      tpu.vector_store %arg7[%c0_17, %c0_18], %21 {strides = array<i32>} : memref<32x8xbf16, #tpu.memory_space<vmem>>, vector<32x8xbf16>,
    } else {
    }
    return
  }
  func.func @transform_0(%arg0: i32, %arg1: i32, %arg2: i32) -> (i32, i32) {
    %c0_i32 = arith.constant 0 : i32
    return %arg0, %arg2 : i32, i32
  }
  func.func @transform_1(%arg0: i32, %arg1: i32, %arg2: i32) -> (i32, i32) {
    %c0_i32 = arith.constant 0 : i32
    return %arg2, %arg1 : i32, i32
  }
  func.func @transform_2(%arg0: i32, %arg1: i32, %arg2: i32) -> (i32, i32) {
    %c0_i32 = arith.constant 0 : i32
    %c0_i32_0 = arith.constant 0 : i32
    return %c0_i32, %arg1 : i32, i32
  }
  func.func @transform_3(%arg0: i32, %arg1: i32, %arg2: i32) -> (i32, i32) {
    %c0_i32 = arith.constant 0 : i32
    %c0_i32_0 = arith.constant 0 : i32
    return %c0_i32, %arg1 : i32, i32
  }
  func.func @transform_4(%arg0: i32, %arg1: i32, %arg2: i32) -> (i32, i32) {
    %c0_i32 = arith.constant 0 : i32
    return %arg0, %arg1 : i32, i32
  }
}

module attributes {stable_mosaic.version = 11 : i64} {
  func.func @kernel(%arg0: i32, %arg1: i32, %arg2: i32, %arg3: memref<32x32xbf16, #tpu.memory_space<vmem>>, %arg4: memref<32x96xbf16, #tpu.memory_space<vmem>>, %arg5: memref<1x96xf32, #tpu.memory_space<vmem>>, %arg6: memref<1x96xf32, #tpu.memory_space<vmem>>, %arg7: memref<32x96xbf16, #tpu.memory_space<vmem>>, %arg8: memref<32x96xf32, #tpu.memory_space<vmem>>) attributes {dimension_semantics = [#tpu.dimension_semantics<parallel>, #tpu.dimension_semantics<parallel>, #tpu.dimension_semantics<arbitrary>], iteration_bounds = array<i64: 1, 1, 1>, scalar_prefetch = 0 : i64, scratch_operands = 1 : i64, tpu.core_type = #tpu.core_type<tc>, window_params = [{transform_indices = @transform_0, window_bounds = array<i64: 32, 32>}, {transform_indices = @transform_1, window_bounds = array<i64: 32, 96>}, {transform_indices = @transform_2, window_bounds = array<i64: 1, 96>}, {transform_indices = @transform_3, window_bounds = array<i64: 1, 96>}, {transform_indices = @transform_4, window_bounds = array<i64: 32, 96>}]} {
    %c0_i32 = arith.constant 0 : i32
    %0 = arith.cmpi eq, %arg2, %c0_i32 : i32
    %1 = arith.extui %0 : i1 to i32
    %c0_i32_0 = arith.constant 0 : i32
    %2 = arith.cmpi ne, %1, %c0_i32_0 : i32
    scf.if %2 {
      %cst_10 = arith.constant 0.000000e+00 : f32
      %12 = vector.broadcast %cst_10 : f32 to vector<32x96xf32>
      %c0_11 = arith.constant 0 : index
      %c0_12 = arith.constant 0 : index
      %13 = vector.load %arg8[%c0_11, %c0_12] : memref<32x96xf32, #tpu.memory_space<vmem>>, vector<32x96xf32>
      tpu.vector_store %arg8[%c0_11, %c0_12], %12 {strides = array<i32>} : memref<32x96xf32, #tpu.memory_space<vmem>>, vector<32x96xf32>,
    } else {
    }
    %c0 = arith.constant 0 : index
    %c0_1 = arith.constant 0 : index
    %3 = vector.load %arg8[%c0, %c0_1] : memref<32x96xf32, #tpu.memory_space<vmem>>, vector<32x96xf32>
    %c0_2 = arith.constant 0 : index
    %c0_3 = arith.constant 0 : index
    %4 = vector.load %arg3[%c0_2, %c0_3] : memref<32x32xbf16, #tpu.memory_space<vmem>>, vector<32x32xbf16>
    %c0_4 = arith.constant 0 : index
    %c0_5 = arith.constant 0 : index
    %5 = vector.load %arg4[%c0_4, %c0_5] : memref<32x96xbf16, #tpu.memory_space<vmem>>, vector<32x96xbf16>
    %cst = arith.constant dense<0.000000e+00> : vector<32x96xf32>
    %6 = tpu.matmul %4, %5, %cst {dimension_numbers = #tpu.dot_dimension_numbers<[1], [0], [0], [1], [0, 0, 1, 1], [], []>} : vector<32x32xbf16>, vector<32x96xbf16>, vector<32x96xf32> -> vector<32x96xf32>
    %7 = arith.addf %3, %6 : vector<32x96xf32>
    %c0_6 = arith.constant 0 : index
    %c0_7 = arith.constant 0 : index
    %8 = vector.load %arg8[%c0_6, %c0_7] : memref<32x96xf32, #tpu.memory_space<vmem>>, vector<32x96xf32>
    tpu.vector_store %arg8[%c0_6, %c0_7], %7 {strides = array<i32>} : memref<32x96xf32, #tpu.memory_space<vmem>>, vector<32x96xf32>,
    %c0_i32_8 = arith.constant 0 : i32
    %9 = arith.cmpi eq, %arg2, %c0_i32_8 : i32
    %10 = arith.extui %9 : i1 to i32
    %c0_i32_9 = arith.constant 0 : i32
    %11 = arith.cmpi ne, %10, %c0_i32_9 : i32
    scf.if %11 {
      %c0_10 = arith.constant 0 : index
      %c0_11 = arith.constant 0 : index
      %12 = vector.load %arg8[%c0_10, %c0_11] : memref<32x96xf32, #tpu.memory_space<vmem>>, vector<32x96xf32>
      %c0_12 = arith.constant 0 : index
      %c0_13 = arith.constant 0 : index
      %13 = vector.load %arg5[%c0_12, %c0_13] : memref<1x96xf32, #tpu.memory_space<vmem>>, vector<1x96xf32>
      %14 = vector.broadcast %13 : vector<1x96xf32> to vector<32x96xf32>
      %15 = arith.mulf %12, %14 : vector<32x96xf32>
      %c0_14 = arith.constant 0 : index
      %c0_15 = arith.constant 0 : index
      %16 = vector.load %arg6[%c0_14, %c0_15] : memref<1x96xf32, #tpu.memory_space<vmem>>, vector<1x96xf32>
      %17 = vector.broadcast %16 : vector<1x96xf32> to vector<32x96xf32>
      %18 = arith.addf %15, %17 : vector<32x96xf32>
      %cst_16 = arith.constant 0.000000e+00 : f32
      %19 = vector.broadcast %cst_16 : f32 to vector<32x96xf32>
      %20 = arith.maximumf %18, %19 : vector<32x96xf32>
      %21 = arith.truncf %20 : vector<32x96xf32> to vector<32x96xbf16>
      %c0_17 = arith.constant 0 : index
      %c0_18 = arith.constant 0 : index
      %22 = vector.load %arg7[%c0_17, %c0_18] : memref<32x96xbf16, #tpu.memory_space<vmem>>, vector<32x96xbf16>
      tpu.vector_store %arg7[%c0_17, %c0_18], %21 {strides = array<i32>} : memref<32x96xbf16, #tpu.memory_space<vmem>>, vector<32x96xbf16>,
    } else {
    }
    return
  }
  func.func @transform_0(%arg0: i32, %arg1: i32, %arg2: i32) -> (i32, i32) {
    %c0_i32 = arith.constant 0 : i32
    return %arg0, %arg2 : i32, i32
  }
  func.func @transform_1(%arg0: i32, %arg1: i32, %arg2: i32) -> (i32, i32) {
    %c0_i32 = arith.constant 0 : i32
    return %arg2, %arg1 : i32, i32
  }
  func.func @transform_2(%arg0: i32, %arg1: i32, %arg2: i32) -> (i32, i32) {
    %c0_i32 = arith.constant 0 : i32
    %c0_i32_0 = arith.constant 0 : i32
    return %c0_i32, %arg1 : i32, i32
  }
  func.func @transform_3(%arg0: i32, %arg1: i32, %arg2: i32) -> (i32, i32) {
    %c0_i32 = arith.constant 0 : i32
    %c0_i32_0 = arith.constant 0 : i32
    return %c0_i32, %arg1 : i32, i32
  }
  func.func @transform_4(%arg0: i32, %arg1: i32, %arg2: i32) -> (i32, i32) {
    %c0_i32 = arith.constant 0 : i32
    return %arg0, %arg1 : i32, i32
  }
}

module attributes {stable_mosaic.version = 11 : i64} {
  func.func @kernel(%arg0: i32, %arg1: i32, %arg2: i32, %arg3: memref<32x8xbf16, #tpu.memory_space<vmem>>, %arg4: memref<8x32xbf16, #tpu.memory_space<vmem>>, %arg5: memref<1x32xf32, #tpu.memory_space<vmem>>, %arg6: memref<1x32xf32, #tpu.memory_space<vmem>>, %arg7: memref<32x32xbf16, #tpu.memory_space<vmem>>, %arg8: memref<32x32xbf16, #tpu.memory_space<vmem>>, %arg9: memref<32x32xf32, #tpu.memory_space<vmem>>) attributes {dimension_semantics = [#tpu.dimension_semantics<parallel>, #tpu.dimension_semantics<parallel>, #tpu.dimension_semantics<arbitrary>], iteration_bounds = array<i64: 1, 1, 1>, scalar_prefetch = 0 : i64, scratch_operands = 1 : i64, tpu.core_type = #tpu.core_type<tc>, window_params = [{transform_indices = @transform_0, window_bounds = array<i64: 32, 8>}, {transform_indices = @transform_1, window_bounds = array<i64: 8, 32>}, {transform_indices = @transform_2, window_bounds = array<i64: 1, 32>}, {transform_indices = @transform_3, window_bounds = array<i64: 1, 32>}, {transform_indices = @transform_4, window_bounds = array<i64: 32, 32>}, {transform_indices = @transform_5, window_bounds = array<i64: 32, 32>}]} {
    %c0_i32 = arith.constant 0 : i32
    %0 = arith.cmpi eq, %arg2, %c0_i32 : i32
    %1 = arith.extui %0 : i1 to i32
    %c0_i32_0 = arith.constant 0 : i32
    %2 = arith.cmpi ne, %1, %c0_i32_0 : i32
    scf.if %2 {
      %cst_10 = arith.constant 0.000000e+00 : f32
      %12 = vector.broadcast %cst_10 : f32 to vector<32x32xf32>
      %c0_11 = arith.constant 0 : index
      %c0_12 = arith.constant 0 : index
      %13 = vector.load %arg9[%c0_11, %c0_12] : memref<32x32xf32, #tpu.memory_space<vmem>>, vector<32x32xf32>
      tpu.vector_store %arg9[%c0_11, %c0_12], %12 {strides = array<i32>} : memref<32x32xf32, #tpu.memory_space<vmem>>, vector<32x32xf32>,
    } else {
    }
    %c0 = arith.constant 0 : index
    %c0_1 = arith.constant 0 : index
    %3 = vector.load %arg9[%c0, %c0_1] : memref<32x32xf32, #tpu.memory_space<vmem>>, vector<32x32xf32>
    %c0_2 = arith.constant 0 : index
    %c0_3 = arith.constant 0 : index
    %4 = vector.load %arg3[%c0_2, %c0_3] : memref<32x8xbf16, #tpu.memory_space<vmem>>, vector<32x8xbf16>
    %c0_4 = arith.constant 0 : index
    %c0_5 = arith.constant 0 : index
    %5 = vector.load %arg4[%c0_4, %c0_5] : memref<8x32xbf16, #tpu.memory_space<vmem>>, vector<8x32xbf16>
    %cst = arith.constant dense<0.000000e+00> : vector<32x32xf32>
    %6 = tpu.matmul %4, %5, %cst {dimension_numbers = #tpu.dot_dimension_numbers<[1], [0], [0], [1], [0, 0, 1, 1], [], []>} : vector<32x8xbf16>, vector<8x32xbf16>, vector<32x32xf32> -> vector<32x32xf32>
    %7 = arith.addf %3, %6 : vector<32x32xf32>
    %c0_6 = arith.constant 0 : index
    %c0_7 = arith.constant 0 : index
    %8 = vector.load %arg9[%c0_6, %c0_7] : memref<32x32xf32, #tpu.memory_space<vmem>>, vector<32x32xf32>
    tpu.vector_store %arg9[%c0_6, %c0_7], %7 {strides = array<i32>} : memref<32x32xf32, #tpu.memory_space<vmem>>, vector<32x32xf32>,
    %c0_i32_8 = arith.constant 0 : i32
    %9 = arith.cmpi eq, %arg2, %c0_i32_8 : i32
    %10 = arith.extui %9 : i1 to i32
    %c0_i32_9 = arith.constant 0 : i32
    %11 = arith.cmpi ne, %10, %c0_i32_9 : i32
    scf.if %11 {
      %c0_10 = arith.constant 0 : index
      %c0_11 = arith.constant 0 : index
      %12 = vector.load %arg9[%c0_10, %c0_11] : memref<32x32xf32, #tpu.memory_space<vmem>>, vector<32x32xf32>
      %c0_12 = arith.constant 0 : index
      %c0_13 = arith.constant 0 : index
      %13 = vector.load %arg5[%c0_12, %c0_13] : memref<1x32xf32, #tpu.memory_space<vmem>>, vector<1x32xf32>
      %14 = vector.broadcast %13 : vector<1x32xf32> to vector<32x32xf32>
      %15 = arith.mulf %12, %14 : vector<32x32xf32>
      %c0_14 = arith.constant 0 : index
      %c0_15 = arith.constant 0 : index
      %16 = vector.load %arg6[%c0_14, %c0_15] : memref<1x32xf32, #tpu.memory_space<vmem>>, vector<1x32xf32>
      %17 = vector.broadcast %16 : vector<1x32xf32> to vector<32x32xf32>
      %18 = arith.addf %15, %17 : vector<32x32xf32>
      %c0_16 = arith.constant 0 : index
      %c0_17 = arith.constant 0 : index
      %19 = vector.load %arg7[%c0_16, %c0_17] : memref<32x32xbf16, #tpu.memory_space<vmem>>, vector<32x32xbf16>
      %20 = arith.extf %19 : vector<32x32xbf16> to vector<32x32xf32>
      %21 = arith.addf %18, %20 : vector<32x32xf32>
      %cst_18 = arith.constant 0.000000e+00 : f32
      %22 = vector.broadcast %cst_18 : f32 to vector<32x32xf32>
      %23 = arith.maximumf %21, %22 : vector<32x32xf32>
      %24 = arith.truncf %23 : vector<32x32xf32> to vector<32x32xbf16>
      %c0_19 = arith.constant 0 : index
      %c0_20 = arith.constant 0 : index
      %25 = vector.load %arg8[%c0_19, %c0_20] : memref<32x32xbf16, #tpu.memory_space<vmem>>, vector<32x32xbf16>
      tpu.vector_store %arg8[%c0_19, %c0_20], %24 {strides = array<i32>} : memref<32x32xbf16, #tpu.memory_space<vmem>>, vector<32x32xbf16>,
    } else {
    }
    return
  }
  func.func @transform_0(%arg0: i32, %arg1: i32, %arg2: i32) -> (i32, i32) {
    %c0_i32 = arith.constant 0 : i32
    return %arg0, %arg2 : i32, i32
  }
  func.func @transform_1(%arg0: i32, %arg1: i32, %arg2: i32) -> (i32, i32) {
    %c0_i32 = arith.constant 0 : i32
    return %arg2, %arg1 : i32, i32
  }
  func.func @transform_2(%arg0: i32, %arg1: i32, %arg2: i32) -> (i32, i32) {
    %c0_i32 = arith.constant 0 : i32
    %c0_i32_0 = arith.constant 0 : i32
    return %c0_i32, %arg1 : i32, i32
  }
  func.func @transform_3(%arg0: i32, %arg1: i32, %arg2: i32) -> (i32, i32) {
    %c0_i32 = arith.constant 0 : i32
    %c0_i32_0 = arith.constant 0 : i32
    return %c0_i32, %arg1 : i32, i32
  }
  func.func @transform_4(%arg0: i32, %arg1: i32, %arg2: i32) -> (i32, i32) {
    %c0_i32 = arith.constant 0 : i32
    return %arg0, %arg1 : i32, i32
  }
  func.func @transform_5(%arg0: i32, %arg1: i32, %arg2: i32) -> (i32, i32) {
    %c0_i32 = arith.constant 0 : i32
    return %arg0, %arg1 : i32, i32
  }
}

module attributes {stable_mosaic.version = 11 : i64} {
  func.func @kernel(%arg0: i32, %arg1: i32, %arg2: i32, %arg3: memref<32x864xbf16, #tpu.memory_space<vmem>>, %arg4: memref<864x96xbf16, #tpu.memory_space<vmem>>, %arg5: memref<1x96xf32, #tpu.memory_space<vmem>>, %arg6: memref<1x96xf32, #tpu.memory_space<vmem>>, %arg7: memref<32x96xbf16, #tpu.memory_space<vmem>>, %arg8: memref<32x96xf32, #tpu.memory_space<vmem>>) attributes {dimension_semantics = [#tpu.dimension_semantics<parallel>, #tpu.dimension_semantics<parallel>, #tpu.dimension_semantics<arbitrary>], iteration_bounds = array<i64: 1, 1, 1>, scalar_prefetch = 0 : i64, scratch_operands = 1 : i64, tpu.core_type = #tpu.core_type<tc>, window_params = [{transform_indices = @transform_0, window_bounds = array<i64: 32, 864>}, {transform_indices = @transform_1, window_bounds = array<i64: 864, 96>}, {transform_indices = @transform_2, window_bounds = array<i64: 1, 96>}, {transform_indices = @transform_3, window_bounds = array<i64: 1, 96>}, {transform_indices = @transform_4, window_bounds = array<i64: 32, 96>}]} {
    %c0_i32 = arith.constant 0 : i32
    %0 = arith.cmpi eq, %arg2, %c0_i32 : i32
    %1 = arith.extui %0 : i1 to i32
    %c0_i32_0 = arith.constant 0 : i32
    %2 = arith.cmpi ne, %1, %c0_i32_0 : i32
    scf.if %2 {
      %cst_10 = arith.constant 0.000000e+00 : f32
      %12 = vector.broadcast %cst_10 : f32 to vector<32x96xf32>
      %c0_11 = arith.constant 0 : index
      %c0_12 = arith.constant 0 : index
      %13 = vector.load %arg8[%c0_11, %c0_12] : memref<32x96xf32, #tpu.memory_space<vmem>>, vector<32x96xf32>
      tpu.vector_store %arg8[%c0_11, %c0_12], %12 {strides = array<i32>} : memref<32x96xf32, #tpu.memory_space<vmem>>, vector<32x96xf32>,
    } else {
    }
    %c0 = arith.constant 0 : index
    %c0_1 = arith.constant 0 : index
    %3 = vector.load %arg8[%c0, %c0_1] : memref<32x96xf32, #tpu.memory_space<vmem>>, vector<32x96xf32>
    %c0_2 = arith.constant 0 : index
    %c0_3 = arith.constant 0 : index
    %4 = vector.load %arg3[%c0_2, %c0_3] : memref<32x864xbf16, #tpu.memory_space<vmem>>, vector<32x864xbf16>
    %c0_4 = arith.constant 0 : index
    %c0_5 = arith.constant 0 : index
    %5 = vector.load %arg4[%c0_4, %c0_5] : memref<864x96xbf16, #tpu.memory_space<vmem>>, vector<864x96xbf16>
    %cst = arith.constant dense<0.000000e+00> : vector<32x96xf32>
    %6 = tpu.matmul %4, %5, %cst {dimension_numbers = #tpu.dot_dimension_numbers<[1], [0], [0], [1], [0, 0, 1, 1], [], []>} : vector<32x864xbf16>, vector<864x96xbf16>, vector<32x96xf32> -> vector<32x96xf32>
    %7 = arith.addf %3, %6 : vector<32x96xf32>
    %c0_6 = arith.constant 0 : index
    %c0_7 = arith.constant 0 : index
    %8 = vector.load %arg8[%c0_6, %c0_7] : memref<32x96xf32, #tpu.memory_space<vmem>>, vector<32x96xf32>
    tpu.vector_store %arg8[%c0_6, %c0_7], %7 {strides = array<i32>} : memref<32x96xf32, #tpu.memory_space<vmem>>, vector<32x96xf32>,
    %c0_i32_8 = arith.constant 0 : i32
    %9 = arith.cmpi eq, %arg2, %c0_i32_8 : i32
    %10 = arith.extui %9 : i1 to i32
    %c0_i32_9 = arith.constant 0 : i32
    %11 = arith.cmpi ne, %10, %c0_i32_9 : i32
    scf.if %11 {
      %c0_10 = arith.constant 0 : index
      %c0_11 = arith.constant 0 : index
      %12 = vector.load %arg8[%c0_10, %c0_11] : memref<32x96xf32, #tpu.memory_space<vmem>>, vector<32x96xf32>
      %c0_12 = arith.constant 0 : index
      %c0_13 = arith.constant 0 : index
      %13 = vector.load %arg5[%c0_12, %c0_13] : memref<1x96xf32, #tpu.memory_space<vmem>>, vector<1x96xf32>
      %14 = vector.broadcast %13 : vector<1x96xf32> to vector<32x96xf32>
      %15 = arith.mulf %12, %14 : vector<32x96xf32>
      %c0_14 = arith.constant 0 : index
      %c0_15 = arith.constant 0 : index
      %16 = vector.load %arg6[%c0_14, %c0_15] : memref<1x96xf32, #tpu.memory_space<vmem>>, vector<1x96xf32>
      %17 = vector.broadcast %16 : vector<1x96xf32> to vector<32x96xf32>
      %18 = arith.addf %15, %17 : vector<32x96xf32>
      %cst_16 = arith.constant 0.000000e+00 : f32
      %19 = vector.broadcast %cst_16 : f32 to vector<32x96xf32>
      %20 = arith.maximumf %18, %19 : vector<32x96xf32>
      %21 = arith.truncf %20 : vector<32x96xf32> to vector<32x96xbf16>
      %c0_17 = arith.constant 0 : index
      %c0_18 = arith.constant 0 : index
      %22 = vector.load %arg7[%c0_17, %c0_18] : memref<32x96xbf16, #tpu.memory_space<vmem>>, vector<32x96xbf16>
      tpu.vector_store %arg7[%c0_17, %c0_18], %21 {strides = array<i32>} : memref<32x96xbf16, #tpu.memory_space<vmem>>, vector<32x96xbf16>,
    } else {
    }
    return
  }
  func.func @transform_0(%arg0: i32, %arg1: i32, %arg2: i32) -> (i32, i32) {
    %c0_i32 = arith.constant 0 : i32
    return %arg0, %arg2 : i32, i32
  }
  func.func @transform_1(%arg0: i32, %arg1: i32, %arg2: i32) -> (i32, i32) {
    %c0_i32 = arith.constant 0 : i32
    return %arg2, %arg1 : i32, i32
  }
  func.func @transform_2(%arg0: i32, %arg1: i32, %arg2: i32) -> (i32, i32) {
    %c0_i32 = arith.constant 0 : i32
    %c0_i32_0 = arith.constant 0 : i32
    return %c0_i32, %arg1 : i32, i32
  }
  func.func @transform_3(%arg0: i32, %arg1: i32, %arg2: i32) -> (i32, i32) {
    %c0_i32 = arith.constant 0 : i32
    %c0_i32_0 = arith.constant 0 : i32
    return %c0_i32, %arg1 : i32, i32
  }
  func.func @transform_4(%arg0: i32, %arg1: i32, %arg2: i32) -> (i32, i32) {
    %c0_i32 = arith.constant 0 : i32
    return %arg0, %arg1 : i32, i32
  }
}

module attributes {stable_mosaic.version = 11 : i64} {
  func.func @kernel(%arg0: i32, %arg1: i32, %arg2: i32, %arg3: memref<32x32xbf16, #tpu.memory_space<vmem>>, %arg4: memref<32x64xbf16, #tpu.memory_space<vmem>>, %arg5: memref<1x64xf32, #tpu.memory_space<vmem>>, %arg6: memref<1x64xf32, #tpu.memory_space<vmem>>, %arg7: memref<32x64xbf16, #tpu.memory_space<vmem>>, %arg8: memref<32x64xf32, #tpu.memory_space<vmem>>) attributes {dimension_semantics = [#tpu.dimension_semantics<parallel>, #tpu.dimension_semantics<parallel>, #tpu.dimension_semantics<arbitrary>], iteration_bounds = array<i64: 1, 1, 1>, scalar_prefetch = 0 : i64, scratch_operands = 1 : i64, tpu.core_type = #tpu.core_type<tc>, window_params = [{transform_indices = @transform_0, window_bounds = array<i64: 32, 32>}, {transform_indices = @transform_1, window_bounds = array<i64: 32, 64>}, {transform_indices = @transform_2, window_bounds = array<i64: 1, 64>}, {transform_indices = @transform_3, window_bounds = array<i64: 1, 64>}, {transform_indices = @transform_4, window_bounds = array<i64: 32, 64>}]} {
    %c0_i32 = arith.constant 0 : i32
    %0 = arith.cmpi eq, %arg2, %c0_i32 : i32
    %1 = arith.extui %0 : i1 to i32
    %c0_i32_0 = arith.constant 0 : i32
    %2 = arith.cmpi ne, %1, %c0_i32_0 : i32
    scf.if %2 {
      %cst_10 = arith.constant 0.000000e+00 : f32
      %12 = vector.broadcast %cst_10 : f32 to vector<32x64xf32>
      %c0_11 = arith.constant 0 : index
      %c0_12 = arith.constant 0 : index
      %13 = vector.load %arg8[%c0_11, %c0_12] : memref<32x64xf32, #tpu.memory_space<vmem>>, vector<32x64xf32>
      tpu.vector_store %arg8[%c0_11, %c0_12], %12 {strides = array<i32>} : memref<32x64xf32, #tpu.memory_space<vmem>>, vector<32x64xf32>,
    } else {
    }
    %c0 = arith.constant 0 : index
    %c0_1 = arith.constant 0 : index
    %3 = vector.load %arg8[%c0, %c0_1] : memref<32x64xf32, #tpu.memory_space<vmem>>, vector<32x64xf32>
    %c0_2 = arith.constant 0 : index
    %c0_3 = arith.constant 0 : index
    %4 = vector.load %arg3[%c0_2, %c0_3] : memref<32x32xbf16, #tpu.memory_space<vmem>>, vector<32x32xbf16>
    %c0_4 = arith.constant 0 : index
    %c0_5 = arith.constant 0 : index
    %5 = vector.load %arg4[%c0_4, %c0_5] : memref<32x64xbf16, #tpu.memory_space<vmem>>, vector<32x64xbf16>
    %cst = arith.constant dense<0.000000e+00> : vector<32x64xf32>
    %6 = tpu.matmul %4, %5, %cst {dimension_numbers = #tpu.dot_dimension_numbers<[1], [0], [0], [1], [0, 0, 1, 1], [], []>} : vector<32x32xbf16>, vector<32x64xbf16>, vector<32x64xf32> -> vector<32x64xf32>
    %7 = arith.addf %3, %6 : vector<32x64xf32>
    %c0_6 = arith.constant 0 : index
    %c0_7 = arith.constant 0 : index
    %8 = vector.load %arg8[%c0_6, %c0_7] : memref<32x64xf32, #tpu.memory_space<vmem>>, vector<32x64xf32>
    tpu.vector_store %arg8[%c0_6, %c0_7], %7 {strides = array<i32>} : memref<32x64xf32, #tpu.memory_space<vmem>>, vector<32x64xf32>,
    %c0_i32_8 = arith.constant 0 : i32
    %9 = arith.cmpi eq, %arg2, %c0_i32_8 : i32
    %10 = arith.extui %9 : i1 to i32
    %c0_i32_9 = arith.constant 0 : i32
    %11 = arith.cmpi ne, %10, %c0_i32_9 : i32
    scf.if %11 {
      %c0_10 = arith.constant 0 : index
      %c0_11 = arith.constant 0 : index
      %12 = vector.load %arg8[%c0_10, %c0_11] : memref<32x64xf32, #tpu.memory_space<vmem>>, vector<32x64xf32>
      %c0_12 = arith.constant 0 : index
      %c0_13 = arith.constant 0 : index
      %13 = vector.load %arg5[%c0_12, %c0_13] : memref<1x64xf32, #tpu.memory_space<vmem>>, vector<1x64xf32>
      %14 = vector.broadcast %13 : vector<1x64xf32> to vector<32x64xf32>
      %15 = arith.mulf %12, %14 : vector<32x64xf32>
      %c0_14 = arith.constant 0 : index
      %c0_15 = arith.constant 0 : index
      %16 = vector.load %arg6[%c0_14, %c0_15] : memref<1x64xf32, #tpu.memory_space<vmem>>, vector<1x64xf32>
      %17 = vector.broadcast %16 : vector<1x64xf32> to vector<32x64xf32>
      %18 = arith.addf %15, %17 : vector<32x64xf32>
      %cst_16 = arith.constant 0.000000e+00 : f32
      %19 = vector.broadcast %cst_16 : f32 to vector<32x64xf32>
      %20 = arith.maximumf %18, %19 : vector<32x64xf32>
      %21 = arith.truncf %20 : vector<32x64xf32> to vector<32x64xbf16>
      %c0_17 = arith.constant 0 : index
      %c0_18 = arith.constant 0 : index
      %22 = vector.load %arg7[%c0_17, %c0_18] : memref<32x64xbf16, #tpu.memory_space<vmem>>, vector<32x64xbf16>
      tpu.vector_store %arg7[%c0_17, %c0_18], %21 {strides = array<i32>} : memref<32x64xbf16, #tpu.memory_space<vmem>>, vector<32x64xbf16>,
    } else {
    }
    return
  }
  func.func @transform_0(%arg0: i32, %arg1: i32, %arg2: i32) -> (i32, i32) {
    %c0_i32 = arith.constant 0 : i32
    return %arg0, %arg2 : i32, i32
  }
  func.func @transform_1(%arg0: i32, %arg1: i32, %arg2: i32) -> (i32, i32) {
    %c0_i32 = arith.constant 0 : i32
    return %arg2, %arg1 : i32, i32
  }
  func.func @transform_2(%arg0: i32, %arg1: i32, %arg2: i32) -> (i32, i32) {
    %c0_i32 = arith.constant 0 : i32
    %c0_i32_0 = arith.constant 0 : i32
    return %c0_i32, %arg1 : i32, i32
  }
  func.func @transform_3(%arg0: i32, %arg1: i32, %arg2: i32) -> (i32, i32) {
    %c0_i32 = arith.constant 0 : i32
    %c0_i32_0 = arith.constant 0 : i32
    return %c0_i32, %arg1 : i32, i32
  }
  func.func @transform_4(%arg0: i32, %arg1: i32, %arg2: i32) -> (i32, i32) {
    %c0_i32 = arith.constant 0 : i32
    return %arg0, %arg1 : i32, i32
  }
}

module attributes {stable_mosaic.version = 11 : i64} {
  func.func @kernel(%arg0: i32, %arg1: i32, %arg2: i32, %arg3: memref<32x96xbf16, #tpu.memory_space<vmem>>, %arg4: memref<96x32xbf16, #tpu.memory_space<vmem>>, %arg5: memref<1x32xf32, #tpu.memory_space<vmem>>, %arg6: memref<1x32xf32, #tpu.memory_space<vmem>>, %arg7: memref<32x32xbf16, #tpu.memory_space<vmem>>, %arg8: memref<32x32xbf16, #tpu.memory_space<vmem>>, %arg9: memref<32x32xf32, #tpu.memory_space<vmem>>) attributes {dimension_semantics = [#tpu.dimension_semantics<parallel>, #tpu.dimension_semantics<parallel>, #tpu.dimension_semantics<arbitrary>], iteration_bounds = array<i64: 1, 1, 1>, scalar_prefetch = 0 : i64, scratch_operands = 1 : i64, tpu.core_type = #tpu.core_type<tc>, window_params = [{transform_indices = @transform_0, window_bounds = array<i64: 32, 96>}, {transform_indices = @transform_1, window_bounds = array<i64: 96, 32>}, {transform_indices = @transform_2, window_bounds = array<i64: 1, 32>}, {transform_indices = @transform_3, window_bounds = array<i64: 1, 32>}, {transform_indices = @transform_4, window_bounds = array<i64: 32, 32>}, {transform_indices = @transform_5, window_bounds = array<i64: 32, 32>}]} {
    %c0_i32 = arith.constant 0 : i32
    %0 = arith.cmpi eq, %arg2, %c0_i32 : i32
    %1 = arith.extui %0 : i1 to i32
    %c0_i32_0 = arith.constant 0 : i32
    %2 = arith.cmpi ne, %1, %c0_i32_0 : i32
    scf.if %2 {
      %cst_10 = arith.constant 0.000000e+00 : f32
      %12 = vector.broadcast %cst_10 : f32 to vector<32x32xf32>
      %c0_11 = arith.constant 0 : index
      %c0_12 = arith.constant 0 : index
      %13 = vector.load %arg9[%c0_11, %c0_12] : memref<32x32xf32, #tpu.memory_space<vmem>>, vector<32x32xf32>
      tpu.vector_store %arg9[%c0_11, %c0_12], %12 {strides = array<i32>} : memref<32x32xf32, #tpu.memory_space<vmem>>, vector<32x32xf32>,
    } else {
    }
    %c0 = arith.constant 0 : index
    %c0_1 = arith.constant 0 : index
    %3 = vector.load %arg9[%c0, %c0_1] : memref<32x32xf32, #tpu.memory_space<vmem>>, vector<32x32xf32>
    %c0_2 = arith.constant 0 : index
    %c0_3 = arith.constant 0 : index
    %4 = vector.load %arg3[%c0_2, %c0_3] : memref<32x96xbf16, #tpu.memory_space<vmem>>, vector<32x96xbf16>
    %c0_4 = arith.constant 0 : index
    %c0_5 = arith.constant 0 : index
    %5 = vector.load %arg4[%c0_4, %c0_5] : memref<96x32xbf16, #tpu.memory_space<vmem>>, vector<96x32xbf16>
    %cst = arith.constant dense<0.000000e+00> : vector<32x32xf32>
    %6 = tpu.matmul %4, %5, %cst {dimension_numbers = #tpu.dot_dimension_numbers<[1], [0], [0], [1], [0, 0, 1, 1], [], []>} : vector<32x96xbf16>, vector<96x32xbf16>, vector<32x32xf32> -> vector<32x32xf32>
    %7 = arith.addf %3, %6 : vector<32x32xf32>
    %c0_6 = arith.constant 0 : index
    %c0_7 = arith.constant 0 : index
    %8 = vector.load %arg9[%c0_6, %c0_7] : memref<32x32xf32, #tpu.memory_space<vmem>>, vector<32x32xf32>
    tpu.vector_store %arg9[%c0_6, %c0_7], %7 {strides = array<i32>} : memref<32x32xf32, #tpu.memory_space<vmem>>, vector<32x32xf32>,
    %c0_i32_8 = arith.constant 0 : i32
    %9 = arith.cmpi eq, %arg2, %c0_i32_8 : i32
    %10 = arith.extui %9 : i1 to i32
    %c0_i32_9 = arith.constant 0 : i32
    %11 = arith.cmpi ne, %10, %c0_i32_9 : i32
    scf.if %11 {
      %c0_10 = arith.constant 0 : index
      %c0_11 = arith.constant 0 : index
      %12 = vector.load %arg9[%c0_10, %c0_11] : memref<32x32xf32, #tpu.memory_space<vmem>>, vector<32x32xf32>
      %c0_12 = arith.constant 0 : index
      %c0_13 = arith.constant 0 : index
      %13 = vector.load %arg5[%c0_12, %c0_13] : memref<1x32xf32, #tpu.memory_space<vmem>>, vector<1x32xf32>
      %14 = vector.broadcast %13 : vector<1x32xf32> to vector<32x32xf32>
      %15 = arith.mulf %12, %14 : vector<32x32xf32>
      %c0_14 = arith.constant 0 : index
      %c0_15 = arith.constant 0 : index
      %16 = vector.load %arg6[%c0_14, %c0_15] : memref<1x32xf32, #tpu.memory_space<vmem>>, vector<1x32xf32>
      %17 = vector.broadcast %16 : vector<1x32xf32> to vector<32x32xf32>
      %18 = arith.addf %15, %17 : vector<32x32xf32>
      %c0_16 = arith.constant 0 : index
      %c0_17 = arith.constant 0 : index
      %19 = vector.load %arg7[%c0_16, %c0_17] : memref<32x32xbf16, #tpu.memory_space<vmem>>, vector<32x32xbf16>
      %20 = arith.extf %19 : vector<32x32xbf16> to vector<32x32xf32>
      %21 = arith.addf %18, %20 : vector<32x32xf32>
      %cst_18 = arith.constant 0.000000e+00 : f32
      %22 = vector.broadcast %cst_18 : f32 to vector<32x32xf32>
      %23 = arith.maximumf %21, %22 : vector<32x32xf32>
      %24 = arith.truncf %23 : vector<32x32xf32> to vector<32x32xbf16>
      %c0_19 = arith.constant 0 : index
      %c0_20 = arith.constant 0 : index
      %25 = vector.load %arg8[%c0_19, %c0_20] : memref<32x32xbf16, #tpu.memory_space<vmem>>, vector<32x32xbf16>
      tpu.vector_store %arg8[%c0_19, %c0_20], %24 {strides = array<i32>} : memref<32x32xbf16, #tpu.memory_space<vmem>>, vector<32x32xbf16>,
    } else {
    }
    return
  }
  func.func @transform_0(%arg0: i32, %arg1: i32, %arg2: i32) -> (i32, i32) {
    %c0_i32 = arith.constant 0 : i32
    return %arg0, %arg2 : i32, i32
  }
  func.func @transform_1(%arg0: i32, %arg1: i32, %arg2: i32) -> (i32, i32) {
    %c0_i32 = arith.constant 0 : i32
    return %arg2, %arg1 : i32, i32
  }
  func.func @transform_2(%arg0: i32, %arg1: i32, %arg2: i32) -> (i32, i32) {
    %c0_i32 = arith.constant 0 : i32
    %c0_i32_0 = arith.constant 0 : i32
    return %c0_i32, %arg1 : i32, i32
  }
  func.func @transform_3(%arg0: i32, %arg1: i32, %arg2: i32) -> (i32, i32) {
    %c0_i32 = arith.constant 0 : i32
    %c0_i32_0 = arith.constant 0 : i32
    return %c0_i32, %arg1 : i32, i32
  }
  func.func @transform_4(%arg0: i32, %arg1: i32, %arg2: i32) -> (i32, i32) {
    %c0_i32 = arith.constant 0 : i32
    return %arg0, %arg1 : i32, i32
  }
  func.func @transform_5(%arg0: i32, %arg1: i32, %arg2: i32) -> (i32, i32) {
    %c0_i32 = arith.constant 0 : i32
    return %arg0, %arg1 : i32, i32
  }
}

module attributes {stable_mosaic.version = 11 : i64} {
  func.func @_gap_linear_kernel(%arg0: i32, %arg1: memref<2x16x64xbf16, #tpu.memory_space<vmem>>, %arg2: memref<64x10xf32, #tpu.memory_space<vmem>>, %arg3: memref<1x10xf32, #tpu.memory_space<vmem>>, %arg4: memref<2x10xf32, #tpu.memory_space<vmem>>) attributes {dimension_semantics = [#tpu.dimension_semantics<arbitrary>], iteration_bounds = array<i64: 1>, scalar_prefetch = 0 : i64, scratch_operands = 0 : i64, tpu.core_type = #tpu.core_type<tc>, window_params = [{pipeline_mode = #tpu.pipeline_mode<synchronous>, transform_indices = @transform_0, window_bounds = array<i64: 2, 16, 64>}, {pipeline_mode = #tpu.pipeline_mode<synchronous>, transform_indices = @transform_1, window_bounds = array<i64: 64, 10>}, {pipeline_mode = #tpu.pipeline_mode<synchronous>, transform_indices = @transform_2, window_bounds = array<i64: 1, 10>}, {pipeline_mode = #tpu.pipeline_mode<synchronous>, transform_indices = @transform_3, window_bounds = array<i64: 2, 10>}]} {
    %c0 = arith.constant 0 : index
    %c0_0 = arith.constant 0 : index
    %c0_1 = arith.constant 0 : index
    %0 = vector.load %arg1[%c0, %c0_0, %c0_1] : memref<2x16x64xbf16, #tpu.memory_space<vmem>>, vector<2x16x64xbf16>
    %1 = arith.extf %0 : vector<2x16x64xbf16> to vector<2x16x64xf32>
    %cst = arith.constant dense<0.000000e+00> : vector<2x64xf32>
    %2 = vector.multi_reduction <add>, %1, %cst [1] : vector<2x16x64xf32> to vector<2x64xf32>
    %cst_2 = arith.constant 6.250000e-02 : f32
    %3 = vector.broadcast %cst_2 : f32 to vector<2x64xf32>
    %4 = arith.mulf %2, %3 : vector<2x64xf32>
    %c0_3 = arith.constant 0 : index
    %c0_4 = arith.constant 0 : index
    %5 = vector.load %arg2[%c0_3, %c0_4] : memref<64x10xf32, #tpu.memory_space<vmem>>, vector<64x10xf32>
    %cst_5 = arith.constant dense<0.000000e+00> : vector<2x10xf32>
    %6 = tpu.matmul %4, %5, %cst_5 {dimension_numbers = #tpu.dot_dimension_numbers<[1], [0], [0], [1], [0, 0, 1, 1], [], []>} : vector<2x64xf32>, vector<64x10xf32>, vector<2x10xf32> -> vector<2x10xf32>
    %c0_6 = arith.constant 0 : index
    %c0_7 = arith.constant 0 : index
    %7 = vector.load %arg3[%c0_6, %c0_7] : memref<1x10xf32, #tpu.memory_space<vmem>>, vector<1x10xf32>
    %8 = vector.broadcast %7 : vector<1x10xf32> to vector<2x10xf32>
    %9 = arith.addf %6, %8 : vector<2x10xf32>
    %c0_8 = arith.constant 0 : index
    %c0_9 = arith.constant 0 : index
    %10 = vector.load %arg4[%c0_8, %c0_9] : memref<2x10xf32, #tpu.memory_space<vmem>>, vector<2x10xf32>
    tpu.vector_store %arg4[%c0_8, %c0_9], %9 {strides = array<i32>} : memref<2x10xf32, #tpu.memory_space<vmem>>, vector<2x10xf32>,
    return
  }
  func.func @transform_0(%arg0: i32) -> (i32, i32, i32) {
    %c0_i32 = arith.constant 0 : i32
    %c0_i32_0 = arith.constant 0 : i32
    %c0_i32_1 = arith.constant 0 : i32
    %c0_i32_2 = arith.constant 0 : i32
    return %c0_i32, %c0_i32_0, %c0_i32_1 : i32, i32, i32
  }
  func.func @transform_1(%arg0: i32) -> (i32, i32) {
    %c0_i32 = arith.constant 0 : i32
    %c0_i32_0 = arith.constant 0 : i32
    %c0_i32_1 = arith.constant 0 : i32
    return %c0_i32, %c0_i32_0 : i32, i32
  }
  func.func @transform_2(%arg0: i32) -> (i32, i32) {
    %c0_i32 = arith.constant 0 : i32
    %c0_i32_0 = arith.constant 0 : i32
    %c0_i32_1 = arith.constant 0 : i32
    return %c0_i32, %c0_i32_0 : i32, i32
  }
  func.func @transform_3(%arg0: i32) -> (i32, i32) {
    %c0_i32 = arith.constant 0 : i32
    %c0_i32_0 = arith.constant 0 : i32
    %c0_i32_1 = arith.constant 0 : i32
    return %c0_i32, %c0_i32_0 : i32, i32
  }
}

</mosaic_0001>

<llo_original>
// kernel: _lambda_.13
$region0: #{_lambda_.13}
  #allocation0 [shape = 'u32[]', space=smem, size = 0x4, offset = 0x4, fixed_abs, tag = 'smem constant byte address 0x4 - core index']
  #allocation1 [shape = 'u32[144,128]{1,0:T(1,128)}', space=vmem, size = 0x12000, scoped, tag = 'internal scratch']
  #allocation2 [shape = 'f32[450,8]{1,0:T(8,128)}', space=vmem, size = 0x39000, scoped, tag = 'scratch operand']
  %s0 = inlined_call_operand.vmem [shape: bf16[450,27], index: 0, kind: input, shape index: {}]
  %s1 = inlined_call_operand.vmem [shape: bf16[27,8], index: 1, kind: input, shape index: {}]
  %s2 = inlined_call_operand.vmem [shape: f32[1,8], index: 2, kind: input, shape index: {}]
  %s3 = inlined_call_operand.vmem [shape: f32[1,8], index: 3, kind: input, shape index: {}]
  %s4 = inlined_call_operand.vmem [shape: bf16[450,8], index: 4, kind: output, shape index: {}]
  %s5 = sld [smem:[#allocation0]]
  $region34: #{_lambda_.13} parent=0
    _
  %s7 = ssub.s32 1, %s5
  %s8 = scalar_select 0, %s7, %s5
  // Predicated region
  $region2: #{_lambda_.13} parent=0 // pred_check
    _
  $region3: #{_lambda_.13} parent=0 // pred_check_branch
    %10 = sbr.rel (0) target = $region5
  $region4: #{_lambda_.13} parent=0 // pred_region
    _
  $region5: #{_lambda_.13} parent=0 // pred_fallthru
    _
  // Predicated region
  $region6: #{_lambda_.13} parent=0 // pred_check
    _
  $region7: #{_lambda_.13} parent=0 // pred_check_branch
    %12 = sbr.rel (0) target = $region9
  $region8: #{_lambda_.13} parent=0 // pred_region
    _
  $region9: #{_lambda_.13} parent=0 // pred_fallthru
    _
  // Predicated region
  $region10: #{_lambda_.13} parent=0 // pred_check
    _
  $region11: #{_lambda_.13} parent=0 // pred_check_branch
    %14 = sbr.rel (0) target = $region13
  $region12: #{_lambda_.13} parent=0 // pred_region
    _
  $region13: #{_lambda_.13} parent=0 // pred_fallthru
    _
  // Predicated region
  $region14: #{_lambda_.13} parent=0 // pred_check
    _
  $region15: #{_lambda_.13} parent=0 // pred_check_branch
    %16 = sbr.rel (0) target = $region17
  $region16: #{_lambda_.13} parent=0 // pred_region
    _
  $region17: #{_lambda_.13} parent=0 // pred_fallthru
    _
  %p18 = scmp.eq.s32.totalorder 0, 0
  // Predicated region
  $region18: #{_lambda_.13} parent=0 // pred_check
    %p19 = pneg %p18
  $region19: #{_lambda_.13} parent=0 // pred_check_branch
    %21 = sbr.rel (%p19) target = $region21
  $region20: #{_lambda_.13} parent=0 // pred_region
    %vm22 = vcmask 64512
    %23 = vst.msk [vmem:[#allocation2] sm:$0xff] %vm22, 0.0
    %24 = vst.msk [vmem:[#allocation2 + $0x8] sm:$0xff] %vm22, 0.0
    %25 = vst.msk [vmem:[#allocation2 + $0x10] sm:$0xff] %vm22, 0.0
    %26 = vst.msk [vmem:[#allocation2 + $0x18] sm:$0xff] %vm22, 0.0
    %27 = vst.msk [vmem:[#allocation2 + $0x20] sm:$0xff] %vm22, 0.0
    %28 = vst.msk [vmem:[#allocation2 + $0x28] sm:$0xff] %vm22, 0.0
    %29 = vst.msk [vmem:[#allocation2 + $0x30] sm:$0xff] %vm22, 0.0
    %30 = vst.msk [vmem:[#allocation2 + $0x38] sm:$0xff] %vm22, 0.0
    %31 = vst.msk [vmem:[#allocation2 + $0x40] sm:$0xff] %vm22, 0.0
    %32 = vst.msk [vmem:[#allocation2 + $0x48] sm:$0xff] %vm22, 0.0
    %33 = vst.msk [vmem:[#allocation2 + $0x50] sm:$0xff] %vm22, 0.0
    %34 = vst.msk [vmem:[#allocation2 + $0x58] sm:$0xff] %vm22, 0.0
    %35 = vst.msk [vmem:[#allocation2 + $0x60] sm:$0xff] %vm22, 0.0
    %36 = vst.msk [vmem:[#allocation2 + $0x68] sm:$0xff] %vm22, 0.0
    %37 = vst.msk [vmem:[#allocation2 + $0x70] sm:$0xff] %vm22, 0.0
    %38 = vst.msk [vmem:[#allocation2 + $0x78] sm:$0xff] %vm22, 0.0
    %39 = vst.msk [vmem:[#allocation2 + $0x80] sm:$0xff] %vm22, 0.0
    %40 = vst.msk [vmem:[#allocation2 + $0x88] sm:$0xff] %vm22, 0.0
    %41 = vst.msk [vmem:[#allocation2 + $0x90] sm:$0xff] %vm22, 0.0
    %42 = vst.msk [vmem:[#allocation2 + $0x98] sm:$0xff] %vm22, 0.0
    %43 = vst.msk [vmem:[#allocation2 + $0xa0] sm:$0xff] %vm22, 0.0
    %44 = vst.msk [vmem:[#allocation2 + $0xa8] sm:$0xff] %vm22, 0.0
    %45 = vst.msk [vmem:[#allocation2 + $0xb0] sm:$0xff] %vm22, 0.0
    %46 = vst.msk [vmem:[#allocation2 + $0xb8] sm:$0xff] %vm22, 0.0
    %47 = vst.msk [vmem:[#allocation2 + $0xc0] sm:$0xff] %vm22, 0.0
    %48 = vst.msk [vmem:[#allocation2 + $0xc8] sm:$0xff] %vm22, 0.0
    %49 = vst.msk [vmem:[#allocation2 + $0xd0] sm:$0xff] %vm22, 0.0
    %50 = vst.msk [vmem:[#allocation2 + $0xd8] sm:$0xff] %vm22, 0.0
    %51 = vst.msk [vmem:[#allocation2 + $0xe0] sm:$0xff] %vm22, 0.0
    %52 = vst.msk [vmem:[#allocation2 + $0xe8] sm:$0xff] %vm22, 0.0
    %53 = vst.msk [vmem:[#allocation2 + $0xf0] sm:$0xff] %vm22, 0.0
    %54 = vst.msk [vmem:[#allocation2 + $0xf8] sm:$0xff] %vm22, 0.0
    %55 = vst.msk [vmem:[#allocation2 + $0x100] sm:$0xff] %vm22, 0.0
    %56 = vst.msk [vmem:[#allocation2 + $0x108] sm:$0xff] %vm22, 0.0
    %57 = vst.msk [vmem:[#allocation2 + $0x110] sm:$0xff] %vm22, 0.0
    %58 = vst.msk [vmem:[#allocation2 + $0x118] sm:$0xff] %vm22, 0.0
    %59 = vst.msk [vmem:[#allocation2 + $0x120] sm:$0xff] %vm22, 0.0
    %60 = vst.msk [vmem:[#allocation2 + $0x128] sm:$0xff] %vm22, 0.0
    %61 = vst.msk [vmem:[#allocation2 + $0x130] sm:$0xff] %vm22, 0.0
    %62 = vst.msk [vmem:[#allocation2 + $0x138] sm:$0xff] %vm22, 0.0
    %63 = vst.msk [vmem:[#allocation2 + $0x140] sm:$0xff] %vm22, 0.0
    %64 = vst.msk [vmem:[#allocation2 + $0x148] sm:$0xff] %vm22, 0.0
    %65 = vst.msk [vmem:[#allocation2 + $0x150] sm:$0xff] %vm22, 0.0
    %66 = vst.msk [vmem:[#allocation2 + $0x158] sm:$0xff] %vm22, 0.0
    %67 = vst.msk [vmem:[#allocation2 + $0x160] sm:$0xff] %vm22, 0.0
    %68 = vst.msk [vmem:[#allocation2 + $0x168] sm:$0xff] %vm22, 0.0
    %69 = vst.msk [vmem:[#allocation2 + $0x170] sm:$0xff] %vm22, 0.0
    %70 = vst.msk [vmem:[#allocation2 + $0x178] sm:$0xff] %vm22, 0.0
    %71 = vst.msk [vmem:[#allocation2 + $0x180] sm:$0xff] %vm22, 0.0
    %72 = vst.msk [vmem:[#allocation2 + $0x188] sm:$0xff] %vm22, 0.0
    %73 = vst.msk [vmem:[#allocation2 + $0x190] sm:$0xff] %vm22, 0.0
    %74 = vst.msk [vmem:[#allocation2 + $0x198] sm:$0xff] %vm22, 0.0
    %75 = vst.msk [vmem:[#allocation2 + $0x1a0] sm:$0xff] %vm22, 0.0
    %76 = vst.msk [vmem:[#allocation2 + $0x1a8] sm:$0xff] %vm22, 0.0
    %77 = vst.msk [vmem:[#allocation2 + $0x1b0] sm:$0xff] %vm22, 0.0
    %78 = vst.msk [vmem:[#allocation2 + $0x1b8] sm:$0xff] %vm22, 0.0
    %vm79 = vcmask 58368
    %80 = vst.msk [vmem:[#allocation2 + $0x1c0] sm:$0x3] %vm79, 0.0
  $region21: #{_lambda_.13} parent=0 // pred_fallthru
    _
  %v81 = vld [vmem:[#allocation2] sm:$0xff]
  %v82 = vld [vmem:[#allocation2 + $0x8] sm:$0xff]
  %v83 = vld [vmem:[#allocation2 + $0x10] sm:$0xff]
  %v84 = vld [vmem:[#allocation2 + $0x18] sm:$0xff]
  %v85 = vld [vmem:[#allocation2 + $0x20] sm:$0xff]
  %v86 = vld [vmem:[#allocation2 + $0x28] sm:$0xff]
  %v87 = vld [vmem:[#allocation2 + $0x30] sm:$0xff]
  %v88 = vld [vmem:[#allocation2 + $0x38] sm:$0xff]
  %v89 = vld [vmem:[#allocation2 + $0x40] sm:$0xff]
  %v90 = vld [vmem:[#allocation2 + $0x48] sm:$0xff]
  %v91 = vld [vmem:[#allocation2 + $0x50] sm:$0xff]
  %v92 = vld [vmem:[#allocation2 + $0x58] sm:$0xff]
  %v93 = vld [vmem:[#allocation2 + $0x60] sm:$0xff]
  %v94 = vld [vmem:[#allocation2 + $0x68] sm:$0xff]
  %v95 = vld [vmem:[#allocation2 + $0x70] sm:$0xff]
  %v96 = vld [vmem:[#allocation2 + $0x78] sm:$0xff]
  %v97 = vld [vmem:[#allocation2 + $0x80] sm:$0xff]
  %v98 = vld [vmem:[#allocation2 + $0x88] sm:$0xff]
  %v99 = vld [vmem:[#allocation2 + $0x90] sm:$0xff]
  %v100 = vld [vmem:[#allocation2 + $0x98] sm:$0xff]
  %v101 = vld [vmem:[#allocation2 + $0xa0] sm:$0xff]
  %v102 = vld [vmem:[#allocation2 + $0xa8] sm:$0xff]
  %v103 = vld [vmem:[#allocation2 + $0xb0] sm:$0xff]
  %v104 = vld [vmem:[#allocation2 + $0xb8] sm:$0xff]
  %v105 = vld [vmem:[#allocation2 + $0xc0] sm:$0xff]
  %v106 = vld [vmem:[#allocation2 + $0xc8] sm:$0xff]
  %v107 = vld [vmem:[#allocation2 + $0xd0] sm:$0xff]
  %v108 = vld [vmem:[#allocation2 + $0xd8] sm:$0xff]
  %v109 = vld [vmem:[#allocation2 + $0xe0] sm:$0xff]
  %v110 = vld [vmem:[#allocation2 + $0xe8] sm:$0xff]
  %v111 = vld [vmem:[#allocation2 + $0xf0] sm:$0xff]
  %v112 = vld [vmem:[#allocation2 + $0xf8] sm:$0xff]
  %v113 = vld [vmem:[#allocation2 + $0x100] sm:$0xff]
  %v114 = vld [vmem:[#allocation2 + $0x108] sm:$0xff]
  %v115 = vld [vmem:[#allocation2 + $0x110] sm:$0xff]
  %v116 = vld [vmem:[#allocation2 + $0x118] sm:$0xff]
  %v117 = vld [vmem:[#allocation2 + $0x120] sm:$0xff]
  %v118 = vld [vmem:[#allocation2 + $0x128] sm:$0xff]
  %v119 = vld [vmem:[#allocation2 + $0x130] sm:$0xff]
  %v120 = vld [vmem:[#allocation2 + $0x138] sm:$0xff]
  %v121 = vld [vmem:[#allocation2 + $0x140] sm:$0xff]
  %v122 = vld [vmem:[#allocation2 + $0x148] sm:$0xff]
  %v123 = vld [vmem:[#allocation2 + $0x150] sm:$0xff]
  %v124 = vld [vmem:[#allocation2 + $0x158] sm:$0xff]
  %v125 = vld [vmem:[#allocation2 + $0x160] sm:$0xff]
  %v126 = vld [vmem:[#allocation2 + $0x168] sm:$0xff]
  %v127 = vld [vmem:[#allocation2 + $0x170] sm:$0xff]
  %v128 = vld [vmem:[#allocation2 + $0x178] sm:$0xff]
  %v129 = vld [vmem:[#allocation2 + $0x180] sm:$0xff]
  %v130 = vld [vmem:[#allocation2 + $0x188] sm:$0xff]
  %v131 = vld [vmem:[#allocation2 + $0x190] sm:$0xff]
  %v132 = vld [vmem:[#allocation2 + $0x198] sm:$0xff]
  %v133 = vld [vmem:[#allocation2 + $0x1a0] sm:$0xff]
  %v134 = vld [vmem:[#allocation2 + $0x1a8] sm:$0xff]
  %v135 = vld [vmem:[#allocation2 + $0x1b0] sm:$0xff]
  %v136 = vld [vmem:[#allocation2 + $0x1b8] sm:$0xff]
  %v137 = vld [vmem:[#allocation2 + $0x1c0] sm:$0x3]
  %v138 = vld [vmem:[%s0] sm:$0xf]
  %v139 = vld [vmem:[%s0 + $0x4] sm:$0xf]
  %v140 = vld [vmem:[%s0 + $0x8] sm:$0xf]
  %v141 = vld [vmem:[%s0 + $0xc] sm:$0xf]
  %v142 = vld [vmem:[%s0 + $0x10] sm:$0xf]
  %v143 = vld [vmem:[%s0 + $0x14] sm:$0xf]
  %v144 = vld [vmem:[%s0 + $0x18] sm:$0xf]
  %v145 = vld [vmem:[%s0 + $0x1c] sm:$0xf]
  %v146 = vld [vmem:[%s0 + $0x20] sm:$0xf]
  %v147 = vld [vmem:[%s0 + $0x24] sm:$0xf]
  %v148 = vld [vmem:[%s0 + $0x28] sm:$0xf]
  %v149 = vld [vmem:[%s0 + $0x2c] sm:$0xf]
  %v150 = vld [vmem:[%s0 + $0x30] sm:$0xf]
  %v151 = vld [vmem:[%s0 + $0x34] sm:$0xf]
  %v152 = vld [vmem:[%s0 + $0x38] sm:$0xf]
  %v153 = vld [vmem:[%s0 + $0x3c] sm:$0xf]
  %v154 = vld [vmem:[%s0 + $0x40] sm:$0xf]
  %v155 = vld [vmem:[%s0 + $0x44] sm:$0xf]
  %v156 = vld [vmem:[%s0 + $0x48] sm:$0xf]
  %v157 = vld [vmem:[%s0 + $0x4c] sm:$0xf]
  %v158 = vld [vmem:[%s0 + $0x50] sm:$0xf]
  %v159 = vld [vmem:[%s0 + $0x54] sm:$0xf]
  %v160 = vld [vmem:[%s0 + $0x58] sm:$0xf]
  %v161 = vld [vmem:[%s0 + $0x5c] sm:$0xf]
  %v162 = vld [vmem:[%s0 + $0x60] sm:$0xf]
  %v163 = vld [vmem:[%s0 + $0x64] sm:$0xf]
  %v164 = vld [vmem:[%s0 + $0x68] sm:$0xf]
  %v165 = vld [vmem:[%s0 + $0x6c] sm:$0xf]
  %v166 = vld [vmem:[%s0 + $0x70] sm:$0xf]
  %v167 = vld [vmem:[%s0 + $0x74] sm:$0xf]
  %v168 = vld [vmem:[%s0 + $0x78] sm:$0xf]
  %v169 = vld [vmem:[%s0 + $0x7c] sm:$0xf]
  %v170 = vld [vmem:[%s0 + $0x80] sm:$0xf]
  %v171 = vld [vmem:[%s0 + $0x84] sm:$0xf]
  %v172 = vld [vmem:[%s0 + $0x88] sm:$0xf]
  %v173 = vld [vmem:[%s0 + $0x8c] sm:$0xf]
  %v174 = vld [vmem:[%s0 + $0x90] sm:$0xf]
  %v175 = vld [vmem:[%s0 + $0x94] sm:$0xf]
  %v176 = vld [vmem:[%s0 + $0x98] sm:$0xf]
  %v177 = vld [vmem:[%s0 + $0x9c] sm:$0xf]
  %v178 = vld [vmem:[%s0 + $0xa0] sm:$0xf]
  %v179 = vld [vmem:[%s0 + $0xa4] sm:$0xf]
  %v180 = vld [vmem:[%s0 + $0xa8] sm:$0xf]
  %v181 = vld [vmem:[%s0 + $0xac] sm:$0xf]
  %v182 = vld [vmem:[%s0 + $0xb0] sm:$0xf]
  %v183 = vld [vmem:[%s0 + $0xb4] sm:$0xf]
  %v184 = vld [vmem:[%s0 + $0xb8] sm:$0xf]
  %v185 = vld [vmem:[%s0 + $0xbc] sm:$0xf]
  %v186 = vld [vmem:[%s0 + $0xc0] sm:$0xf]
  %v187 = vld [vmem:[%s0 + $0xc4] sm:$0xf]
  %v188 = vld [vmem:[%s0 + $0xc8] sm:$0xf]
  %v189 = vld [vmem:[%s0 + $0xcc] sm:$0xf]
  %v190 = vld [vmem:[%s0 + $0xd0] sm:$0xf]
  %v191 = vld [vmem:[%s0 + $0xd4] sm:$0xf]
  %v192 = vld [vmem:[%s0 + $0xd8] sm:$0xf]
  %v193 = vld [vmem:[%s0 + $0xdc] sm:$0xf]
  %v194 = vld [vmem:[%s0 + $0xe0] sm:$0x1]
  %v195 = vld [vmem:[%s1] sm:$0xf]
  %v196 = vld [vmem:[%s1 + $0x4] sm:$0xf]
  %v197 = vld [vmem:[%s1 + $0x8] sm:$0xf]
  %v198 = vld [vmem:[%s1 + $0xc] sm:$0x3]
  %v256 = vunpack.c.l.b16 %v138
  %v257 = vunpack.c.l.b16 %v139
  %v258 = vunpack.c.l.b16 %v140
  %v259 = vunpack.c.l.b16 %v141
  %v260 = vunpack.c.l.b16 %v142
  %v261 = vunpack.c.l.b16 %v143
  %v262 = vunpack.c.l.b16 %v144
  %v263 = vunpack.c.l.b16 %v145
  %v264 = vunpack.c.l.b16 %v146
  %v265 = vunpack.c.l.b16 %v147
  %v266 = vunpack.c.l.b16 %v148
  %v267 = vunpack.c.l.b16 %v149
  %v268 = vunpack.c.l.b16 %v150
  %v269 = vunpack.c.l.b16 %v151
  %v270 = vunpack.c.l.b16 %v152
  %v271 = vunpack.c.l.b16 %v153
  %v272 = vunpack.c.l.b16 %v154
  %v273 = vunpack.c.l.b16 %v155
  %v274 = vunpack.c.l.b16 %v156
  %v275 = vunpack.c.l.b16 %v157
  %v276 = vunpack.c.l.b16 %v158
  %v277 = vunpack.c.l.b16 %v159
  %v278 = vunpack.c.l.b16 %v160
  %v279 = vunpack.c.l.b16 %v161
  %v280 = vunpack.c.l.b16 %v162
  %v281 = vunpack.c.l.b16 %v163
  %v282 = vunpack.c.l.b16 %v164
  %v283 = vunpack.c.l.b16 %v165
  %v284 = vunpack.c.l.b16 %v166
  %v285 = vunpack.c.l.b16 %v167
  %v286 = vunpack.c.l.b16 %v168
  %v287 = vunpack.c.l.b16 %v169
  %v288 = vunpack.c.l.b16 %v170
  %v289 = vunpack.c.l.b16 %v171
  %v290 = vunpack.c.l.b16 %v172
  %v291 = vunpack.c.l.b16 %v173
  %v292 = vunpack.c.l.b16 %v174
  %v293 = vunpack.c.l.b16 %v175
  %v294 = vunpack.c.l.b16 %v176
  %v295 = vunpack.c.l.b16 %v177
  %v296 = vunpack.c.l.b16 %v178
  %v297 = vunpack.c.l.b16 %v179
  %v298 = vunpack.c.l.b16 %v180
  %v299 = vunpack.c.l.b16 %v181
  %v300 = vunpack.c.l.b16 %v182
  %v301 = vunpack.c.l.b16 %v183
  %v302 = vunpack.c.l.b16 %v184
  %v303 = vunpack.c.l.b16 %v185
  %v304 = vunpack.c.l.b16 %v186
  %v305 = vunpack.c.l.b16 %v187
  %v306 = vunpack.c.l.b16 %v188
  %v307 = vunpack.c.l.b16 %v189
  %v308 = vunpack.c.l.b16 %v190
  %v309 = vunpack.c.l.b16 %v191
  %v310 = vunpack.c.l.b16 %v192
  %v311 = vunpack.c.l.b16 %v193
  %v312 = vunpack.c.l.b16 %v194
  %v313 = vpack.c.b16 %v257, %v256
  %v314 = vpack.c.b16 %v259, %v258
  %v315 = vpack.c.b16 %v261, %v260
  %v316 = vpack.c.b16 %v263, %v262
  %v317 = vpack.c.b16 %v265, %v264
  %v318 = vpack.c.b16 %v267, %v266
  %v319 = vpack.c.b16 %v269, %v268
  %v320 = vpack.c.b16 %v271, %v270
  %v321 = vpack.c.b16 %v273, %v272
  %v322 = vpack.c.b16 %v275, %v274
  %v323 = vpack.c.b16 %v277, %v276
  %v324 = vpack.c.b16 %v279, %v278
  %v325 = vpack.c.b16 %v281, %v280
  %v326 = vpack.c.b16 %v283, %v282
  %v327 = vpack.c.b16 %v285, %v284
  %v328 = vpack.c.b16 %v287, %v286
  %v329 = vpack.c.b16 %v289, %v288
  %v330 = vpack.c.b16 %v291, %v290
  %v331 = vpack.c.b16 %v293, %v292
  %v332 = vpack.c.b16 %v295, %v294
  %v333 = vpack.c.b16 %v297, %v296
  %v334 = vpack.c.b16 %v299, %v298
  %v335 = vpack.c.b16 %v301, %v300
  %v336 = vpack.c.b16 %v303, %v302
  %v337 = vpack.c.b16 %v305, %v304
  %v338 = vpack.c.b16 %v307, %v306
  %v339 = vpack.c.b16 %v309, %v308
  %v340 = vpack.c.b16 %v311, %v310
  %v341 = vpack.c.b16 %v312, %v312
  %v346 = vunpack.c.l.b16 %v195
  %v347 = vunpack.c.l.b16 %v196
  %v348 = vunpack.c.l.b16 %v197
  %v349 = vunpack.c.l.b16 %v198
  %v350 = vpack.c.b16 %v347, %v346
  %v351 = vpack.c.b16 %v349, %v348
  %vm353 = vcmask 220160
  %v355 = vsel %vm353, %v313, 0
  %v358 = vsel %vm353, %v314, 0
  %v361 = vsel %vm353, %v315, 0
  %v364 = vsel %vm353, %v316, 0
  %v367 = vsel %vm353, %v317, 0
  %v370 = vsel %vm353, %v318, 0
  %v373 = vsel %vm353, %v319, 0
  %v376 = vsel %vm353, %v320, 0
  %v379 = vsel %vm353, %v321, 0
  %v382 = vsel %vm353, %v322, 0
  %v385 = vsel %vm353, %v323, 0
  %v388 = vsel %vm353, %v324, 0
  %v391 = vsel %vm353, %v325, 0
  %v394 = vsel %vm353, %v326, 0
  %v397 = vsel %vm353, %v327, 0
  %v400 = vsel %vm353, %v328, 0
  %v403 = vsel %vm353, %v329, 0
  %v406 = vsel %vm353, %v330, 0
  %v409 = vsel %vm353, %v331, 0
  %v412 = vsel %vm353, %v332, 0
  %v415 = vsel %vm353, %v333, 0
  %v418 = vsel %vm353, %v334, 0
  %v421 = vsel %vm353, %v335, 0
  %v424 = vsel %vm353, %v336, 0
  %v427 = vsel %vm353, %v337, 0
  %v430 = vsel %vm353, %v338, 0
  %v433 = vsel %vm353, %v339, 0
  %v436 = vsel %vm353, %v340, 0
  %v439 = vsel %vm353, %v341, 0
  %vm441 = vcmask 1044480
  %vm442 = vcmask 1045504
  %v443 = vsel %vm441, 4294967295, 65535
  %v444 = vsel %vm442, %v443, 0
  %v446 = vand.u32 %v351, %v444
  %448 = vmatprep.subr.bf16.mxu0 0
  %449 = vmatpush1.bf16.msra.mxu0 %v350
  %450 = vmatprep.subr.bf16.mxu0 0
  %451 = vmatpush1.bf16.msra.mxu0 %v446
  %452 = vmatprep.subr.bf16.mxu0 0
  %453 = vmatpush1.bf16.msra.mxu0 0
  %454 = vmatprep.subr.bf16.mxu0 0
  %455 = vmatpush1.bf16.msra.mxu0 0
  %456 = vmatprep.subr.bf16.mxu0 0
  %457 = vmatpush1.bf16.msra.mxu0 0
  %458 = vmatprep.subr.bf16.mxu0 0
  %459 = vmatpush1.bf16.msra.mxu0 0
  %460 = vmatprep.subr.bf16.mxu0 0
  %461 = vmatpush1.bf16.msra.mxu0 0
  %462 = vmatprep.subr.bf16.mxu0 0
  %463 = vmatpush1.bf16.msra.mxu0 0
  %464 = vmatprep.subr.bf16.mxu0 0
  %465 = vmatpush1.bf16.msra.mxu0 0
  %466 = vmatprep.subr.bf16.mxu0 0
  %467 = vmatpush1.bf16.msra.mxu0 0
  %468 = vmatprep.subr.bf16.mxu0 0
  %469 = vmatpush1.bf16.msra.mxu0 0
  %470 = vmatprep.subr.bf16.mxu0 0
  %471 = vmatpush1.bf16.msra.mxu0 0
  %472 = vmatprep.subr.bf16.mxu0 0
  %473 = vmatpush1.bf16.msra.mxu0 0
  %474 = vmatprep.subr.bf16.mxu0 0
  %475 = vmatpush1.bf16.msra.mxu0 0
  %476 = vmatprep.subr.bf16.mxu0 0
  %477 = vmatpush1.bf16.msra.mxu0 0
  %478 = vmatprep.subr.bf16.mxu0 0
  %479 = vmatpush1.bf16.msra.mxu0 0
  %480 = vmatprep.mubr.bf16.mxu0 0
  %481 = vmatmul.mubr.bf16.gmra.mrb[0].mxu0 %v355
  %v482 = vpop.f32.mrb[0].mxu0
  %v483 = vadd.f32 0.0, %v482
  %v484 = vpop.f32.mrb[0].mxu0
  %v485 = vpop.f32.mrb[0].mxu0
  %v486 = vadd.f32 0.0, %v485
  %v487 = vpop.f32.mrb[0].mxu0
  %488 = vmatprep.mubr.bf16.mxu0 0
  %489 = vmatmul.mubr.bf16.gmra.mrb[0].mxu0 %v358
  %v490 = vpop.f32.mrb[0].mxu0
  %v491 = vadd.f32 0.0, %v490
  %v492 = vpop.f32.mrb[0].mxu0
  %v493 = vpop.f32.mrb[0].mxu0
  %v494 = vadd.f32 0.0, %v493
  %v495 = vpop.f32.mrb[0].mxu0
  %496 = vmatprep.mubr.bf16.mxu0 0
  %497 = vmatmul.mubr.bf16.gmra.mrb[0].mxu0 %v361
  %v498 = vpop.f32.mrb[0].mxu0
  %v499 = vadd.f32 0.0, %v498
  %v500 = vpop.f32.mrb[0].mxu0
  %v501 = vpop.f32.mrb[0].mxu0
  %v502 = vadd.f32 0.0, %v501
  %v503 = vpop.f32.mrb[0].mxu0
  %504 = vmatprep.mubr.bf16.mxu0 0
  %505 = vmatmul.mubr.bf16.gmra.mrb[0].mxu0 %v364
  %v506 = vpop.f32.mrb[0].mxu0
  %v507 = vadd.f32 0.0, %v506
  %v508 = vpop.f32.mrb[0].mxu0
  %v509 = vpop.f32.mrb[0].mxu0
  %v510 = vadd.f32 0.0, %v509
  %v511 = vpop.f32.mrb[0].mxu0
  %512 = vmatprep.mubr.bf16.mxu0 0
  %513 = vmatmul.mubr.bf16.gmra.mrb[0].mxu0 %v367
  %v514 = vpop.f32.mrb[0].mxu0
  %v515 = vadd.f32 0.0, %v514
  %v516 = vpop.f32.mrb[0].mxu0
  %v517 = vpop.f32.mrb[0].mxu0
  %v518 = vadd.f32 0.0, %v517
  %v519 = vpop.f32.mrb[0].mxu0
  %520 = vmatprep.mubr.bf16.mxu0 0
  %521 = vmatmul.mubr.bf16.gmra.mrb[0].mxu0 %v370
  %v522 = vpop.f32.mrb[0].mxu0
  %v523 = vadd.f32 0.0, %v522
  %v524 = vpop.f32.mrb[0].mxu0
  %v525 = vpop.f32.mrb[0].mxu0
  %v526 = vadd.f32 0.0, %v525
  %v527 = vpop.f32.mrb[0].mxu0
  %528 = vmatprep.mubr.bf16.mxu0 0
  %529 = vmatmul.mubr.bf16.gmra.mrb[0].mxu0 %v373
  %v530 = vpop.f32.mrb[0].mxu0
  %v531 = vadd.f32 0.0, %v530
  %v532 = vpop.f32.mrb[0].mxu0
  %v533 = vpop.f32.mrb[0].mxu0
  %v534 = vadd.f32 0.0, %v533
  %v535 = vpop.f32.mrb[0].mxu0
  %536 = vmatprep.mubr.bf16.mxu0 0
  %537 = vmatmul.mubr.bf16.gmra.mrb[0].mxu0 %v376
  %v538 = vpop.f32.mrb[0].mxu0
  %v539 = vadd.f32 0.0, %v538
  %v540 = vpop.f32.mrb[0].mxu0
  %v541 = vpop.f32.mrb[0].mxu0
  %v542 = vadd.f32 0.0, %v541
  %v543 = vpop.f32.mrb[0].mxu0
  %544 = vmatprep.mubr.bf16.mxu0 0
  %545 = vmatmul.mubr.bf16.gmra.mrb[0].mxu0 %v379
  %v546 = vpop.f32.mrb[0].mxu0
  %v547 = vadd.f32 0.0, %v546
  %v548 = vpop.f32.mrb[0].mxu0
  %v549 = vpop.f32.mrb[0].mxu0
  %v550 = vadd.f32 0.0, %v549
  %v551 = vpop.f32.mrb[0].mxu0
  %552 = vmatprep.mubr.bf16.mxu0 0
  %553 = vmatmul.mubr.bf16.gmra.mrb[0].mxu0 %v382
  %v554 = vpop.f32.mrb[0].mxu0
  %v555 = vadd.f32 0.0, %v554
  %v556 = vpop.f32.mrb[0].mxu0
  %v557 = vpop.f32.mrb[0].mxu0
  %v558 = vadd.f32 0.0, %v557
  %v559 = vpop.f32.mrb[0].mxu0
  %560 = vmatprep.mubr.bf16.mxu0 0
  %561 = vmatmul.mubr.bf16.gmra.mrb[0].mxu0 %v385
  %v562 = vpop.f32.mrb[0].mxu0
  %v563 = vadd.f32 0.0, %v562
  %v564 = vpop.f32.mrb[0].mxu0
  %v565 = vpop.f32.mrb[0].mxu0
  %v566 = vadd.f32 0.0, %v565
  %v567 = vpop.f32.mrb[0].mxu0
  %568 = vmatprep.mubr.bf16.mxu0 0
  %569 = vmatmul.mubr.bf16.gmra.mrb[0].mxu0 %v388
  %v570 = vpop.f32.mrb[0].mxu0
  %v571 = vadd.f32 0.0, %v570
  %v572 = vpop.f32.mrb[0].mxu0
  %v573 = vpop.f32.mrb[0].mxu0
  %v574 = vadd.f32 0.0, %v573
  %v575 = vpop.f32.mrb[0].mxu0
  %576 = vmatprep.mubr.bf16.mxu0 0
  %577 = vmatmul.mubr.bf16.gmra.mrb[0].mxu0 %v391
  %v578 = vpop.f32.mrb[0].mxu0
  %v579 = vadd.f32 0.0, %v578
  %v580 = vpop.f32.mrb[0].mxu0
  %v581 = vpop.f32.mrb[0].mxu0
  %v582 = vadd.f32 0.0, %v581
  %v583 = vpop.f32.mrb[0].mxu0
  %584 = vmatprep.mubr.bf16.mxu0 0
  %585 = vmatmul.mubr.bf16.gmra.mrb[0].mxu0 %v394
  %v586 = vpop.f32.mrb[0].mxu0
  %v587 = vadd.f32 0.0, %v586
  %v588 = vpop.f32.mrb[0].mxu0
  %v589 = vpop.f32.mrb[0].mxu0
  %v590 = vadd.f32 0.0, %v589
  %v591 = vpop.f32.mrb[0].mxu0
  %592 = vmatprep.mubr.bf16.mxu0 0
  %593 = vmatmul.mubr.bf16.gmra.mrb[0].mxu0 %v397
  %v594 = vpop.f32.mrb[0].mxu0
  %v595 = vadd.f32 0.0, %v594
  %v596 = vpop.f32.mrb[0].mxu0
  %v597 = vpop.f32.mrb[0].mxu0
  %v598 = vadd.f32 0.0, %v597
  %v599 = vpop.f32.mrb[0].mxu0
  %600 = vmatprep.mubr.bf16.mxu0 0
  %601 = vmatmul.mubr.bf16.gmra.mrb[0].mxu0 %v400
  %v602 = vpop.f32.mrb[0].mxu0
  %v603 = vadd.f32 0.0, %v602
  %v604 = vpop.f32.mrb[0].mxu0
  %v605 = vpop.f32.mrb[0].mxu0
  %v606 = vadd.f32 0.0, %v605
  %v607 = vpop.f32.mrb[0].mxu0
  %608 = vmatprep.mubr.bf16.mxu0 0
  %609 = vmatmul.mubr.bf16.gmra.mrb[0].mxu0 %v403
  %v610 = vpop.f32.mrb[0].mxu0
  %v611 = vadd.f32 0.0, %v610
  %v612 = vpop.f32.mrb[0].mxu0
  %v613 = vpop.f32.mrb[0].mxu0
  %v614 = vadd.f32 0.0, %v613
  %v615 = vpop.f32.mrb[0].mxu0
  %616 = vmatprep.mubr.bf16.mxu0 0
  %617 = vmatmul.mubr.bf16.gmra.mrb[0].mxu0 %v406
  %v618 = vpop.f32.mrb[0].mxu0
  %v619 = vadd.f32 0.0, %v618
  %v620 = vpop.f32.mrb[0].mxu0
  %v621 = vpop.f32.mrb[0].mxu0
  %v622 = vadd.f32 0.0, %v621
  %v623 = vpop.f32.mrb[0].mxu0
  %624 = vmatprep.mubr.bf16.mxu0 0
  %625 = vmatmul.mubr.bf16.gmra.mrb[0].mxu0 %v409
  %v626 = vpop.f32.mrb[0].mxu0
  %v627 = vadd.f32 0.0, %v626
  %v628 = vpop.f32.mrb[0].mxu0
  %v629 = vpop.f32.mrb[0].mxu0
  %v630 = vadd.f32 0.0, %v629
  %v631 = vpop.f32.mrb[0].mxu0
  %632 = vmatprep.mubr.bf16.mxu0 0
  %633 = vmatmul.mubr.bf16.gmra.mrb[0].mxu0 %v412
  %v634 = vpop.f32.mrb[0].mxu0
  %v635 = vadd.f32 0.0, %v634
  %v636 = vpop.f32.mrb[0].mxu0
  %v637 = vpop.f32.mrb[0].mxu0
  %v638 = vadd.f32 0.0, %v637
  %v639 = vpop.f32.mrb[0].mxu0
  %640 = vmatprep.mubr.bf16.mxu0 0
  %641 = vmatmul.mubr.bf16.gmra.mrb[0].mxu0 %v415
  %v642 = vpop.f32.mrb[0].mxu0
  %v643 = vadd.f32 0.0, %v642
  %v644 = vpop.f32.mrb[0].mxu0
  %v645 = vpop.f32.mrb[0].mxu0
  %v646 = vadd.f32 0.0, %v645
  %v647 = vpop.f32.mrb[0].mxu0
  %648 = vmatprep.mubr.bf16.mxu0 0
  %649 = vmatmul.mubr.bf16.gmra.mrb[0].mxu0 %v418
  %v650 = vpop.f32.mrb[0].mxu0
  %v651 = vadd.f32 0.0, %v650
  %v652 = vpop.f32.mrb[0].mxu0
  %v653 = vpop.f32.mrb[0].mxu0
  %v654 = vadd.f32 0.0, %v653
  %v655 = vpop.f32.mrb[0].mxu0
  %656 = vmatprep.mubr.bf16.mxu0 0
  %657 = vmatmul.mubr.bf16.gmra.mrb[0].mxu0 %v421
  %v658 = vpop.f32.mrb[0].mxu0
  %v659 = vadd.f32 0.0, %v658
  %v660 = vpop.f32.mrb[0].mxu0
  %v661 = vpop.f32.mrb[0].mxu0
  %v662 = vadd.f32 0.0, %v661
  %v663 = vpop.f32.mrb[0].mxu0
  %664 = vmatprep.mubr.bf16.mxu0 0
  %665 = vmatmul.mubr.bf16.gmra.mrb[0].mxu0 %v424
  %v666 = vpop.f32.mrb[0].mxu0
  %v667 = vadd.f32 0.0, %v666
  %v668 = vpop.f32.mrb[0].mxu0
  %v669 = vpop.f32.mrb[0].mxu0
  %v670 = vadd.f32 0.0, %v669
  %v671 = vpop.f32.mrb[0].mxu0
  %672 = vmatprep.mubr.bf16.mxu0 0
  %673 = vmatmul.mubr.bf16.gmra.mrb[0].mxu0 %v427
  %v674 = vpop.f32.mrb[0].mxu0
  %v675 = vadd.f32 0.0, %v674
  %v676 = vpop.f32.mrb[0].mxu0
  %v677 = vpop.f32.mrb[0].mxu0
  %v678 = vadd.f32 0.0, %v677
  %v679 = vpop.f32.mrb[0].mxu0
  %680 = vmatprep.mubr.bf16.mxu0 0
  %681 = vmatmul.mubr.bf16.gmra.mrb[0].mxu0 %v430
  %v682 = vpop.f32.mrb[0].mxu0
  %v683 = vadd.f32 0.0, %v682
  %v684 = vpop.f32.mrb[0].mxu0
  %v685 = vpop.f32.mrb[0].mxu0
  %v686 = vadd.f32 0.0, %v685
  %v687 = vpop.f32.mrb[0].mxu0
  %688 = vmatprep.mubr.bf16.mxu0 0
  %689 = vmatmul.mubr.bf16.gmra.mrb[0].mxu0 %v433
  %v690 = vpop.f32.mrb[0].mxu0
  %v691 = vadd.f32 0.0, %v690
  %v692 = vpop.f32.mrb[0].mxu0
  %v693 = vpop.f32.mrb[0].mxu0
  %v694 = vadd.f32 0.0, %v693
  %v695 = vpop.f32.mrb[0].mxu0
  %696 = vmatprep.mubr.bf16.mxu0 0
  %697 = vmatmul.mubr.bf16.gmra.mrb[0].mxu0 %v436
  %v698 = vpop.f32.mrb[0].mxu0
  %v699 = vadd.f32 0.0, %v698
  %v700 = vpop.f32.mrb[0].mxu0
  %v701 = vpop.f32.mrb[0].mxu0
  %v702 = vadd.f32 0.0, %v701
  %v703 = vpop.f32.mrb[0].mxu0
  %704 = vmatprep.mubr.bf16.mxu0 0
  %705 = vmatmul.mubr.bf16.gmra.mrb[0].mxu0 %v439
  %v706 = vpop.f32.mrb[0].mxu0
  %v707 = vadd.f32 0.0, %v706
  %v708 = vpop.f32.mrb[0].mxu0
  %v709 = vpop.f32.mrb[0].mxu0
  %v710 = vpop.f32.mrb[0].mxu0
  %711 = vdwg.mxu0
  %v712 = vadd.f32 %v81, %v483
  %v713 = vadd.f32 %v82, %v486
  %v714 = vadd.f32 %v83, %v491
  %v715 = vadd.f32 %v84, %v494
  %v716 = vadd.f32 %v85, %v499
  %v717 = vadd.f32 %v86, %v502
  %v718 = vadd.f32 %v87, %v507
  %v719 = vadd.f32 %v88, %v510
  %v720 = vadd.f32 %v89, %v515
  %v721 = vadd.f32 %v90, %v518
  %v722 = vadd.f32 %v91, %v523
  %v723 = vadd.f32 %v92, %v526
  %v724 = vadd.f32 %v93, %v531
  %v725 = vadd.f32 %v94, %v534
  %v726 = vadd.f32 %v95, %v539
  %v727 = vadd.f32 %v96, %v542
  %v728 = vadd.f32 %v97, %v547
  %v729 = vadd.f32 %v98, %v550
  %v730 = vadd.f32 %v99, %v555
  %v731 = vadd.f32 %v100, %v558
  %v732 = vadd.f32 %v101, %v563
  %v733 = vadd.f32 %v102, %v566
  %v734 = vadd.f32 %v103, %v571
  %v735 = vadd.f32 %v104, %v574
  %v736 = vadd.f32 %v105, %v579
  %v737 = vadd.f32 %v106, %v582
  %v738 = vadd.f32 %v107, %v587
  %v739 = vadd.f32 %v108, %v590
  %v740 = vadd.f32 %v109, %v595
  %v741 = vadd.f32 %v110, %v598
  %v742 = vadd.f32 %v111, %v603
  %v743 = vadd.f32 %v112, %v606
  %v744 = vadd.f32 %v113, %v611
  %v745 = vadd.f32 %v114, %v614
  %v746 = vadd.f32 %v115, %v619
  %v747 = vadd.f32 %v116, %v622
  %v748 = vadd.f32 %v117, %v627
  %v749 = vadd.f32 %v118, %v630
  %v750 = vadd.f32 %v119, %v635
  %v751 = vadd.f32 %v120, %v638
  %v752 = vadd.f32 %v121, %v643
  %v753 = vadd.f32 %v122, %v646
  %v754 = vadd.f32 %v123, %v651
  %v755 = vadd.f32 %v124, %v654
  %v756 = vadd.f32 %v125, %v659
  %v757 = vadd.f32 %v126, %v662
  %v758 = vadd.f32 %v127, %v667
  %v759 = vadd.f32 %v128, %v670
  %v760 = vadd.f32 %v129, %v675
  %v761 = vadd.f32 %v130, %v678
  %v762 = vadd.f32 %v131, %v683
  %v763 = vadd.f32 %v132, %v686
  %v764 = vadd.f32 %v133, %v691
  %v765 = vadd.f32 %v134, %v694
  %v766 = vadd.f32 %v135, %v699
  %v767 = vadd.f32 %v136, %v702
  %v768 = vadd.f32 %v137, %v707
  %vm769 = vcmask 64512
  %770 = vst.msk [vmem:[#allocation2] sm:$0xff] %vm769, %v712
  %771 = vst.msk [vmem:[#allocation2 + $0x8] sm:$0xff] %vm769, %v713
  %772 = vst.msk [vmem:[#allocation2 + $0x10] sm:$0xff] %vm769, %v714
  %773 = vst.msk [vmem:[#allocation2 + $0x18] sm:$0xff] %vm769, %v715
  %774 = vst.msk [vmem:[#allocation2 + $0x20] sm:$0xff] %vm769, %v716
  %775 = vst.msk [vmem:[#allocation2 + $0x28] sm:$0xff] %vm769, %v717
  %776 = vst.msk [vmem:[#allocation2 + $0x30] sm:$0xff] %vm769, %v718
  %777 = vst.msk [vmem:[#allocation2 + $0x38] sm:$0xff] %vm769, %v719
  %778 = vst.msk [vmem:[#allocation2 + $0x40] sm:$0xff] %vm769, %v720
  %779 = vst.msk [vmem:[#allocation2 + $0x48] sm:$0xff] %vm769, %v721
  %780 = vst.msk [vmem:[#allocation2 + $0x50] sm:$0xff] %vm769, %v722
  %781 = vst.msk [vmem:[#allocation2 + $0x58] sm:$0xff] %vm769, %v723
  %782 = vst.msk [vmem:[#allocation2 + $0x60] sm:$0xff] %vm769, %v724
  %783 = vst.msk [vmem:[#allocation2 + $0x68] sm:$0xff] %vm769, %v725
  %784 = vst.msk [vmem:[#allocation2 + $0x70] sm:$0xff] %vm769, %v726
  %785 = vst.msk [vmem:[#allocation2 + $0x78] sm:$0xff] %vm769, %v727
  %786 = vst.msk [vmem:[#allocation2 + $0x80] sm:$0xff] %vm769, %v728
  %787 = vst.msk [vmem:[#allocation2 + $0x88] sm:$0xff] %vm769, %v729
  %788 = vst.msk [vmem:[#allocation2 + $0x90] sm:$0xff] %vm769, %v730
  %789 = vst.msk [vmem:[#allocation2 + $0x98] sm:$0xff] %vm769, %v731
  %790 = vst.msk [vmem:[#allocation2 + $0xa0] sm:$0xff] %vm769, %v732
  %791 = vst.msk [vmem:[#allocation2 + $0xa8] sm:$0xff] %vm769, %v733
  %792 = vst.msk [vmem:[#allocation2 + $0xb0] sm:$0xff] %vm769, %v734
  %793 = vst.msk [vmem:[#allocation2 + $0xb8] sm:$0xff] %vm769, %v735
  %794 = vst.msk [vmem:[#allocation2 + $0xc0] sm:$0xff] %vm769, %v736
  %795 = vst.msk [vmem:[#allocation2 + $0xc8] sm:$0xff] %vm769, %v737
  %796 = vst.msk [vmem:[#allocation2 + $0xd0] sm:$0xff] %vm769, %v738
  %797 = vst.msk [vmem:[#allocation2 + $0xd8] sm:$0xff] %vm769, %v739
  %798 = vst.msk [vmem:[#allocation2 + $0xe0] sm:$0xff] %vm769, %v740
  %799 = vst.msk [vmem:[#allocation2 + $0xe8] sm:$0xff] %vm769, %v741
  %800 = vst.msk [vmem:[#allocation2 + $0xf0] sm:$0xff] %vm769, %v742
  %801 = vst.msk [vmem:[#allocation2 + $0xf8] sm:$0xff] %vm769, %v743
  %802 = vst.msk [vmem:[#allocation2 + $0x100] sm:$0xff] %vm769, %v744
  %803 = vst.msk [vmem:[#allocation2 + $0x108] sm:$0xff] %vm769, %v745
  %804 = vst.msk [vmem:[#allocation2 + $0x110] sm:$0xff] %vm769, %v746
  %805 = vst.msk [vmem:[#allocation2 + $0x118] sm:$0xff] %vm769, %v747
  %806 = vst.msk [vmem:[#allocation2 + $0x120] sm:$0xff] %vm769, %v748
  %807 = vst.msk [vmem:[#allocation2 + $0x128] sm:$0xff] %vm769, %v749
  %808 = vst.msk [vmem:[#allocation2 + $0x130] sm:$0xff] %vm769, %v750
  %809 = vst.msk [vmem:[#allocation2 + $0x138] sm:$0xff] %vm769, %v751
  %810 = vst.msk [vmem:[#allocation2 + $0x140] sm:$0xff] %vm769, %v752
  %811 = vst.msk [vmem:[#allocation2 + $0x148] sm:$0xff] %vm769, %v753
  %812 = vst.msk [vmem:[#allocation2 + $0x150] sm:$0xff] %vm769, %v754
  %813 = vst.msk [vmem:[#allocation2 + $0x158] sm:$0xff] %vm769, %v755
  %814 = vst.msk [vmem:[#allocation2 + $0x160] sm:$0xff] %vm769, %v756
  %815 = vst.msk [vmem:[#allocation2 + $0x168] sm:$0xff] %vm769, %v757
  %816 = vst.msk [vmem:[#allocation2 + $0x170] sm:$0xff] %vm769, %v758
  %817 = vst.msk [vmem:[#allocation2 + $0x178] sm:$0xff] %vm769, %v759
  %818 = vst.msk [vmem:[#allocation2 + $0x180] sm:$0xff] %vm769, %v760
  %819 = vst.msk [vmem:[#allocation2 + $0x188] sm:$0xff] %vm769, %v761
  %820 = vst.msk [vmem:[#allocation2 + $0x190] sm:$0xff] %vm769, %v762
  %821 = vst.msk [vmem:[#allocation2 + $0x198] sm:$0xff] %vm769, %v763
  %822 = vst.msk [vmem:[#allocation2 + $0x1a0] sm:$0xff] %vm769, %v764
  %823 = vst.msk [vmem:[#allocation2 + $0x1a8] sm:$0xff] %vm769, %v765
  %824 = vst.msk [vmem:[#allocation2 + $0x1b0] sm:$0xff] %vm769, %v766
  %825 = vst.msk [vmem:[#allocation2 + $0x1b8] sm:$0xff] %vm769, %v767
  %vm826 = vcmask 58368
  %827 = vst.msk [vmem:[#allocation2 + $0x1c0] sm:$0x3] %vm826, %v768
  // Predicated region
  $region22: #{_lambda_.13} parent=0 // pred_check
    %p828 = pneg %p18
  $region23: #{_lambda_.13} parent=0 // pred_check_branch
    %830 = sbr.rel (%p828) target = $region25
  $region24: #{_lambda_.13} parent=0 // pred_region
    %v831 = vld [vmem:[#allocation2] sm:$0xff]
    %v832 = vld [vmem:[#allocation2 + $0x8] sm:$0xff]
    %v833 = vld [vmem:[#allocation2 + $0x10] sm:$0xff]
    %v834 = vld [vmem:[#allocation2 + $0x18] sm:$0xff]
    %v835 = vld [vmem:[#allocation2 + $0x20] sm:$0xff]
    %v836 = vld [vmem:[#allocation2 + $0x28] sm:$0xff]
    %v837 = vld [vmem:[#allocation2 + $0x30] sm:$0xff]
    %v838 = vld [vmem:[#allocation2 + $0x38] sm:$0xff]
    %v839 = vld [vmem:[#allocation2 + $0x40] sm:$0xff]
    %v840 = vld [vmem:[#allocation2 + $0x48] sm:$0xff]
    %v841 = vld [vmem:[#allocation2 + $0x50] sm:$0xff]
    %v842 = vld [vmem:[#allocation2 + $0x58] sm:$0xff]
    %v843 = vld [vmem:[#allocation2 + $0x60] sm:$0xff]
    %v844 = vld [vmem:[#allocation2 + $0x68] sm:$0xff]
    %v845 = vld [vmem:[#allocation2 + $0x70] sm:$0xff]
    %v846 = vld [vmem:[#allocation2 + $0x78] sm:$0xff]
    %v847 = vld [vmem:[#allocation2 + $0x80] sm:$0xff]
    %v848 = vld [vmem:[#allocation2 + $0x88] sm:$0xff]
    %v849 = vld [vmem:[#allocation2 + $0x90] sm:$0xff]
    %v850 = vld [vmem:[#allocation2 + $0x98] sm:$0xff]
    %v851 = vld [vmem:[#allocation2 + $0xa0] sm:$0xff]
    %v852 = vld [vmem:[#allocation2 + $0xa8] sm:$0xff]
    %v853 = vld [vmem:[#allocation2 + $0xb0] sm:$0xff]
    %v854 = vld [vmem:[#allocation2 + $0xb8] sm:$0xff]
    %v855 = vld [vmem:[#allocation2 + $0xc0] sm:$0xff]
    %v856 = vld [vmem:[#allocation2 + $0xc8] sm:$0xff]
    %v857 = vld [vmem:[#allocation2 + $0xd0] sm:$0xff]
    %v858 = vld [vmem:[#allocation2 + $0xd8] sm:$0xff]
    %v859 = vld [vmem:[#allocation2 + $0xe0] sm:$0xff]
    %v860 = vld [vmem:[#allocation2 + $0xe8] sm:$0xff]
    %v861 = vld [vmem:[#allocation2 + $0xf0] sm:$0xff]
    %v862 = vld [vmem:[#allocation2 + $0xf8] sm:$0xff]
    %v863 = vld [vmem:[#allocation2 + $0x100] sm:$0xff]
    %v864 = vld [vmem:[#allocation2 + $0x108] sm:$0xff]
    %v865 = vld [vmem:[#allocation2 + $0x110] sm:$0xff]
    %v866 = vld [vmem:[#allocation2 + $0x118] sm:$0xff]
    %v867 = vld [vmem:[#allocation2 + $0x120] sm:$0xff]
    %v868 = vld [vmem:[#allocation2 + $0x128] sm:$0xff]
    %v869 = vld [vmem:[#allocation2 + $0x130] sm:$0xff]
    %v870 = vld [vmem:[#allocation2 + $0x138] sm:$0xff]
    %v871 = vld [vmem:[#allocation2 + $0x140] sm:$0xff]
    %v872 = vld [vmem:[#allocation2 + $0x148] sm:$0xff]
    %v873 = vld [vmem:[#allocation2 + $0x150] sm:$0xff]
    %v874 = vld [vmem:[#allocation2 + $0x158] sm:$0xff]
    %v875 = vld [vmem:[#allocation2 + $0x160] sm:$0xff]
    %v876 = vld [vmem:[#allocation2 + $0x168] sm:$0xff]
    %v877 = vld [vmem:[#allocation2 + $0x170] sm:$0xff]
    %v878 = vld [vmem:[#allocation2 + $0x178] sm:$0xff]
    %v879 = vld [vmem:[#allocation2 + $0x180] sm:$0xff]
    %v880 = vld [vmem:[#allocation2 + $0x188] sm:$0xff]
    %v881 = vld [vmem:[#allocation2 + $0x190] sm:$0xff]
    %v882 = vld [vmem:[#allocation2 + $0x198] sm:$0xff]
    %v883 = vld [vmem:[#allocation2 + $0x1a0] sm:$0xff]
    %v884 = vld [vmem:[#allocation2 + $0x1a8] sm:$0xff]
    %v885 = vld [vmem:[#allocation2 + $0x1b0] sm:$0xff]
    %v886 = vld [vmem:[#allocation2 + $0x1b8] sm:$0xff]
    %v887 = vld [vmem:[#allocation2 + $0x1c0] sm:$0x3]
    %v888 = vld [vmem:[%s2] sm:$0x1]
    %v890 = vlaneseq
    %v891 = vshrl.u32 %v890, 7
    %v892 = vsub.s32 0, %v891
    %v893 = vrot.slane %v888, %v892
    %v895 = vmul.f32 %v831, %v893
    %v896 = vmul.f32 %v832, %v893
    %v897 = vmul.f32 %v833, %v893
    %v898 = vmul.f32 %v834, %v893
    %v899 = vmul.f32 %v835, %v893
    %v900 = vmul.f32 %v836, %v893
    %v901 = vmul.f32 %v837, %v893
    %v902 = vmul.f32 %v838, %v893
    %v903 = vmul.f32 %v839, %v893
    %v904 = vmul.f32 %v840, %v893
    %v905 = vmul.f32 %v841, %v893
    %v906 = vmul.f32 %v842, %v893
    %v907 = vmul.f32 %v843, %v893
    %v908 = vmul.f32 %v844, %v893
    %v909 = vmul.f32 %v845, %v893
    %v910 = vmul.f32 %v846, %v893
    %v911 = vmul.f32 %v847, %v893
    %v912 = vmul.f32 %v848, %v893
    %v913 = vmul.f32 %v849, %v893
    %v914 = vmul.f32 %v850, %v893
    %v915 = vmul.f32 %v851, %v893
    %v916 = vmul.f32 %v852, %v893
    %v917 = vmul.f32 %v853, %v893
    %v918 = vmul.f32 %v854, %v893
    %v919 = vmul.f32 %v855, %v893
    %v920 = vmul.f32 %v856, %v893
    %v921 = vmul.f32 %v857, %v893
    %v922 = vmul.f32 %v858, %v893
    %v923 = vmul.f32 %v859, %v893
    %v924 = vmul.f32 %v860, %v893
    %v925 = vmul.f32 %v861, %v893
    %v926 = vmul.f32 %v862, %v893
    %v927 = vmul.f32 %v863, %v893
    %v928 = vmul.f32 %v864, %v893
    %v929 = vmul.f32 %v865, %v893
    %v930 = vmul.f32 %v866, %v893
    %v931 = vmul.f32 %v867, %v893
    %v932 = vmul.f32 %v868, %v893
    %v933 = vmul.f32 %v869, %v893
    %v934 = vmul.f32 %v870, %v893
    %v935 = vmul.f32 %v871, %v893
    %v936 = vmul.f32 %v872, %v893
    %v937 = vmul.f32 %v873, %v893
    %v938 = vmul.f32 %v874, %v893
    %v939 = vmul.f32 %v875, %v893
    %v940 = vmul.f32 %v876, %v893
    %v941 = vmul.f32 %v877, %v893
    %v942 = vmul.f32 %v878, %v893
    %v943 = vmul.f32 %v879, %v893
    %v944 = vmul.f32 %v880, %v893
    %v945 = vmul.f32 %v881, %v893
    %v946 = vmul.f32 %v882, %v893
    %v947 = vmul.f32 %v883, %v893
    %v948 = vmul.f32 %v884, %v893
    %v949 = vmul.f32 %v885, %v893
    %v950 = vmul.f32 %v886, %v893
    %v951 = vmul.f32 %v887, %v893
    %v952 = vld [vmem:[%s3] sm:$0x1]
    %v954 = vlaneseq
    %v955 = vshrl.u32 %v954, 7
    %v956 = vsub.s32 0, %v955
    %v957 = vrot.slane %v952, %v956
    %v959 = vadd.f32 %v895, %v957
    %v960 = vadd.f32 %v896, %v957
    %v961 = vadd.f32 %v897, %v957
    %v962 = vadd.f32 %v898, %v957
    %v963 = vadd.f32 %v899, %v957
    %v964 = vadd.f32 %v900, %v957
    %v965 = vadd.f32 %v901, %v957
    %v966 = vadd.f32 %v902, %v957
    %v967 = vadd.f32 %v903, %v957
    %v968 = vadd.f32 %v904, %v957
    %v969 = vadd.f32 %v905, %v957
    %v970 = vadd.f32 %v906, %v957
    %v971 = vadd.f32 %v907, %v957
    %v972 = vadd.f32 %v908, %v957
    %v973 = vadd.f32 %v909, %v957
    %v974 = vadd.f32 %v910, %v957
    %v975 = vadd.f32 %v911, %v957
    %v976 = vadd.f32 %v912, %v957
    %v977 = vadd.f32 %v913, %v957
    %v978 = vadd.f32 %v914, %v957
    %v979 = vadd.f32 %v915, %v957
    %v980 = vadd.f32 %v916, %v957
    %v981 = vadd.f32 %v917, %v957
    %v982 = vadd.f32 %v918, %v957
    %v983 = vadd.f32 %v919, %v957
    %v984 = vadd.f32 %v920, %v957
    %v985 = vadd.f32 %v921, %v957
    %v986 = vadd.f32 %v922, %v957
    %v987 = vadd.f32 %v923, %v957
    %v988 = vadd.f32 %v924, %v957
    %v989 = vadd.f32 %v925, %v957
    %v990 = vadd.f32 %v926, %v957
    %v991 = vadd.f32 %v927, %v957
    %v992 = vadd.f32 %v928, %v957
    %v993 = vadd.f32 %v929, %v957
    %v994 = vadd.f32 %v930, %v957
    %v995 = vadd.f32 %v931, %v957
    %v996 = vadd.f32 %v932, %v957
    %v997 = vadd.f32 %v933, %v957
    %v998 = vadd.f32 %v934, %v957
    %v999 = vadd.f32 %v935, %v957
    %v1000 = vadd.f32 %v936, %v957
    %v1001 = vadd.f32 %v937, %v957
    %v1002 = vadd.f32 %v938, %v957
    %v1003 = vadd.f32 %v939, %v957
    %v1004 = vadd.f32 %v940, %v957
    %v1005 = vadd.f32 %v941, %v957
    %v1006 = vadd.f32 %v942, %v957
    %v1007 = vadd.f32 %v943, %v957
    %v1008 = vadd.f32 %v944, %v957
    %v1009 = vadd.f32 %v945, %v957
    %v1010 = vadd.f32 %v946, %v957
    %v1011 = vadd.f32 %v947, %v957
    %v1012 = vadd.f32 %v948, %v957
    %v1013 = vadd.f32 %v949, %v957
    %v1014 = vadd.f32 %v950, %v957
    %v1015 = vadd.f32 %v951, %v957
    %v1016 = vmax.f32 %v959, 0.0
    %v1017 = vmax.f32 %v960, 0.0
    %v1018 = vmax.f32 %v961, 0.0
    %v1019 = vmax.f32 %v962, 0.0
    %v1020 = vmax.f32 %v963, 0.0
    %v1021 = vmax.f32 %v964, 0.0
    %v1022 = vmax.f32 %v965, 0.0
    %v1023 = vmax.f32 %v966, 0.0
    %v1024 = vmax.f32 %v967, 0.0
    %v1025 = vmax.f32 %v968, 0.0
    %v1026 = vmax.f32 %v969, 0.0
    %v1027 = vmax.f32 %v970, 0.0
    %v1028 = vmax.f32 %v971, 0.0
    %v1029 = vmax.f32 %v972, 0.0
    %v1030 = vmax.f32 %v973, 0.0
    %v1031 = vmax.f32 %v974, 0.0
    %v1032 = vmax.f32 %v975, 0.0
    %v1033 = vmax.f32 %v976, 0.0
    %v1034 = vmax.f32 %v977, 0.0
    %v1035 = vmax.f32 %v978, 0.0
    %v1036 = vmax.f32 %v979, 0.0
    %v1037 = vmax.f32 %v980, 0.0
    %v1038 = vmax.f32 %v981, 0.0
    %v1039 = vmax.f32 %v982, 0.0
    %v1040 = vmax.f32 %v983, 0.0
    %v1041 = vmax.f32 %v984, 0.0
    %v1042 = vmax.f32 %v985, 0.0
    %v1043 = vmax.f32 %v986, 0.0
    %v1044 = vmax.f32 %v987, 0.0
    %v1045 = vmax.f32 %v988, 0.0
    %v1046 = vmax.f32 %v989, 0.0
    %v1047 = vmax.f32 %v990, 0.0
    %v1048 = vmax.f32 %v991, 0.0
    %v1049 = vmax.f32 %v992, 0.0
    %v1050 = vmax.f32 %v993, 0.0
    %v1051 = vmax.f32 %v994, 0.0
    %v1052 = vmax.f32 %v995, 0.0
    %v1053 = vmax.f32 %v996, 0.0
    %v1054 = vmax.f32 %v997, 0.0
    %v1055 = vmax.f32 %v998, 0.0
    %v1056 = vmax.f32 %v999, 0.0
    %v1057 = vmax.f32 %v1000, 0.0
    %v1058 = vmax.f32 %v1001, 0.0
    %v1059 = vmax.f32 %v1002, 0.0
    %v1060 = vmax.f32 %v1003, 0.0
    %v1061 = vmax.f32 %v1004, 0.0
    %v1062 = vmax.f32 %v1005, 0.0
    %v1063 = vmax.f32 %v1006, 0.0
    %v1064 = vmax.f32 %v1007, 0.0
    %v1065 = vmax.f32 %v1008, 0.0
    %v1066 = vmax.f32 %v1009, 0.0
    %v1067 = vmax.f32 %v1010, 0.0
    %v1068 = vmax.f32 %v1011, 0.0
    %v1069 = vmax.f32 %v1012, 0.0
    %v1070 = vmax.f32 %v1013, 0.0
    %v1071 = vmax.f32 %v1014, 0.0
    %v1072 = vmax.f32 %v1015, 0.0
    %v1073 = vpack.c.bf16 %v1017, %v1016
    %v1074 = vpack.c.bf16 %v1019, %v1018
    %v1075 = vpack.c.bf16 %v1021, %v1020
    %v1076 = vpack.c.bf16 %v1023, %v1022
    %v1077 = vpack.c.bf16 %v1025, %v1024
    %v1078 = vpack.c.bf16 %v1027, %v1026
    %v1079 = vpack.c.bf16 %v1029, %v1028
    %v1080 = vpack.c.bf16 %v1031, %v1030
    %v1081 = vpack.c.bf16 %v1033, %v1032
    %v1082 = vpack.c.bf16 %v1035, %v1034
    %v1083 = vpack.c.bf16 %v1037, %v1036
    %v1084 = vpack.c.bf16 %v1039, %v1038
    %v1085 = vpack.c.bf16 %v1041, %v1040
    %v1086 = vpack.c.bf16 %v1043, %v1042
    %v1087 = vpack.c.bf16 %v1045, %v1044
    %v1088 = vpack.c.bf16 %v1047, %v1046
    %v1089 = vpack.c.bf16 %v1049, %v1048
    %v1090 = vpack.c.bf16 %v1051, %v1050
    %v1091 = vpack.c.bf16 %v1053, %v1052
    %v1092 = vpack.c.bf16 %v1055, %v1054
    %v1093 = vpack.c.bf16 %v1057, %v1056
    %v1094 = vpack.c.bf16 %v1059, %v1058
    %v1095 = vpack.c.bf16 %v1061, %v1060
    %v1096 = vpack.c.bf16 %v1063, %v1062
    %v1097 = vpack.c.bf16 %v1065, %v1064
    %v1098 = vpack.c.bf16 %v1067, %v1066
    %v1099 = vpack.c.bf16 %v1069, %v1068
    %v1100 = vpack.c.bf16 %v1071, %v1070
    %v1101 = vpack.c.bf16 %v1072, %v1072
    %v1131 = vunpack.c.l.b16 %v1073
    %v1132 = vunpack.c.h.b16 %v1073
    %v1133 = vunpack.c.l.b16 %v1074
    %v1134 = vunpack.c.h.b16 %v1074
    %v1135 = vunpack.c.l.b16 %v1075
    %v1136 = vunpack.c.h.b16 %v1075
    %v1137 = vunpack.c.l.b16 %v1076
    %v1138 = vunpack.c.h.b16 %v1076
    %v1139 = vunpack.c.l.b16 %v1077
    %v1140 = vunpack.c.h.b16 %v1077
    %v1141 = vunpack.c.l.b16 %v1078
    %v1142 = vunpack.c.h.b16 %v1078
    %v1143 = vunpack.c.l.b16 %v1079
    %v1144 = vunpack.c.h.b16 %v1079
    %v1145 = vunpack.c.l.b16 %v1080
    %v1146 = vunpack.c.h.b16 %v1080
    %v1147 = vunpack.c.l.b16 %v1081
    %v1148 = vunpack.c.h.b16 %v1081
    %v1149 = vunpack.c.l.b16 %v1082
    %v1150 = vunpack.c.h.b16 %v1082
    %v1151 = vunpack.c.l.b16 %v1083
    %v1152 = vunpack.c.h.b16 %v1083
    %v1153 = vunpack.c.l.b16 %v1084
    %v1154 = vunpack.c.h.b16 %v1084
    %v1155 = vunpack.c.l.b16 %v1085
    %v1156 = vunpack.c.h.b16 %v1085
    %v1157 = vunpack.c.l.b16 %v1086
    %v1158 = vunpack.c.h.b16 %v1086
    %v1159 = vunpack.c.l.b16 %v1087
    %v1160 = vunpack.c.h.b16 %v1087
    %v1161 = vunpack.c.l.b16 %v1088
    %v1162 = vunpack.c.h.b16 %v1088
    %v1163 = vunpack.c.l.b16 %v1089
    %v1164 = vunpack.c.h.b16 %v1089
    %v1165 = vunpack.c.l.b16 %v1090
    %v1166 = vunpack.c.h.b16 %v1090
    %v1167 = vunpack.c.l.b16 %v1091
    %v1168 = vunpack.c.h.b16 %v1091
    %v1169 = vunpack.c.l.b16 %v1092
    %v1170 = vunpack.c.h.b16 %v1092
    %v1171 = vunpack.c.l.b16 %v1093
    %v1172 = vunpack.c.h.b16 %v1093
    %v1173 = vunpack.c.l.b16 %v1094
    %v1174 = vunpack.c.h.b16 %v1094
    %v1175 = vunpack.c.l.b16 %v1095
    %v1176 = vunpack.c.h.b16 %v1095
    %v1177 = vunpack.c.l.b16 %v1096
    %v1178 = vunpack.c.h.b16 %v1096
    %v1179 = vunpack.c.l.b16 %v1097
    %v1180 = vunpack.c.h.b16 %v1097
    %v1181 = vunpack.c.l.b16 %v1098
    %v1182 = vunpack.c.h.b16 %v1098
    %v1183 = vunpack.c.l.b16 %v1099
    %v1184 = vunpack.c.h.b16 %v1099
    %v1185 = vunpack.c.l.b16 %v1100
    %v1186 = vunpack.c.h.b16 %v1100
    %v1187 = vunpack.c.l.b16 %v1101
    %v1188 = vpack.c.b16 %v1131, %v1131
    %v1189 = vpack.c.b16 %v1132, %v1132
    %v1190 = vpack.c.b16 %v1133, %v1133
    %v1191 = vpack.c.b16 %v1134, %v1134
    %v1192 = vpack.c.b16 %v1135, %v1135
    %v1193 = vpack.c.b16 %v1136, %v1136
    %v1194 = vpack.c.b16 %v1137, %v1137
    %v1195 = vpack.c.b16 %v1138, %v1138
    %v1196 = vpack.c.b16 %v1139, %v1139
    %v1197 = vpack.c.b16 %v1140, %v1140
    %v1198 = vpack.c.b16 %v1141, %v1141
    %v1199 = vpack.c.b16 %v1142, %v1142
    %v1200 = vpack.c.b16 %v1143, %v1143
    %v1201 = vpack.c.b16 %v1144, %v1144
    %v1202 = vpack.c.b16 %v1145, %v1145
    %v1203 = vpack.c.b16 %v1146, %v1146
    %v1204 = vpack.c.b16 %v1147, %v1147
    %v1205 = vpack.c.b16 %v1148, %v1148
    %v1206 = vpack.c.b16 %v1149, %v1149
    %v1207 = vpack.c.b16 %v1150, %v1150
    %v1208 = vpack.c.b16 %v1151, %v1151
    %v1209 = vpack.c.b16 %v1152, %v1152
    %v1210 = vpack.c.b16 %v1153, %v1153
    %v1211 = vpack.c.b16 %v1154, %v1154
    %v1212 = vpack.c.b16 %v1155, %v1155
    %v1213 = vpack.c.b16 %v1156, %v1156
    %v1214 = vpack.c.b16 %v1157, %v1157
    %v1215 = vpack.c.b16 %v1158, %v1158
    %v1216 = vpack.c.b16 %v1159, %v1159
    %v1217 = vpack.c.b16 %v1160, %v1160
    %v1218 = vpack.c.b16 %v1161, %v1161
    %v1219 = vpack.c.b16 %v1162, %v1162
    %v1220 = vpack.c.b16 %v1163, %v1163
    %v1221 = vpack.c.b16 %v1164, %v1164
    %v1222 = vpack.c.b16 %v1165, %v1165
    %v1223 = vpack.c.b16 %v1166, %v1166
    %v1224 = vpack.c.b16 %v1167, %v1167
    %v1225 = vpack.c.b16 %v1168, %v1168
    %v1226 = vpack.c.b16 %v1169, %v1169
    %v1227 = vpack.c.b16 %v1170, %v1170
    %v1228 = vpack.c.b16 %v1171, %v1171
    %v1229 = vpack.c.b16 %v1172, %v1172
    %v1230 = vpack.c.b16 %v1173, %v1173
    %v1231 = vpack.c.b16 %v1174, %v1174
    %v1232 = vpack.c.b16 %v1175, %v1175
    %v1233 = vpack.c.b16 %v1176, %v1176
    %v1234 = vpack.c.b16 %v1177, %v1177
    %v1235 = vpack.c.b16 %v1178, %v1178
    %v1236 = vpack.c.b16 %v1179, %v1179
    %v1237 = vpack.c.b16 %v1180, %v1180
    %v1238 = vpack.c.b16 %v1181, %v1181
    %v1239 = vpack.c.b16 %v1182, %v1182
    %v1240 = vpack.c.b16 %v1183, %v1183
    %v1241 = vpack.c.b16 %v1184, %v1184
    %v1242 = vpack.c.b16 %v1185, %v1185
    %v1243 = vpack.c.b16 %v1186, %v1186
    %v1244 = vpack.c.b16 %v1187, %v1187
    %vm1302 = vcmask 60416
    %1303 = vst.msk [vmem:[%s4] sm:$0xf] %vm1302, %v1188
    %1304 = vst.msk [vmem:[%s4 + $0x4] sm:$0xf] %vm1302, %v1189
    %1305 = vst.msk [vmem:[%s4 + $0x8] sm:$0xf] %vm1302, %v1190
    %1306 = vst.msk [vmem:[%s4 + $0xc] sm:$0xf] %vm1302, %v1191
    %1307 = vst.msk [vmem:[%s4 + $0x10] sm:$0xf] %vm1302, %v1192
    %1308 = vst.msk [vmem:[%s4 + $0x14] sm:$0xf] %vm1302, %v1193
    %1309 = vst.msk [vmem:[%s4 + $0x18] sm:$0xf] %vm1302, %v1194
    %1310 = vst.msk [vmem:[%s4 + $0x1c] sm:$0xf] %vm1302, %v1195
    %1311 = vst.msk [vmem:[%s4 + $0x20] sm:$0xf] %vm1302, %v1196
    %1312 = vst.msk [vmem:[%s4 + $0x24] sm:$0xf] %vm1302, %v1197
    %1313 = vst.msk [vmem:[%s4 + $0x28] sm:$0xf] %vm1302, %v1198
    %1314 = vst.msk [vmem:[%s4 + $0x2c] sm:$0xf] %vm1302, %v1199
    %1315 = vst.msk [vmem:[%s4 + $0x30] sm:$0xf] %vm1302, %v1200
    %1316 = vst.msk [vmem:[%s4 + $0x34] sm:$0xf] %vm1302, %v1201
    %1317 = vst.msk [vmem:[%s4 + $0x38] sm:$0xf] %vm1302, %v1202
    %1318 = vst.msk [vmem:[%s4 + $0x3c] sm:$0xf] %vm1302, %v1203
    %1319 = vst.msk [vmem:[%s4 + $0x40] sm:$0xf] %vm1302, %v1204
    %1320 = vst.msk [vmem:[%s4 + $0x44] sm:$0xf] %vm1302, %v1205
    %1321 = vst.msk [vmem:[%s4 + $0x48] sm:$0xf] %vm1302, %v1206
    %1322 = vst.msk [vmem:[%s4 + $0x4c] sm:$0xf] %vm1302, %v1207
    %1323 = vst.msk [vmem:[%s4 + $0x50] sm:$0xf] %vm1302, %v1208
    %1324 = vst.msk [vmem:[%s4 + $0x54] sm:$0xf] %vm1302, %v1209
    %1325 = vst.msk [vmem:[%s4 + $0x58] sm:$0xf] %vm1302, %v1210
    %1326 = vst.msk [vmem:[%s4 + $0x5c] sm:$0xf] %vm1302, %v1211
    %1327 = vst.msk [vmem:[%s4 + $0x60] sm:$0xf] %vm1302, %v1212
    %1328 = vst.msk [vmem:[%s4 + $0x64] sm:$0xf] %vm1302, %v1213
    %1329 = vst.msk [vmem:[%s4 + $0x68] sm:$0xf] %vm1302, %v1214
    %1330 = vst.msk [vmem:[%s4 + $0x6c] sm:$0xf] %vm1302, %v1215
    %1331 = vst.msk [vmem:[%s4 + $0x70] sm:$0xf] %vm1302, %v1216
    %1332 = vst.msk [vmem:[%s4 + $0x74] sm:$0xf] %vm1302, %v1217
    %1333 = vst.msk [vmem:[%s4 + $0x78] sm:$0xf] %vm1302, %v1218
    %1334 = vst.msk [vmem:[%s4 + $0x7c] sm:$0xf] %vm1302, %v1219
    %1335 = vst.msk [vmem:[%s4 + $0x80] sm:$0xf] %vm1302, %v1220
    %1336 = vst.msk [vmem:[%s4 + $0x84] sm:$0xf] %vm1302, %v1221
    %1337 = vst.msk [vmem:[%s4 + $0x88] sm:$0xf] %vm1302, %v1222
    %1338 = vst.msk [vmem:[%s4 + $0x8c] sm:$0xf] %vm1302, %v1223
    %1339 = vst.msk [vmem:[%s4 + $0x90] sm:$0xf] %vm1302, %v1224
    %1340 = vst.msk [vmem:[%s4 + $0x94] sm:$0xf] %vm1302, %v1225
    %1341 = vst.msk [vmem:[%s4 + $0x98] sm:$0xf] %vm1302, %v1226
    %1342 = vst.msk [vmem:[%s4 + $0x9c] sm:$0xf] %vm1302, %v1227
    %1343 = vst.msk [vmem:[%s4 + $0xa0] sm:$0xf] %vm1302, %v1228
    %1344 = vst.msk [vmem:[%s4 + $0xa4] sm:$0xf] %vm1302, %v1229
    %1345 = vst.msk [vmem:[%s4 + $0xa8] sm:$0xf] %vm1302, %v1230
    %1346 = vst.msk [vmem:[%s4 + $0xac] sm:$0xf] %vm1302, %v1231
    %1347 = vst.msk [vmem:[%s4 + $0xb0] sm:$0xf] %vm1302, %v1232
    %1348 = vst.msk [vmem:[%s4 + $0xb4] sm:$0xf] %vm1302, %v1233
    %1349 = vst.msk [vmem:[%s4 + $0xb8] sm:$0xf] %vm1302, %v1234
    %1350 = vst.msk [vmem:[%s4 + $0xbc] sm:$0xf] %vm1302, %v1235
    %1351 = vst.msk [vmem:[%s4 + $0xc0] sm:$0xf] %vm1302, %v1236
    %1352 = vst.msk [vmem:[%s4 + $0xc4] sm:$0xf] %vm1302, %v1237
    %1353 = vst.msk [vmem:[%s4 + $0xc8] sm:$0xf] %vm1302, %v1238
    %1354 = vst.msk [vmem:[%s4 + $0xcc] sm:$0xf] %vm1302, %v1239
    %1355 = vst.msk [vmem:[%s4 + $0xd0] sm:$0xf] %vm1302, %v1240
    %1356 = vst.msk [vmem:[%s4 + $0xd4] sm:$0xf] %vm1302, %v1241
    %1357 = vst.msk [vmem:[%s4 + $0xd8] sm:$0xf] %vm1302, %v1242
    %1358 = vst.msk [vmem:[%s4 + $0xdc] sm:$0xf] %vm1302, %v1243
    %vm1359 = vcmask 57344
    %1360 = vst.msk [vmem:[%s4 + $0xe0] sm:$0x1] %vm1359, %v1244
  $region25: #{_lambda_.13} parent=0 // pred_fallthru
    _
  // Predicated region
  $region26: #{_lambda_.13} parent=0 // pred_check
    _
  $region27: #{_lambda_.13} parent=0 // pred_check_branch
    %1362 = sbr.rel (0) target = $region29
  $region28: #{_lambda_.13} parent=0 // pred_region
    _
  $region29: #{_lambda_.13} parent=0 // pred_fallthru
    _
  // Predicated region
  $region30: #{_lambda_.13} parent=0 // pred_check
    _
  $region31: #{_lambda_.13} parent=0 // pred_check_branch
    %1364 = sbr.rel (0) target = $region33
  $region32: #{_lambda_.13} parent=0 // pred_region
    _
  $region33: #{_lambda_.13} parent=0 // pred_fallthru
    _

// kernel: _lambda_.14
$region0: #{_lambda_.14}
  #allocation0 [shape = 'u32[]', space=smem, size = 0x4, offset = 0x4, fixed_abs, tag = 'smem constant byte address 0x4 - core index']
  #allocation1 [shape = 'u32[144,128]{1,0:T(1,128)}', space=vmem, size = 0x12000, scoped, tag = 'internal scratch']
  #allocation2 [shape = 'f32[128,16]{1,0:T(8,128)}', space=vmem, size = 0x10000, scoped, tag = 'scratch operand']
  %s0 = inlined_call_operand.vmem [shape: bf16[128,8], index: 0, kind: input, shape index: {}]
  %s1 = inlined_call_operand.vmem [shape: bf16[8,16], index: 1, kind: input, shape index: {}]
  %s2 = inlined_call_operand.vmem [shape: f32[1,16], index: 2, kind: input, shape index: {}]
  %s3 = inlined_call_operand.vmem [shape: f32[1,16], index: 3, kind: input, shape index: {}]
  %s4 = inlined_call_operand.vmem [shape: bf16[128,16], index: 4, kind: output, shape index: {}]
  %s5 = sld [smem:[#allocation0]]
  $region34: #{_lambda_.14} parent=0
    _
  %s7 = ssub.s32 1, %s5
  %s8 = scalar_select 0, %s7, %s5
  // Predicated region
  $region2: #{_lambda_.14} parent=0 // pred_check
    _
  $region3: #{_lambda_.14} parent=0 // pred_check_branch
    %10 = sbr.rel (0) target = $region5
  $region4: #{_lambda_.14} parent=0 // pred_region
    _
  $region5: #{_lambda_.14} parent=0 // pred_fallthru
    _
  // Predicated region
  $region6: #{_lambda_.14} parent=0 // pred_check
    _
  $region7: #{_lambda_.14} parent=0 // pred_check_branch
    %12 = sbr.rel (0) target = $region9
  $region8: #{_lambda_.14} parent=0 // pred_region
    _
  $region9: #{_lambda_.14} parent=0 // pred_fallthru
    _
  // Predicated region
  $region10: #{_lambda_.14} parent=0 // pred_check
    _
  $region11: #{_lambda_.14} parent=0 // pred_check_branch
    %14 = sbr.rel (0) target = $region13
  $region12: #{_lambda_.14} parent=0 // pred_region
    _
  $region13: #{_lambda_.14} parent=0 // pred_fallthru
    _
  // Predicated region
  $region14: #{_lambda_.14} parent=0 // pred_check
    _
  $region15: #{_lambda_.14} parent=0 // pred_check_branch
    %16 = sbr.rel (0) target = $region17
  $region16: #{_lambda_.14} parent=0 // pred_region
    _
  $region17: #{_lambda_.14} parent=0 // pred_fallthru
    _
  %p18 = scmp.eq.s32.totalorder 0, 0
  // Predicated region
  $region18: #{_lambda_.14} parent=0 // pred_check
    %p19 = pneg %p18
  $region19: #{_lambda_.14} parent=0 // pred_check_branch
    %21 = sbr.rel (%p19) target = $region21
  $region20: #{_lambda_.14} parent=0 // pred_region
    %vm22 = vcmask 130048
    %23 = vst.msk [vmem:[#allocation2] sm:$0xff] %vm22, 0.0
    %24 = vst.msk [vmem:[#allocation2 + $0x8] sm:$0xff] %vm22, 0.0
    %25 = vst.msk [vmem:[#allocation2 + $0x10] sm:$0xff] %vm22, 0.0
    %26 = vst.msk [vmem:[#allocation2 + $0x18] sm:$0xff] %vm22, 0.0
    %27 = vst.msk [vmem:[#allocation2 + $0x20] sm:$0xff] %vm22, 0.0
    %28 = vst.msk [vmem:[#allocation2 + $0x28] sm:$0xff] %vm22, 0.0
    %29 = vst.msk [vmem:[#allocation2 + $0x30] sm:$0xff] %vm22, 0.0
    %30 = vst.msk [vmem:[#allocation2 + $0x38] sm:$0xff] %vm22, 0.0
    %31 = vst.msk [vmem:[#allocation2 + $0x40] sm:$0xff] %vm22, 0.0
    %32 = vst.msk [vmem:[#allocation2 + $0x48] sm:$0xff] %vm22, 0.0
    %33 = vst.msk [vmem:[#allocation2 + $0x50] sm:$0xff] %vm22, 0.0
    %34 = vst.msk [vmem:[#allocation2 + $0x58] sm:$0xff] %vm22, 0.0
    %35 = vst.msk [vmem:[#allocation2 + $0x60] sm:$0xff] %vm22, 0.0
    %36 = vst.msk [vmem:[#allocation2 + $0x68] sm:$0xff] %vm22, 0.0
    %37 = vst.msk [vmem:[#allocation2 + $0x70] sm:$0xff] %vm22, 0.0
    %38 = vst.msk [vmem:[#allocation2 + $0x78] sm:$0xff] %vm22, 0.0
  $region21: #{_lambda_.14} parent=0 // pred_fallthru
    _
  %v39 = vld [vmem:[#allocation2] sm:$0xff]
  %v40 = vld [vmem:[#allocation2 + $0x8] sm:$0xff]
  %v41 = vld [vmem:[#allocation2 + $0x10] sm:$0xff]
  %v42 = vld [vmem:[#allocation2 + $0x18] sm:$0xff]
  %v43 = vld [vmem:[#allocation2 + $0x20] sm:$0xff]
  %v44 = vld [vmem:[#allocation2 + $0x28] sm:$0xff]
  %v45 = vld [vmem:[#allocation2 + $0x30] sm:$0xff]
  %v46 = vld [vmem:[#allocation2 + $0x38] sm:$0xff]
  %v47 = vld [vmem:[#allocation2 + $0x40] sm:$0xff]
  %v48 = vld [vmem:[#allocation2 + $0x48] sm:$0xff]
  %v49 = vld [vmem:[#allocation2 + $0x50] sm:$0xff]
  %v50 = vld [vmem:[#allocation2 + $0x58] sm:$0xff]
  %v51 = vld [vmem:[#allocation2 + $0x60] sm:$0xff]
  %v52 = vld [vmem:[#allocation2 + $0x68] sm:$0xff]
  %v53 = vld [vmem:[#allocation2 + $0x70] sm:$0xff]
  %v54 = vld [vmem:[#allocation2 + $0x78] sm:$0xff]
  %v55 = vld [vmem:[%s0] sm:$0xf]
  %v56 = vld [vmem:[%s0 + $0x4] sm:$0xf]
  %v57 = vld [vmem:[%s0 + $0x8] sm:$0xf]
  %v58 = vld [vmem:[%s0 + $0xc] sm:$0xf]
  %v59 = vld [vmem:[%s0 + $0x10] sm:$0xf]
  %v60 = vld [vmem:[%s0 + $0x14] sm:$0xf]
  %v61 = vld [vmem:[%s0 + $0x18] sm:$0xf]
  %v62 = vld [vmem:[%s0 + $0x1c] sm:$0xf]
  %v63 = vld [vmem:[%s0 + $0x20] sm:$0xf]
  %v64 = vld [vmem:[%s0 + $0x24] sm:$0xf]
  %v65 = vld [vmem:[%s0 + $0x28] sm:$0xf]
  %v66 = vld [vmem:[%s0 + $0x2c] sm:$0xf]
  %v67 = vld [vmem:[%s0 + $0x30] sm:$0xf]
  %v68 = vld [vmem:[%s0 + $0x34] sm:$0xf]
  %v69 = vld [vmem:[%s0 + $0x38] sm:$0xf]
  %v70 = vld [vmem:[%s0 + $0x3c] sm:$0xf]
  %v71 = vld [vmem:[%s1] sm:$0xf]
  %v88 = vunpack.c.l.b16 %v55
  %v89 = vunpack.c.l.b16 %v56
  %v90 = vunpack.c.l.b16 %v57
  %v91 = vunpack.c.l.b16 %v58
  %v92 = vunpack.c.l.b16 %v59
  %v93 = vunpack.c.l.b16 %v60
  %v94 = vunpack.c.l.b16 %v61
  %v95 = vunpack.c.l.b16 %v62
  %v96 = vunpack.c.l.b16 %v63
  %v97 = vunpack.c.l.b16 %v64
  %v98 = vunpack.c.l.b16 %v65
  %v99 = vunpack.c.l.b16 %v66
  %v100 = vunpack.c.l.b16 %v67
  %v101 = vunpack.c.l.b16 %v68
  %v102 = vunpack.c.l.b16 %v69
  %v103 = vunpack.c.l.b16 %v70
  %v104 = vpack.c.b16 %v89, %v88
  %v105 = vpack.c.b16 %v91, %v90
  %v106 = vpack.c.b16 %v93, %v92
  %v107 = vpack.c.b16 %v95, %v94
  %v108 = vpack.c.b16 %v97, %v96
  %v109 = vpack.c.b16 %v99, %v98
  %v110 = vpack.c.b16 %v101, %v100
  %v111 = vpack.c.b16 %v103, %v102
  %vm112 = vcmask 64512
  %v114 = vsel %vm112, %v104, 0
  %v117 = vsel %vm112, %v105, 0
  %v120 = vsel %vm112, %v106, 0
  %v123 = vsel %vm112, %v107, 0
  %v126 = vsel %vm112, %v108, 0
  %v129 = vsel %vm112, %v109, 0
  %v132 = vsel %vm112, %v110, 0
  %v135 = vsel %vm112, %v111, 0
  %vm137 = vcmask 1043456
  %v139 = vsel %vm137, %v71, 0
  %141 = vmatprep.subr.bf16.mxu0 0
  %142 = vmatpush1.bf16.msra.mxu0 %v139
  %143 = vmatprep.subr.bf16.mxu0 0
  %144 = vmatpush1.bf16.msra.mxu0 0
  %145 = vmatprep.subr.bf16.mxu0 0
  %146 = vmatpush1.bf16.msra.mxu0 0
  %147 = vmatprep.subr.bf16.mxu0 0
  %148 = vmatpush1.bf16.msra.mxu0 0
  %149 = vmatprep.subr.bf16.mxu0 0
  %150 = vmatpush1.bf16.msra.mxu0 0
  %151 = vmatprep.subr.bf16.mxu0 0
  %152 = vmatpush1.bf16.msra.mxu0 0
  %153 = vmatprep.subr.bf16.mxu0 0
  %154 = vmatpush1.bf16.msra.mxu0 0
  %155 = vmatprep.subr.bf16.mxu0 0
  %156 = vmatpush1.bf16.msra.mxu0 0
  %157 = vmatprep.subr.bf16.mxu0 0
  %158 = vmatpush1.bf16.msra.mxu0 0
  %159 = vmatprep.subr.bf16.mxu0 0
  %160 = vmatpush1.bf16.msra.mxu0 0
  %161 = vmatprep.subr.bf16.mxu0 0
  %162 = vmatpush1.bf16.msra.mxu0 0
  %163 = vmatprep.subr.bf16.mxu0 0
  %164 = vmatpush1.bf16.msra.mxu0 0
  %165 = vmatprep.subr.bf16.mxu0 0
  %166 = vmatpush1.bf16.msra.mxu0 0
  %167 = vmatprep.subr.bf16.mxu0 0
  %168 = vmatpush1.bf16.msra.mxu0 0
  %169 = vmatprep.subr.bf16.mxu0 0
  %170 = vmatpush1.bf16.msra.mxu0 0
  %171 = vmatprep.subr.bf16.mxu0 0
  %172 = vmatpush1.bf16.msra.mxu0 0
  %173 = vmatprep.mubr.bf16.mxu0 0
  %174 = vmatmul.mubr.bf16.gmra.mrb[0].mxu0 %v114
  %v175 = vpop.f32.mrb[0].mxu0
  %v176 = vadd.f32 0.0, %v175
  %v177 = vpop.f32.mrb[0].mxu0
  %v178 = vpop.f32.mrb[0].mxu0
  %v179 = vadd.f32 0.0, %v178
  %v180 = vpop.f32.mrb[0].mxu0
  %181 = vmatprep.mubr.bf16.mxu0 0
  %182 = vmatmul.mubr.bf16.gmra.mrb[0].mxu0 %v117
  %v183 = vpop.f32.mrb[0].mxu0
  %v184 = vadd.f32 0.0, %v183
  %v185 = vpop.f32.mrb[0].mxu0
  %v186 = vpop.f32.mrb[0].mxu0
  %v187 = vadd.f32 0.0, %v186
  %v188 = vpop.f32.mrb[0].mxu0
  %189 = vmatprep.mubr.bf16.mxu0 0
  %190 = vmatmul.mubr.bf16.gmra.mrb[0].mxu0 %v120
  %v191 = vpop.f32.mrb[0].mxu0
  %v192 = vadd.f32 0.0, %v191
  %v193 = vpop.f32.mrb[0].mxu0
  %v194 = vpop.f32.mrb[0].mxu0
  %v195 = vadd.f32 0.0, %v194
  %v196 = vpop.f32.mrb[0].mxu0
  %197 = vmatprep.mubr.bf16.mxu0 0
  %198 = vmatmul.mubr.bf16.gmra.mrb[0].mxu0 %v123
  %v199 = vpop.f32.mrb[0].mxu0
  %v200 = vadd.f32 0.0, %v199
  %v201 = vpop.f32.mrb[0].mxu0
  %v202 = vpop.f32.mrb[0].mxu0
  %v203 = vadd.f32 0.0, %v202
  %v204 = vpop.f32.mrb[0].mxu0
  %205 = vmatprep.mubr.bf16.mxu0 0
  %206 = vmatmul.mubr.bf16.gmra.mrb[0].mxu0 %v126
  %v207 = vpop.f32.mrb[0].mxu0
  %v208 = vadd.f32 0.0, %v207
  %v209 = vpop.f32.mrb[0].mxu0
  %v210 = vpop.f32.mrb[0].mxu0
  %v211 = vadd.f32 0.0, %v210
  %v212 = vpop.f32.mrb[0].mxu0
  %213 = vmatprep.mubr.bf16.mxu0 0
  %214 = vmatmul.mubr.bf16.gmra.mrb[0].mxu0 %v129
  %v215 = vpop.f32.mrb[0].mxu0
  %v216 = vadd.f32 0.0, %v215
  %v217 = vpop.f32.mrb[0].mxu0
  %v218 = vpop.f32.mrb[0].mxu0
  %v219 = vadd.f32 0.0, %v218
  %v220 = vpop.f32.mrb[0].mxu0
  %221 = vmatprep.mubr.bf16.mxu0 0
  %222 = vmatmul.mubr.bf16.gmra.mrb[0].mxu0 %v132
  %v223 = vpop.f32.mrb[0].mxu0
  %v224 = vadd.f32 0.0, %v223
  %v225 = vpop.f32.mrb[0].mxu0
  %v226 = vpop.f32.mrb[0].mxu0
  %v227 = vadd.f32 0.0, %v226
  %v228 = vpop.f32.mrb[0].mxu0
  %229 = vmatprep.mubr.bf16.mxu0 0
  %230 = vmatmul.mubr.bf16.gmra.mrb[0].mxu0 %v135
  %v231 = vpop.f32.mrb[0].mxu0
  %v232 = vadd.f32 0.0, %v231
  %v233 = vpop.f32.mrb[0].mxu0
  %v234 = vpop.f32.mrb[0].mxu0
  %v235 = vadd.f32 0.0, %v234
  %v236 = vpop.f32.mrb[0].mxu0
  %237 = vdwg.mxu0
  %v238 = vadd.f32 %v39, %v176
  %v239 = vadd.f32 %v40, %v179
  %v240 = vadd.f32 %v41, %v184
  %v241 = vadd.f32 %v42, %v187
  %v242 = vadd.f32 %v43, %v192
  %v243 = vadd.f32 %v44, %v195
  %v244 = vadd.f32 %v45, %v200
  %v245 = vadd.f32 %v46, %v203
  %v246 = vadd.f32 %v47, %v208
  %v247 = vadd.f32 %v48, %v211
  %v248 = vadd.f32 %v49, %v216
  %v249 = vadd.f32 %v50, %v219
  %v250 = vadd.f32 %v51, %v224
  %v251 = vadd.f32 %v52, %v227
  %v252 = vadd.f32 %v53, %v232
  %v253 = vadd.f32 %v54, %v235
  %vm254 = vcmask 130048
  %255 = vst.msk [vmem:[#allocation2] sm:$0xff] %vm254, %v238
  %256 = vst.msk [vmem:[#allocation2 + $0x8] sm:$0xff] %vm254, %v239
  %257 = vst.msk [vmem:[#allocation2 + $0x10] sm:$0xff] %vm254, %v240
  %258 = vst.msk [vmem:[#allocation2 + $0x18] sm:$0xff] %vm254, %v241
  %259 = vst.msk [vmem:[#allocation2 + $0x20] sm:$0xff] %vm254, %v242
  %260 = vst.msk [vmem:[#allocation2 + $0x28] sm:$0xff] %vm254, %v243
  %261 = vst.msk [vmem:[#allocation2 + $0x30] sm:$0xff] %vm254, %v244
  %262 = vst.msk [vmem:[#allocation2 + $0x38] sm:$0xff] %vm254, %v245
  %263 = vst.msk [vmem:[#allocation2 + $0x40] sm:$0xff] %vm254, %v246
  %264 = vst.msk [vmem:[#allocation2 + $0x48] sm:$0xff] %vm254, %v247
  %265 = vst.msk [vmem:[#allocation2 + $0x50] sm:$0xff] %vm254, %v248
  %266 = vst.msk [vmem:[#allocation2 + $0x58] sm:$0xff] %vm254, %v249
  %267 = vst.msk [vmem:[#allocation2 + $0x60] sm:$0xff] %vm254, %v250
  %268 = vst.msk [vmem:[#allocation2 + $0x68] sm:$0xff] %vm254, %v251
  %269 = vst.msk [vmem:[#allocation2 + $0x70] sm:$0xff] %vm254, %v252
  %270 = vst.msk [vmem:[#allocation2 + $0x78] sm:$0xff] %vm254, %v253
  // Predicated region
  $region22: #{_lambda_.14} parent=0 // pred_check
    %p271 = pneg %p18
  $region23: #{_lambda_.14} parent=0 // pred_check_branch
    %273 = sbr.rel (%p271) target = $region25
  $region24: #{_lambda_.14} parent=0 // pred_region
    %v274 = vld [vmem:[#allocation2] sm:$0xff]
    %v275 = vld [vmem:[#allocation2 + $0x8] sm:$0xff]
    %v276 = vld [vmem:[#allocation2 + $0x10] sm:$0xff]
    %v277 = vld [vmem:[#allocation2 + $0x18] sm:$0xff]
    %v278 = vld [vmem:[#allocation2 + $0x20] sm:$0xff]
    %v279 = vld [vmem:[#allocation2 + $0x28] sm:$0xff]
    %v280 = vld [vmem:[#allocation2 + $0x30] sm:$0xff]
    %v281 = vld [vmem:[#allocation2 + $0x38] sm:$0xff]
    %v282 = vld [vmem:[#allocation2 + $0x40] sm:$0xff]
    %v283 = vld [vmem:[#allocation2 + $0x48] sm:$0xff]
    %v284 = vld [vmem:[#allocation2 + $0x50] sm:$0xff]
    %v285 = vld [vmem:[#allocation2 + $0x58] sm:$0xff]
    %v286 = vld [vmem:[#allocation2 + $0x60] sm:$0xff]
    %v287 = vld [vmem:[#allocation2 + $0x68] sm:$0xff]
    %v288 = vld [vmem:[#allocation2 + $0x70] sm:$0xff]
    %v289 = vld [vmem:[#allocation2 + $0x78] sm:$0xff]
    %v290 = vld [vmem:[%s2] sm:$0x1]
    %v292 = vlaneseq
    %v293 = vshrl.u32 %v292, 7
    %v294 = vsub.s32 0, %v293
    %v295 = vrot.slane %v290, %v294
    %v297 = vmul.f32 %v274, %v295
    %v298 = vmul.f32 %v275, %v295
    %v299 = vmul.f32 %v276, %v295
    %v300 = vmul.f32 %v277, %v295
    %v301 = vmul.f32 %v278, %v295
    %v302 = vmul.f32 %v279, %v295
    %v303 = vmul.f32 %v280, %v295
    %v304 = vmul.f32 %v281, %v295
    %v305 = vmul.f32 %v282, %v295
    %v306 = vmul.f32 %v283, %v295
    %v307 = vmul.f32 %v284, %v295
    %v308 = vmul.f32 %v285, %v295
    %v309 = vmul.f32 %v286, %v295
    %v310 = vmul.f32 %v287, %v295
    %v311 = vmul.f32 %v288, %v295
    %v312 = vmul.f32 %v289, %v295
    %v313 = vld [vmem:[%s3] sm:$0x1]
    %v315 = vlaneseq
    %v316 = vshrl.u32 %v315, 7
    %v317 = vsub.s32 0, %v316
    %v318 = vrot.slane %v313, %v317
    %v320 = vadd.f32 %v297, %v318
    %v321 = vadd.f32 %v298, %v318
    %v322 = vadd.f32 %v299, %v318
    %v323 = vadd.f32 %v300, %v318
    %v324 = vadd.f32 %v301, %v318
    %v325 = vadd.f32 %v302, %v318
    %v326 = vadd.f32 %v303, %v318
    %v327 = vadd.f32 %v304, %v318
    %v328 = vadd.f32 %v305, %v318
    %v329 = vadd.f32 %v306, %v318
    %v330 = vadd.f32 %v307, %v318
    %v331 = vadd.f32 %v308, %v318
    %v332 = vadd.f32 %v309, %v318
    %v333 = vadd.f32 %v310, %v318
    %v334 = vadd.f32 %v311, %v318
    %v335 = vadd.f32 %v312, %v318
    %v336 = vpack.c.bf16 %v321, %v320
    %v337 = vpack.c.bf16 %v323, %v322
    %v338 = vpack.c.bf16 %v325, %v324
    %v339 = vpack.c.bf16 %v327, %v326
    %v340 = vpack.c.bf16 %v329, %v328
    %v341 = vpack.c.bf16 %v331, %v330
    %v342 = vpack.c.bf16 %v333, %v332
    %v343 = vpack.c.bf16 %v335, %v334
    %v352 = vunpack.c.l.b16 %v336
    %v353 = vunpack.c.h.b16 %v336
    %v354 = vunpack.c.l.b16 %v337
    %v355 = vunpack.c.h.b16 %v337
    %v356 = vunpack.c.l.b16 %v338
    %v357 = vunpack.c.h.b16 %v338
    %v358 = vunpack.c.l.b16 %v339
    %v359 = vunpack.c.h.b16 %v339
    %v360 = vunpack.c.l.b16 %v340
    %v361 = vunpack.c.h.b16 %v340
    %v362 = vunpack.c.l.b16 %v341
    %v363 = vunpack.c.h.b16 %v341
    %v364 = vunpack.c.l.b16 %v342
    %v365 = vunpack.c.h.b16 %v342
    %v366 = vunpack.c.l.b16 %v343
    %v367 = vunpack.c.h.b16 %v343
    %v368 = vpack.c.b16 %v352, %v352
    %v369 = vpack.c.b16 %v353, %v353
    %v370 = vpack.c.b16 %v354, %v354
    %v371 = vpack.c.b16 %v355, %v355
    %v372 = vpack.c.b16 %v356, %v356
    %v373 = vpack.c.b16 %v357, %v357
    %v374 = vpack.c.b16 %v358, %v358
    %v375 = vpack.c.b16 %v359, %v359
    %v376 = vpack.c.b16 %v360, %v360
    %v377 = vpack.c.b16 %v361, %v361
    %v378 = vpack.c.b16 %v362, %v362
    %v379 = vpack.c.b16 %v363, %v363
    %v380 = vpack.c.b16 %v364, %v364
    %v381 = vpack.c.b16 %v365, %v365
    %v382 = vpack.c.b16 %v366, %v366
    %v383 = vpack.c.b16 %v367, %v367
    %vm400 = vcmask 125952
    %401 = vst.msk [vmem:[%s4] sm:$0xf] %vm400, %v368
    %402 = vst.msk [vmem:[%s4 + $0x4] sm:$0xf] %vm400, %v369
    %403 = vst.msk [vmem:[%s4 + $0x8] sm:$0xf] %vm400, %v370
    %404 = vst.msk [vmem:[%s4 + $0xc] sm:$0xf] %vm400, %v371
    %405 = vst.msk [vmem:[%s4 + $0x10] sm:$0xf] %vm400, %v372
    %406 = vst.msk [vmem:[%s4 + $0x14] sm:$0xf] %vm400, %v373
    %407 = vst.msk [vmem:[%s4 + $0x18] sm:$0xf] %vm400, %v374
    %408 = vst.msk [vmem:[%s4 + $0x1c] sm:$0xf] %vm400, %v375
    %409 = vst.msk [vmem:[%s4 + $0x20] sm:$0xf] %vm400, %v376
    %410 = vst.msk [vmem:[%s4 + $0x24] sm:$0xf] %vm400, %v377
    %411 = vst.msk [vmem:[%s4 + $0x28] sm:$0xf] %vm400, %v378
    %412 = vst.msk [vmem:[%s4 + $0x2c] sm:$0xf] %vm400, %v379
    %413 = vst.msk [vmem:[%s4 + $0x30] sm:$0xf] %vm400, %v380
    %414 = vst.msk [vmem:[%s4 + $0x34] sm:$0xf] %vm400, %v381
    %415 = vst.msk [vmem:[%s4 + $0x38] sm:$0xf] %vm400, %v382
    %416 = vst.msk [vmem:[%s4 + $0x3c] sm:$0xf] %vm400, %v383
  $region25: #{_lambda_.14} parent=0 // pred_fallthru
    _
  // Predicated region
  $region26: #{_lambda_.14} parent=0 // pred_check
    _
  $region27: #{_lambda_.14} parent=0 // pred_check_branch
    %418 = sbr.rel (0) target = $region29
  $region28: #{_lambda_.14} parent=0 // pred_region
    _
  $region29: #{_lambda_.14} parent=0 // pred_fallthru
    _
  // Predicated region
  $region30: #{_lambda_.14} parent=0 // pred_check
    _
  $region31: #{_lambda_.14} parent=0 // pred_check_branch
    %420 = sbr.rel (0) target = $region33
  $region32: #{_lambda_.14} parent=0 // pred_region
    _
  $region33: #{_lambda_.14} parent=0 // pred_fallthru
    _

// kernel: _lambda_.15
$region0: #{_lambda_.15}
  #allocation0 [shape = 'u32[]', space=smem, size = 0x4, offset = 0x4, fixed_abs, tag = 'smem constant byte address 0x4 - core index']
  #allocation1 [shape = 'u32[144,128]{1,0:T(1,128)}', space=vmem, size = 0x12000, scoped, tag = 'internal scratch']
  #allocation2 [shape = 'f32[128,16]{1,0:T(8,128)}', space=vmem, size = 0x10000, scoped, tag = 'scratch operand']
  %s0 = inlined_call_operand.vmem [shape: bf16[128,72], index: 0, kind: input, shape index: {}]
  %s1 = inlined_call_operand.vmem [shape: bf16[72,16], index: 1, kind: input, shape index: {}]
  %s2 = inlined_call_operand.vmem [shape: f32[1,16], index: 2, kind: input, shape index: {}]
  %s3 = inlined_call_operand.vmem [shape: f32[1,16], index: 3, kind: input, shape index: {}]
  %s4 = inlined_call_operand.vmem [shape: bf16[128,16], index: 4, kind: output, shape index: {}]
  %s5 = sld [smem:[#allocation0]]
  $region34: #{_lambda_.15} parent=0
    _
  %s7 = ssub.s32 1, %s5
  %s8 = scalar_select 0, %s7, %s5
  // Predicated region
  $region2: #{_lambda_.15} parent=0 // pred_check
    _
  $region3: #{_lambda_.15} parent=0 // pred_check_branch
    %10 = sbr.rel (0) target = $region5
  $region4: #{_lambda_.15} parent=0 // pred_region
    _
  $region5: #{_lambda_.15} parent=0 // pred_fallthru
    _
  // Predicated region
  $region6: #{_lambda_.15} parent=0 // pred_check
    _
  $region7: #{_lambda_.15} parent=0 // pred_check_branch
    %12 = sbr.rel (0) target = $region9
  $region8: #{_lambda_.15} parent=0 // pred_region
    _
  $region9: #{_lambda_.15} parent=0 // pred_fallthru
    _
  // Predicated region
  $region10: #{_lambda_.15} parent=0 // pred_check
    _
  $region11: #{_lambda_.15} parent=0 // pred_check_branch
    %14 = sbr.rel (0) target = $region13
  $region12: #{_lambda_.15} parent=0 // pred_region
    _
  $region13: #{_lambda_.15} parent=0 // pred_fallthru
    _
  // Predicated region
  $region14: #{_lambda_.15} parent=0 // pred_check
    _
  $region15: #{_lambda_.15} parent=0 // pred_check_branch
    %16 = sbr.rel (0) target = $region17
  $region16: #{_lambda_.15} parent=0 // pred_region
    _
  $region17: #{_lambda_.15} parent=0 // pred_fallthru
    _
  %p18 = scmp.eq.s32.totalorder 0, 0
  // Predicated region
  $region18: #{_lambda_.15} parent=0 // pred_check
    %p19 = pneg %p18
  $region19: #{_lambda_.15} parent=0 // pred_check_branch
    %21 = sbr.rel (%p19) target = $region21
  $region20: #{_lambda_.15} parent=0 // pred_region
    %vm22 = vcmask 130048
    %23 = vst.msk [vmem:[#allocation2] sm:$0xff] %vm22, 0.0
    %24 = vst.msk [vmem:[#allocation2 + $0x8] sm:$0xff] %vm22, 0.0
    %25 = vst.msk [vmem:[#allocation2 + $0x10] sm:$0xff] %vm22, 0.0
    %26 = vst.msk [vmem:[#allocation2 + $0x18] sm:$0xff] %vm22, 0.0
    %27 = vst.msk [vmem:[#allocation2 + $0x20] sm:$0xff] %vm22, 0.0
    %28 = vst.msk [vmem:[#allocation2 + $0x28] sm:$0xff] %vm22, 0.0
    %29 = vst.msk [vmem:[#allocation2 + $0x30] sm:$0xff] %vm22, 0.0
    %30 = vst.msk [vmem:[#allocation2 + $0x38] sm:$0xff] %vm22, 0.0
    %31 = vst.msk [vmem:[#allocation2 + $0x40] sm:$0xff] %vm22, 0.0
    %32 = vst.msk [vmem:[#allocation2 + $0x48] sm:$0xff] %vm22, 0.0
    %33 = vst.msk [vmem:[#allocation2 + $0x50] sm:$0xff] %vm22, 0.0
    %34 = vst.msk [vmem:[#allocation2 + $0x58] sm:$0xff] %vm22, 0.0
    %35 = vst.msk [vmem:[#allocation2 + $0x60] sm:$0xff] %vm22, 0.0
    %36 = vst.msk [vmem:[#allocation2 + $0x68] sm:$0xff] %vm22, 0.0
    %37 = vst.msk [vmem:[#allocation2 + $0x70] sm:$0xff] %vm22, 0.0
    %38 = vst.msk [vmem:[#allocation2 + $0x78] sm:$0xff] %vm22, 0.0
  $region21: #{_lambda_.15} parent=0 // pred_fallthru
    _
  %v39 = vld [vmem:[#allocation2] sm:$0xff]
  %v40 = vld [vmem:[#allocation2 + $0x8] sm:$0xff]
  %v41 = vld [vmem:[#allocation2 + $0x10] sm:$0xff]
  %v42 = vld [vmem:[#allocation2 + $0x18] sm:$0xff]
  %v43 = vld [vmem:[#allocation2 + $0x20] sm:$0xff]
  %v44 = vld [vmem:[#allocation2 + $0x28] sm:$0xff]
  %v45 = vld [vmem:[#allocation2 + $0x30] sm:$0xff]
  %v46 = vld [vmem:[#allocation2 + $0x38] sm:$0xff]
  %v47 = vld [vmem:[#allocation2 + $0x40] sm:$0xff]
  %v48 = vld [vmem:[#allocation2 + $0x48] sm:$0xff]
  %v49 = vld [vmem:[#allocation2 + $0x50] sm:$0xff]
  %v50 = vld [vmem:[#allocation2 + $0x58] sm:$0xff]
  %v51 = vld [vmem:[#allocation2 + $0x60] sm:$0xff]
  %v52 = vld [vmem:[#allocation2 + $0x68] sm:$0xff]
  %v53 = vld [vmem:[#allocation2 + $0x70] sm:$0xff]
  %v54 = vld [vmem:[#allocation2 + $0x78] sm:$0xff]
  %v55 = vld [vmem:[%s0] sm:$0xf]
  %v56 = vld [vmem:[%s0 + $0x4] sm:$0xf]
  %v57 = vld [vmem:[%s0 + $0x8] sm:$0xf]
  %v58 = vld [vmem:[%s0 + $0xc] sm:$0xf]
  %v59 = vld [vmem:[%s0 + $0x10] sm:$0xf]
  %v60 = vld [vmem:[%s0 + $0x14] sm:$0xf]
  %v61 = vld [vmem:[%s0 + $0x18] sm:$0xf]
  %v62 = vld [vmem:[%s0 + $0x1c] sm:$0xf]
  %v63 = vld [vmem:[%s0 + $0x20] sm:$0xf]
  %v64 = vld [vmem:[%s0 + $0x24] sm:$0xf]
  %v65 = vld [vmem:[%s0 + $0x28] sm:$0xf]
  %v66 = vld [vmem:[%s0 + $0x2c] sm:$0xf]
  %v67 = vld [vmem:[%s0 + $0x30] sm:$0xf]
  %v68 = vld [vmem:[%s0 + $0x34] sm:$0xf]
  %v69 = vld [vmem:[%s0 + $0x38] sm:$0xf]
  %v70 = vld [vmem:[%s0 + $0x3c] sm:$0xf]
  %v71 = vld [vmem:[%s1] sm:$0xf]
  %v72 = vld [vmem:[%s1 + $0x4] sm:$0xf]
  %v73 = vld [vmem:[%s1 + $0x8] sm:$0xf]
  %v74 = vld [vmem:[%s1 + $0xc] sm:$0xf]
  %v75 = vld [vmem:[%s1 + $0x10] sm:$0xf]
  %v76 = vld [vmem:[%s1 + $0x14] sm:$0xf]
  %v77 = vld [vmem:[%s1 + $0x18] sm:$0xf]
  %v78 = vld [vmem:[%s1 + $0x1c] sm:$0xf]
  %v79 = vld [vmem:[%s1 + $0x20] sm:$0xf]
  %v96 = vunpack.c.l.b16 %v55
  %v97 = vunpack.c.l.b16 %v56
  %v98 = vunpack.c.l.b16 %v57
  %v99 = vunpack.c.l.b16 %v58
  %v100 = vunpack.c.l.b16 %v59
  %v101 = vunpack.c.l.b16 %v60
  %v102 = vunpack.c.l.b16 %v61
  %v103 = vunpack.c.l.b16 %v62
  %v104 = vunpack.c.l.b16 %v63
  %v105 = vunpack.c.l.b16 %v64
  %v106 = vunpack.c.l.b16 %v65
  %v107 = vunpack.c.l.b16 %v66
  %v108 = vunpack.c.l.b16 %v67
  %v109 = vunpack.c.l.b16 %v68
  %v110 = vunpack.c.l.b16 %v69
  %v111 = vunpack.c.l.b16 %v70
  %v112 = vpack.c.b16 %v97, %v96
  %v113 = vpack.c.b16 %v99, %v98
  %v114 = vpack.c.b16 %v101, %v100
  %v115 = vpack.c.b16 %v103, %v102
  %v116 = vpack.c.b16 %v105, %v104
  %v117 = vpack.c.b16 %v107, %v106
  %v118 = vpack.c.b16 %v109, %v108
  %v119 = vpack.c.b16 %v111, %v110
  %v129 = vunpack.c.l.b16 %v71
  %v130 = vunpack.c.l.b16 %v72
  %v131 = vunpack.c.l.b16 %v73
  %v132 = vunpack.c.l.b16 %v74
  %v133 = vunpack.c.l.b16 %v75
  %v134 = vunpack.c.l.b16 %v76
  %v135 = vunpack.c.l.b16 %v77
  %v136 = vunpack.c.l.b16 %v78
  %v137 = vunpack.c.l.b16 %v79
  %v138 = vpack.c.b16 %v130, %v129
  %v139 = vpack.c.b16 %v132, %v131
  %v140 = vpack.c.b16 %v134, %v133
  %v141 = vpack.c.b16 %v136, %v135
  %v142 = vpack.c.b16 %v137, %v137
  %vm147 = vcmask 588800
  %v149 = vsel %vm147, %v112, 0
  %v152 = vsel %vm147, %v113, 0
  %v155 = vsel %vm147, %v114, 0
  %v158 = vsel %vm147, %v115, 0
  %v161 = vsel %vm147, %v116, 0
  %v164 = vsel %vm147, %v117, 0
  %v167 = vsel %vm147, %v118, 0
  %v170 = vsel %vm147, %v119, 0
  %vm172 = vcmask 1043456
  %v174 = vsel %vm172, %v142, 0
  %176 = vmatprep.subr.bf16.mxu0 0
  %177 = vmatpush1.bf16.msra.mxu0 %v138
  %178 = vmatprep.subr.bf16.mxu0 0
  %179 = vmatpush1.bf16.msra.mxu0 %v139
  %180 = vmatprep.subr.bf16.mxu0 0
  %181 = vmatpush1.bf16.msra.mxu0 %v140
  %182 = vmatprep.subr.bf16.mxu0 0
  %183 = vmatpush1.bf16.msra.mxu0 %v141
  %184 = vmatprep.subr.bf16.mxu0 0
  %185 = vmatpush1.bf16.msra.mxu0 %v174
  %186 = vmatprep.subr.bf16.mxu0 0
  %187 = vmatpush1.bf16.msra.mxu0 0
  %188 = vmatprep.subr.bf16.mxu0 0
  %189 = vmatpush1.bf16.msra.mxu0 0
  %190 = vmatprep.subr.bf16.mxu0 0
  %191 = vmatpush1.bf16.msra.mxu0 0
  %192 = vmatprep.subr.bf16.mxu0 0
  %193 = vmatpush1.bf16.msra.mxu0 0
  %194 = vmatprep.subr.bf16.mxu0 0
  %195 = vmatpush1.bf16.msra.mxu0 0
  %196 = vmatprep.subr.bf16.mxu0 0
  %197 = vmatpush1.bf16.msra.mxu0 0
  %198 = vmatprep.subr.bf16.mxu0 0
  %199 = vmatpush1.bf16.msra.mxu0 0
  %200 = vmatprep.subr.bf16.mxu0 0
  %201 = vmatpush1.bf16.msra.mxu0 0
  %202 = vmatprep.subr.bf16.mxu0 0
  %203 = vmatpush1.bf16.msra.mxu0 0
  %204 = vmatprep.subr.bf16.mxu0 0
  %205 = vmatpush1.bf16.msra.mxu0 0
  %206 = vmatprep.subr.bf16.mxu0 0
  %207 = vmatpush1.bf16.msra.mxu0 0
  %208 = vmatprep.mubr.bf16.mxu0 0
  %209 = vmatmul.mubr.bf16.gmra.mrb[0].mxu0 %v149
  %v210 = vpop.f32.mrb[0].mxu0
  %v211 = vadd.f32 0.0, %v210
  %v212 = vpop.f32.mrb[0].mxu0
  %v213 = vpop.f32.mrb[0].mxu0
  %v214 = vadd.f32 0.0, %v213
  %v215 = vpop.f32.mrb[0].mxu0
  %216 = vmatprep.mubr.bf16.mxu0 0
  %217 = vmatmul.mubr.bf16.gmra.mrb[0].mxu0 %v152
  %v218 = vpop.f32.mrb[0].mxu0
  %v219 = vadd.f32 0.0, %v218
  %v220 = vpop.f32.mrb[0].mxu0
  %v221 = vpop.f32.mrb[0].mxu0
  %v222 = vadd.f32 0.0, %v221
  %v223 = vpop.f32.mrb[0].mxu0
  %224 = vmatprep.mubr.bf16.mxu0 0
  %225 = vmatmul.mubr.bf16.gmra.mrb[0].mxu0 %v155
  %v226 = vpop.f32.mrb[0].mxu0
  %v227 = vadd.f32 0.0, %v226
  %v228 = vpop.f32.mrb[0].mxu0
  %v229 = vpop.f32.mrb[0].mxu0
  %v230 = vadd.f32 0.0, %v229
  %v231 = vpop.f32.mrb[0].mxu0
  %232 = vmatprep.mubr.bf16.mxu0 0
  %233 = vmatmul.mubr.bf16.gmra.mrb[0].mxu0 %v158
  %v234 = vpop.f32.mrb[0].mxu0
  %v235 = vadd.f32 0.0, %v234
  %v236 = vpop.f32.mrb[0].mxu0
  %v237 = vpop.f32.mrb[0].mxu0
  %v238 = vadd.f32 0.0, %v237
  %v239 = vpop.f32.mrb[0].mxu0
  %240 = vmatprep.mubr.bf16.mxu0 0
  %241 = vmatmul.mubr.bf16.gmra.mrb[0].mxu0 %v161
  %v242 = vpop.f32.mrb[0].mxu0
  %v243 = vadd.f32 0.0, %v242
  %v244 = vpop.f32.mrb[0].mxu0
  %v245 = vpop.f32.mrb[0].mxu0
  %v246 = vadd.f32 0.0, %v245
  %v247 = vpop.f32.mrb[0].mxu0
  %248 = vmatprep.mubr.bf16.mxu0 0
  %249 = vmatmul.mubr.bf16.gmra.mrb[0].mxu0 %v164
  %v250 = vpop.f32.mrb[0].mxu0
  %v251 = vadd.f32 0.0, %v250
  %v252 = vpop.f32.mrb[0].mxu0
  %v253 = vpop.f32.mrb[0].mxu0
  %v254 = vadd.f32 0.0, %v253
  %v255 = vpop.f32.mrb[0].mxu0
  %256 = vmatprep.mubr.bf16.mxu0 0
  %257 = vmatmul.mubr.bf16.gmra.mrb[0].mxu0 %v167
  %v258 = vpop.f32.mrb[0].mxu0
  %v259 = vadd.f32 0.0, %v258
  %v260 = vpop.f32.mrb[0].mxu0
  %v261 = vpop.f32.mrb[0].mxu0
  %v262 = vadd.f32 0.0, %v261
  %v263 = vpop.f32.mrb[0].mxu0
  %264 = vmatprep.mubr.bf16.mxu0 0
  %265 = vmatmul.mubr.bf16.gmra.mrb[0].mxu0 %v170
  %v266 = vpop.f32.mrb[0].mxu0
  %v267 = vadd.f32 0.0, %v266
  %v268 = vpop.f32.mrb[0].mxu0
  %v269 = vpop.f32.mrb[0].mxu0
  %v270 = vadd.f32 0.0, %v269
  %v271 = vpop.f32.mrb[0].mxu0
  %272 = vdwg.mxu0
  %v273 = vadd.f32 %v39, %v211
  %v274 = vadd.f32 %v40, %v214
  %v275 = vadd.f32 %v41, %v219
  %v276 = vadd.f32 %v42, %v222
  %v277 = vadd.f32 %v43, %v227
  %v278 = vadd.f32 %v44, %v230
  %v279 = vadd.f32 %v45, %v235
  %v280 = vadd.f32 %v46, %v238
  %v281 = vadd.f32 %v47, %v243
  %v282 = vadd.f32 %v48, %v246
  %v283 = vadd.f32 %v49, %v251
  %v284 = vadd.f32 %v50, %v254
  %v285 = vadd.f32 %v51, %v259
  %v286 = vadd.f32 %v52, %v262
  %v287 = vadd.f32 %v53, %v267
  %v288 = vadd.f32 %v54, %v270
  %vm289 = vcmask 130048
  %290 = vst.msk [vmem:[#allocation2] sm:$0xff] %vm289, %v273
  %291 = vst.msk [vmem:[#allocation2 + $0x8] sm:$0xff] %vm289, %v274
  %292 = vst.msk [vmem:[#allocation2 + $0x10] sm:$0xff] %vm289, %v275
  %293 = vst.msk [vmem:[#allocation2 + $0x18] sm:$0xff] %vm289, %v276
  %294 = vst.msk [vmem:[#allocation2 + $0x20] sm:$0xff] %vm289, %v277
  %295 = vst.msk [vmem:[#allocation2 + $0x28] sm:$0xff] %vm289, %v278
  %296 = vst.msk [vmem:[#allocation2 + $0x30] sm:$0xff] %vm289, %v279
  %297 = vst.msk [vmem:[#allocation2 + $0x38] sm:$0xff] %vm289, %v280
  %298 = vst.msk [vmem:[#allocation2 + $0x40] sm:$0xff] %vm289, %v281
  %299 = vst.msk [vmem:[#allocation2 + $0x48] sm:$0xff] %vm289, %v282
  %300 = vst.msk [vmem:[#allocation2 + $0x50] sm:$0xff] %vm289, %v283
  %301 = vst.msk [vmem:[#allocation2 + $0x58] sm:$0xff] %vm289, %v284
  %302 = vst.msk [vmem:[#allocation2 + $0x60] sm:$0xff] %vm289, %v285
  %303 = vst.msk [vmem:[#allocation2 + $0x68] sm:$0xff] %vm289, %v286
  %304 = vst.msk [vmem:[#allocation2 + $0x70] sm:$0xff] %vm289, %v287
  %305 = vst.msk [vmem:[#allocation2 + $0x78] sm:$0xff] %vm289, %v288
  // Predicated region
  $region22: #{_lambda_.15} parent=0 // pred_check
    %p306 = pneg %p18
  $region23: #{_lambda_.15} parent=0 // pred_check_branch
    %308 = sbr.rel (%p306) target = $region25
  $region24: #{_lambda_.15} parent=0 // pred_region
    %v309 = vld [vmem:[#allocation2] sm:$0xff]
    %v310 = vld [vmem:[#allocation2 + $0x8] sm:$0xff]
    %v311 = vld [vmem:[#allocation2 + $0x10] sm:$0xff]
    %v312 = vld [vmem:[#allocation2 + $0x18] sm:$0xff]
    %v313 = vld [vmem:[#allocation2 + $0x20] sm:$0xff]
    %v314 = vld [vmem:[#allocation2 + $0x28] sm:$0xff]
    %v315 = vld [vmem:[#allocation2 + $0x30] sm:$0xff]
    %v316 = vld [vmem:[#allocation2 + $0x38] sm:$0xff]
    %v317 = vld [vmem:[#allocation2 + $0x40] sm:$0xff]
    %v318 = vld [vmem:[#allocation2 + $0x48] sm:$0xff]
    %v319 = vld [vmem:[#allocation2 + $0x50] sm:$0xff]
    %v320 = vld [vmem:[#allocation2 + $0x58] sm:$0xff]
    %v321 = vld [vmem:[#allocation2 + $0x60] sm:$0xff]
    %v322 = vld [vmem:[#allocation2 + $0x68] sm:$0xff]
    %v323 = vld [vmem:[#allocation2 + $0x70] sm:$0xff]
    %v324 = vld [vmem:[#allocation2 + $0x78] sm:$0xff]
    %v325 = vld [vmem:[%s2] sm:$0x1]
    %v327 = vlaneseq
    %v328 = vshrl.u32 %v327, 7
    %v329 = vsub.s32 0, %v328
    %v330 = vrot.slane %v325, %v329
    %v332 = vmul.f32 %v309, %v330
    %v333 = vmul.f32 %v310, %v330
    %v334 = vmul.f32 %v311, %v330
    %v335 = vmul.f32 %v312, %v330
    %v336 = vmul.f32 %v313, %v330
    %v337 = vmul.f32 %v314, %v330
    %v338 = vmul.f32 %v315, %v330
    %v339 = vmul.f32 %v316, %v330
    %v340 = vmul.f32 %v317, %v330
    %v341 = vmul.f32 %v318, %v330
    %v342 = vmul.f32 %v319, %v330
    %v343 = vmul.f32 %v320, %v330
    %v344 = vmul.f32 %v321, %v330
    %v345 = vmul.f32 %v322, %v330
    %v346 = vmul.f32 %v323, %v330
    %v347 = vmul.f32 %v324, %v330
    %v348 = vld [vmem:[%s3] sm:$0x1]
    %v350 = vlaneseq
    %v351 = vshrl.u32 %v350, 7
    %v352 = vsub.s32 0, %v351
    %v353 = vrot.slane %v348, %v352
    %v355 = vadd.f32 %v332, %v353
    %v356 = vadd.f32 %v333, %v353
    %v357 = vadd.f32 %v334, %v353
    %v358 = vadd.f32 %v335, %v353
    %v359 = vadd.f32 %v336, %v353
    %v360 = vadd.f32 %v337, %v353
    %v361 = vadd.f32 %v338, %v353
    %v362 = vadd.f32 %v339, %v353
    %v363 = vadd.f32 %v340, %v353
    %v364 = vadd.f32 %v341, %v353
    %v365 = vadd.f32 %v342, %v353
    %v366 = vadd.f32 %v343, %v353
    %v367 = vadd.f32 %v344, %v353
    %v368 = vadd.f32 %v345, %v353
    %v369 = vadd.f32 %v346, %v353
    %v370 = vadd.f32 %v347, %v353
    %v371 = vmax.f32 %v355, 0.0
    %v372 = vmax.f32 %v356, 0.0
    %v373 = vmax.f32 %v357, 0.0
    %v374 = vmax.f32 %v358, 0.0
    %v375 = vmax.f32 %v359, 0.0
    %v376 = vmax.f32 %v360, 0.0
    %v377 = vmax.f32 %v361, 0.0
    %v378 = vmax.f32 %v362, 0.0
    %v379 = vmax.f32 %v363, 0.0
    %v380 = vmax.f32 %v364, 0.0
    %v381 = vmax.f32 %v365, 0.0
    %v382 = vmax.f32 %v366, 0.0
    %v383 = vmax.f32 %v367, 0.0
    %v384 = vmax.f32 %v368, 0.0
    %v385 = vmax.f32 %v369, 0.0
    %v386 = vmax.f32 %v370, 0.0
    %v387 = vpack.c.bf16 %v372, %v371
    %v388 = vpack.c.bf16 %v374, %v373
    %v389 = vpack.c.bf16 %v376, %v375
    %v390 = vpack.c.bf16 %v378, %v377
    %v391 = vpack.c.bf16 %v380, %v379
    %v392 = vpack.c.bf16 %v382, %v381
    %v393 = vpack.c.bf16 %v384, %v383
    %v394 = vpack.c.bf16 %v386, %v385
    %v403 = vunpack.c.l.b16 %v387
    %v404 = vunpack.c.h.b16 %v387
    %v405 = vunpack.c.l.b16 %v388
    %v406 = vunpack.c.h.b16 %v388
    %v407 = vunpack.c.l.b16 %v389
    %v408 = vunpack.c.h.b16 %v389
    %v409 = vunpack.c.l.b16 %v390
    %v410 = vunpack.c.h.b16 %v390
    %v411 = vunpack.c.l.b16 %v391
    %v412 = vunpack.c.h.b16 %v391
    %v413 = vunpack.c.l.b16 %v392
    %v414 = vunpack.c.h.b16 %v392
    %v415 = vunpack.c.l.b16 %v393
    %v416 = vunpack.c.h.b16 %v393
    %v417 = vunpack.c.l.b16 %v394
    %v418 = vunpack.c.h.b16 %v394
    %v419 = vpack.c.b16 %v403, %v403
    %v420 = vpack.c.b16 %v404, %v404
    %v421 = vpack.c.b16 %v405, %v405
    %v422 = vpack.c.b16 %v406, %v406
    %v423 = vpack.c.b16 %v407, %v407
    %v424 = vpack.c.b16 %v408, %v408
    %v425 = vpack.c.b16 %v409, %v409
    %v426 = vpack.c.b16 %v410, %v410
    %v427 = vpack.c.b16 %v411, %v411
    %v428 = vpack.c.b16 %v412, %v412
    %v429 = vpack.c.b16 %v413, %v413
    %v430 = vpack.c.b16 %v414, %v414
    %v431 = vpack.c.b16 %v415, %v415
    %v432 = vpack.c.b16 %v416, %v416
    %v433 = vpack.c.b16 %v417, %v417
    %v434 = vpack.c.b16 %v418, %v418
    %vm451 = vcmask 125952
    %452 = vst.msk [vmem:[%s4] sm:$0xf] %vm451, %v419
    %453 = vst.msk [vmem:[%s4 + $0x4] sm:$0xf] %vm451, %v420
    %454 = vst.msk [vmem:[%s4 + $0x8] sm:$0xf] %vm451, %v421
    %455 = vst.msk [vmem:[%s4 + $0xc] sm:$0xf] %vm451, %v422
    %456 = vst.msk [vmem:[%s4 + $0x10] sm:$0xf] %vm451, %v423
    %457 = vst.msk [vmem:[%s4 + $0x14] sm:$0xf] %vm451, %v424
    %458 = vst.msk [vmem:[%s4 + $0x18] sm:$0xf] %vm451, %v425
    %459 = vst.msk [vmem:[%s4 + $0x1c] sm:$0xf] %vm451, %v426
    %460 = vst.msk [vmem:[%s4 + $0x20] sm:$0xf] %vm451, %v427
    %461 = vst.msk [vmem:[%s4 + $0x24] sm:$0xf] %vm451, %v428
    %462 = vst.msk [vmem:[%s4 + $0x28] sm:$0xf] %vm451, %v429
    %463 = vst.msk [vmem:[%s4 + $0x2c] sm:$0xf] %vm451, %v430
    %464 = vst.msk [vmem:[%s4 + $0x30] sm:$0xf] %vm451, %v431
    %465 = vst.msk [vmem:[%s4 + $0x34] sm:$0xf] %vm451, %v432
    %466 = vst.msk [vmem:[%s4 + $0x38] sm:$0xf] %vm451, %v433
    %467 = vst.msk [vmem:[%s4 + $0x3c] sm:$0xf] %vm451, %v434
  $region25: #{_lambda_.15} parent=0 // pred_fallthru
    _
  // Predicated region
  $region26: #{_lambda_.15} parent=0 // pred_check
    _
  $region27: #{_lambda_.15} parent=0 // pred_check_branch
    %469 = sbr.rel (0) target = $region29
  $region28: #{_lambda_.15} parent=0 // pred_region
    _
  $region29: #{_lambda_.15} parent=0 // pred_fallthru
    _
  // Predicated region
  $region30: #{_lambda_.15} parent=0 // pred_check
    _
  $region31: #{_lambda_.15} parent=0 // pred_check_branch
    %471 = sbr.rel (0) target = $region33
  $region32: #{_lambda_.15} parent=0 // pred_region
    _
  $region33: #{_lambda_.15} parent=0 // pred_fallthru
    _

// kernel: _lambda_.16
$region0: #{_lambda_.16}
  #allocation0 [shape = 'u32[]', space=smem, size = 0x4, offset = 0x4, fixed_abs, tag = 'smem constant byte address 0x4 - core index']
  #allocation1 [shape = 'u32[144,128]{1,0:T(1,128)}', space=vmem, size = 0x12000, scoped, tag = 'internal scratch']
  #allocation2 [shape = 'f32[128,16]{1,0:T(8,128)}', space=vmem, size = 0x10000, scoped, tag = 'scratch operand']
  %s0 = inlined_call_operand.vmem [shape: bf16[128,144], index: 0, kind: input, shape index: {}]
  %s1 = inlined_call_operand.vmem [shape: bf16[144,16], index: 1, kind: input, shape index: {}]
  %s2 = inlined_call_operand.vmem [shape: f32[1,16], index: 2, kind: input, shape index: {}]
  %s3 = inlined_call_operand.vmem [shape: f32[1,16], index: 3, kind: input, shape index: {}]
  %s4 = inlined_call_operand.vmem [shape: bf16[128,16], index: 4, kind: input, shape index: {}]
  %s5 = inlined_call_operand.vmem [shape: bf16[128,16], index: 5, kind: output, shape index: {}]
  %s6 = sld [smem:[#allocation0]]
  $region38: #{_lambda_.16} parent=0
    _
  %s8 = ssub.s32 1, %s6
  %s9 = scalar_select 0, %s8, %s6
  // Predicated region
  $region2: #{_lambda_.16} parent=0 // pred_check
    _
  $region3: #{_lambda_.16} parent=0 // pred_check_branch
    %11 = sbr.rel (0) target = $region5
  $region4: #{_lambda_.16} parent=0 // pred_region
    _
  $region5: #{_lambda_.16} parent=0 // pred_fallthru
    _
  // Predicated region
  $region6: #{_lambda_.16} parent=0 // pred_check
    _
  $region7: #{_lambda_.16} parent=0 // pred_check_branch
    %13 = sbr.rel (0) target = $region9
  $region8: #{_lambda_.16} parent=0 // pred_region
    _
  $region9: #{_lambda_.16} parent=0 // pred_fallthru
    _
  // Predicated region
  $region10: #{_lambda_.16} parent=0 // pred_check
    _
  $region11: #{_lambda_.16} parent=0 // pred_check_branch
    %15 = sbr.rel (0) target = $region13
  $region12: #{_lambda_.16} parent=0 // pred_region
    _
  $region13: #{_lambda_.16} parent=0 // pred_fallthru
    _
  // Predicated region
  $region14: #{_lambda_.16} parent=0 // pred_check
    _
  $region15: #{_lambda_.16} parent=0 // pred_check_branch
    %17 = sbr.rel (0) target = $region17
  $region16: #{_lambda_.16} parent=0 // pred_region
    _
  $region17: #{_lambda_.16} parent=0 // pred_fallthru
    _
  // Predicated region
  $region18: #{_lambda_.16} parent=0 // pred_check
    _
  $region19: #{_lambda_.16} parent=0 // pred_check_branch
    %19 = sbr.rel (0) target = $region21
  $region20: #{_lambda_.16} parent=0 // pred_region
    _
  $region21: #{_lambda_.16} parent=0 // pred_fallthru
    _
  %p21 = scmp.eq.s32.totalorder 0, 0
  // Predicated region
  $region22: #{_lambda_.16} parent=0 // pred_check
    %p22 = pneg %p21
  $region23: #{_lambda_.16} parent=0 // pred_check_branch
    %24 = sbr.rel (%p22) target = $region25
  $region24: #{_lambda_.16} parent=0 // pred_region
    %vm25 = vcmask 130048
    %26 = vst.msk [vmem:[#allocation2] sm:$0xff] %vm25, 0.0
    %27 = vst.msk [vmem:[#allocation2 + $0x8] sm:$0xff] %vm25, 0.0
    %28 = vst.msk [vmem:[#allocation2 + $0x10] sm:$0xff] %vm25, 0.0
    %29 = vst.msk [vmem:[#allocation2 + $0x18] sm:$0xff] %vm25, 0.0
    %30 = vst.msk [vmem:[#allocation2 + $0x20] sm:$0xff] %vm25, 0.0
    %31 = vst.msk [vmem:[#allocation2 + $0x28] sm:$0xff] %vm25, 0.0
    %32 = vst.msk [vmem:[#allocation2 + $0x30] sm:$0xff] %vm25, 0.0
    %33 = vst.msk [vmem:[#allocation2 + $0x38] sm:$0xff] %vm25, 0.0
    %34 = vst.msk [vmem:[#allocation2 + $0x40] sm:$0xff] %vm25, 0.0
    %35 = vst.msk [vmem:[#allocation2 + $0x48] sm:$0xff] %vm25, 0.0
    %36 = vst.msk [vmem:[#allocation2 + $0x50] sm:$0xff] %vm25, 0.0
    %37 = vst.msk [vmem:[#allocation2 + $0x58] sm:$0xff] %vm25, 0.0
    %38 = vst.msk [vmem:[#allocation2 + $0x60] sm:$0xff] %vm25, 0.0
    %39 = vst.msk [vmem:[#allocation2 + $0x68] sm:$0xff] %vm25, 0.0
    %40 = vst.msk [vmem:[#allocation2 + $0x70] sm:$0xff] %vm25, 0.0
    %41 = vst.msk [vmem:[#allocation2 + $0x78] sm:$0xff] %vm25, 0.0
  $region25: #{_lambda_.16} parent=0 // pred_fallthru
    _
  %v42 = vld [vmem:[#allocation2] sm:$0xff]
  %v43 = vld [vmem:[#allocation2 + $0x8] sm:$0xff]
  %v44 = vld [vmem:[#allocation2 + $0x10] sm:$0xff]
  %v45 = vld [vmem:[#allocation2 + $0x18] sm:$0xff]
  %v46 = vld [vmem:[#allocation2 + $0x20] sm:$0xff]
  %v47 = vld [vmem:[#allocation2 + $0x28] sm:$0xff]
  %v48 = vld [vmem:[#allocation2 + $0x30] sm:$0xff]
  %v49 = vld [vmem:[#allocation2 + $0x38] sm:$0xff]
  %v50 = vld [vmem:[#allocation2 + $0x40] sm:$0xff]
  %v51 = vld [vmem:[#allocation2 + $0x48] sm:$0xff]
  %v52 = vld [vmem:[#allocation2 + $0x50] sm:$0xff]
  %v53 = vld [vmem:[#allocation2 + $0x58] sm:$0xff]
  %v54 = vld [vmem:[#allocation2 + $0x60] sm:$0xff]
  %v55 = vld [vmem:[#allocation2 + $0x68] sm:$0xff]
  %v56 = vld [vmem:[#allocation2 + $0x70] sm:$0xff]
  %v57 = vld [vmem:[#allocation2 + $0x78] sm:$0xff]
  %v58 = vld [vmem:[%s0] sm:$0xff]
  %v59 = vld [vmem:[%s0 + $0x8] sm:$0xff]
  %v60 = vld [vmem:[%s0 + $0x10] sm:$0xff]
  %v61 = vld [vmem:[%s0 + $0x18] sm:$0xff]
  %v62 = vld [vmem:[%s0 + $0x20] sm:$0xff]
  %v63 = vld [vmem:[%s0 + $0x28] sm:$0xff]
  %v64 = vld [vmem:[%s0 + $0x30] sm:$0xff]
  %v65 = vld [vmem:[%s0 + $0x38] sm:$0xff]
  %v66 = vld [vmem:[%s0 + $0x40] sm:$0xff]
  %v67 = vld [vmem:[%s0 + $0x48] sm:$0xff]
  %v68 = vld [vmem:[%s0 + $0x50] sm:$0xff]
  %v69 = vld [vmem:[%s0 + $0x58] sm:$0xff]
  %v70 = vld [vmem:[%s0 + $0x60] sm:$0xff]
  %v71 = vld [vmem:[%s0 + $0x68] sm:$0xff]
  %v72 = vld [vmem:[%s0 + $0x70] sm:$0xff]
  %v73 = vld [vmem:[%s0 + $0x78] sm:$0xff]
  %v74 = vld [vmem:[%s1] sm:$0xf]
  %v75 = vld [vmem:[%s1 + $0x4] sm:$0xf]
  %v76 = vld [vmem:[%s1 + $0x8] sm:$0xf]
  %v77 = vld [vmem:[%s1 + $0xc] sm:$0xf]
  %v78 = vld [vmem:[%s1 + $0x10] sm:$0xf]
  %v79 = vld [vmem:[%s1 + $0x14] sm:$0xf]
  %v80 = vld [vmem:[%s1 + $0x18] sm:$0xf]
  %v81 = vld [vmem:[%s1 + $0x1c] sm:$0xf]
  %v82 = vld [vmem:[%s1 + $0x20] sm:$0xf]
  %v83 = vld [vmem:[%s1 + $0x24] sm:$0xf]
  %v84 = vld [vmem:[%s1 + $0x28] sm:$0xf]
  %v85 = vld [vmem:[%s1 + $0x2c] sm:$0xf]
  %v86 = vld [vmem:[%s1 + $0x30] sm:$0xf]
  %v87 = vld [vmem:[%s1 + $0x34] sm:$0xf]
  %v88 = vld [vmem:[%s1 + $0x38] sm:$0xf]
  %v89 = vld [vmem:[%s1 + $0x3c] sm:$0xf]
  %v90 = vld [vmem:[%s1 + $0x40] sm:$0xf]
  %v91 = vld [vmem:[%s1 + $0x44] sm:$0xf]
  %v108 = vunpack.c.l.b16 %v58
  %v109 = vunpack.c.h.b16 %v58
  %v110 = vunpack.c.l.b16 %v59
  %v111 = vunpack.c.h.b16 %v59
  %v112 = vunpack.c.l.b16 %v60
  %v113 = vunpack.c.h.b16 %v60
  %v114 = vunpack.c.l.b16 %v61
  %v115 = vunpack.c.h.b16 %v61
  %v116 = vunpack.c.l.b16 %v62
  %v117 = vunpack.c.h.b16 %v62
  %v118 = vunpack.c.l.b16 %v63
  %v119 = vunpack.c.h.b16 %v63
  %v120 = vunpack.c.l.b16 %v64
  %v121 = vunpack.c.h.b16 %v64
  %v122 = vunpack.c.l.b16 %v65
  %v123 = vunpack.c.h.b16 %v65
  %v124 = vunpack.c.l.b16 %v66
  %v125 = vunpack.c.h.b16 %v66
  %v126 = vunpack.c.l.b16 %v67
  %v127 = vunpack.c.h.b16 %v67
  %v128 = vunpack.c.l.b16 %v68
  %v129 = vunpack.c.h.b16 %v68
  %v130 = vunpack.c.l.b16 %v69
  %v131 = vunpack.c.h.b16 %v69
  %v132 = vunpack.c.l.b16 %v70
  %v133 = vunpack.c.h.b16 %v70
  %v134 = vunpack.c.l.b16 %v71
  %v135 = vunpack.c.h.b16 %v71
  %v136 = vunpack.c.l.b16 %v72
  %v137 = vunpack.c.h.b16 %v72
  %v138 = vunpack.c.l.b16 %v73
  %v139 = vunpack.c.h.b16 %v73
  %v140 = vpack.c.b16 %v110, %v108
  %v141 = vpack.c.b16 %v111, %v109
  %v142 = vpack.c.b16 %v114, %v112
  %v143 = vpack.c.b16 %v115, %v113
  %v144 = vpack.c.b16 %v118, %v116
  %v145 = vpack.c.b16 %v119, %v117
  %v146 = vpack.c.b16 %v122, %v120
  %v147 = vpack.c.b16 %v123, %v121
  %v148 = vpack.c.b16 %v126, %v124
  %v149 = vpack.c.b16 %v127, %v125
  %v150 = vpack.c.b16 %v130, %v128
  %v151 = vpack.c.b16 %v131, %v129
  %v152 = vpack.c.b16 %v134, %v132
  %v153 = vpack.c.b16 %v135, %v133
  %v154 = vpack.c.b16 %v138, %v136
  %v155 = vpack.c.b16 %v139, %v137
  %v182 = vunpack.c.l.b16 %v74
  %v183 = vunpack.c.l.b16 %v75
  %v184 = vunpack.c.l.b16 %v76
  %v185 = vunpack.c.l.b16 %v77
  %v186 = vunpack.c.l.b16 %v78
  %v187 = vunpack.c.l.b16 %v79
  %v188 = vunpack.c.l.b16 %v80
  %v189 = vunpack.c.l.b16 %v81
  %v190 = vunpack.c.l.b16 %v82
  %v191 = vunpack.c.l.b16 %v83
  %v192 = vunpack.c.l.b16 %v84
  %v193 = vunpack.c.l.b16 %v85
  %v194 = vunpack.c.l.b16 %v86
  %v195 = vunpack.c.l.b16 %v87
  %v196 = vunpack.c.l.b16 %v88
  %v197 = vunpack.c.l.b16 %v89
  %v198 = vunpack.c.l.b16 %v90
  %v199 = vunpack.c.l.b16 %v91
  %v200 = vpack.c.b16 %v183, %v182
  %v201 = vpack.c.b16 %v185, %v184
  %v202 = vpack.c.b16 %v187, %v186
  %v203 = vpack.c.b16 %v189, %v188
  %v204 = vpack.c.b16 %v191, %v190
  %v205 = vpack.c.b16 %v193, %v192
  %v206 = vpack.c.b16 %v195, %v194
  %v207 = vpack.c.b16 %v197, %v196
  %v208 = vpack.c.b16 %v199, %v198
  %vm218 = vcmask 130048
  %v220 = vsel %vm218, %v141, 0
  %v223 = vsel %vm218, %v143, 0
  %v226 = vsel %vm218, %v145, 0
  %v229 = vsel %vm218, %v147, 0
  %v232 = vsel %vm218, %v149, 0
  %v235 = vsel %vm218, %v151, 0
  %v238 = vsel %vm218, %v153, 0
  %v241 = vsel %vm218, %v155, 0
  %243 = vmatprep.subr.bf16.mxu0 0
  %244 = vmatpush1.bf16.msra.mxu0 %v200
  %245 = vmatprep.subr.bf16.mxu0 0
  %246 = vmatpush1.bf16.msra.mxu0 %v201
  %247 = vmatprep.subr.bf16.mxu0 0
  %248 = vmatpush1.bf16.msra.mxu0 %v202
  %249 = vmatprep.subr.bf16.mxu0 0
  %250 = vmatpush1.bf16.msra.mxu0 %v203
  %251 = vmatprep.subr.bf16.mxu0 0
  %252 = vmatpush1.bf16.msra.mxu0 %v204
  %253 = vmatprep.subr.bf16.mxu0 0
  %254 = vmatpush1.bf16.msra.mxu0 %v205
  %255 = vmatprep.subr.bf16.mxu0 0
  %256 = vmatpush1.bf16.msra.mxu0 %v206
  %257 = vmatprep.subr.bf16.mxu0 0
  %258 = vmatpush1.bf16.msra.mxu0 %v207
  %259 = vmatprep.subr.bf16.mxu0 0
  %260 = vmatpush1.bf16.msra.mxu0 %v208
  %261 = vmatprep.subr.bf16.mxu0 0
  %262 = vmatpush1.bf16.msra.mxu0 0
  %263 = vmatprep.subr.bf16.mxu0 0
  %264 = vmatpush1.bf16.msra.mxu0 0
  %265 = vmatprep.subr.bf16.mxu0 0
  %266 = vmatpush1.bf16.msra.mxu0 0
  %267 = vmatprep.subr.bf16.mxu0 0
  %268 = vmatpush1.bf16.msra.mxu0 0
  %269 = vmatprep.subr.bf16.mxu0 0
  %270 = vmatpush1.bf16.msra.mxu0 0
  %271 = vmatprep.subr.bf16.mxu0 0
  %272 = vmatpush1.bf16.msra.mxu0 0
  %273 = vmatprep.subr.bf16.mxu0 0
  %274 = vmatpush1.bf16.msra.mxu0 0
  %275 = vmatprep.mubr.bf16.mxu0 %v220
  %276 = vmatmul.mubr.bf16.gmra.mrb[0].mxu0 %v140
  %v277 = vpop.f32.mrb[0].mxu0
  %v278 = vadd.f32 0.0, %v277
  %v279 = vpop.f32.mrb[0].mxu0
  %v280 = vpop.f32.mrb[0].mxu0
  %v281 = vadd.f32 0.0, %v280
  %v282 = vpop.f32.mrb[0].mxu0
  %283 = vmatprep.mubr.bf16.mxu0 %v223
  %284 = vmatmul.mubr.bf16.gmra.mrb[0].mxu0 %v142
  %v285 = vpop.f32.mrb[0].mxu0
  %v286 = vadd.f32 0.0, %v285
  %v287 = vpop.f32.mrb[0].mxu0
  %v288 = vpop.f32.mrb[0].mxu0
  %v289 = vadd.f32 0.0, %v288
  %v290 = vpop.f32.mrb[0].mxu0
  %291 = vmatprep.mubr.bf16.mxu0 %v226
  %292 = vmatmul.mubr.bf16.gmra.mrb[0].mxu0 %v144
  %v293 = vpop.f32.mrb[0].mxu0
  %v294 = vadd.f32 0.0, %v293
  %v295 = vpop.f32.mrb[0].mxu0
  %v296 = vpop.f32.mrb[0].mxu0
  %v297 = vadd.f32 0.0, %v296
  %v298 = vpop.f32.mrb[0].mxu0
  %299 = vmatprep.mubr.bf16.mxu0 %v229
  %300 = vmatmul.mubr.bf16.gmra.mrb[0].mxu0 %v146
  %v301 = vpop.f32.mrb[0].mxu0
  %v302 = vadd.f32 0.0, %v301
  %v303 = vpop.f32.mrb[0].mxu0
  %v304 = vpop.f32.mrb[0].mxu0
  %v305 = vadd.f32 0.0, %v304
  %v306 = vpop.f32.mrb[0].mxu0
  %307 = vmatprep.mubr.bf16.mxu0 %v232
  %308 = vmatmul.mubr.bf16.gmra.mrb[0].mxu0 %v148
  %v309 = vpop.f32.mrb[0].mxu0
  %v310 = vadd.f32 0.0, %v309
  %v311 = vpop.f32.mrb[0].mxu0
  %v312 = vpop.f32.mrb[0].mxu0
  %v313 = vadd.f32 0.0, %v312
  %v314 = vpop.f32.mrb[0].mxu0
  %315 = vmatprep.mubr.bf16.mxu0 %v235
  %316 = vmatmul.mubr.bf16.gmra.mrb[0].mxu0 %v150
  %v317 = vpop.f32.mrb[0].mxu0
  %v318 = vadd.f32 0.0, %v317
  %v319 = vpop.f32.mrb[0].mxu0
  %v320 = vpop.f32.mrb[0].mxu0
  %v321 = vadd.f32 0.0, %v320
  %v322 = vpop.f32.mrb[0].mxu0
  %323 = vmatprep.mubr.bf16.mxu0 %v238
  %324 = vmatmul.mubr.bf16.gmra.mrb[0].mxu0 %v152
  %v325 = vpop.f32.mrb[0].mxu0
  %v326 = vadd.f32 0.0, %v325
  %v327 = vpop.f32.mrb[0].mxu0
  %v328 = vpop.f32.mrb[0].mxu0
  %v329 = vadd.f32 0.0, %v328
  %v330 = vpop.f32.mrb[0].mxu0
  %331 = vmatprep.mubr.bf16.mxu0 %v241
  %332 = vmatmul.mubr.bf16.gmra.mrb[0].mxu0 %v154
  %v333 = vpop.f32.mrb[0].mxu0
  %v334 = vadd.f32 0.0, %v333
  %v335 = vpop.f32.mrb[0].mxu0
  %v336 = vpop.f32.mrb[0].mxu0
  %v337 = vadd.f32 0.0, %v336
  %v338 = vpop.f32.mrb[0].mxu0
  %339 = vdwg.mxu0
  %v340 = vadd.f32 %v42, %v278
  %v341 = vadd.f32 %v43, %v281
  %v342 = vadd.f32 %v44, %v286
  %v343 = vadd.f32 %v45, %v289
  %v344 = vadd.f32 %v46, %v294
  %v345 = vadd.f32 %v47, %v297
  %v346 = vadd.f32 %v48, %v302
  %v347 = vadd.f32 %v49, %v305
  %v348 = vadd.f32 %v50, %v310
  %v349 = vadd.f32 %v51, %v313
  %v350 = vadd.f32 %v52, %v318
  %v351 = vadd.f32 %v53, %v321
  %v352 = vadd.f32 %v54, %v326
  %v353 = vadd.f32 %v55, %v329
  %v354 = vadd.f32 %v56, %v334
  %v355 = vadd.f32 %v57, %v337
  %356 = vst.msk [vmem:[#allocation2] sm:$0xff] %vm218, %v340
  %357 = vst.msk [vmem:[#allocation2 + $0x8] sm:$0xff] %vm218, %v341
  %358 = vst.msk [vmem:[#allocation2 + $0x10] sm:$0xff] %vm218, %v342
  %359 = vst.msk [vmem:[#allocation2 + $0x18] sm:$0xff] %vm218, %v343
  %360 = vst.msk [vmem:[#allocation2 + $0x20] sm:$0xff] %vm218, %v344
  %361 = vst.msk [vmem:[#allocation2 + $0x28] sm:$0xff] %vm218, %v345
  %362 = vst.msk [vmem:[#allocation2 + $0x30] sm:$0xff] %vm218, %v346
  %363 = vst.msk [vmem:[#allocation2 + $0x38] sm:$0xff] %vm218, %v347
  %364 = vst.msk [vmem:[#allocation2 + $0x40] sm:$0xff] %vm218, %v348
  %365 = vst.msk [vmem:[#allocation2 + $0x48] sm:$0xff] %vm218, %v349
  %366 = vst.msk [vmem:[#allocation2 + $0x50] sm:$0xff] %vm218, %v350
  %367 = vst.msk [vmem:[#allocation2 + $0x58] sm:$0xff] %vm218, %v351
  %368 = vst.msk [vmem:[#allocation2 + $0x60] sm:$0xff] %vm218, %v352
  %369 = vst.msk [vmem:[#allocation2 + $0x68] sm:$0xff] %vm218, %v353
  %370 = vst.msk [vmem:[#allocation2 + $0x70] sm:$0xff] %vm218, %v354
  %371 = vst.msk [vmem:[#allocation2 + $0x78] sm:$0xff] %vm218, %v355
  // Predicated region
  $region26: #{_lambda_.16} parent=0 // pred_check
    %p372 = pneg %p21
  $region27: #{_lambda_.16} parent=0 // pred_check_branch
    %374 = sbr.rel (%p372) target = $region29
  $region28: #{_lambda_.16} parent=0 // pred_region
    %v375 = vld [vmem:[#allocation2] sm:$0xff]
    %v376 = vld [vmem:[#allocation2 + $0x8] sm:$0xff]
    %v377 = vld [vmem:[#allocation2 + $0x10] sm:$0xff]
    %v378 = vld [vmem:[#allocation2 + $0x18] sm:$0xff]
    %v379 = vld [vmem:[#allocation2 + $0x20] sm:$0xff]
    %v380 = vld [vmem:[#allocation2 + $0x28] sm:$0xff]
    %v381 = vld [vmem:[#allocation2 + $0x30] sm:$0xff]
    %v382 = vld [vmem:[#allocation2 + $0x38] sm:$0xff]
    %v383 = vld [vmem:[#allocation2 + $0x40] sm:$0xff]
    %v384 = vld [vmem:[#allocation2 + $0x48] sm:$0xff]
    %v385 = vld [vmem:[#allocation2 + $0x50] sm:$0xff]
    %v386 = vld [vmem:[#allocation2 + $0x58] sm:$0xff]
    %v387 = vld [vmem:[#allocation2 + $0x60] sm:$0xff]
    %v388 = vld [vmem:[#allocation2 + $0x68] sm:$0xff]
    %v389 = vld [vmem:[#allocation2 + $0x70] sm:$0xff]
    %v390 = vld [vmem:[#allocation2 + $0x78] sm:$0xff]
    %v391 = vld [vmem:[%s2] sm:$0x1]
    %v393 = vlaneseq
    %v394 = vshrl.u32 %v393, 7
    %v395 = vsub.s32 0, %v394
    %v396 = vrot.slane %v391, %v395
    %v398 = vmul.f32 %v375, %v396
    %v399 = vmul.f32 %v376, %v396
    %v400 = vmul.f32 %v377, %v396
    %v401 = vmul.f32 %v378, %v396
    %v402 = vmul.f32 %v379, %v396
    %v403 = vmul.f32 %v380, %v396
    %v404 = vmul.f32 %v381, %v396
    %v405 = vmul.f32 %v382, %v396
    %v406 = vmul.f32 %v383, %v396
    %v407 = vmul.f32 %v384, %v396
    %v408 = vmul.f32 %v385, %v396
    %v409 = vmul.f32 %v386, %v396
    %v410 = vmul.f32 %v387, %v396
    %v411 = vmul.f32 %v388, %v396
    %v412 = vmul.f32 %v389, %v396
    %v413 = vmul.f32 %v390, %v396
    %v414 = vld [vmem:[%s3] sm:$0x1]
    %v416 = vlaneseq
    %v417 = vshrl.u32 %v416, 7
    %v418 = vsub.s32 0, %v417
    %v419 = vrot.slane %v414, %v418
    %v421 = vadd.f32 %v398, %v419
    %v422 = vadd.f32 %v399, %v419
    %v423 = vadd.f32 %v400, %v419
    %v424 = vadd.f32 %v401, %v419
    %v425 = vadd.f32 %v402, %v419
    %v426 = vadd.f32 %v403, %v419
    %v427 = vadd.f32 %v404, %v419
    %v428 = vadd.f32 %v405, %v419
    %v429 = vadd.f32 %v406, %v419
    %v430 = vadd.f32 %v407, %v419
    %v431 = vadd.f32 %v408, %v419
    %v432 = vadd.f32 %v409, %v419
    %v433 = vadd.f32 %v410, %v419
    %v434 = vadd.f32 %v411, %v419
    %v435 = vadd.f32 %v412, %v419
    %v436 = vadd.f32 %v413, %v419
    %v437 = vld [vmem:[%s4] sm:$0xf]
    %v438 = vld [vmem:[%s4 + $0x4] sm:$0xf]
    %v439 = vld [vmem:[%s4 + $0x8] sm:$0xf]
    %v440 = vld [vmem:[%s4 + $0xc] sm:$0xf]
    %v441 = vld [vmem:[%s4 + $0x10] sm:$0xf]
    %v442 = vld [vmem:[%s4 + $0x14] sm:$0xf]
    %v443 = vld [vmem:[%s4 + $0x18] sm:$0xf]
    %v444 = vld [vmem:[%s4 + $0x1c] sm:$0xf]
    %v445 = vld [vmem:[%s4 + $0x20] sm:$0xf]
    %v446 = vld [vmem:[%s4 + $0x24] sm:$0xf]
    %v447 = vld [vmem:[%s4 + $0x28] sm:$0xf]
    %v448 = vld [vmem:[%s4 + $0x2c] sm:$0xf]
    %v449 = vld [vmem:[%s4 + $0x30] sm:$0xf]
    %v450 = vld [vmem:[%s4 + $0x34] sm:$0xf]
    %v451 = vld [vmem:[%s4 + $0x38] sm:$0xf]
    %v452 = vld [vmem:[%s4 + $0x3c] sm:$0xf]
    %v453 = vunpack.c.l.bf16 %v437
    %v454 = vunpack.c.l.bf16 %v438
    %v455 = vunpack.c.l.bf16 %v439
    %v456 = vunpack.c.l.bf16 %v440
    %v457 = vunpack.c.l.bf16 %v441
    %v458 = vunpack.c.l.bf16 %v442
    %v459 = vunpack.c.l.bf16 %v443
    %v460 = vunpack.c.l.bf16 %v444
    %v461 = vunpack.c.l.bf16 %v445
    %v462 = vunpack.c.l.bf16 %v446
    %v463 = vunpack.c.l.bf16 %v447
    %v464 = vunpack.c.l.bf16 %v448
    %v465 = vunpack.c.l.bf16 %v449
    %v466 = vunpack.c.l.bf16 %v450
    %v467 = vunpack.c.l.bf16 %v451
    %v468 = vunpack.c.l.bf16 %v452
    %v469 = vadd.f32 %v421, %v453
    %v470 = vadd.f32 %v422, %v454
    %v471 = vadd.f32 %v423, %v455
    %v472 = vadd.f32 %v424, %v456
    %v473 = vadd.f32 %v425, %v457
    %v474 = vadd.f32 %v426, %v458
    %v475 = vadd.f32 %v427, %v459
    %v476 = vadd.f32 %v428, %v460
    %v477 = vadd.f32 %v429, %v461
    %v478 = vadd.f32 %v430, %v462
    %v479 = vadd.f32 %v431, %v463
    %v480 = vadd.f32 %v432, %v464
    %v481 = vadd.f32 %v433, %v465
    %v482 = vadd.f32 %v434, %v466
    %v483 = vadd.f32 %v435, %v467
    %v484 = vadd.f32 %v436, %v468
    %v485 = vmax.f32 %v469, 0.0
    %v486 = vmax.f32 %v470, 0.0
    %v487 = vmax.f32 %v471, 0.0
    %v488 = vmax.f32 %v472, 0.0
    %v489 = vmax.f32 %v473, 0.0
    %v490 = vmax.f32 %v474, 0.0
    %v491 = vmax.f32 %v475, 0.0
    %v492 = vmax.f32 %v476, 0.0
    %v493 = vmax.f32 %v477, 0.0
    %v494 = vmax.f32 %v478, 0.0
    %v495 = vmax.f32 %v479, 0.0
    %v496 = vmax.f32 %v480, 0.0
    %v497 = vmax.f32 %v481, 0.0
    %v498 = vmax.f32 %v482, 0.0
    %v499 = vmax.f32 %v483, 0.0
    %v500 = vmax.f32 %v484, 0.0
    %v501 = vpack.c.bf16 %v486, %v485
    %v502 = vpack.c.bf16 %v488, %v487
    %v503 = vpack.c.bf16 %v490, %v489
    %v504 = vpack.c.bf16 %v492, %v491
    %v505 = vpack.c.bf16 %v494, %v493
    %v506 = vpack.c.bf16 %v496, %v495
    %v507 = vpack.c.bf16 %v498, %v497
    %v508 = vpack.c.bf16 %v500, %v499
    %v517 = vunpack.c.l.b16 %v501
    %v518 = vunpack.c.h.b16 %v501
    %v519 = vunpack.c.l.b16 %v502
    %v520 = vunpack.c.h.b16 %v502
    %v521 = vunpack.c.l.b16 %v503
    %v522 = vunpack.c.h.b16 %v503
    %v523 = vunpack.c.l.b16 %v504
    %v524 = vunpack.c.h.b16 %v504
    %v525 = vunpack.c.l.b16 %v505
    %v526 = vunpack.c.h.b16 %v505
    %v527 = vunpack.c.l.b16 %v506
    %v528 = vunpack.c.h.b16 %v506
    %v529 = vunpack.c.l.b16 %v507
    %v530 = vunpack.c.h.b16 %v507
    %v531 = vunpack.c.l.b16 %v508
    %v532 = vunpack.c.h.b16 %v508
    %v533 = vpack.c.b16 %v517, %v517
    %v534 = vpack.c.b16 %v518, %v518
    %v535 = vpack.c.b16 %v519, %v519
    %v536 = vpack.c.b16 %v520, %v520
    %v537 = vpack.c.b16 %v521, %v521
    %v538 = vpack.c.b16 %v522, %v522
    %v539 = vpack.c.b16 %v523, %v523
    %v540 = vpack.c.b16 %v524, %v524
    %v541 = vpack.c.b16 %v525, %v525
    %v542 = vpack.c.b16 %v526, %v526
    %v543 = vpack.c.b16 %v527, %v527
    %v544 = vpack.c.b16 %v528, %v528
    %v545 = vpack.c.b16 %v529, %v529
    %v546 = vpack.c.b16 %v530, %v530
    %v547 = vpack.c.b16 %v531, %v531
    %v548 = vpack.c.b16 %v532, %v532
    %vm565 = vcmask 125952
    %566 = vst.msk [vmem:[%s5] sm:$0xf] %vm565, %v533
    %567 = vst.msk [vmem:[%s5 + $0x4] sm:$0xf] %vm565, %v534
    %568 = vst.msk [vmem:[%s5 + $0x8] sm:$0xf] %vm565, %v535
    %569 = vst.msk [vmem:[%s5 + $0xc] sm:$0xf] %vm565, %v536
    %570 = vst.msk [vmem:[%s5 + $0x10] sm:$0xf] %vm565, %v537
    %571 = vst.msk [vmem:[%s5 + $0x14] sm:$0xf] %vm565, %v538
    %572 = vst.msk [vmem:[%s5 + $0x18] sm:$0xf] %vm565, %v539
    %573 = vst.msk [vmem:[%s5 + $0x1c] sm:$0xf] %vm565, %v540
    %574 = vst.msk [vmem:[%s5 + $0x20] sm:$0xf] %vm565, %v541
    %575 = vst.msk [vmem:[%s5 + $0x24] sm:$0xf] %vm565, %v542
    %576 = vst.msk [vmem:[%s5 + $0x28] sm:$0xf] %vm565, %v543
    %577 = vst.msk [vmem:[%s5 + $0x2c] sm:$0xf] %vm565, %v544
    %578 = vst.msk [vmem:[%s5 + $0x30] sm:$0xf] %vm565, %v545
    %579 = vst.msk [vmem:[%s5 + $0x34] sm:$0xf] %vm565, %v546
    %580 = vst.msk [vmem:[%s5 + $0x38] sm:$0xf] %vm565, %v547
    %581 = vst.msk [vmem:[%s5 + $0x3c] sm:$0xf] %vm565, %v548
  $region29: #{_lambda_.16} parent=0 // pred_fallthru
    _
  // Predicated region
  $region30: #{_lambda_.16} parent=0 // pred_check
    _
  $region31: #{_lambda_.16} parent=0 // pred_check_branch
    %583 = sbr.rel (0) target = $region33
  $region32: #{_lambda_.16} parent=0 // pred_region
    _
  $region33: #{_lambda_.16} parent=0 // pred_fallthru
    _
  // Predicated region
  $region34: #{_lambda_.16} parent=0 // pred_check
    _
  $region35: #{_lambda_.16} parent=0 // pred_check_branch
    %585 = sbr.rel (0) target = $region37
  $region36: #{_lambda_.16} parent=0 // pred_region
    _
  $region37: #{_lambda_.16} parent=0 // pred_fallthru
    _

// kernel: _lambda_.17
$region0: #{_lambda_.17}
  #allocation0 [shape = 'u32[]', space=smem, size = 0x4, offset = 0x4, fixed_abs, tag = 'smem constant byte address 0x4 - core index']
  #allocation1 [shape = 'u32[144,128]{1,0:T(1,128)}', space=vmem, size = 0x12000, scoped, tag = 'internal scratch']
  #allocation2 [shape = 'f32[32,32]{1,0:T(8,128)}', space=vmem, size = 0x4000, scoped, tag = 'scratch operand']
  %s0 = inlined_call_operand.vmem [shape: bf16[32,16], index: 0, kind: input, shape index: {}]
  %s1 = inlined_call_operand.vmem [shape: bf16[16,32], index: 1, kind: input, shape index: {}]
  %s2 = inlined_call_operand.vmem [shape: f32[1,32], index: 2, kind: input, shape index: {}]
  %s3 = inlined_call_operand.vmem [shape: f32[1,32], index: 3, kind: input, shape index: {}]
  %s4 = inlined_call_operand.vmem [shape: bf16[32,32], index: 4, kind: output, shape index: {}]
  %s5 = sld [smem:[#allocation0]]
  $region34: #{_lambda_.17} parent=0
    _
  %s7 = ssub.s32 1, %s5
  %s8 = scalar_select 0, %s7, %s5
  // Predicated region
  $region2: #{_lambda_.17} parent=0 // pred_check
    _
  $region3: #{_lambda_.17} parent=0 // pred_check_branch
    %10 = sbr.rel (0) target = $region5
  $region4: #{_lambda_.17} parent=0 // pred_region
    _
  $region5: #{_lambda_.17} parent=0 // pred_fallthru
    _
  // Predicated region
  $region6: #{_lambda_.17} parent=0 // pred_check
    _
  $region7: #{_lambda_.17} parent=0 // pred_check_branch
    %12 = sbr.rel (0) target = $region9
  $region8: #{_lambda_.17} parent=0 // pred_region
    _
  $region9: #{_lambda_.17} parent=0 // pred_fallthru
    _
  // Predicated region
  $region10: #{_lambda_.17} parent=0 // pred_check
    _
  $region11: #{_lambda_.17} parent=0 // pred_check_branch
    %14 = sbr.rel (0) target = $region13
  $region12: #{_lambda_.17} parent=0 // pred_region
    _
  $region13: #{_lambda_.17} parent=0 // pred_fallthru
    _
  // Predicated region
  $region14: #{_lambda_.17} parent=0 // pred_check
    _
  $region15: #{_lambda_.17} parent=0 // pred_check_branch
    %16 = sbr.rel (0) target = $region17
  $region16: #{_lambda_.17} parent=0 // pred_region
    _
  $region17: #{_lambda_.17} parent=0 // pred_fallthru
    _
  %p18 = scmp.eq.s32.totalorder 0, 0
  // Predicated region
  $region18: #{_lambda_.17} parent=0 // pred_check
    %p19 = pneg %p18
  $region19: #{_lambda_.17} parent=0 // pred_check_branch
    %21 = sbr.rel (%p19) target = $region21
  $region20: #{_lambda_.17} parent=0 // pred_region
    %vm22 = vcmask 261120
    %23 = vst.msk [vmem:[#allocation2] sm:$0xff] %vm22, 0.0
    %24 = vst.msk [vmem:[#allocation2 + $0x8] sm:$0xff] %vm22, 0.0
    %25 = vst.msk [vmem:[#allocation2 + $0x10] sm:$0xff] %vm22, 0.0
    %26 = vst.msk [vmem:[#allocation2 + $0x18] sm:$0xff] %vm22, 0.0
  $region21: #{_lambda_.17} parent=0 // pred_fallthru
    _
  %v27 = vld [vmem:[#allocation2] sm:$0xff]
  %v28 = vld [vmem:[#allocation2 + $0x8] sm:$0xff]
  %v29 = vld [vmem:[#allocation2 + $0x10] sm:$0xff]
  %v30 = vld [vmem:[#allocation2 + $0x18] sm:$0xff]
  %v31 = vld [vmem:[%s0] sm:$0xf]
  %v32 = vld [vmem:[%s0 + $0x4] sm:$0xf]
  %v33 = vld [vmem:[%s0 + $0x8] sm:$0xf]
  %v34 = vld [vmem:[%s0 + $0xc] sm:$0xf]
  %v35 = vld [vmem:[%s1] sm:$0xf]
  %v36 = vld [vmem:[%s1 + $0x4] sm:$0xf]
  %v41 = vunpack.c.l.b16 %v31
  %v42 = vunpack.c.l.b16 %v32
  %v43 = vunpack.c.l.b16 %v33
  %v44 = vunpack.c.l.b16 %v34
  %v45 = vpack.c.b16 %v42, %v41
  %v46 = vpack.c.b16 %v44, %v43
  %v49 = vunpack.c.l.b16 %v35
  %v50 = vunpack.c.l.b16 %v36
  %v51 = vpack.c.b16 %v50, %v49
  %vm53 = vcmask 130048
  %v55 = vsel %vm53, %v45, 0
  %v58 = vsel %vm53, %v46, 0
  %60 = vmatprep.subr.bf16.mxu0 0
  %61 = vmatpush1.bf16.msra.mxu0 %v51
  %62 = vmatprep.subr.bf16.mxu0 0
  %63 = vmatpush1.bf16.msra.mxu0 0
  %64 = vmatprep.subr.bf16.mxu0 0
  %65 = vmatpush1.bf16.msra.mxu0 0
  %66 = vmatprep.subr.bf16.mxu0 0
  %67 = vmatpush1.bf16.msra.mxu0 0
  %68 = vmatprep.subr.bf16.mxu0 0
  %69 = vmatpush1.bf16.msra.mxu0 0
  %70 = vmatprep.subr.bf16.mxu0 0
  %71 = vmatpush1.bf16.msra.mxu0 0
  %72 = vmatprep.subr.bf16.mxu0 0
  %73 = vmatpush1.bf16.msra.mxu0 0
  %74 = vmatprep.subr.bf16.mxu0 0
  %75 = vmatpush1.bf16.msra.mxu0 0
  %76 = vmatprep.subr.bf16.mxu0 0
  %77 = vmatpush1.bf16.msra.mxu0 0
  %78 = vmatprep.subr.bf16.mxu0 0
  %79 = vmatpush1.bf16.msra.mxu0 0
  %80 = vmatprep.subr.bf16.mxu0 0
  %81 = vmatpush1.bf16.msra.mxu0 0
  %82 = vmatprep.subr.bf16.mxu0 0
  %83 = vmatpush1.bf16.msra.mxu0 0
  %84 = vmatprep.subr.bf16.mxu0 0
  %85 = vmatpush1.bf16.msra.mxu0 0
  %86 = vmatprep.subr.bf16.mxu0 0
  %87 = vmatpush1.bf16.msra.mxu0 0
  %88 = vmatprep.subr.bf16.mxu0 0
  %89 = vmatpush1.bf16.msra.mxu0 0
  %90 = vmatprep.subr.bf16.mxu0 0
  %91 = vmatpush1.bf16.msra.mxu0 0
  %92 = vmatprep.mubr.bf16.mxu0 0
  %93 = vmatmul.mubr.bf16.gmra.mrb[0].mxu0 %v55
  %v94 = vpop.f32.mrb[0].mxu0
  %v95 = vadd.f32 0.0, %v94
  %v96 = vpop.f32.mrb[0].mxu0
  %v97 = vpop.f32.mrb[0].mxu0
  %v98 = vadd.f32 0.0, %v97
  %v99 = vpop.f32.mrb[0].mxu0
  %100 = vmatprep.mubr.bf16.mxu0 0
  %101 = vmatmul.mubr.bf16.gmra.mrb[0].mxu0 %v58
  %v102 = vpop.f32.mrb[0].mxu0
  %v103 = vadd.f32 0.0, %v102
  %v104 = vpop.f32.mrb[0].mxu0
  %v105 = vpop.f32.mrb[0].mxu0
  %v106 = vadd.f32 0.0, %v105
  %v107 = vpop.f32.mrb[0].mxu0
  %108 = vdwg.mxu0
  %v109 = vadd.f32 %v27, %v95
  %v110 = vadd.f32 %v28, %v98
  %v111 = vadd.f32 %v29, %v103
  %v112 = vadd.f32 %v30, %v106
  %vm113 = vcmask 261120
  %114 = vst.msk [vmem:[#allocation2] sm:$0xff] %vm113, %v109
  %115 = vst.msk [vmem:[#allocation2 + $0x8] sm:$0xff] %vm113, %v110
  %116 = vst.msk [vmem:[#allocation2 + $0x10] sm:$0xff] %vm113, %v111
  %117 = vst.msk [vmem:[#allocation2 + $0x18] sm:$0xff] %vm113, %v112
  // Predicated region
  $region22: #{_lambda_.17} parent=0 // pred_check
    %p118 = pneg %p18
  $region23: #{_lambda_.17} parent=0 // pred_check_branch
    %120 = sbr.rel (%p118) target = $region25
  $region24: #{_lambda_.17} parent=0 // pred_region
    %v121 = vld [vmem:[#allocation2] sm:$0xff]
    %v122 = vld [vmem:[#allocation2 + $0x8] sm:$0xff]
    %v123 = vld [vmem:[#allocation2 + $0x10] sm:$0xff]
    %v124 = vld [vmem:[#allocation2 + $0x18] sm:$0xff]
    %v125 = vld [vmem:[%s2] sm:$0x1]
    %v127 = vlaneseq
    %v128 = vshrl.u32 %v127, 7
    %v129 = vsub.s32 0, %v128
    %v130 = vrot.slane %v125, %v129
    %v132 = vmul.f32 %v121, %v130
    %v133 = vmul.f32 %v122, %v130
    %v134 = vmul.f32 %v123, %v130
    %v135 = vmul.f32 %v124, %v130
    %v136 = vld [vmem:[%s3] sm:$0x1]
    %v138 = vlaneseq
    %v139 = vshrl.u32 %v138, 7
    %v140 = vsub.s32 0, %v139
    %v141 = vrot.slane %v136, %v140
    %v143 = vadd.f32 %v132, %v141
    %v144 = vadd.f32 %v133, %v141
    %v145 = vadd.f32 %v134, %v141
    %v146 = vadd.f32 %v135, %v141
    %v147 = vpack.c.bf16 %v144, %v143
    %v148 = vpack.c.bf16 %v146, %v145
    %v151 = vunpack.c.l.b16 %v147
    %v152 = vunpack.c.h.b16 %v147
    %v153 = vunpack.c.l.b16 %v148
    %v154 = vunpack.c.h.b16 %v148
    %v155 = vpack.c.b16 %v151, %v151
    %v156 = vpack.c.b16 %v152, %v152
    %v157 = vpack.c.b16 %v153, %v153
    %v158 = vpack.c.b16 %v154, %v154
    %vm163 = vcmask 257024
    %164 = vst.msk [vmem:[%s4] sm:$0xf] %vm163, %v155
    %165 = vst.msk [vmem:[%s4 + $0x4] sm:$0xf] %vm163, %v156
    %166 = vst.msk [vmem:[%s4 + $0x8] sm:$0xf] %vm163, %v157
    %167 = vst.msk [vmem:[%s4 + $0xc] sm:$0xf] %vm163, %v158
  $region25: #{_lambda_.17} parent=0 // pred_fallthru
    _
  // Predicated region
  $region26: #{_lambda_.17} parent=0 // pred_check
    _
  $region27: #{_lambda_.17} parent=0 // pred_check_branch
    %169 = sbr.rel (0) target = $region29
  $region28: #{_lambda_.17} parent=0 // pred_region
    _
  $region29: #{_lambda_.17} parent=0 // pred_fallthru
    _
  // Predicated region
  $region30: #{_lambda_.17} parent=0 // pred_check
    _
  $region31: #{_lambda_.17} parent=0 // pred_check_branch
    %171 = sbr.rel (0) target = $region33
  $region32: #{_lambda_.17} parent=0 // pred_region
    _
  $region33: #{_lambda_.17} parent=0 // pred_fallthru
    _

// kernel: _lambda_.18
$region0: #{_lambda_.18}
  #allocation0 [shape = 'u32[]', space=smem, size = 0x4, offset = 0x4, fixed_abs, tag = 'smem constant byte address 0x4 - core index']
  #allocation1 [shape = 'u32[144,128]{1,0:T(1,128)}', space=vmem, size = 0x12000, scoped, tag = 'internal scratch']
  #allocation2 [shape = 'f32[128,8]{1,0:T(8,128)}', space=vmem, size = 0x10000, scoped, tag = 'scratch operand']
  %s0 = inlined_call_operand.vmem [shape: bf16[128,16], index: 0, kind: input, shape index: {}]
  %s1 = inlined_call_operand.vmem [shape: bf16[16,8], index: 1, kind: input, shape index: {}]
  %s2 = inlined_call_operand.vmem [shape: f32[1,8], index: 2, kind: input, shape index: {}]
  %s3 = inlined_call_operand.vmem [shape: f32[1,8], index: 3, kind: input, shape index: {}]
  %s4 = inlined_call_operand.vmem [shape: bf16[128,8], index: 4, kind: output, shape index: {}]
  %s5 = sld [smem:[#allocation0]]
  $region34: #{_lambda_.18} parent=0
    _
  %s7 = ssub.s32 1, %s5
  %s8 = scalar_select 0, %s7, %s5
  // Predicated region
  $region2: #{_lambda_.18} parent=0 // pred_check
    _
  $region3: #{_lambda_.18} parent=0 // pred_check_branch
    %10 = sbr.rel (0) target = $region5
  $region4: #{_lambda_.18} parent=0 // pred_region
    _
  $region5: #{_lambda_.18} parent=0 // pred_fallthru
    _
  // Predicated region
  $region6: #{_lambda_.18} parent=0 // pred_check
    _
  $region7: #{_lambda_.18} parent=0 // pred_check_branch
    %12 = sbr.rel (0) target = $region9
  $region8: #{_lambda_.18} parent=0 // pred_region
    _
  $region9: #{_lambda_.18} parent=0 // pred_fallthru
    _
  // Predicated region
  $region10: #{_lambda_.18} parent=0 // pred_check
    _
  $region11: #{_lambda_.18} parent=0 // pred_check_branch
    %14 = sbr.rel (0) target = $region13
  $region12: #{_lambda_.18} parent=0 // pred_region
    _
  $region13: #{_lambda_.18} parent=0 // pred_fallthru
    _
  // Predicated region
  $region14: #{_lambda_.18} parent=0 // pred_check
    _
  $region15: #{_lambda_.18} parent=0 // pred_check_branch
    %16 = sbr.rel (0) target = $region17
  $region16: #{_lambda_.18} parent=0 // pred_region
    _
  $region17: #{_lambda_.18} parent=0 // pred_fallthru
    _
  %p18 = scmp.eq.s32.totalorder 0, 0
  // Predicated region
  $region18: #{_lambda_.18} parent=0 // pred_check
    %p19 = pneg %p18
  $region19: #{_lambda_.18} parent=0 // pred_check_branch
    %21 = sbr.rel (%p19) target = $region21
  $region20: #{_lambda_.18} parent=0 // pred_region
    %vm22 = vcmask 64512
    %23 = vst.msk [vmem:[#allocation2] sm:$0xff] %vm22, 0.0
    %24 = vst.msk [vmem:[#allocation2 + $0x8] sm:$0xff] %vm22, 0.0
    %25 = vst.msk [vmem:[#allocation2 + $0x10] sm:$0xff] %vm22, 0.0
    %26 = vst.msk [vmem:[#allocation2 + $0x18] sm:$0xff] %vm22, 0.0
    %27 = vst.msk [vmem:[#allocation2 + $0x20] sm:$0xff] %vm22, 0.0
    %28 = vst.msk [vmem:[#allocation2 + $0x28] sm:$0xff] %vm22, 0.0
    %29 = vst.msk [vmem:[#allocation2 + $0x30] sm:$0xff] %vm22, 0.0
    %30 = vst.msk [vmem:[#allocation2 + $0x38] sm:$0xff] %vm22, 0.0
    %31 = vst.msk [vmem:[#allocation2 + $0x40] sm:$0xff] %vm22, 0.0
    %32 = vst.msk [vmem:[#allocation2 + $0x48] sm:$0xff] %vm22, 0.0
    %33 = vst.msk [vmem:[#allocation2 + $0x50] sm:$0xff] %vm22, 0.0
    %34 = vst.msk [vmem:[#allocation2 + $0x58] sm:$0xff] %vm22, 0.0
    %35 = vst.msk [vmem:[#allocation2 + $0x60] sm:$0xff] %vm22, 0.0
    %36 = vst.msk [vmem:[#allocation2 + $0x68] sm:$0xff] %vm22, 0.0
    %37 = vst.msk [vmem:[#allocation2 + $0x70] sm:$0xff] %vm22, 0.0
    %38 = vst.msk [vmem:[#allocation2 + $0x78] sm:$0xff] %vm22, 0.0
  $region21: #{_lambda_.18} parent=0 // pred_fallthru
    _
  %v39 = vld [vmem:[#allocation2] sm:$0xff]
  %v40 = vld [vmem:[#allocation2 + $0x8] sm:$0xff]
  %v41 = vld [vmem:[#allocation2 + $0x10] sm:$0xff]
  %v42 = vld [vmem:[#allocation2 + $0x18] sm:$0xff]
  %v43 = vld [vmem:[#allocation2 + $0x20] sm:$0xff]
  %v44 = vld [vmem:[#allocation2 + $0x28] sm:$0xff]
  %v45 = vld [vmem:[#allocation2 + $0x30] sm:$0xff]
  %v46 = vld [vmem:[#allocation2 + $0x38] sm:$0xff]
  %v47 = vld [vmem:[#allocation2 + $0x40] sm:$0xff]
  %v48 = vld [vmem:[#allocation2 + $0x48] sm:$0xff]
  %v49 = vld [vmem:[#allocation2 + $0x50] sm:$0xff]
  %v50 = vld [vmem:[#allocation2 + $0x58] sm:$0xff]
  %v51 = vld [vmem:[#allocation2 + $0x60] sm:$0xff]
  %v52 = vld [vmem:[#allocation2 + $0x68] sm:$0xff]
  %v53 = vld [vmem:[#allocation2 + $0x70] sm:$0xff]
  %v54 = vld [vmem:[#allocation2 + $0x78] sm:$0xff]
  %v55 = vld [vmem:[%s0] sm:$0xf]
  %v56 = vld [vmem:[%s0 + $0x4] sm:$0xf]
  %v57 = vld [vmem:[%s0 + $0x8] sm:$0xf]
  %v58 = vld [vmem:[%s0 + $0xc] sm:$0xf]
  %v59 = vld [vmem:[%s0 + $0x10] sm:$0xf]
  %v60 = vld [vmem:[%s0 + $0x14] sm:$0xf]
  %v61 = vld [vmem:[%s0 + $0x18] sm:$0xf]
  %v62 = vld [vmem:[%s0 + $0x1c] sm:$0xf]
  %v63 = vld [vmem:[%s0 + $0x20] sm:$0xf]
  %v64 = vld [vmem:[%s0 + $0x24] sm:$0xf]
  %v65 = vld [vmem:[%s0 + $0x28] sm:$0xf]
  %v66 = vld [vmem:[%s0 + $0x2c] sm:$0xf]
  %v67 = vld [vmem:[%s0 + $0x30] sm:$0xf]
  %v68 = vld [vmem:[%s0 + $0x34] sm:$0xf]
  %v69 = vld [vmem:[%s0 + $0x38] sm:$0xf]
  %v70 = vld [vmem:[%s0 + $0x3c] sm:$0xf]
  %v71 = vld [vmem:[%s1] sm:$0xf]
  %v72 = vld [vmem:[%s1 + $0x4] sm:$0xf]
  %v89 = vunpack.c.l.b16 %v55
  %v90 = vunpack.c.l.b16 %v56
  %v91 = vunpack.c.l.b16 %v57
  %v92 = vunpack.c.l.b16 %v58
  %v93 = vunpack.c.l.b16 %v59
  %v94 = vunpack.c.l.b16 %v60
  %v95 = vunpack.c.l.b16 %v61
  %v96 = vunpack.c.l.b16 %v62
  %v97 = vunpack.c.l.b16 %v63
  %v98 = vunpack.c.l.b16 %v64
  %v99 = vunpack.c.l.b16 %v65
  %v100 = vunpack.c.l.b16 %v66
  %v101 = vunpack.c.l.b16 %v67
  %v102 = vunpack.c.l.b16 %v68
  %v103 = vunpack.c.l.b16 %v69
  %v104 = vunpack.c.l.b16 %v70
  %v105 = vpack.c.b16 %v90, %v89
  %v106 = vpack.c.b16 %v92, %v91
  %v107 = vpack.c.b16 %v94, %v93
  %v108 = vpack.c.b16 %v96, %v95
  %v109 = vpack.c.b16 %v98, %v97
  %v110 = vpack.c.b16 %v100, %v99
  %v111 = vpack.c.b16 %v102, %v101
  %v112 = vpack.c.b16 %v104, %v103
  %v115 = vunpack.c.l.b16 %v71
  %v116 = vunpack.c.l.b16 %v72
  %v117 = vpack.c.b16 %v116, %v115
  %vm119 = vcmask 130048
  %v121 = vsel %vm119, %v105, 0
  %v124 = vsel %vm119, %v106, 0
  %v127 = vsel %vm119, %v107, 0
  %v130 = vsel %vm119, %v108, 0
  %v133 = vsel %vm119, %v109, 0
  %v136 = vsel %vm119, %v110, 0
  %v139 = vsel %vm119, %v111, 0
  %v142 = vsel %vm119, %v112, 0
  %144 = vmatprep.subr.bf16.mxu0 0
  %145 = vmatpush1.bf16.msra.mxu0 %v117
  %146 = vmatprep.subr.bf16.mxu0 0
  %147 = vmatpush1.bf16.msra.mxu0 0
  %148 = vmatprep.subr.bf16.mxu0 0
  %149 = vmatpush1.bf16.msra.mxu0 0
  %150 = vmatprep.subr.bf16.mxu0 0
  %151 = vmatpush1.bf16.msra.mxu0 0
  %152 = vmatprep.subr.bf16.mxu0 0
  %153 = vmatpush1.bf16.msra.mxu0 0
  %154 = vmatprep.subr.bf16.mxu0 0
  %155 = vmatpush1.bf16.msra.mxu0 0
  %156 = vmatprep.subr.bf16.mxu0 0
  %157 = vmatpush1.bf16.msra.mxu0 0
  %158 = vmatprep.subr.bf16.mxu0 0
  %159 = vmatpush1.bf16.msra.mxu0 0
  %160 = vmatprep.subr.bf16.mxu0 0
  %161 = vmatpush1.bf16.msra.mxu0 0
  %162 = vmatprep.subr.bf16.mxu0 0
  %163 = vmatpush1.bf16.msra.mxu0 0
  %164 = vmatprep.subr.bf16.mxu0 0
  %165 = vmatpush1.bf16.msra.mxu0 0
  %166 = vmatprep.subr.bf16.mxu0 0
  %167 = vmatpush1.bf16.msra.mxu0 0
  %168 = vmatprep.subr.bf16.mxu0 0
  %169 = vmatpush1.bf16.msra.mxu0 0
  %170 = vmatprep.subr.bf16.mxu0 0
  %171 = vmatpush1.bf16.msra.mxu0 0
  %172 = vmatprep.subr.bf16.mxu0 0
  %173 = vmatpush1.bf16.msra.mxu0 0
  %174 = vmatprep.subr.bf16.mxu0 0
  %175 = vmatpush1.bf16.msra.mxu0 0
  %176 = vmatprep.mubr.bf16.mxu0 0
  %177 = vmatmul.mubr.bf16.gmra.mrb[0].mxu0 %v121
  %v178 = vpop.f32.mrb[0].mxu0
  %v179 = vadd.f32 0.0, %v178
  %v180 = vpop.f32.mrb[0].mxu0
  %v181 = vpop.f32.mrb[0].mxu0
  %v182 = vadd.f32 0.0, %v181
  %v183 = vpop.f32.mrb[0].mxu0
  %184 = vmatprep.mubr.bf16.mxu0 0
  %185 = vmatmul.mubr.bf16.gmra.mrb[0].mxu0 %v124
  %v186 = vpop.f32.mrb[0].mxu0
  %v187 = vadd.f32 0.0, %v186
  %v188 = vpop.f32.mrb[0].mxu0
  %v189 = vpop.f32.mrb[0].mxu0
  %v190 = vadd.f32 0.0, %v189
  %v191 = vpop.f32.mrb[0].mxu0
  %192 = vmatprep.mubr.bf16.mxu0 0
  %193 = vmatmul.mubr.bf16.gmra.mrb[0].mxu0 %v127
  %v194 = vpop.f32.mrb[0].mxu0
  %v195 = vadd.f32 0.0, %v194
  %v196 = vpop.f32.mrb[0].mxu0
  %v197 = vpop.f32.mrb[0].mxu0
  %v198 = vadd.f32 0.0, %v197
  %v199 = vpop.f32.mrb[0].mxu0
  %200 = vmatprep.mubr.bf16.mxu0 0
  %201 = vmatmul.mubr.bf16.gmra.mrb[0].mxu0 %v130
  %v202 = vpop.f32.mrb[0].mxu0
  %v203 = vadd.f32 0.0, %v202
  %v204 = vpop.f32.mrb[0].mxu0
  %v205 = vpop.f32.mrb[0].mxu0
  %v206 = vadd.f32 0.0, %v205
  %v207 = vpop.f32.mrb[0].mxu0
  %208 = vmatprep.mubr.bf16.mxu0 0
  %209 = vmatmul.mubr.bf16.gmra.mrb[0].mxu0 %v133
  %v210 = vpop.f32.mrb[0].mxu0
  %v211 = vadd.f32 0.0, %v210
  %v212 = vpop.f32.mrb[0].mxu0
  %v213 = vpop.f32.mrb[0].mxu0
  %v214 = vadd.f32 0.0, %v213
  %v215 = vpop.f32.mrb[0].mxu0
  %216 = vmatprep.mubr.bf16.mxu0 0
  %217 = vmatmul.mubr.bf16.gmra.mrb[0].mxu0 %v136
  %v218 = vpop.f32.mrb[0].mxu0
  %v219 = vadd.f32 0.0, %v218
  %v220 = vpop.f32.mrb[0].mxu0
  %v221 = vpop.f32.mrb[0].mxu0
  %v222 = vadd.f32 0.0, %v221
  %v223 = vpop.f32.mrb[0].mxu0
  %224 = vmatprep.mubr.bf16.mxu0 0
  %225 = vmatmul.mubr.bf16.gmra.mrb[0].mxu0 %v139
  %v226 = vpop.f32.mrb[0].mxu0
  %v227 = vadd.f32 0.0, %v226
  %v228 = vpop.f32.mrb[0].mxu0
  %v229 = vpop.f32.mrb[0].mxu0
  %v230 = vadd.f32 0.0, %v229
  %v231 = vpop.f32.mrb[0].mxu0
  %232 = vmatprep.mubr.bf16.mxu0 0
  %233 = vmatmul.mubr.bf16.gmra.mrb[0].mxu0 %v142
  %v234 = vpop.f32.mrb[0].mxu0
  %v235 = vadd.f32 0.0, %v234
  %v236 = vpop.f32.mrb[0].mxu0
  %v237 = vpop.f32.mrb[0].mxu0
  %v238 = vadd.f32 0.0, %v237
  %v239 = vpop.f32.mrb[0].mxu0
  %240 = vdwg.mxu0
  %v241 = vadd.f32 %v39, %v179
  %v242 = vadd.f32 %v40, %v182
  %v243 = vadd.f32 %v41, %v187
  %v244 = vadd.f32 %v42, %v190
  %v245 = vadd.f32 %v43, %v195
  %v246 = vadd.f32 %v44, %v198
  %v247 = vadd.f32 %v45, %v203
  %v248 = vadd.f32 %v46, %v206
  %v249 = vadd.f32 %v47, %v211
  %v250 = vadd.f32 %v48, %v214
  %v251 = vadd.f32 %v49, %v219
  %v252 = vadd.f32 %v50, %v222
  %v253 = vadd.f32 %v51, %v227
  %v254 = vadd.f32 %v52, %v230
  %v255 = vadd.f32 %v53, %v235
  %v256 = vadd.f32 %v54, %v238
  %vm257 = vcmask 64512
  %258 = vst.msk [vmem:[#allocation2] sm:$0xff] %vm257, %v241
  %259 = vst.msk [vmem:[#allocation2 + $0x8] sm:$0xff] %vm257, %v242
  %260 = vst.msk [vmem:[#allocation2 + $0x10] sm:$0xff] %vm257, %v243
  %261 = vst.msk [vmem:[#allocation2 + $0x18] sm:$0xff] %vm257, %v244
  %262 = vst.msk [vmem:[#allocation2 + $0x20] sm:$0xff] %vm257, %v245
  %263 = vst.msk [vmem:[#allocation2 + $0x28] sm:$0xff] %vm257, %v246
  %264 = vst.msk [vmem:[#allocation2 + $0x30] sm:$0xff] %vm257, %v247
  %265 = vst.msk [vmem:[#allocation2 + $0x38] sm:$0xff] %vm257, %v248
  %266 = vst.msk [vmem:[#allocation2 + $0x40] sm:$0xff] %vm257, %v249
  %267 = vst.msk [vmem:[#allocation2 + $0x48] sm:$0xff] %vm257, %v250
  %268 = vst.msk [vmem:[#allocation2 + $0x50] sm:$0xff] %vm257, %v251
  %269 = vst.msk [vmem:[#allocation2 + $0x58] sm:$0xff] %vm257, %v252
  %270 = vst.msk [vmem:[#allocation2 + $0x60] sm:$0xff] %vm257, %v253
  %271 = vst.msk [vmem:[#allocation2 + $0x68] sm:$0xff] %vm257, %v254
  %272 = vst.msk [vmem:[#allocation2 + $0x70] sm:$0xff] %vm257, %v255
  %273 = vst.msk [vmem:[#allocation2 + $0x78] sm:$0xff] %vm257, %v256
  // Predicated region
  $region22: #{_lambda_.18} parent=0 // pred_check
    %p274 = pneg %p18
  $region23: #{_lambda_.18} parent=0 // pred_check_branch
    %276 = sbr.rel (%p274) target = $region25
  $region24: #{_lambda_.18} parent=0 // pred_region
    %v277 = vld [vmem:[#allocation2] sm:$0xff]
    %v278 = vld [vmem:[#allocation2 + $0x8] sm:$0xff]
    %v279 = vld [vmem:[#allocation2 + $0x10] sm:$0xff]
    %v280 = vld [vmem:[#allocation2 + $0x18] sm:$0xff]
    %v281 = vld [vmem:[#allocation2 + $0x20] sm:$0xff]
    %v282 = vld [vmem:[#allocation2 + $0x28] sm:$0xff]
    %v283 = vld [vmem:[#allocation2 + $0x30] sm:$0xff]
    %v284 = vld [vmem:[#allocation2 + $0x38] sm:$0xff]
    %v285 = vld [vmem:[#allocation2 + $0x40] sm:$0xff]
    %v286 = vld [vmem:[#allocation2 + $0x48] sm:$0xff]
    %v287 = vld [vmem:[#allocation2 + $0x50] sm:$0xff]
    %v288 = vld [vmem:[#allocation2 + $0x58] sm:$0xff]
    %v289 = vld [vmem:[#allocation2 + $0x60] sm:$0xff]
    %v290 = vld [vmem:[#allocation2 + $0x68] sm:$0xff]
    %v291 = vld [vmem:[#allocation2 + $0x70] sm:$0xff]
    %v292 = vld [vmem:[#allocation2 + $0x78] sm:$0xff]
    %v293 = vld [vmem:[%s2] sm:$0x1]
    %v295 = vlaneseq
    %v296 = vshrl.u32 %v295, 7
    %v297 = vsub.s32 0, %v296
    %v298 = vrot.slane %v293, %v297
    %v300 = vmul.f32 %v277, %v298
    %v301 = vmul.f32 %v278, %v298
    %v302 = vmul.f32 %v279, %v298
    %v303 = vmul.f32 %v280, %v298
    %v304 = vmul.f32 %v281, %v298
    %v305 = vmul.f32 %v282, %v298
    %v306 = vmul.f32 %v283, %v298
    %v307 = vmul.f32 %v284, %v298
    %v308 = vmul.f32 %v285, %v298
    %v309 = vmul.f32 %v286, %v298
    %v310 = vmul.f32 %v287, %v298
    %v311 = vmul.f32 %v288, %v298
    %v312 = vmul.f32 %v289, %v298
    %v313 = vmul.f32 %v290, %v298
    %v314 = vmul.f32 %v291, %v298
    %v315 = vmul.f32 %v292, %v298
    %v316 = vld [vmem:[%s3] sm:$0x1]
    %v318 = vlaneseq
    %v319 = vshrl.u32 %v318, 7
    %v320 = vsub.s32 0, %v319
    %v321 = vrot.slane %v316, %v320
    %v323 = vadd.f32 %v300, %v321
    %v324 = vadd.f32 %v301, %v321
    %v325 = vadd.f32 %v302, %v321
    %v326 = vadd.f32 %v303, %v321
    %v327 = vadd.f32 %v304, %v321
    %v328 = vadd.f32 %v305, %v321
    %v329 = vadd.f32 %v306, %v321
    %v330 = vadd.f32 %v307, %v321
    %v331 = vadd.f32 %v308, %v321
    %v332 = vadd.f32 %v309, %v321
    %v333 = vadd.f32 %v310, %v321
    %v334 = vadd.f32 %v311, %v321
    %v335 = vadd.f32 %v312, %v321
    %v336 = vadd.f32 %v313, %v321
    %v337 = vadd.f32 %v314, %v321
    %v338 = vadd.f32 %v315, %v321
    %v339 = vmax.f32 %v323, 0.0
    %v340 = vmax.f32 %v324, 0.0
    %v341 = vmax.f32 %v325, 0.0
    %v342 = vmax.f32 %v326, 0.0
    %v343 = vmax.f32 %v327, 0.0
    %v344 = vmax.f32 %v328, 0.0
    %v345 = vmax.f32 %v329, 0.0
    %v346 = vmax.f32 %v330, 0.0
    %v347 = vmax.f32 %v331, 0.0
    %v348 = vmax.f32 %v332, 0.0
    %v349 = vmax.f32 %v333, 0.0
    %v350 = vmax.f32 %v334, 0.0
    %v351 = vmax.f32 %v335, 0.0
    %v352 = vmax.f32 %v336, 0.0
    %v353 = vmax.f32 %v337, 0.0
    %v354 = vmax.f32 %v338, 0.0
    %v355 = vpack.c.bf16 %v340, %v339
    %v356 = vpack.c.bf16 %v342, %v341
    %v357 = vpack.c.bf16 %v344, %v343
    %v358 = vpack.c.bf16 %v346, %v345
    %v359 = vpack.c.bf16 %v348, %v347
    %v360 = vpack.c.bf16 %v350, %v349
    %v361 = vpack.c.bf16 %v352, %v351
    %v362 = vpack.c.bf16 %v354, %v353
    %v371 = vunpack.c.l.b16 %v355
    %v372 = vunpack.c.h.b16 %v355
    %v373 = vunpack.c.l.b16 %v356
    %v374 = vunpack.c.h.b16 %v356
    %v375 = vunpack.c.l.b16 %v357
    %v376 = vunpack.c.h.b16 %v357
    %v377 = vunpack.c.l.b16 %v358
    %v378 = vunpack.c.h.b16 %v358
    %v379 = vunpack.c.l.b16 %v359
    %v380 = vunpack.c.h.b16 %v359
    %v381 = vunpack.c.l.b16 %v360
    %v382 = vunpack.c.h.b16 %v360
    %v383 = vunpack.c.l.b16 %v361
    %v384 = vunpack.c.h.b16 %v361
    %v385 = vunpack.c.l.b16 %v362
    %v386 = vunpack.c.h.b16 %v362
    %v387 = vpack.c.b16 %v371, %v371
    %v388 = vpack.c.b16 %v372, %v372
    %v389 = vpack.c.b16 %v373, %v373
    %v390 = vpack.c.b16 %v374, %v374
    %v391 = vpack.c.b16 %v375, %v375
    %v392 = vpack.c.b16 %v376, %v376
    %v393 = vpack.c.b16 %v377, %v377
    %v394 = vpack.c.b16 %v378, %v378
    %v395 = vpack.c.b16 %v379, %v379
    %v396 = vpack.c.b16 %v380, %v380
    %v397 = vpack.c.b16 %v381, %v381
    %v398 = vpack.c.b16 %v382, %v382
    %v399 = vpack.c.b16 %v383, %v383
    %v400 = vpack.c.b16 %v384, %v384
    %v401 = vpack.c.b16 %v385, %v385
    %v402 = vpack.c.b16 %v386, %v386
    %vm419 = vcmask 60416
    %420 = vst.msk [vmem:[%s4] sm:$0xf] %vm419, %v387
    %421 = vst.msk [vmem:[%s4 + $0x4] sm:$0xf] %vm419, %v388
    %422 = vst.msk [vmem:[%s4 + $0x8] sm:$0xf] %vm419, %v389
    %423 = vst.msk [vmem:[%s4 + $0xc] sm:$0xf] %vm419, %v390
    %424 = vst.msk [vmem:[%s4 + $0x10] sm:$0xf] %vm419, %v391
    %425 = vst.msk [vmem:[%s4 + $0x14] sm:$0xf] %vm419, %v392
    %426 = vst.msk [vmem:[%s4 + $0x18] sm:$0xf] %vm419, %v393
    %427 = vst.msk [vmem:[%s4 + $0x1c] sm:$0xf] %vm419, %v394
    %428 = vst.msk [vmem:[%s4 + $0x20] sm:$0xf] %vm419, %v395
    %429 = vst.msk [vmem:[%s4 + $0x24] sm:$0xf] %vm419, %v396
    %430 = vst.msk [vmem:[%s4 + $0x28] sm:$0xf] %vm419, %v397
    %431 = vst.msk [vmem:[%s4 + $0x2c] sm:$0xf] %vm419, %v398
    %432 = vst.msk [vmem:[%s4 + $0x30] sm:$0xf] %vm419, %v399
    %433 = vst.msk [vmem:[%s4 + $0x34] sm:$0xf] %vm419, %v400
    %434 = vst.msk [vmem:[%s4 + $0x38] sm:$0xf] %vm419, %v401
    %435 = vst.msk [vmem:[%s4 + $0x3c] sm:$0xf] %vm419, %v402
  $region25: #{_lambda_.18} parent=0 // pred_fallthru
    _
  // Predicated region
  $region26: #{_lambda_.18} parent=0 // pred_check
    _
  $region27: #{_lambda_.18} parent=0 // pred_check_branch
    %437 = sbr.rel (0) target = $region29
  $region28: #{_lambda_.18} parent=0 // pred_region
    _
  $region29: #{_lambda_.18} parent=0 // pred_fallthru
    _
  // Predicated region
  $region30: #{_lambda_.18} parent=0 // pred_check
    _
  $region31: #{_lambda_.18} parent=0 // pred_check_branch
    %439 = sbr.rel (0) target = $region33
  $region32: #{_lambda_.18} parent=0 // pred_region
    _
  $region33: #{_lambda_.18} parent=0 // pred_fallthru
    _

// kernel: _lambda_.19
$region0: #{_lambda_.19}
  #allocation0 [shape = 'u32[]', space=smem, size = 0x4, offset = 0x4, fixed_abs, tag = 'smem constant byte address 0x4 - core index']
  #allocation1 [shape = 'u32[144,128]{1,0:T(1,128)}', space=vmem, size = 0x12000, scoped, tag = 'internal scratch']
  #allocation2 [shape = 'f32[32,8]{1,0:T(8,128)}', space=vmem, size = 0x4000, scoped, tag = 'scratch operand']
  %s0 = inlined_call_operand.vmem [shape: bf16[32,72], index: 0, kind: input, shape index: {}]
  %s1 = inlined_call_operand.vmem [shape: bf16[72,8], index: 1, kind: input, shape index: {}]
  %s2 = inlined_call_operand.vmem [shape: f32[1,8], index: 2, kind: input, shape index: {}]
  %s3 = inlined_call_operand.vmem [shape: f32[1,8], index: 3, kind: input, shape index: {}]
  %s4 = inlined_call_operand.vmem [shape: bf16[32,8], index: 4, kind: output, shape index: {}]
  %s5 = sld [smem:[#allocation0]]
  $region34: #{_lambda_.19} parent=0
    _
  %s7 = ssub.s32 1, %s5
  %s8 = scalar_select 0, %s7, %s5
  // Predicated region
  $region2: #{_lambda_.19} parent=0 // pred_check
    _
  $region3: #{_lambda_.19} parent=0 // pred_check_branch
    %10 = sbr.rel (0) target = $region5
  $region4: #{_lambda_.19} parent=0 // pred_region
    _
  $region5: #{_lambda_.19} parent=0 // pred_fallthru
    _
  // Predicated region
  $region6: #{_lambda_.19} parent=0 // pred_check
    _
  $region7: #{_lambda_.19} parent=0 // pred_check_branch
    %12 = sbr.rel (0) target = $region9
  $region8: #{_lambda_.19} parent=0 // pred_region
    _
  $region9: #{_lambda_.19} parent=0 // pred_fallthru
    _
  // Predicated region
  $region10: #{_lambda_.19} parent=0 // pred_check
    _
  $region11: #{_lambda_.19} parent=0 // pred_check_branch
    %14 = sbr.rel (0) target = $region13
  $region12: #{_lambda_.19} parent=0 // pred_region
    _
  $region13: #{_lambda_.19} parent=0 // pred_fallthru
    _
  // Predicated region
  $region14: #{_lambda_.19} parent=0 // pred_check
    _
  $region15: #{_lambda_.19} parent=0 // pred_check_branch
    %16 = sbr.rel (0) target = $region17
  $region16: #{_lambda_.19} parent=0 // pred_region
    _
  $region17: #{_lambda_.19} parent=0 // pred_fallthru
    _
  %p18 = scmp.eq.s32.totalorder 0, 0
  // Predicated region
  $region18: #{_lambda_.19} parent=0 // pred_check
    %p19 = pneg %p18
  $region19: #{_lambda_.19} parent=0 // pred_check_branch
    %21 = sbr.rel (%p19) target = $region21
  $region20: #{_lambda_.19} parent=0 // pred_region
    %vm22 = vcmask 64512
    %23 = vst.msk [vmem:[#allocation2] sm:$0xff] %vm22, 0.0
    %24 = vst.msk [vmem:[#allocation2 + $0x8] sm:$0xff] %vm22, 0.0
    %25 = vst.msk [vmem:[#allocation2 + $0x10] sm:$0xff] %vm22, 0.0
    %26 = vst.msk [vmem:[#allocation2 + $0x18] sm:$0xff] %vm22, 0.0
  $region21: #{_lambda_.19} parent=0 // pred_fallthru
    _
  %v27 = vld [vmem:[#allocation2] sm:$0xff]
  %v28 = vld [vmem:[#allocation2 + $0x8] sm:$0xff]
  %v29 = vld [vmem:[#allocation2 + $0x10] sm:$0xff]
  %v30 = vld [vmem:[#allocation2 + $0x18] sm:$0xff]
  %v31 = vld [vmem:[%s0] sm:$0xf]
  %v32 = vld [vmem:[%s0 + $0x4] sm:$0xf]
  %v33 = vld [vmem:[%s0 + $0x8] sm:$0xf]
  %v34 = vld [vmem:[%s0 + $0xc] sm:$0xf]
  %v35 = vld [vmem:[%s1] sm:$0xf]
  %v36 = vld [vmem:[%s1 + $0x4] sm:$0xf]
  %v37 = vld [vmem:[%s1 + $0x8] sm:$0xf]
  %v38 = vld [vmem:[%s1 + $0xc] sm:$0xf]
  %v39 = vld [vmem:[%s1 + $0x10] sm:$0xf]
  %v40 = vld [vmem:[%s1 + $0x14] sm:$0xf]
  %v41 = vld [vmem:[%s1 + $0x18] sm:$0xf]
  %v42 = vld [vmem:[%s1 + $0x1c] sm:$0xf]
  %v43 = vld [vmem:[%s1 + $0x20] sm:$0xf]
  %v48 = vunpack.c.l.b16 %v31
  %v49 = vunpack.c.l.b16 %v32
  %v50 = vunpack.c.l.b16 %v33
  %v51 = vunpack.c.l.b16 %v34
  %v52 = vpack.c.b16 %v49, %v48
  %v53 = vpack.c.b16 %v51, %v50
  %v63 = vunpack.c.l.b16 %v35
  %v64 = vunpack.c.l.b16 %v36
  %v65 = vunpack.c.l.b16 %v37
  %v66 = vunpack.c.l.b16 %v38
  %v67 = vunpack.c.l.b16 %v39
  %v68 = vunpack.c.l.b16 %v40
  %v69 = vunpack.c.l.b16 %v41
  %v70 = vunpack.c.l.b16 %v42
  %v71 = vunpack.c.l.b16 %v43
  %v72 = vpack.c.b16 %v64, %v63
  %v73 = vpack.c.b16 %v66, %v65
  %v74 = vpack.c.b16 %v68, %v67
  %v75 = vpack.c.b16 %v70, %v69
  %v76 = vpack.c.b16 %v71, %v71
  %vm81 = vcmask 588800
  %v83 = vsel %vm81, %v52, 0
  %v86 = vsel %vm81, %v53, 0
  %vm88 = vcmask 1043456
  %v90 = vsel %vm88, %v76, 0
  %92 = vmatprep.subr.bf16.mxu0 0
  %93 = vmatpush1.bf16.msra.mxu0 %v72
  %94 = vmatprep.subr.bf16.mxu0 0
  %95 = vmatpush1.bf16.msra.mxu0 %v73
  %96 = vmatprep.subr.bf16.mxu0 0
  %97 = vmatpush1.bf16.msra.mxu0 %v74
  %98 = vmatprep.subr.bf16.mxu0 0
  %99 = vmatpush1.bf16.msra.mxu0 %v75
  %100 = vmatprep.subr.bf16.mxu0 0
  %101 = vmatpush1.bf16.msra.mxu0 %v90
  %102 = vmatprep.subr.bf16.mxu0 0
  %103 = vmatpush1.bf16.msra.mxu0 0
  %104 = vmatprep.subr.bf16.mxu0 0
  %105 = vmatpush1.bf16.msra.mxu0 0
  %106 = vmatprep.subr.bf16.mxu0 0
  %107 = vmatpush1.bf16.msra.mxu0 0
  %108 = vmatprep.subr.bf16.mxu0 0
  %109 = vmatpush1.bf16.msra.mxu0 0
  %110 = vmatprep.subr.bf16.mxu0 0
  %111 = vmatpush1.bf16.msra.mxu0 0
  %112 = vmatprep.subr.bf16.mxu0 0
  %113 = vmatpush1.bf16.msra.mxu0 0
  %114 = vmatprep.subr.bf16.mxu0 0
  %115 = vmatpush1.bf16.msra.mxu0 0
  %116 = vmatprep.subr.bf16.mxu0 0
  %117 = vmatpush1.bf16.msra.mxu0 0
  %118 = vmatprep.subr.bf16.mxu0 0
  %119 = vmatpush1.bf16.msra.mxu0 0
  %120 = vmatprep.subr.bf16.mxu0 0
  %121 = vmatpush1.bf16.msra.mxu0 0
  %122 = vmatprep.subr.bf16.mxu0 0
  %123 = vmatpush1.bf16.msra.mxu0 0
  %124 = vmatprep.mubr.bf16.mxu0 0
  %125 = vmatmul.mubr.bf16.gmra.mrb[0].mxu0 %v83
  %v126 = vpop.f32.mrb[0].mxu0
  %v127 = vadd.f32 0.0, %v126
  %v128 = vpop.f32.mrb[0].mxu0
  %v129 = vpop.f32.mrb[0].mxu0
  %v130 = vadd.f32 0.0, %v129
  %v131 = vpop.f32.mrb[0].mxu0
  %132 = vmatprep.mubr.bf16.mxu0 0
  %133 = vmatmul.mubr.bf16.gmra.mrb[0].mxu0 %v86
  %v134 = vpop.f32.mrb[0].mxu0
  %v135 = vadd.f32 0.0, %v134
  %v136 = vpop.f32.mrb[0].mxu0
  %v137 = vpop.f32.mrb[0].mxu0
  %v138 = vadd.f32 0.0, %v137
  %v139 = vpop.f32.mrb[0].mxu0
  %140 = vdwg.mxu0
  %v141 = vadd.f32 %v27, %v127
  %v142 = vadd.f32 %v28, %v130
  %v143 = vadd.f32 %v29, %v135
  %v144 = vadd.f32 %v30, %v138
  %vm145 = vcmask 64512
  %146 = vst.msk [vmem:[#allocation2] sm:$0xff] %vm145, %v141
  %147 = vst.msk [vmem:[#allocation2 + $0x8] sm:$0xff] %vm145, %v142
  %148 = vst.msk [vmem:[#allocation2 + $0x10] sm:$0xff] %vm145, %v143
  %149 = vst.msk [vmem:[#allocation2 + $0x18] sm:$0xff] %vm145, %v144
  // Predicated region
  $region22: #{_lambda_.19} parent=0 // pred_check
    %p150 = pneg %p18
  $region23: #{_lambda_.19} parent=0 // pred_check_branch
    %152 = sbr.rel (%p150) target = $region25
  $region24: #{_lambda_.19} parent=0 // pred_region
    %v153 = vld [vmem:[#allocation2] sm:$0xff]
    %v154 = vld [vmem:[#allocation2 + $0x8] sm:$0xff]
    %v155 = vld [vmem:[#allocation2 + $0x10] sm:$0xff]
    %v156 = vld [vmem:[#allocation2 + $0x18] sm:$0xff]
    %v157 = vld [vmem:[%s2] sm:$0x1]
    %v159 = vlaneseq
    %v160 = vshrl.u32 %v159, 7
    %v161 = vsub.s32 0, %v160
    %v162 = vrot.slane %v157, %v161
    %v164 = vmul.f32 %v153, %v162
    %v165 = vmul.f32 %v154, %v162
    %v166 = vmul.f32 %v155, %v162
    %v167 = vmul.f32 %v156, %v162
    %v168 = vld [vmem:[%s3] sm:$0x1]
    %v170 = vlaneseq
    %v171 = vshrl.u32 %v170, 7
    %v172 = vsub.s32 0, %v171
    %v173 = vrot.slane %v168, %v172
    %v175 = vadd.f32 %v164, %v173
    %v176 = vadd.f32 %v165, %v173
    %v177 = vadd.f32 %v166, %v173
    %v178 = vadd.f32 %v167, %v173
    %v179 = vmax.f32 %v175, 0.0
    %v180 = vmax.f32 %v176, 0.0
    %v181 = vmax.f32 %v177, 0.0
    %v182 = vmax.f32 %v178, 0.0
    %v183 = vpack.c.bf16 %v180, %v179
    %v184 = vpack.c.bf16 %v182, %v181
    %v187 = vunpack.c.l.b16 %v183
    %v188 = vunpack.c.h.b16 %v183
    %v189 = vunpack.c.l.b16 %v184
    %v190 = vunpack.c.h.b16 %v184
    %v191 = vpack.c.b16 %v187, %v187
    %v192 = vpack.c.b16 %v188, %v188
    %v193 = vpack.c.b16 %v189, %v189
    %v194 = vpack.c.b16 %v190, %v190
    %vm199 = vcmask 60416
    %200 = vst.msk [vmem:[%s4] sm:$0xf] %vm199, %v191
    %201 = vst.msk [vmem:[%s4 + $0x4] sm:$0xf] %vm199, %v192
    %202 = vst.msk [vmem:[%s4 + $0x8] sm:$0xf] %vm199, %v193
    %203 = vst.msk [vmem:[%s4 + $0xc] sm:$0xf] %vm199, %v194
  $region25: #{_lambda_.19} parent=0 // pred_fallthru
    _
  // Predicated region
  $region26: #{_lambda_.19} parent=0 // pred_check
    _
  $region27: #{_lambda_.19} parent=0 // pred_check_branch
    %205 = sbr.rel (0) target = $region29
  $region28: #{_lambda_.19} parent=0 // pred_region
    _
  $region29: #{_lambda_.19} parent=0 // pred_fallthru
    _
  // Predicated region
  $region30: #{_lambda_.19} parent=0 // pred_check
    _
  $region31: #{_lambda_.19} parent=0 // pred_check_branch
    %207 = sbr.rel (0) target = $region33
  $region32: #{_lambda_.19} parent=0 // pred_region
    _
  $region33: #{_lambda_.19} parent=0 // pred_fallthru
    _

// kernel: _lambda_.21
$region0: #{_lambda_.21}
  #allocation0 [shape = 'u32[]', space=smem, size = 0x4, offset = 0x4, fixed_abs, tag = 'smem constant byte address 0x4 - core index']
  #allocation1 [shape = 'u32[144,128]{1,0:T(1,128)}', space=vmem, size = 0x12000, scoped, tag = 'internal scratch']
  #allocation2 [shape = 'f32[32,96]{1,0:T(8,128)}', space=vmem, size = 0x4000, scoped, tag = 'scratch operand']
  %s0 = inlined_call_operand.vmem [shape: bf16[32,32], index: 0, kind: input, shape index: {}]
  %s1 = inlined_call_operand.vmem [shape: bf16[32,96], index: 1, kind: input, shape index: {}]
  %s2 = inlined_call_operand.vmem [shape: f32[1,96], index: 2, kind: input, shape index: {}]
  %s3 = inlined_call_operand.vmem [shape: f32[1,96], index: 3, kind: input, shape index: {}]
  %s4 = inlined_call_operand.vmem [shape: bf16[32,96], index: 4, kind: output, shape index: {}]
  %s5 = sld [smem:[#allocation0]]
  $region34: #{_lambda_.21} parent=0
    _
  %s7 = ssub.s32 1, %s5
  %s8 = scalar_select 0, %s7, %s5
  // Predicated region
  $region2: #{_lambda_.21} parent=0 // pred_check
    _
  $region3: #{_lambda_.21} parent=0 // pred_check_branch
    %10 = sbr.rel (0) target = $region5
  $region4: #{_lambda_.21} parent=0 // pred_region
    _
  $region5: #{_lambda_.21} parent=0 // pred_fallthru
    _
  // Predicated region
  $region6: #{_lambda_.21} parent=0 // pred_check
    _
  $region7: #{_lambda_.21} parent=0 // pred_check_branch
    %12 = sbr.rel (0) target = $region9
  $region8: #{_lambda_.21} parent=0 // pred_region
    _
  $region9: #{_lambda_.21} parent=0 // pred_fallthru
    _
  // Predicated region
  $region10: #{_lambda_.21} parent=0 // pred_check
    _
  $region11: #{_lambda_.21} parent=0 // pred_check_branch
    %14 = sbr.rel (0) target = $region13
  $region12: #{_lambda_.21} parent=0 // pred_region
    _
  $region13: #{_lambda_.21} parent=0 // pred_fallthru
    _
  // Predicated region
  $region14: #{_lambda_.21} parent=0 // pred_check
    _
  $region15: #{_lambda_.21} parent=0 // pred_check_branch
    %16 = sbr.rel (0) target = $region17
  $region16: #{_lambda_.21} parent=0 // pred_region
    _
  $region17: #{_lambda_.21} parent=0 // pred_fallthru
    _
  %p18 = scmp.eq.s32.totalorder 0, 0
  // Predicated region
  $region18: #{_lambda_.21} parent=0 // pred_check
    %p19 = pneg %p18
  $region19: #{_lambda_.21} parent=0 // pred_check_branch
    %21 = sbr.rel (%p19) target = $region21
  $region20: #{_lambda_.21} parent=0 // pred_region
    %vm22 = vcmask 785408
    %23 = vst.msk [vmem:[#allocation2] sm:$0xff] %vm22, 0.0
    %24 = vst.msk [vmem:[#allocation2 + $0x8] sm:$0xff] %vm22, 0.0
    %25 = vst.msk [vmem:[#allocation2 + $0x10] sm:$0xff] %vm22, 0.0
    %26 = vst.msk [vmem:[#allocation2 + $0x18] sm:$0xff] %vm22, 0.0
  $region21: #{_lambda_.21} parent=0 // pred_fallthru
    _
  %v27 = vld [vmem:[#allocation2] sm:$0xff]
  %v28 = vld [vmem:[#allocation2 + $0x8] sm:$0xff]
  %v29 = vld [vmem:[#allocation2 + $0x10] sm:$0xff]
  %v30 = vld [vmem:[#allocation2 + $0x18] sm:$0xff]
  %v31 = vld [vmem:[%s0] sm:$0xf]
  %v32 = vld [vmem:[%s0 + $0x4] sm:$0xf]
  %v33 = vld [vmem:[%s0 + $0x8] sm:$0xf]
  %v34 = vld [vmem:[%s0 + $0xc] sm:$0xf]
  %v35 = vld [vmem:[%s1] sm:$0xf]
  %v36 = vld [vmem:[%s1 + $0x4] sm:$0xf]
  %v37 = vld [vmem:[%s1 + $0x8] sm:$0xf]
  %v38 = vld [vmem:[%s1 + $0xc] sm:$0xf]
  %v43 = vunpack.c.l.b16 %v31
  %v44 = vunpack.c.l.b16 %v32
  %v45 = vunpack.c.l.b16 %v33
  %v46 = vunpack.c.l.b16 %v34
  %v47 = vpack.c.b16 %v44, %v43
  %v48 = vpack.c.b16 %v46, %v45
  %v53 = vunpack.c.l.b16 %v35
  %v54 = vunpack.c.l.b16 %v36
  %v55 = vunpack.c.l.b16 %v37
  %v56 = vunpack.c.l.b16 %v38
  %v57 = vpack.c.b16 %v54, %v53
  %v58 = vpack.c.b16 %v56, %v55
  %vm61 = vcmask 261120
  %v63 = vsel %vm61, %v47, 0
  %v66 = vsel %vm61, %v48, 0
  %68 = vmatprep.subr.bf16.mxu0 0
  %69 = vmatpush1.bf16.msra.mxu0 %v57
  %70 = vmatprep.subr.bf16.mxu0 0
  %71 = vmatpush1.bf16.msra.mxu0 %v58
  %72 = vmatprep.subr.bf16.mxu0 0
  %73 = vmatpush1.bf16.msra.mxu0 0
  %74 = vmatprep.subr.bf16.mxu0 0
  %75 = vmatpush1.bf16.msra.mxu0 0
  %76 = vmatprep.subr.bf16.mxu0 0
  %77 = vmatpush1.bf16.msra.mxu0 0
  %78 = vmatprep.subr.bf16.mxu0 0
  %79 = vmatpush1.bf16.msra.mxu0 0
  %80 = vmatprep.subr.bf16.mxu0 0
  %81 = vmatpush1.bf16.msra.mxu0 0
  %82 = vmatprep.subr.bf16.mxu0 0
  %83 = vmatpush1.bf16.msra.mxu0 0
  %84 = vmatprep.subr.bf16.mxu0 0
  %85 = vmatpush1.bf16.msra.mxu0 0
  %86 = vmatprep.subr.bf16.mxu0 0
  %87 = vmatpush1.bf16.msra.mxu0 0
  %88 = vmatprep.subr.bf16.mxu0 0
  %89 = vmatpush1.bf16.msra.mxu0 0
  %90 = vmatprep.subr.bf16.mxu0 0
  %91 = vmatpush1.bf16.msra.mxu0 0
  %92 = vmatprep.subr.bf16.mxu0 0
  %93 = vmatpush1.bf16.msra.mxu0 0
  %94 = vmatprep.subr.bf16.mxu0 0
  %95 = vmatpush1.bf16.msra.mxu0 0
  %96 = vmatprep.subr.bf16.mxu0 0
  %97 = vmatpush1.bf16.msra.mxu0 0
  %98 = vmatprep.subr.bf16.mxu0 0
  %99 = vmatpush1.bf16.msra.mxu0 0
  %100 = vmatprep.mubr.bf16.mxu0 0
  %101 = vmatmul.mubr.bf16.gmra.mrb[0].mxu0 %v63
  %v102 = vpop.f32.mrb[0].mxu0
  %v103 = vadd.f32 0.0, %v102
  %v104 = vpop.f32.mrb[0].mxu0
  %v105 = vpop.f32.mrb[0].mxu0
  %v106 = vadd.f32 0.0, %v105
  %v107 = vpop.f32.mrb[0].mxu0
  %108 = vmatprep.mubr.bf16.mxu0 0
  %109 = vmatmul.mubr.bf16.gmra.mrb[0].mxu0 %v66
  %v110 = vpop.f32.mrb[0].mxu0
  %v111 = vadd.f32 0.0, %v110
  %v112 = vpop.f32.mrb[0].mxu0
  %v113 = vpop.f32.mrb[0].mxu0
  %v114 = vadd.f32 0.0, %v113
  %v115 = vpop.f32.mrb[0].mxu0
  %116 = vdwg.mxu0
  %v117 = vadd.f32 %v27, %v103
  %v118 = vadd.f32 %v28, %v106
  %v119 = vadd.f32 %v29, %v111
  %v120 = vadd.f32 %v30, %v114
  %vm121 = vcmask 785408
  %122 = vst.msk [vmem:[#allocation2] sm:$0xff] %vm121, %v117
  %123 = vst.msk [vmem:[#allocation2 + $0x8] sm:$0xff] %vm121, %v118
  %124 = vst.msk [vmem:[#allocation2 + $0x10] sm:$0xff] %vm121, %v119
  %125 = vst.msk [vmem:[#allocation2 + $0x18] sm:$0xff] %vm121, %v120
  // Predicated region
  $region22: #{_lambda_.21} parent=0 // pred_check
    %p126 = pneg %p18
  $region23: #{_lambda_.21} parent=0 // pred_check_branch
    %128 = sbr.rel (%p126) target = $region25
  $region24: #{_lambda_.21} parent=0 // pred_region
    %v129 = vld [vmem:[#allocation2] sm:$0xff]
    %v130 = vld [vmem:[#allocation2 + $0x8] sm:$0xff]
    %v131 = vld [vmem:[#allocation2 + $0x10] sm:$0xff]
    %v132 = vld [vmem:[#allocation2 + $0x18] sm:$0xff]
    %v133 = vld [vmem:[%s2] sm:$0x1]
    %v135 = vlaneseq
    %v136 = vshrl.u32 %v135, 7
    %v137 = vsub.s32 0, %v136
    %v138 = vrot.slane %v133, %v137
    %v140 = vmul.f32 %v129, %v138
    %v141 = vmul.f32 %v130, %v138
    %v142 = vmul.f32 %v131, %v138
    %v143 = vmul.f32 %v132, %v138
    %v144 = vld [vmem:[%s3] sm:$0x1]
    %v146 = vlaneseq
    %v147 = vshrl.u32 %v146, 7
    %v148 = vsub.s32 0, %v147
    %v149 = vrot.slane %v144, %v148
    %v151 = vadd.f32 %v140, %v149
    %v152 = vadd.f32 %v141, %v149
    %v153 = vadd.f32 %v142, %v149
    %v154 = vadd.f32 %v143, %v149
    %v155 = vmax.f32 %v151, 0.0
    %v156 = vmax.f32 %v152, 0.0
    %v157 = vmax.f32 %v153, 0.0
    %v158 = vmax.f32 %v154, 0.0
    %v159 = vpack.c.bf16 %v156, %v155
    %v160 = vpack.c.bf16 %v158, %v157
    %v163 = vunpack.c.l.b16 %v159
    %v164 = vunpack.c.h.b16 %v159
    %v165 = vunpack.c.l.b16 %v160
    %v166 = vunpack.c.h.b16 %v160
    %v167 = vpack.c.b16 %v163, %v163
    %v168 = vpack.c.b16 %v164, %v164
    %v169 = vpack.c.b16 %v165, %v165
    %v170 = vpack.c.b16 %v166, %v166
    %vm175 = vcmask 781312
    %176 = vst.msk [vmem:[%s4] sm:$0xf] %vm175, %v167
    %177 = vst.msk [vmem:[%s4 + $0x4] sm:$0xf] %vm175, %v168
    %178 = vst.msk [vmem:[%s4 + $0x8] sm:$0xf] %vm175, %v169
    %179 = vst.msk [vmem:[%s4 + $0xc] sm:$0xf] %vm175, %v170
  $region25: #{_lambda_.21} parent=0 // pred_fallthru
    _
  // Predicated region
  $region26: #{_lambda_.21} parent=0 // pred_check
    _
  $region27: #{_lambda_.21} parent=0 // pred_check_branch
    %181 = sbr.rel (0) target = $region29
  $region28: #{_lambda_.21} parent=0 // pred_region
    _
  $region29: #{_lambda_.21} parent=0 // pred_fallthru
    _
  // Predicated region
  $region30: #{_lambda_.21} parent=0 // pred_check
    _
  $region31: #{_lambda_.21} parent=0 // pred_check_branch
    %183 = sbr.rel (0) target = $region33
  $region32: #{_lambda_.21} parent=0 // pred_region
    _
  $region33: #{_lambda_.21} parent=0 // pred_fallthru
    _

// kernel: _lambda_.20
$region0: #{_lambda_.20}
  #allocation0 [shape = 'u32[]', space=smem, size = 0x4, offset = 0x4, fixed_abs, tag = 'smem constant byte address 0x4 - core index']
  #allocation1 [shape = 'u32[144,128]{1,0:T(1,128)}', space=vmem, size = 0x12000, scoped, tag = 'internal scratch']
  #allocation2 [shape = 'f32[32,32]{1,0:T(8,128)}', space=vmem, size = 0x4000, scoped, tag = 'scratch operand']
  %s0 = inlined_call_operand.vmem [shape: bf16[32,8], index: 0, kind: input, shape index: {}]
  %s1 = inlined_call_operand.vmem [shape: bf16[8,32], index: 1, kind: input, shape index: {}]
  %s2 = inlined_call_operand.vmem [shape: f32[1,32], index: 2, kind: input, shape index: {}]
  %s3 = inlined_call_operand.vmem [shape: f32[1,32], index: 3, kind: input, shape index: {}]
  %s4 = inlined_call_operand.vmem [shape: bf16[32,32], index: 4, kind: input, shape index: {}]
  %s5 = inlined_call_operand.vmem [shape: bf16[32,32], index: 5, kind: output, shape index: {}]
  %s6 = sld [smem:[#allocation0]]
  $region38: #{_lambda_.20} parent=0
    _
  %s8 = ssub.s32 1, %s6
  %s9 = scalar_select 0, %s8, %s6
  // Predicated region
  $region2: #{_lambda_.20} parent=0 // pred_check
    _
  $region3: #{_lambda_.20} parent=0 // pred_check_branch
    %11 = sbr.rel (0) target = $region5
  $region4: #{_lambda_.20} parent=0 // pred_region
    _
  $region5: #{_lambda_.20} parent=0 // pred_fallthru
    _
  // Predicated region
  $region6: #{_lambda_.20} parent=0 // pred_check
    _
  $region7: #{_lambda_.20} parent=0 // pred_check_branch
    %13 = sbr.rel (0) target = $region9
  $region8: #{_lambda_.20} parent=0 // pred_region
    _
  $region9: #{_lambda_.20} parent=0 // pred_fallthru
    _
  // Predicated region
  $region10: #{_lambda_.20} parent=0 // pred_check
    _
  $region11: #{_lambda_.20} parent=0 // pred_check_branch
    %15 = sbr.rel (0) target = $region13
  $region12: #{_lambda_.20} parent=0 // pred_region
    _
  $region13: #{_lambda_.20} parent=0 // pred_fallthru
    _
  // Predicated region
  $region14: #{_lambda_.20} parent=0 // pred_check
    _
  $region15: #{_lambda_.20} parent=0 // pred_check_branch
    %17 = sbr.rel (0) target = $region17
  $region16: #{_lambda_.20} parent=0 // pred_region
    _
  $region17: #{_lambda_.20} parent=0 // pred_fallthru
    _
  // Predicated region
  $region18: #{_lambda_.20} parent=0 // pred_check
    _
  $region19: #{_lambda_.20} parent=0 // pred_check_branch
    %19 = sbr.rel (0) target = $region21
  $region20: #{_lambda_.20} parent=0 // pred_region
    _
  $region21: #{_lambda_.20} parent=0 // pred_fallthru
    _
  %p21 = scmp.eq.s32.totalorder 0, 0
  // Predicated region
  $region22: #{_lambda_.20} parent=0 // pred_check
    %p22 = pneg %p21
  $region23: #{_lambda_.20} parent=0 // pred_check_branch
    %24 = sbr.rel (%p22) target = $region25
  $region24: #{_lambda_.20} parent=0 // pred_region
    %vm25 = vcmask 261120
    %26 = vst.msk [vmem:[#allocation2] sm:$0xff] %vm25, 0.0
    %27 = vst.msk [vmem:[#allocation2 + $0x8] sm:$0xff] %vm25, 0.0
    %28 = vst.msk [vmem:[#allocation2 + $0x10] sm:$0xff] %vm25, 0.0
    %29 = vst.msk [vmem:[#allocation2 + $0x18] sm:$0xff] %vm25, 0.0
  $region25: #{_lambda_.20} parent=0 // pred_fallthru
    _
  %v30 = vld [vmem:[#allocation2] sm:$0xff]
  %v31 = vld [vmem:[#allocation2 + $0x8] sm:$0xff]
  %v32 = vld [vmem:[#allocation2 + $0x10] sm:$0xff]
  %v33 = vld [vmem:[#allocation2 + $0x18] sm:$0xff]
  %v34 = vld [vmem:[%s0] sm:$0xf]
  %v35 = vld [vmem:[%s0 + $0x4] sm:$0xf]
  %v36 = vld [vmem:[%s0 + $0x8] sm:$0xf]
  %v37 = vld [vmem:[%s0 + $0xc] sm:$0xf]
  %v38 = vld [vmem:[%s1] sm:$0xf]
  %v43 = vunpack.c.l.b16 %v34
  %v44 = vunpack.c.l.b16 %v35
  %v45 = vunpack.c.l.b16 %v36
  %v46 = vunpack.c.l.b16 %v37
  %v47 = vpack.c.b16 %v44, %v43
  %v48 = vpack.c.b16 %v46, %v45
  %vm49 = vcmask 64512
  %v51 = vsel %vm49, %v47, 0
  %v54 = vsel %vm49, %v48, 0
  %vm56 = vcmask 1043456
  %v58 = vsel %vm56, %v38, 0
  %60 = vmatprep.subr.bf16.mxu0 0
  %61 = vmatpush1.bf16.msra.mxu0 %v58
  %62 = vmatprep.subr.bf16.mxu0 0
  %63 = vmatpush1.bf16.msra.mxu0 0
  %64 = vmatprep.subr.bf16.mxu0 0
  %65 = vmatpush1.bf16.msra.mxu0 0
  %66 = vmatprep.subr.bf16.mxu0 0
  %67 = vmatpush1.bf16.msra.mxu0 0
  %68 = vmatprep.subr.bf16.mxu0 0
  %69 = vmatpush1.bf16.msra.mxu0 0
  %70 = vmatprep.subr.bf16.mxu0 0
  %71 = vmatpush1.bf16.msra.mxu0 0
  %72 = vmatprep.subr.bf16.mxu0 0
  %73 = vmatpush1.bf16.msra.mxu0 0
  %74 = vmatprep.subr.bf16.mxu0 0
  %75 = vmatpush1.bf16.msra.mxu0 0
  %76 = vmatprep.subr.bf16.mxu0 0
  %77 = vmatpush1.bf16.msra.mxu0 0
  %78 = vmatprep.subr.bf16.mxu0 0
  %79 = vmatpush1.bf16.msra.mxu0 0
  %80 = vmatprep.subr.bf16.mxu0 0
  %81 = vmatpush1.bf16.msra.mxu0 0
  %82 = vmatprep.subr.bf16.mxu0 0
  %83 = vmatpush1.bf16.msra.mxu0 0
  %84 = vmatprep.subr.bf16.mxu0 0
  %85 = vmatpush1.bf16.msra.mxu0 0
  %86 = vmatprep.subr.bf16.mxu0 0
  %87 = vmatpush1.bf16.msra.mxu0 0
  %88 = vmatprep.subr.bf16.mxu0 0
  %89 = vmatpush1.bf16.msra.mxu0 0
  %90 = vmatprep.subr.bf16.mxu0 0
  %91 = vmatpush1.bf16.msra.mxu0 0
  %92 = vmatprep.mubr.bf16.mxu0 0
  %93 = vmatmul.mubr.bf16.gmra.mrb[0].mxu0 %v51
  %v94 = vpop.f32.mrb[0].mxu0
  %v95 = vadd.f32 0.0, %v94
  %v96 = vpop.f32.mrb[0].mxu0
  %v97 = vpop.f32.mrb[0].mxu0
  %v98 = vadd.f32 0.0, %v97
  %v99 = vpop.f32.mrb[0].mxu0
  %100 = vmatprep.mubr.bf16.mxu0 0
  %101 = vmatmul.mubr.bf16.gmra.mrb[0].mxu0 %v54
  %v102 = vpop.f32.mrb[0].mxu0
  %v103 = vadd.f32 0.0, %v102
  %v104 = vpop.f32.mrb[0].mxu0
  %v105 = vpop.f32.mrb[0].mxu0
  %v106 = vadd.f32 0.0, %v105
  %v107 = vpop.f32.mrb[0].mxu0
  %108 = vdwg.mxu0
  %v109 = vadd.f32 %v30, %v95
  %v110 = vadd.f32 %v31, %v98
  %v111 = vadd.f32 %v32, %v103
  %v112 = vadd.f32 %v33, %v106
  %vm113 = vcmask 261120
  %114 = vst.msk [vmem:[#allocation2] sm:$0xff] %vm113, %v109
  %115 = vst.msk [vmem:[#allocation2 + $0x8] sm:$0xff] %vm113, %v110
  %116 = vst.msk [vmem:[#allocation2 + $0x10] sm:$0xff] %vm113, %v111
  %117 = vst.msk [vmem:[#allocation2 + $0x18] sm:$0xff] %vm113, %v112
  // Predicated region
  $region26: #{_lambda_.20} parent=0 // pred_check
    %p118 = pneg %p21
  $region27: #{_lambda_.20} parent=0 // pred_check_branch
    %120 = sbr.rel (%p118) target = $region29
  $region28: #{_lambda_.20} parent=0 // pred_region
    %v121 = vld [vmem:[#allocation2] sm:$0xff]
    %v122 = vld [vmem:[#allocation2 + $0x8] sm:$0xff]
    %v123 = vld [vmem:[#allocation2 + $0x10] sm:$0xff]
    %v124 = vld [vmem:[#allocation2 + $0x18] sm:$0xff]
    %v125 = vld [vmem:[%s2] sm:$0x1]
    %v127 = vlaneseq
    %v128 = vshrl.u32 %v127, 7
    %v129 = vsub.s32 0, %v128
    %v130 = vrot.slane %v125, %v129
    %v132 = vmul.f32 %v121, %v130
    %v133 = vmul.f32 %v122, %v130
    %v134 = vmul.f32 %v123, %v130
    %v135 = vmul.f32 %v124, %v130
    %v136 = vld [vmem:[%s3] sm:$0x1]
    %v138 = vlaneseq
    %v139 = vshrl.u32 %v138, 7
    %v140 = vsub.s32 0, %v139
    %v141 = vrot.slane %v136, %v140
    %v143 = vadd.f32 %v132, %v141
    %v144 = vadd.f32 %v133, %v141
    %v145 = vadd.f32 %v134, %v141
    %v146 = vadd.f32 %v135, %v141
    %v147 = vld [vmem:[%s4] sm:$0xf]
    %v148 = vld [vmem:[%s4 + $0x4] sm:$0xf]
    %v149 = vld [vmem:[%s4 + $0x8] sm:$0xf]
    %v150 = vld [vmem:[%s4 + $0xc] sm:$0xf]
    %v151 = vunpack.c.l.bf16 %v147
    %v152 = vunpack.c.l.bf16 %v148
    %v153 = vunpack.c.l.bf16 %v149
    %v154 = vunpack.c.l.bf16 %v150
    %v155 = vadd.f32 %v143, %v151
    %v156 = vadd.f32 %v144, %v152
    %v157 = vadd.f32 %v145, %v153
    %v158 = vadd.f32 %v146, %v154
    %v159 = vmax.f32 %v155, 0.0
    %v160 = vmax.f32 %v156, 0.0
    %v161 = vmax.f32 %v157, 0.0
    %v162 = vmax.f32 %v158, 0.0
    %v163 = vpack.c.bf16 %v160, %v159
    %v164 = vpack.c.bf16 %v162, %v161
    %v167 = vunpack.c.l.b16 %v163
    %v168 = vunpack.c.h.b16 %v163
    %v169 = vunpack.c.l.b16 %v164
    %v170 = vunpack.c.h.b16 %v164
    %v171 = vpack.c.b16 %v167, %v167
    %v172 = vpack.c.b16 %v168, %v168
    %v173 = vpack.c.b16 %v169, %v169
    %v174 = vpack.c.b16 %v170, %v170
    %vm179 = vcmask 257024
    %180 = vst.msk [vmem:[%s5] sm:$0xf] %vm179, %v171
    %181 = vst.msk [vmem:[%s5 + $0x4] sm:$0xf] %vm179, %v172
    %182 = vst.msk [vmem:[%s5 + $0x8] sm:$0xf] %vm179, %v173
    %183 = vst.msk [vmem:[%s5 + $0xc] sm:$0xf] %vm179, %v174
  $region29: #{_lambda_.20} parent=0 // pred_fallthru
    _
  // Predicated region
  $region30: #{_lambda_.20} parent=0 // pred_check
    _
  $region31: #{_lambda_.20} parent=0 // pred_check_branch
    %185 = sbr.rel (0) target = $region33
  $region32: #{_lambda_.20} parent=0 // pred_region
    _
  $region33: #{_lambda_.20} parent=0 // pred_fallthru
    _
  // Predicated region
  $region34: #{_lambda_.20} parent=0 // pred_check
    _
  $region35: #{_lambda_.20} parent=0 // pred_check_branch
    %187 = sbr.rel (0) target = $region37
  $region36: #{_lambda_.20} parent=0 // pred_region
    _
  $region37: #{_lambda_.20} parent=0 // pred_fallthru
    _

// kernel: _lambda_.24
$region0: #{_lambda_.24}
  #allocation0 [shape = 'u32[]', space=smem, size = 0x4, offset = 0x4, fixed_abs, tag = 'smem constant byte address 0x4 - core index']
  #allocation1 [shape = 'u32[144,128]{1,0:T(1,128)}', space=vmem, size = 0x12000, scoped, tag = 'internal scratch']
  #allocation2 [shape = 'f32[32,64]{1,0:T(8,128)}', space=vmem, size = 0x4000, scoped, tag = 'scratch operand']
  %s0 = inlined_call_operand.vmem [shape: bf16[32,32], index: 0, kind: input, shape index: {}]
  %s1 = inlined_call_operand.vmem [shape: bf16[32,64], index: 1, kind: input, shape index: {}]
  %s2 = inlined_call_operand.vmem [shape: f32[1,64], index: 2, kind: input, shape index: {}]
  %s3 = inlined_call_operand.vmem [shape: f32[1,64], index: 3, kind: input, shape index: {}]
  %s4 = inlined_call_operand.vmem [shape: bf16[32,64], index: 4, kind: output, shape index: {}]
  %s5 = sld [smem:[#allocation0]]
  $region34: #{_lambda_.24} parent=0
    _
  %s7 = ssub.s32 1, %s5
  %s8 = scalar_select 0, %s7, %s5
  // Predicated region
  $region2: #{_lambda_.24} parent=0 // pred_check
    _
  $region3: #{_lambda_.24} parent=0 // pred_check_branch
    %10 = sbr.rel (0) target = $region5
  $region4: #{_lambda_.24} parent=0 // pred_region
    _
  $region5: #{_lambda_.24} parent=0 // pred_fallthru
    _
  // Predicated region
  $region6: #{_lambda_.24} parent=0 // pred_check
    _
  $region7: #{_lambda_.24} parent=0 // pred_check_branch
    %12 = sbr.rel (0) target = $region9
  $region8: #{_lambda_.24} parent=0 // pred_region
    _
  $region9: #{_lambda_.24} parent=0 // pred_fallthru
    _
  // Predicated region
  $region10: #{_lambda_.24} parent=0 // pred_check
    _
  $region11: #{_lambda_.24} parent=0 // pred_check_branch
    %14 = sbr.rel (0) target = $region13
  $region12: #{_lambda_.24} parent=0 // pred_region
    _
  $region13: #{_lambda_.24} parent=0 // pred_fallthru
    _
  // Predicated region
  $region14: #{_lambda_.24} parent=0 // pred_check
    _
  $region15: #{_lambda_.24} parent=0 // pred_check_branch
    %16 = sbr.rel (0) target = $region17
  $region16: #{_lambda_.24} parent=0 // pred_region
    _
  $region17: #{_lambda_.24} parent=0 // pred_fallthru
    _
  %p18 = scmp.eq.s32.totalorder 0, 0
  // Predicated region
  $region18: #{_lambda_.24} parent=0 // pred_check
    %p19 = pneg %p18
  $region19: #{_lambda_.24} parent=0 // pred_check_branch
    %21 = sbr.rel (%p19) target = $region21
  $region20: #{_lambda_.24} parent=0 // pred_region
    %vm22 = vcmask 523264
    %23 = vst.msk [vmem:[#allocation2] sm:$0xff] %vm22, 0.0
    %24 = vst.msk [vmem:[#allocation2 + $0x8] sm:$0xff] %vm22, 0.0
    %25 = vst.msk [vmem:[#allocation2 + $0x10] sm:$0xff] %vm22, 0.0
    %26 = vst.msk [vmem:[#allocation2 + $0x18] sm:$0xff] %vm22, 0.0
  $region21: #{_lambda_.24} parent=0 // pred_fallthru
    _
  %v27 = vld [vmem:[#allocation2] sm:$0xff]
  %v28 = vld [vmem:[#allocation2 + $0x8] sm:$0xff]
  %v29 = vld [vmem:[#allocation2 + $0x10] sm:$0xff]
  %v30 = vld [vmem:[#allocation2 + $0x18] sm:$0xff]
  %v31 = vld [vmem:[%s0] sm:$0xf]
  %v32 = vld [vmem:[%s0 + $0x4] sm:$0xf]
  %v33 = vld [vmem:[%s0 + $0x8] sm:$0xf]
  %v34 = vld [vmem:[%s0 + $0xc] sm:$0xf]
  %v35 = vld [vmem:[%s1] sm:$0xf]
  %v36 = vld [vmem:[%s1 + $0x4] sm:$0xf]
  %v37 = vld [vmem:[%s1 + $0x8] sm:$0xf]
  %v38 = vld [vmem:[%s1 + $0xc] sm:$0xf]
  %v43 = vunpack.c.l.b16 %v31
  %v44 = vunpack.c.l.b16 %v32
  %v45 = vunpack.c.l.b16 %v33
  %v46 = vunpack.c.l.b16 %v34
  %v47 = vpack.c.b16 %v44, %v43
  %v48 = vpack.c.b16 %v46, %v45
  %v53 = vunpack.c.l.b16 %v35
  %v54 = vunpack.c.l.b16 %v36
  %v55 = vunpack.c.l.b16 %v37
  %v56 = vunpack.c.l.b16 %v38
  %v57 = vpack.c.b16 %v54, %v53
  %v58 = vpack.c.b16 %v56, %v55
  %vm61 = vcmask 261120
  %v63 = vsel %vm61, %v47, 0
  %v66 = vsel %vm61, %v48, 0
  %68 = vmatprep.subr.bf16.mxu0 0
  %69 = vmatpush1.bf16.msra.mxu0 %v57
  %70 = vmatprep.subr.bf16.mxu0 0
  %71 = vmatpush1.bf16.msra.mxu0 %v58
  %72 = vmatprep.subr.bf16.mxu0 0
  %73 = vmatpush1.bf16.msra.mxu0 0
  %74 = vmatprep.subr.bf16.mxu0 0
  %75 = vmatpush1.bf16.msra.mxu0 0
  %76 = vmatprep.subr.bf16.mxu0 0
  %77 = vmatpush1.bf16.msra.mxu0 0
  %78 = vmatprep.subr.bf16.mxu0 0
  %79 = vmatpush1.bf16.msra.mxu0 0
  %80 = vmatprep.subr.bf16.mxu0 0
  %81 = vmatpush1.bf16.msra.mxu0 0
  %82 = vmatprep.subr.bf16.mxu0 0
  %83 = vmatpush1.bf16.msra.mxu0 0
  %84 = vmatprep.subr.bf16.mxu0 0
  %85 = vmatpush1.bf16.msra.mxu0 0
  %86 = vmatprep.subr.bf16.mxu0 0
  %87 = vmatpush1.bf16.msra.mxu0 0
  %88 = vmatprep.subr.bf16.mxu0 0
  %89 = vmatpush1.bf16.msra.mxu0 0
  %90 = vmatprep.subr.bf16.mxu0 0
  %91 = vmatpush1.bf16.msra.mxu0 0
  %92 = vmatprep.subr.bf16.mxu0 0
  %93 = vmatpush1.bf16.msra.mxu0 0
  %94 = vmatprep.subr.bf16.mxu0 0
  %95 = vmatpush1.bf16.msra.mxu0 0
  %96 = vmatprep.subr.bf16.mxu0 0
  %97 = vmatpush1.bf16.msra.mxu0 0
  %98 = vmatprep.subr.bf16.mxu0 0
  %99 = vmatpush1.bf16.msra.mxu0 0
  %100 = vmatprep.mubr.bf16.mxu0 0
  %101 = vmatmul.mubr.bf16.gmra.mrb[0].mxu0 %v63
  %v102 = vpop.f32.mrb[0].mxu0
  %v103 = vadd.f32 0.0, %v102
  %v104 = vpop.f32.mrb[0].mxu0
  %v105 = vpop.f32.mrb[0].mxu0
  %v106 = vadd.f32 0.0, %v105
  %v107 = vpop.f32.mrb[0].mxu0
  %108 = vmatprep.mubr.bf16.mxu0 0
  %109 = vmatmul.mubr.bf16.gmra.mrb[0].mxu0 %v66
  %v110 = vpop.f32.mrb[0].mxu0
  %v111 = vadd.f32 0.0, %v110
  %v112 = vpop.f32.mrb[0].mxu0
  %v113 = vpop.f32.mrb[0].mxu0
  %v114 = vadd.f32 0.0, %v113
  %v115 = vpop.f32.mrb[0].mxu0
  %116 = vdwg.mxu0
  %v117 = vadd.f32 %v27, %v103
  %v118 = vadd.f32 %v28, %v106
  %v119 = vadd.f32 %v29, %v111
  %v120 = vadd.f32 %v30, %v114
  %vm121 = vcmask 523264
  %122 = vst.msk [vmem:[#allocation2] sm:$0xff] %vm121, %v117
  %123 = vst.msk [vmem:[#allocation2 + $0x8] sm:$0xff] %vm121, %v118
  %124 = vst.msk [vmem:[#allocation2 + $0x10] sm:$0xff] %vm121, %v119
  %125 = vst.msk [vmem:[#allocation2 + $0x18] sm:$0xff] %vm121, %v120
  // Predicated region
  $region22: #{_lambda_.24} parent=0 // pred_check
    %p126 = pneg %p18
  $region23: #{_lambda_.24} parent=0 // pred_check_branch
    %128 = sbr.rel (%p126) target = $region25
  $region24: #{_lambda_.24} parent=0 // pred_region
    %v129 = vld [vmem:[#allocation2] sm:$0xff]
    %v130 = vld [vmem:[#allocation2 + $0x8] sm:$0xff]
    %v131 = vld [vmem:[#allocation2 + $0x10] sm:$0xff]
    %v132 = vld [vmem:[#allocation2 + $0x18] sm:$0xff]
    %v133 = vld [vmem:[%s2] sm:$0x1]
    %v135 = vlaneseq
    %v136 = vshrl.u32 %v135, 7
    %v137 = vsub.s32 0, %v136
    %v138 = vrot.slane %v133, %v137
    %v140 = vmul.f32 %v129, %v138
    %v141 = vmul.f32 %v130, %v138
    %v142 = vmul.f32 %v131, %v138
    %v143 = vmul.f32 %v132, %v138
    %v144 = vld [vmem:[%s3] sm:$0x1]
    %v146 = vlaneseq
    %v147 = vshrl.u32 %v146, 7
    %v148 = vsub.s32 0, %v147
    %v149 = vrot.slane %v144, %v148
    %v151 = vadd.f32 %v140, %v149
    %v152 = vadd.f32 %v141, %v149
    %v153 = vadd.f32 %v142, %v149
    %v154 = vadd.f32 %v143, %v149
    %v155 = vmax.f32 %v151, 0.0
    %v156 = vmax.f32 %v152, 0.0
    %v157 = vmax.f32 %v153, 0.0
    %v158 = vmax.f32 %v154, 0.0
    %v159 = vpack.c.bf16 %v156, %v155
    %v160 = vpack.c.bf16 %v158, %v157
    %v163 = vunpack.c.l.b16 %v159
    %v164 = vunpack.c.h.b16 %v159
    %v165 = vunpack.c.l.b16 %v160
    %v166 = vunpack.c.h.b16 %v160
    %v167 = vpack.c.b16 %v163, %v163
    %v168 = vpack.c.b16 %v164, %v164
    %v169 = vpack.c.b16 %v165, %v165
    %v170 = vpack.c.b16 %v166, %v166
    %vm175 = vcmask 519168
    %176 = vst.msk [vmem:[%s4] sm:$0xf] %vm175, %v167
    %177 = vst.msk [vmem:[%s4 + $0x4] sm:$0xf] %vm175, %v168
    %178 = vst.msk [vmem:[%s4 + $0x8] sm:$0xf] %vm175, %v169
    %179 = vst.msk [vmem:[%s4 + $0xc] sm:$0xf] %vm175, %v170
  $region25: #{_lambda_.24} parent=0 // pred_fallthru
    _
  // Predicated region
  $region26: #{_lambda_.24} parent=0 // pred_check
    _
  $region27: #{_lambda_.24} parent=0 // pred_check_branch
    %181 = sbr.rel (0) target = $region29
  $region28: #{_lambda_.24} parent=0 // pred_region
    _
  $region29: #{_lambda_.24} parent=0 // pred_fallthru
    _
  // Predicated region
  $region30: #{_lambda_.24} parent=0 // pred_check
    _
  $region31: #{_lambda_.24} parent=0 // pred_check_branch
    %183 = sbr.rel (0) target = $region33
  $region32: #{_lambda_.24} parent=0 // pred_region
    _
  $region33: #{_lambda_.24} parent=0 // pred_fallthru
    _

// kernel: _lambda_.23
$region0: #{_lambda_.23}
  #allocation0 [shape = 'u32[]', space=smem, size = 0x4, offset = 0x4, fixed_abs, tag = 'smem constant byte address 0x4 - core index']
  #allocation1 [shape = 'u32[144,128]{1,0:T(1,128)}', space=vmem, size = 0x12000, scoped, tag = 'internal scratch']
  #allocation2 [shape = 'f32[32,32]{1,0:T(8,128)}', space=vmem, size = 0x4000, scoped, tag = 'scratch operand']
  %s0 = inlined_call_operand.vmem [shape: bf16[32,96], index: 0, kind: input, shape index: {}]
  %s1 = inlined_call_operand.vmem [shape: bf16[96,32], index: 1, kind: input, shape index: {}]
  %s2 = inlined_call_operand.vmem [shape: f32[1,32], index: 2, kind: input, shape index: {}]
  %s3 = inlined_call_operand.vmem [shape: f32[1,32], index: 3, kind: input, shape index: {}]
  %s4 = inlined_call_operand.vmem [shape: bf16[32,32], index: 4, kind: input, shape index: {}]
  %s5 = inlined_call_operand.vmem [shape: bf16[32,32], index: 5, kind: output, shape index: {}]
  %s6 = sld [smem:[#allocation0]]
  $region38: #{_lambda_.23} parent=0
    _
  %s8 = ssub.s32 1, %s6
  %s9 = scalar_select 0, %s8, %s6
  // Predicated region
  $region2: #{_lambda_.23} parent=0 // pred_check
    _
  $region3: #{_lambda_.23} parent=0 // pred_check_branch
    %11 = sbr.rel (0) target = $region5
  $region4: #{_lambda_.23} parent=0 // pred_region
    _
  $region5: #{_lambda_.23} parent=0 // pred_fallthru
    _
  // Predicated region
  $region6: #{_lambda_.23} parent=0 // pred_check
    _
  $region7: #{_lambda_.23} parent=0 // pred_check_branch
    %13 = sbr.rel (0) target = $region9
  $region8: #{_lambda_.23} parent=0 // pred_region
    _
  $region9: #{_lambda_.23} parent=0 // pred_fallthru
    _
  // Predicated region
  $region10: #{_lambda_.23} parent=0 // pred_check
    _
  $region11: #{_lambda_.23} parent=0 // pred_check_branch
    %15 = sbr.rel (0) target = $region13
  $region12: #{_lambda_.23} parent=0 // pred_region
    _
  $region13: #{_lambda_.23} parent=0 // pred_fallthru
    _
  // Predicated region
  $region14: #{_lambda_.23} parent=0 // pred_check
    _
  $region15: #{_lambda_.23} parent=0 // pred_check_branch
    %17 = sbr.rel (0) target = $region17
  $region16: #{_lambda_.23} parent=0 // pred_region
    _
  $region17: #{_lambda_.23} parent=0 // pred_fallthru
    _
  // Predicated region
  $region18: #{_lambda_.23} parent=0 // pred_check
    _
  $region19: #{_lambda_.23} parent=0 // pred_check_branch
    %19 = sbr.rel (0) target = $region21
  $region20: #{_lambda_.23} parent=0 // pred_region
    _
  $region21: #{_lambda_.23} parent=0 // pred_fallthru
    _
  %p21 = scmp.eq.s32.totalorder 0, 0
  // Predicated region
  $region22: #{_lambda_.23} parent=0 // pred_check
    %p22 = pneg %p21
  $region23: #{_lambda_.23} parent=0 // pred_check_branch
    %24 = sbr.rel (%p22) target = $region25
  $region24: #{_lambda_.23} parent=0 // pred_region
    %vm25 = vcmask 261120
    %26 = vst.msk [vmem:[#allocation2] sm:$0xff] %vm25, 0.0
    %27 = vst.msk [vmem:[#allocation2 + $0x8] sm:$0xff] %vm25, 0.0
    %28 = vst.msk [vmem:[#allocation2 + $0x10] sm:$0xff] %vm25, 0.0
    %29 = vst.msk [vmem:[#allocation2 + $0x18] sm:$0xff] %vm25, 0.0
  $region25: #{_lambda_.23} parent=0 // pred_fallthru
    _
  %v30 = vld [vmem:[#allocation2] sm:$0xff]
  %v31 = vld [vmem:[#allocation2 + $0x8] sm:$0xff]
  %v32 = vld [vmem:[#allocation2 + $0x10] sm:$0xff]
  %v33 = vld [vmem:[#allocation2 + $0x18] sm:$0xff]
  %v34 = vld [vmem:[%s0] sm:$0xf]
  %v35 = vld [vmem:[%s0 + $0x4] sm:$0xf]
  %v36 = vld [vmem:[%s0 + $0x8] sm:$0xf]
  %v37 = vld [vmem:[%s0 + $0xc] sm:$0xf]
  %v38 = vld [vmem:[%s1] sm:$0xf]
  %v39 = vld [vmem:[%s1 + $0x4] sm:$0xf]
  %v40 = vld [vmem:[%s1 + $0x8] sm:$0xf]
  %v41 = vld [vmem:[%s1 + $0xc] sm:$0xf]
  %v42 = vld [vmem:[%s1 + $0x10] sm:$0xf]
  %v43 = vld [vmem:[%s1 + $0x14] sm:$0xf]
  %v44 = vld [vmem:[%s1 + $0x18] sm:$0xf]
  %v45 = vld [vmem:[%s1 + $0x1c] sm:$0xf]
  %v46 = vld [vmem:[%s1 + $0x20] sm:$0xf]
  %v47 = vld [vmem:[%s1 + $0x24] sm:$0xf]
  %v48 = vld [vmem:[%s1 + $0x28] sm:$0xf]
  %v49 = vld [vmem:[%s1 + $0x2c] sm:$0xf]
  %v54 = vunpack.c.l.b16 %v34
  %v55 = vunpack.c.l.b16 %v35
  %v56 = vunpack.c.l.b16 %v36
  %v57 = vunpack.c.l.b16 %v37
  %v58 = vpack.c.b16 %v55, %v54
  %v59 = vpack.c.b16 %v57, %v56
  %v72 = vunpack.c.l.b16 %v38
  %v73 = vunpack.c.l.b16 %v39
  %v74 = vunpack.c.l.b16 %v40
  %v75 = vunpack.c.l.b16 %v41
  %v76 = vunpack.c.l.b16 %v42
  %v77 = vunpack.c.l.b16 %v43
  %v78 = vunpack.c.l.b16 %v44
  %v79 = vunpack.c.l.b16 %v45
  %v80 = vunpack.c.l.b16 %v46
  %v81 = vunpack.c.l.b16 %v47
  %v82 = vunpack.c.l.b16 %v48
  %v83 = vunpack.c.l.b16 %v49
  %v84 = vpack.c.b16 %v73, %v72
  %v85 = vpack.c.b16 %v75, %v74
  %v86 = vpack.c.b16 %v77, %v76
  %v87 = vpack.c.b16 %v79, %v78
  %v88 = vpack.c.b16 %v81, %v80
  %v89 = vpack.c.b16 %v83, %v82
  %vm96 = vcmask 785408
  %v98 = vsel %vm96, %v58, 0
  %v101 = vsel %vm96, %v59, 0
  %103 = vmatprep.subr.bf16.mxu0 0
  %104 = vmatpush1.bf16.msra.mxu0 %v84
  %105 = vmatprep.subr.bf16.mxu0 0
  %106 = vmatpush1.bf16.msra.mxu0 %v85
  %107 = vmatprep.subr.bf16.mxu0 0
  %108 = vmatpush1.bf16.msra.mxu0 %v86
  %109 = vmatprep.subr.bf16.mxu0 0
  %110 = vmatpush1.bf16.msra.mxu0 %v87
  %111 = vmatprep.subr.bf16.mxu0 0
  %112 = vmatpush1.bf16.msra.mxu0 %v88
  %113 = vmatprep.subr.bf16.mxu0 0
  %114 = vmatpush1.bf16.msra.mxu0 %v89
  %115 = vmatprep.subr.bf16.mxu0 0
  %116 = vmatpush1.bf16.msra.mxu0 0
  %117 = vmatprep.subr.bf16.mxu0 0
  %118 = vmatpush1.bf16.msra.mxu0 0
  %119 = vmatprep.subr.bf16.mxu0 0
  %120 = vmatpush1.bf16.msra.mxu0 0
  %121 = vmatprep.subr.bf16.mxu0 0
  %122 = vmatpush1.bf16.msra.mxu0 0
  %123 = vmatprep.subr.bf16.mxu0 0
  %124 = vmatpush1.bf16.msra.mxu0 0
  %125 = vmatprep.subr.bf16.mxu0 0
  %126 = vmatpush1.bf16.msra.mxu0 0
  %127 = vmatprep.subr.bf16.mxu0 0
  %128 = vmatpush1.bf16.msra.mxu0 0
  %129 = vmatprep.subr.bf16.mxu0 0
  %130 = vmatpush1.bf16.msra.mxu0 0
  %131 = vmatprep.subr.bf16.mxu0 0
  %132 = vmatpush1.bf16.msra.mxu0 0
  %133 = vmatprep.subr.bf16.mxu0 0
  %134 = vmatpush1.bf16.msra.mxu0 0
  %135 = vmatprep.mubr.bf16.mxu0 0
  %136 = vmatmul.mubr.bf16.gmra.mrb[0].mxu0 %v98
  %v137 = vpop.f32.mrb[0].mxu0
  %v138 = vadd.f32 0.0, %v137
  %v139 = vpop.f32.mrb[0].mxu0
  %v140 = vpop.f32.mrb[0].mxu0
  %v141 = vadd.f32 0.0, %v140
  %v142 = vpop.f32.mrb[0].mxu0
  %143 = vmatprep.mubr.bf16.mxu0 0
  %144 = vmatmul.mubr.bf16.gmra.mrb[0].mxu0 %v101
  %v145 = vpop.f32.mrb[0].mxu0
  %v146 = vadd.f32 0.0, %v145
  %v147 = vpop.f32.mrb[0].mxu0
  %v148 = vpop.f32.mrb[0].mxu0
  %v149 = vadd.f32 0.0, %v148
  %v150 = vpop.f32.mrb[0].mxu0
  %151 = vdwg.mxu0
  %v152 = vadd.f32 %v30, %v138
  %v153 = vadd.f32 %v31, %v141
  %v154 = vadd.f32 %v32, %v146
  %v155 = vadd.f32 %v33, %v149
  %vm156 = vcmask 261120
  %157 = vst.msk [vmem:[#allocation2] sm:$0xff] %vm156, %v152
  %158 = vst.msk [vmem:[#allocation2 + $0x8] sm:$0xff] %vm156, %v153
  %159 = vst.msk [vmem:[#allocation2 + $0x10] sm:$0xff] %vm156, %v154
  %160 = vst.msk [vmem:[#allocation2 + $0x18] sm:$0xff] %vm156, %v155
  // Predicated region
  $region26: #{_lambda_.23} parent=0 // pred_check
    %p161 = pneg %p21
  $region27: #{_lambda_.23} parent=0 // pred_check_branch
    %163 = sbr.rel (%p161) target = $region29
  $region28: #{_lambda_.23} parent=0 // pred_region
    %v164 = vld [vmem:[#allocation2] sm:$0xff]
    %v165 = vld [vmem:[#allocation2 + $0x8] sm:$0xff]
    %v166 = vld [vmem:[#allocation2 + $0x10] sm:$0xff]
    %v167 = vld [vmem:[#allocation2 + $0x18] sm:$0xff]
    %v168 = vld [vmem:[%s2] sm:$0x1]
    %v170 = vlaneseq
    %v171 = vshrl.u32 %v170, 7
    %v172 = vsub.s32 0, %v171
    %v173 = vrot.slane %v168, %v172
    %v175 = vmul.f32 %v164, %v173
    %v176 = vmul.f32 %v165, %v173
    %v177 = vmul.f32 %v166, %v173
    %v178 = vmul.f32 %v167, %v173
    %v179 = vld [vmem:[%s3] sm:$0x1]
    %v181 = vlaneseq
    %v182 = vshrl.u32 %v181, 7
    %v183 = vsub.s32 0, %v182
    %v184 = vrot.slane %v179, %v183
    %v186 = vadd.f32 %v175, %v184
    %v187 = vadd.f32 %v176, %v184
    %v188 = vadd.f32 %v177, %v184
    %v189 = vadd.f32 %v178, %v184
    %v190 = vld [vmem:[%s4] sm:$0xf]
    %v191 = vld [vmem:[%s4 + $0x4] sm:$0xf]
    %v192 = vld [vmem:[%s4 + $0x8] sm:$0xf]
    %v193 = vld [vmem:[%s4 + $0xc] sm:$0xf]
    %v194 = vunpack.c.l.bf16 %v190
    %v195 = vunpack.c.l.bf16 %v191
    %v196 = vunpack.c.l.bf16 %v192
    %v197 = vunpack.c.l.bf16 %v193
    %v198 = vadd.f32 %v186, %v194
    %v199 = vadd.f32 %v187, %v195
    %v200 = vadd.f32 %v188, %v196
    %v201 = vadd.f32 %v189, %v197
    %v202 = vmax.f32 %v198, 0.0
    %v203 = vmax.f32 %v199, 0.0
    %v204 = vmax.f32 %v200, 0.0
    %v205 = vmax.f32 %v201, 0.0
    %v206 = vpack.c.bf16 %v203, %v202
    %v207 = vpack.c.bf16 %v205, %v204
    %v210 = vunpack.c.l.b16 %v206
    %v211 = vunpack.c.h.b16 %v206
    %v212 = vunpack.c.l.b16 %v207
    %v213 = vunpack.c.h.b16 %v207
    %v214 = vpack.c.b16 %v210, %v210
    %v215 = vpack.c.b16 %v211, %v211
    %v216 = vpack.c.b16 %v212, %v212
    %v217 = vpack.c.b16 %v213, %v213
    %vm222 = vcmask 257024
    %223 = vst.msk [vmem:[%s5] sm:$0xf] %vm222, %v214
    %224 = vst.msk [vmem:[%s5 + $0x4] sm:$0xf] %vm222, %v215
    %225 = vst.msk [vmem:[%s5 + $0x8] sm:$0xf] %vm222, %v216
    %226 = vst.msk [vmem:[%s5 + $0xc] sm:$0xf] %vm222, %v217
  $region29: #{_lambda_.23} parent=0 // pred_fallthru
    _
  // Predicated region
  $region30: #{_lambda_.23} parent=0 // pred_check
    _
  $region31: #{_lambda_.23} parent=0 // pred_check_branch
    %228 = sbr.rel (0) target = $region33
  $region32: #{_lambda_.23} parent=0 // pred_region
    _
  $region33: #{_lambda_.23} parent=0 // pred_fallthru
    _
  // Predicated region
  $region34: #{_lambda_.23} parent=0 // pred_check
    _
  $region35: #{_lambda_.23} parent=0 // pred_check_branch
    %230 = sbr.rel (0) target = $region37
  $region36: #{_lambda_.23} parent=0 // pred_region
    _
  $region37: #{_lambda_.23} parent=0 // pred_fallthru
    _

// kernel: _lambda_.25
$region0: #{_lambda_.25}
  #allocation0 [shape = 'u32[]', space=smem, size = 0x4, offset = 0x4, fixed_abs, tag = 'smem constant byte address 0x4 - core index']
  #allocation1 [shape = 'u32[144,128]{1,0:T(1,128)}', space=vmem, size = 0x12000, scoped, tag = 'internal scratch']
  %s0 = inlined_call_operand.vmem [shape: bf16[2,16,64], index: 0, kind: input, shape index: {}]
  %s1 = inlined_call_operand.vmem [shape: f32[64,10], index: 1, kind: input, shape index: {}]
  %s2 = inlined_call_operand.vmem [shape: f32[1,10], index: 2, kind: input, shape index: {}]
  %s3 = inlined_call_operand.hbm [shape: f32[2,10], index: 3, kind: output, shape index: {}]
  %s4 = sld [smem:[#allocation0]]
  $region22: #{_lambda_.25} parent=0
    _
  %s6 = ssub.s32 1, %s4
  %s7 = scalar_select 0, %s6, %s4
  $region1: #{_lambda_.25} parent=0
    #allocation2 [shape = 'u8[1024]{0}', space=vmem, size = 0x400, scoped, tag = 'output window, operand 0, single buffered']
    #allocation3 [shape = 's32[1]{0}', space=sflag, size = 0x4, scoped, tag = 'scoped memory for _lambda_.25']
    %8 = vsyncpa [#allocation3], 0
    // Predicated region
    $region2: #{_lambda_.25} parent=1 // pred_check
      _
    $region3: #{_lambda_.25} parent=1 // pred_check_branch
      %10 = sbr.rel (0) target = $region5
    $region4: #{_lambda_.25} parent=1 // pred_region
      _
    $region5: #{_lambda_.25} parent=1 // pred_fallthru
      _
    // Predicated region
    $region6: #{_lambda_.25} parent=1 // pred_check
      _
    $region7: #{_lambda_.25} parent=1 // pred_check_branch
      %12 = sbr.rel (0) target = $region9
    $region8: #{_lambda_.25} parent=1 // pred_region
      _
    $region9: #{_lambda_.25} parent=1 // pred_fallthru
      _
    // Predicated region
    $region10: #{_lambda_.25} parent=1 // pred_check
      _
    $region11: #{_lambda_.25} parent=1 // pred_check_branch
      %14 = sbr.rel (0) target = $region13
    $region12: #{_lambda_.25} parent=1 // pred_region
      _
    $region13: #{_lambda_.25} parent=1 // pred_fallthru
      _
    %v15 = vld [vmem:[%s0] sm:$0xf]
    %v16 = vld [vmem:[%s0 + $0x4] sm:$0xf]
    %v17 = vld [vmem:[%s0 + $0x8] sm:$0xf]
    %v18 = vld [vmem:[%s0 + $0xc] sm:$0xf]
    %v19 = vunpack.c.l.bf16 %v15
    %v20 = vunpack.c.l.bf16 %v16
    %v21 = vunpack.c.l.bf16 %v17
    %v22 = vunpack.c.l.bf16 %v18
    %vm23 = vcmask 523264
    %v24 = vsel %vm23, %v19, 0.0
    %v25 = vsel %vm23, %v20, 0.0
    %v26 = vadd.f32 %v24, %v25
    %v27 = vrot.slane %v26, 4
    %v28 = vadd.f32 %v26, %v27
    %v29 = vrot.slane %v28, 2
    %v30 = vadd.f32 %v28, %v29
    %v31 = vrot.slane %v30, 1
    %v32 = vadd.f32 %v30, %v31
    %v33 = vsel %vm23, %v21, 0.0
    %v34 = vsel %vm23, %v22, 0.0
    %v35 = vadd.f32 %v33, %v34
    %v36 = vrot.slane %v35, 4
    %v37 = vadd.f32 %v35, %v36
    %v38 = vrot.slane %v37, 2
    %v39 = vadd.f32 %v37, %v38
    %v40 = vrot.slane %v39, 1
    %v41 = vadd.f32 %v39, %v40
    %v42 = vmul.f32 %v32, 0.0625
    %v43 = vmul.f32 %v41, 0.0625
    %v44 = vld [vmem:[%s1] sm:$0xff]
    %v45 = vld [vmem:[%s1 + $0x8] sm:$0xff]
    %v46 = vld [vmem:[%s1 + $0x10] sm:$0xff]
    %v47 = vld [vmem:[%s1 + $0x18] sm:$0xff]
    %v48 = vld [vmem:[%s1 + $0x20] sm:$0xff]
    %v49 = vld [vmem:[%s1 + $0x28] sm:$0xff]
    %v50 = vld [vmem:[%s1 + $0x30] sm:$0xff]
    %v51 = vld [vmem:[%s1 + $0x38] sm:$0xff]
    %v52 = vld [vmem:[%s2] sm:$0x1]
    %v54 = vlaneseq
    %v55 = vshrl.u32 %v54, 7
    %v56 = vsub.s32 0, %v55
    %v57 = vrot.slane %v52, %v56
    %vm61 = vcmask 1041409
    %v62 = vsel %vm61, %v43, %v42
    %v63 = vsel %vm23, %v62, 0
    %65 = vmatprep.subr.mxu0 0.0
    %66 = vmatpush1.msra.mxu0 %v44
    %67 = vmatprep.subr.mxu0 0.0
    %68 = vmatpush1.msra.mxu0 %v45
    %69 = vmatprep.subr.mxu0 0.0
    %70 = vmatpush1.msra.mxu0 %v46
    %71 = vmatprep.subr.mxu0 0.0
    %72 = vmatpush1.msra.mxu0 %v47
    %73 = vmatprep.subr.mxu0 0.0
    %74 = vmatpush1.msra.mxu0 %v48
    %75 = vmatprep.subr.mxu0 0.0
    %76 = vmatpush1.msra.mxu0 %v49
    %77 = vmatprep.subr.mxu0 0.0
    %78 = vmatpush1.msra.mxu0 %v50
    %79 = vmatprep.subr.mxu0 0.0
    %80 = vmatpush1.msra.mxu0 %v51
    %81 = vmatprep.subr.mxu0 0.0
    %82 = vmatpush1.msra.mxu0 0.0
    %83 = vmatprep.subr.mxu0 0.0
    %84 = vmatpush1.msra.mxu0 0.0
    %85 = vmatprep.subr.mxu0 0.0
    %86 = vmatpush1.msra.mxu0 0.0
    %87 = vmatprep.subr.mxu0 0.0
    %88 = vmatpush1.msra.mxu0 0.0
    %89 = vmatprep.subr.mxu0 0.0
    %90 = vmatpush1.msra.mxu0 0.0
    %91 = vmatprep.subr.mxu0 0.0
    %92 = vmatpush1.msra.mxu0 0.0
    %93 = vmatprep.subr.mxu0 0.0
    %94 = vmatpush1.msra.mxu0 0.0
    %95 = vmatprep.subr.mxu0 0.0
    %96 = vmatpush1.msra.mxu0 0.0
    %97 = vmatprep.subr.mxu0 0.0
    %98 = vmatpush1.msra.mxu0 0.0
    %99 = vmatprep.subr.mxu0 0.0
    %100 = vmatpush1.msra.mxu0 0.0
    %101 = vmatprep.subr.mxu0 0.0
    %102 = vmatpush1.msra.mxu0 0.0
    %103 = vmatprep.subr.mxu0 0.0
    %104 = vmatpush1.msra.mxu0 0.0
    %105 = vmatprep.subr.mxu0 0.0
    %106 = vmatpush1.msra.mxu0 0.0
    %107 = vmatprep.subr.mxu0 0.0
    %108 = vmatpush1.msra.mxu0 0.0
    %109 = vmatprep.subr.mxu0 0.0
    %110 = vmatpush1.msra.mxu0 0.0
    %111 = vmatprep.subr.mxu0 0.0
    %112 = vmatpush1.msra.mxu0 0.0
    %113 = vmatprep.subr.mxu0 0.0
    %114 = vmatpush1.msra.mxu0 0.0
    %115 = vmatprep.subr.mxu0 0.0
    %116 = vmatpush1.msra.mxu0 0.0
    %117 = vmatprep.subr.mxu0 0.0
    %118 = vmatpush1.msra.mxu0 0.0
    %119 = vmatprep.subr.mxu0 0.0
    %120 = vmatpush1.msra.mxu0 0.0
    %121 = vmatprep.subr.mxu0 0.0
    %122 = vmatpush1.msra.mxu0 0.0
    %123 = vmatprep.subr.mxu0 0.0
    %124 = vmatpush1.msra.mxu0 0.0
    %125 = vmatprep.subr.mxu0 0.0
    %126 = vmatpush1.msra.mxu0 0.0
    %127 = vmatprep.subr.mxu0 0.0
    %128 = vmatpush1.msra.mxu0 0.0
    %129 = vmatprep.mubr.f32.mxu0 0.0
    %130 = vmatmul.mubr.f32.gmra.mrb[0].mxu0 %v63
    %v131 = vpop.f32.mrb[0].mxu0
    %v132 = vadd.f32 %v57, %v131
    %v133 = vpop.f32.mrb[0].mxu0
    %134 = vdwg.mxu0
    %vm135 = vcmask 74752
    %136 = vst.msk [vmem:[#allocation2] sm:$0x3] %vm135, %v132
    // Predicated region
    $region14: #{_lambda_.25} parent=1 // pred_check
      _
    $region15: #{_lambda_.25} parent=1 // pred_check_branch
      %138 = sbr.rel (0) target = $region17
    $region16: #{_lambda_.25} parent=1 // pred_region
      %s140 = ssub.s32 32, 32
      %141 = vsyncadd [#allocation3], %s140
      %s143 = sshll.u32 [#allocation2], 4
      %s144 = int_to_ptr.vmem [resolvable:$true] %s143
      %146 = dma.vmem_to_hbm [thread:$0]  %s144, 32, %s3, [#allocation3]
    $region17: #{_lambda_.25} parent=1 // pred_fallthru
      _
    // Predicated region
    $region18: #{_lambda_.25} parent=1 // pred_check
      _
    $region19: #{_lambda_.25} parent=1 // pred_check_branch
      %148 = sbr.rel (0) target = $region21
    $region20: #{_lambda_.25} parent=1 // pred_region
      %149 = dma.done [#allocation3], 32
    $region21: #{_lambda_.25} parent=1 // pred_fallthru
      _
    %150 = vsyncpa [#allocation3], 1

// kernel: _lambda_.22
$region0: #{_lambda_.22}
  #allocation0 [shape = 'u32[]', space=smem, size = 0x4, offset = 0x4, fixed_abs, tag = 'smem constant byte address 0x4 - core index']
  #allocation1 [shape = 'u32[144,128]{1,0:T(1,128)}', space=vmem, size = 0x12000, scoped, tag = 'internal scratch']
  #allocation2 [shape = 'f32[32,96]{1,0:T(8,128)}', space=vmem, size = 0x4000, scoped, tag = 'scratch operand']
  %s0 = inlined_call_operand.vmem [shape: bf16[32,864], index: 0, kind: input, shape index: {}]
  %s1 = inlined_call_operand.vmem [shape: bf16[864,96], index: 1, kind: input, shape index: {}]
  %s2 = inlined_call_operand.vmem [shape: f32[1,96], index: 2, kind: input, shape index: {}]
  %s3 = inlined_call_operand.vmem [shape: f32[1,96], index: 3, kind: input, shape index: {}]
  %s4 = inlined_call_operand.vmem [shape: bf16[32,96], index: 4, kind: output, shape index: {}]
  %s5 = sld [smem:[#allocation0]]
  $region34: #{_lambda_.22} parent=0
    _
  %s7 = ssub.s32 1, %s5
  %s8 = scalar_select 0, %s7, %s5
  // Predicated region
  $region2: #{_lambda_.22} parent=0 // pred_check
    _
  $region3: #{_lambda_.22} parent=0 // pred_check_branch
    %10 = sbr.rel (0) target = $region5
  $region4: #{_lambda_.22} parent=0 // pred_region
    _
  $region5: #{_lambda_.22} parent=0 // pred_fallthru
    _
  // Predicated region
  $region6: #{_lambda_.22} parent=0 // pred_check
    _
  $region7: #{_lambda_.22} parent=0 // pred_check_branch
    %12 = sbr.rel (0) target = $region9
  $region8: #{_lambda_.22} parent=0 // pred_region
    _
  $region9: #{_lambda_.22} parent=0 // pred_fallthru
    _
  // Predicated region
  $region10: #{_lambda_.22} parent=0 // pred_check
    _
  $region11: #{_lambda_.22} parent=0 // pred_check_branch
    %14 = sbr.rel (0) target = $region13
  $region12: #{_lambda_.22} parent=0 // pred_region
    _
  $region13: #{_lambda_.22} parent=0 // pred_fallthru
    _
  // Predicated region
  $region14: #{_lambda_.22} parent=0 // pred_check
    _
  $region15: #{_lambda_.22} parent=0 // pred_check_branch
    %16 = sbr.rel (0) target = $region17
  $region16: #{_lambda_.22} parent=0 // pred_region
    _
  $region17: #{_lambda_.22} parent=0 // pred_fallthru
    _
  %p18 = scmp.eq.s32.totalorder 0, 0
  // Predicated region
  $region18: #{_lambda_.22} parent=0 // pred_check
    %p19 = pneg %p18
  $region19: #{_lambda_.22} parent=0 // pred_check_branch
    %21 = sbr.rel (%p19) target = $region21
  $region20: #{_lambda_.22} parent=0 // pred_region
    %vm22 = vcmask 785408
    %23 = vst.msk [vmem:[#allocation2] sm:$0xff] %vm22, 0.0
    %24 = vst.msk [vmem:[#allocation2 + $0x8] sm:$0xff] %vm22, 0.0
    %25 = vst.msk [vmem:[#allocation2 + $0x10] sm:$0xff] %vm22, 0.0
    %26 = vst.msk [vmem:[#allocation2 + $0x18] sm:$0xff] %vm22, 0.0
  $region21: #{_lambda_.22} parent=0 // pred_fallthru
    _
  %v27 = vld [vmem:[#allocation2] sm:$0xff]
  %v28 = vld [vmem:[#allocation2 + $0x8] sm:$0xff]
  %v29 = vld [vmem:[#allocation2 + $0x10] sm:$0xff]
  %v30 = vld [vmem:[#allocation2 + $0x18] sm:$0xff]
  %v31 = vld [vmem:[%s0] sm:$0xff]
  %v32 = vld [vmem:[%s0 + $0x8] sm:$0xff]
  %v33 = vld [vmem:[%s0 + $0x10] sm:$0xff]
  %v34 = vld [vmem:[%s0 + $0x18] sm:$0xf]
  %v35 = vld [vmem:[%s0 + $0x1c] sm:$0xff]
  %v36 = vld [vmem:[%s0 + $0x24] sm:$0xff]
  %v37 = vld [vmem:[%s0 + $0x2c] sm:$0xff]
  %v38 = vld [vmem:[%s0 + $0x34] sm:$0xf]
  %v39 = vld [vmem:[%s0 + $0x38] sm:$0xff]
  %v40 = vld [vmem:[%s0 + $0x40] sm:$0xff]
  %v41 = vld [vmem:[%s0 + $0x48] sm:$0xff]
  %v42 = vld [vmem:[%s0 + $0x50] sm:$0xf]
  %v43 = vld [vmem:[%s0 + $0x54] sm:$0xff]
  %v44 = vld [vmem:[%s0 + $0x5c] sm:$0xff]
  %v45 = vld [vmem:[%s0 + $0x64] sm:$0xff]
  %v46 = vld [vmem:[%s0 + $0x6c] sm:$0xf]
  %v47 = vld [vmem:[%s1] sm:$0xf]
  %v48 = vld [vmem:[%s1 + $0x4] sm:$0xf]
  %v49 = vld [vmem:[%s1 + $0x8] sm:$0xf]
  %v50 = vld [vmem:[%s1 + $0xc] sm:$0xf]
  %v51 = vld [vmem:[%s1 + $0x10] sm:$0xf]
  %v52 = vld [vmem:[%s1 + $0x14] sm:$0xf]
  %v53 = vld [vmem:[%s1 + $0x18] sm:$0xf]
  %v54 = vld [vmem:[%s1 + $0x1c] sm:$0xf]
  %v55 = vld [vmem:[%s1 + $0x20] sm:$0xf]
  %v56 = vld [vmem:[%s1 + $0x24] sm:$0xf]
  %v57 = vld [vmem:[%s1 + $0x28] sm:$0xf]
  %v58 = vld [vmem:[%s1 + $0x2c] sm:$0xf]
  %v59 = vld [vmem:[%s1 + $0x30] sm:$0xf]
  %v60 = vld [vmem:[%s1 + $0x34] sm:$0xf]
  %v61 = vld [vmem:[%s1 + $0x38] sm:$0xf]
  %v62 = vld [vmem:[%s1 + $0x3c] sm:$0xf]
  %v63 = vld [vmem:[%s1 + $0x40] sm:$0xf]
  %v64 = vld [vmem:[%s1 + $0x44] sm:$0xf]
  %v65 = vld [vmem:[%s1 + $0x48] sm:$0xf]
  %v66 = vld [vmem:[%s1 + $0x4c] sm:$0xf]
  %v67 = vld [vmem:[%s1 + $0x50] sm:$0xf]
  %v68 = vld [vmem:[%s1 + $0x54] sm:$0xf]
  %v69 = vld [vmem:[%s1 + $0x58] sm:$0xf]
  %v70 = vld [vmem:[%s1 + $0x5c] sm:$0xf]
  %v71 = vld [vmem:[%s1 + $0x60] sm:$0xf]
  %v72 = vld [vmem:[%s1 + $0x64] sm:$0xf]
  %v73 = vld [vmem:[%s1 + $0x68] sm:$0xf]
  %v74 = vld [vmem:[%s1 + $0x6c] sm:$0xf]
  %v75 = vld [vmem:[%s1 + $0x70] sm:$0xf]
  %v76 = vld [vmem:[%s1 + $0x74] sm:$0xf]
  %v77 = vld [vmem:[%s1 + $0x78] sm:$0xf]
  %v78 = vld [vmem:[%s1 + $0x7c] sm:$0xf]
  %v79 = vld [vmem:[%s1 + $0x80] sm:$0xf]
  %v80 = vld [vmem:[%s1 + $0x84] sm:$0xf]
  %v81 = vld [vmem:[%s1 + $0x88] sm:$0xf]
  %v82 = vld [vmem:[%s1 + $0x8c] sm:$0xf]
  %v83 = vld [vmem:[%s1 + $0x90] sm:$0xf]
  %v84 = vld [vmem:[%s1 + $0x94] sm:$0xf]
  %v85 = vld [vmem:[%s1 + $0x98] sm:$0xf]
  %v86 = vld [vmem:[%s1 + $0x9c] sm:$0xf]
  %v87 = vld [vmem:[%s1 + $0xa0] sm:$0xf]
  %v88 = vld [vmem:[%s1 + $0xa4] sm:$0xf]
  %v89 = vld [vmem:[%s1 + $0xa8] sm:$0xf]
  %v90 = vld [vmem:[%s1 + $0xac] sm:$0xf]
  %v91 = vld [vmem:[%s1 + $0xb0] sm:$0xf]
  %v92 = vld [vmem:[%s1 + $0xb4] sm:$0xf]
  %v93 = vld [vmem:[%s1 + $0xb8] sm:$0xf]
  %v94 = vld [vmem:[%s1 + $0xbc] sm:$0xf]
  %v95 = vld [vmem:[%s1 + $0xc0] sm:$0xf]
  %v96 = vld [vmem:[%s1 + $0xc4] sm:$0xf]
  %v97 = vld [vmem:[%s1 + $0xc8] sm:$0xf]
  %v98 = vld [vmem:[%s1 + $0xcc] sm:$0xf]
  %v99 = vld [vmem:[%s1 + $0xd0] sm:$0xf]
  %v100 = vld [vmem:[%s1 + $0xd4] sm:$0xf]
  %v101 = vld [vmem:[%s1 + $0xd8] sm:$0xf]
  %v102 = vld [vmem:[%s1 + $0xdc] sm:$0xf]
  %v103 = vld [vmem:[%s1 + $0xe0] sm:$0xf]
  %v104 = vld [vmem:[%s1 + $0xe4] sm:$0xf]
  %v105 = vld [vmem:[%s1 + $0xe8] sm:$0xf]
  %v106 = vld [vmem:[%s1 + $0xec] sm:$0xf]
  %v107 = vld [vmem:[%s1 + $0xf0] sm:$0xf]
  %v108 = vld [vmem:[%s1 + $0xf4] sm:$0xf]
  %v109 = vld [vmem:[%s1 + $0xf8] sm:$0xf]
  %v110 = vld [vmem:[%s1 + $0xfc] sm:$0xf]
  %v111 = vld [vmem:[%s1 + $0x100] sm:$0xf]
  %v112 = vld [vmem:[%s1 + $0x104] sm:$0xf]
  %v113 = vld [vmem:[%s1 + $0x108] sm:$0xf]
  %v114 = vld [vmem:[%s1 + $0x10c] sm:$0xf]
  %v115 = vld [vmem:[%s1 + $0x110] sm:$0xf]
  %v116 = vld [vmem:[%s1 + $0x114] sm:$0xf]
  %v117 = vld [vmem:[%s1 + $0x118] sm:$0xf]
  %v118 = vld [vmem:[%s1 + $0x11c] sm:$0xf]
  %v119 = vld [vmem:[%s1 + $0x120] sm:$0xf]
  %v120 = vld [vmem:[%s1 + $0x124] sm:$0xf]
  %v121 = vld [vmem:[%s1 + $0x128] sm:$0xf]
  %v122 = vld [vmem:[%s1 + $0x12c] sm:$0xf]
  %v123 = vld [vmem:[%s1 + $0x130] sm:$0xf]
  %v124 = vld [vmem:[%s1 + $0x134] sm:$0xf]
  %v125 = vld [vmem:[%s1 + $0x138] sm:$0xf]
  %v126 = vld [vmem:[%s1 + $0x13c] sm:$0xf]
  %v127 = vld [vmem:[%s1 + $0x140] sm:$0xf]
  %v128 = vld [vmem:[%s1 + $0x144] sm:$0xf]
  %v129 = vld [vmem:[%s1 + $0x148] sm:$0xf]
  %v130 = vld [vmem:[%s1 + $0x14c] sm:$0xf]
  %v131 = vld [vmem:[%s1 + $0x150] sm:$0xf]
  %v132 = vld [vmem:[%s1 + $0x154] sm:$0xf]
  %v133 = vld [vmem:[%s1 + $0x158] sm:$0xf]
  %v134 = vld [vmem:[%s1 + $0x15c] sm:$0xf]
  %v135 = vld [vmem:[%s1 + $0x160] sm:$0xf]
  %v136 = vld [vmem:[%s1 + $0x164] sm:$0xf]
  %v137 = vld [vmem:[%s1 + $0x168] sm:$0xf]
  %v138 = vld [vmem:[%s1 + $0x16c] sm:$0xf]
  %v139 = vld [vmem:[%s1 + $0x170] sm:$0xf]
  %v140 = vld [vmem:[%s1 + $0x174] sm:$0xf]
  %v141 = vld [vmem:[%s1 + $0x178] sm:$0xf]
  %v142 = vld [vmem:[%s1 + $0x17c] sm:$0xf]
  %v143 = vld [vmem:[%s1 + $0x180] sm:$0xf]
  %v144 = vld [vmem:[%s1 + $0x184] sm:$0xf]
  %v145 = vld [vmem:[%s1 + $0x188] sm:$0xf]
  %v146 = vld [vmem:[%s1 + $0x18c] sm:$0xf]
  %v147 = vld [vmem:[%s1 + $0x190] sm:$0xf]
  %v148 = vld [vmem:[%s1 + $0x194] sm:$0xf]
  %v149 = vld [vmem:[%s1 + $0x198] sm:$0xf]
  %v150 = vld [vmem:[%s1 + $0x19c] sm:$0xf]
  %v151 = vld [vmem:[%s1 + $0x1a0] sm:$0xf]
  %v152 = vld [vmem:[%s1 + $0x1a4] sm:$0xf]
  %v153 = vld [vmem:[%s1 + $0x1a8] sm:$0xf]
  %v154 = vld [vmem:[%s1 + $0x1ac] sm:$0xf]
  %v171 = vunpack.c.l.b16 %v31
  %v172 = vunpack.c.h.b16 %v31
  %v173 = vunpack.c.l.b16 %v32
  %v174 = vunpack.c.h.b16 %v32
  %v175 = vunpack.c.l.b16 %v33
  %v176 = vunpack.c.h.b16 %v33
  %v177 = vunpack.c.l.b16 %v34
  %v178 = vunpack.c.l.b16 %v35
  %v179 = vunpack.c.h.b16 %v35
  %v180 = vunpack.c.l.b16 %v36
  %v181 = vunpack.c.h.b16 %v36
  %v182 = vunpack.c.l.b16 %v37
  %v183 = vunpack.c.h.b16 %v37
  %v184 = vunpack.c.l.b16 %v38
  %v185 = vunpack.c.l.b16 %v39
  %v186 = vunpack.c.h.b16 %v39
  %v187 = vunpack.c.l.b16 %v40
  %v188 = vunpack.c.h.b16 %v40
  %v189 = vunpack.c.l.b16 %v41
  %v190 = vunpack.c.h.b16 %v41
  %v191 = vunpack.c.l.b16 %v42
  %v192 = vunpack.c.l.b16 %v43
  %v193 = vunpack.c.h.b16 %v43
  %v194 = vunpack.c.l.b16 %v44
  %v195 = vunpack.c.h.b16 %v44
  %v196 = vunpack.c.l.b16 %v45
  %v197 = vunpack.c.h.b16 %v45
  %v198 = vunpack.c.l.b16 %v46
  %v199 = vpack.c.b16 %v178, %v171
  %v200 = vpack.c.b16 %v179, %v172
  %v201 = vpack.c.b16 %v180, %v173
  %v202 = vpack.c.b16 %v181, %v174
  %v203 = vpack.c.b16 %v182, %v175
  %v204 = vpack.c.b16 %v183, %v176
  %v205 = vpack.c.b16 %v184, %v177
  %v206 = vpack.c.b16 %v192, %v185
  %v207 = vpack.c.b16 %v193, %v186
  %v208 = vpack.c.b16 %v194, %v187
  %v209 = vpack.c.b16 %v195, %v188
  %v210 = vpack.c.b16 %v196, %v189
  %v211 = vpack.c.b16 %v197, %v190
  %v212 = vpack.c.b16 %v198, %v191
  %v333 = vunpack.c.l.b16 %v47
  %v334 = vunpack.c.l.b16 %v48
  %v335 = vunpack.c.l.b16 %v49
  %v336 = vunpack.c.l.b16 %v50
  %v337 = vunpack.c.l.b16 %v51
  %v338 = vunpack.c.l.b16 %v52
  %v339 = vunpack.c.l.b16 %v53
  %v340 = vunpack.c.l.b16 %v54
  %v341 = vunpack.c.l.b16 %v55
  %v342 = vunpack.c.l.b16 %v56
  %v343 = vunpack.c.l.b16 %v57
  %v344 = vunpack.c.l.b16 %v58
  %v345 = vunpack.c.l.b16 %v59
  %v346 = vunpack.c.l.b16 %v60
  %v347 = vunpack.c.l.b16 %v61
  %v348 = vunpack.c.l.b16 %v62
  %v349 = vunpack.c.l.b16 %v63
  %v350 = vunpack.c.l.b16 %v64
  %v351 = vunpack.c.l.b16 %v65
  %v352 = vunpack.c.l.b16 %v66
  %v353 = vunpack.c.l.b16 %v67
  %v354 = vunpack.c.l.b16 %v68
  %v355 = vunpack.c.l.b16 %v69
  %v356 = vunpack.c.l.b16 %v70
  %v357 = vunpack.c.l.b16 %v71
  %v358 = vunpack.c.l.b16 %v72
  %v359 = vunpack.c.l.b16 %v73
  %v360 = vunpack.c.l.b16 %v74
  %v361 = vunpack.c.l.b16 %v75
  %v362 = vunpack.c.l.b16 %v76
  %v363 = vunpack.c.l.b16 %v77
  %v364 = vunpack.c.l.b16 %v78
  %v365 = vunpack.c.l.b16 %v79
  %v366 = vunpack.c.l.b16 %v80
  %v367 = vunpack.c.l.b16 %v81
  %v368 = vunpack.c.l.b16 %v82
  %v369 = vunpack.c.l.b16 %v83
  %v370 = vunpack.c.l.b16 %v84
  %v371 = vunpack.c.l.b16 %v85
  %v372 = vunpack.c.l.b16 %v86
  %v373 = vunpack.c.l.b16 %v87
  %v374 = vunpack.c.l.b16 %v88
  %v375 = vunpack.c.l.b16 %v89
  %v376 = vunpack.c.l.b16 %v90
  %v377 = vunpack.c.l.b16 %v91
  %v378 = vunpack.c.l.b16 %v92
  %v379 = vunpack.c.l.b16 %v93
  %v380 = vunpack.c.l.b16 %v94
  %v381 = vunpack.c.l.b16 %v95
  %v382 = vunpack.c.l.b16 %v96
  %v383 = vunpack.c.l.b16 %v97
  %v384 = vunpack.c.l.b16 %v98
  %v385 = vunpack.c.l.b16 %v99
  %v386 = vunpack.c.l.b16 %v100
  %v387 = vunpack.c.l.b16 %v101
  %v388 = vunpack.c.l.b16 %v102
  %v389 = vunpack.c.l.b16 %v103
  %v390 = vunpack.c.l.b16 %v104
  %v391 = vunpack.c.l.b16 %v105
  %v392 = vunpack.c.l.b16 %v106
  %v393 = vunpack.c.l.b16 %v107
  %v394 = vunpack.c.l.b16 %v108
  %v395 = vunpack.c.l.b16 %v109
  %v396 = vunpack.c.l.b16 %v110
  %v397 = vunpack.c.l.b16 %v111
  %v398 = vunpack.c.l.b16 %v112
  %v399 = vunpack.c.l.b16 %v113
  %v400 = vunpack.c.l.b16 %v114
  %v401 = vunpack.c.l.b16 %v115
  %v402 = vunpack.c.l.b16 %v116
  %v403 = vunpack.c.l.b16 %v117
  %v404 = vunpack.c.l.b16 %v118
  %v405 = vunpack.c.l.b16 %v119
  %v406 = vunpack.c.l.b16 %v120
  %v407 = vunpack.c.l.b16 %v121
  %v408 = vunpack.c.l.b16 %v122
  %v409 = vunpack.c.l.b16 %v123
  %v410 = vunpack.c.l.b16 %v124
  %v411 = vunpack.c.l.b16 %v125
  %v412 = vunpack.c.l.b16 %v126
  %v413 = vunpack.c.l.b16 %v127
  %v414 = vunpack.c.l.b16 %v128
  %v415 = vunpack.c.l.b16 %v129
  %v416 = vunpack.c.l.b16 %v130
  %v417 = vunpack.c.l.b16 %v131
  %v418 = vunpack.c.l.b16 %v132
  %v419 = vunpack.c.l.b16 %v133
  %v420 = vunpack.c.l.b16 %v134
  %v421 = vunpack.c.l.b16 %v135
  %v422 = vunpack.c.l.b16 %v136
  %v423 = vunpack.c.l.b16 %v137
  %v424 = vunpack.c.l.b16 %v138
  %v425 = vunpack.c.l.b16 %v139
  %v426 = vunpack.c.l.b16 %v140
  %v427 = vunpack.c.l.b16 %v141
  %v428 = vunpack.c.l.b16 %v142
  %v429 = vunpack.c.l.b16 %v143
  %v430 = vunpack.c.l.b16 %v144
  %v431 = vunpack.c.l.b16 %v145
  %v432 = vunpack.c.l.b16 %v146
  %v433 = vunpack.c.l.b16 %v147
  %v434 = vunpack.c.l.b16 %v148
  %v435 = vunpack.c.l.b16 %v149
  %v436 = vunpack.c.l.b16 %v150
  %v437 = vunpack.c.l.b16 %v151
  %v438 = vunpack.c.l.b16 %v152
  %v439 = vunpack.c.l.b16 %v153
  %v440 = vunpack.c.l.b16 %v154
  %v441 = vpack.c.b16 %v334, %v333
  %v442 = vpack.c.b16 %v336, %v335
  %v443 = vpack.c.b16 %v338, %v337
  %v444 = vpack.c.b16 %v340, %v339
  %v445 = vpack.c.b16 %v342, %v341
  %v446 = vpack.c.b16 %v344, %v343
  %v447 = vpack.c.b16 %v346, %v345
  %v448 = vpack.c.b16 %v348, %v347
  %v449 = vpack.c.b16 %v350, %v349
  %v450 = vpack.c.b16 %v352, %v351
  %v451 = vpack.c.b16 %v354, %v353
  %v452 = vpack.c.b16 %v356, %v355
  %v453 = vpack.c.b16 %v358, %v357
  %v454 = vpack.c.b16 %v360, %v359
  %v455 = vpack.c.b16 %v362, %v361
  %v456 = vpack.c.b16 %v364, %v363
  %v457 = vpack.c.b16 %v366, %v365
  %v458 = vpack.c.b16 %v368, %v367
  %v459 = vpack.c.b16 %v370, %v369
  %v460 = vpack.c.b16 %v372, %v371
  %v461 = vpack.c.b16 %v374, %v373
  %v462 = vpack.c.b16 %v376, %v375
  %v463 = vpack.c.b16 %v378, %v377
  %v464 = vpack.c.b16 %v380, %v379
  %v465 = vpack.c.b16 %v382, %v381
  %v466 = vpack.c.b16 %v384, %v383
  %v467 = vpack.c.b16 %v386, %v385
  %v468 = vpack.c.b16 %v388, %v387
  %v469 = vpack.c.b16 %v390, %v389
  %v470 = vpack.c.b16 %v392, %v391
  %v471 = vpack.c.b16 %v394, %v393
  %v472 = vpack.c.b16 %v396, %v395
  %v473 = vpack.c.b16 %v398, %v397
  %v474 = vpack.c.b16 %v400, %v399
  %v475 = vpack.c.b16 %v402, %v401
  %v476 = vpack.c.b16 %v404, %v403
  %v477 = vpack.c.b16 %v406, %v405
  %v478 = vpack.c.b16 %v408, %v407
  %v479 = vpack.c.b16 %v410, %v409
  %v480 = vpack.c.b16 %v412, %v411
  %v481 = vpack.c.b16 %v414, %v413
  %v482 = vpack.c.b16 %v416, %v415
  %v483 = vpack.c.b16 %v418, %v417
  %v484 = vpack.c.b16 %v420, %v419
  %v485 = vpack.c.b16 %v422, %v421
  %v486 = vpack.c.b16 %v424, %v423
  %v487 = vpack.c.b16 %v426, %v425
  %v488 = vpack.c.b16 %v428, %v427
  %v489 = vpack.c.b16 %v430, %v429
  %v490 = vpack.c.b16 %v432, %v431
  %v491 = vpack.c.b16 %v434, %v433
  %v492 = vpack.c.b16 %v436, %v435
  %v493 = vpack.c.b16 %v438, %v437
  %v494 = vpack.c.b16 %v440, %v439
  %vm549 = vcmask 785408
  %v551 = vsel %vm549, %v205, 0
  %v554 = vsel %vm549, %v212, 0
  %556 = vmatprep.subr.bf16.mxu0 0
  %557 = vmatpush1.bf16.msra.mxu0 %v441
  %558 = vmatprep.subr.bf16.mxu0 0
  %559 = vmatpush1.bf16.msra.mxu0 %v442
  %560 = vmatprep.subr.bf16.mxu0 0
  %561 = vmatpush1.bf16.msra.mxu0 %v443
  %562 = vmatprep.subr.bf16.mxu0 0
  %563 = vmatpush1.bf16.msra.mxu0 %v444
  %564 = vmatprep.subr.bf16.mxu0 0
  %565 = vmatpush1.bf16.msra.mxu0 %v445
  %566 = vmatprep.subr.bf16.mxu0 0
  %567 = vmatpush1.bf16.msra.mxu0 %v446
  %568 = vmatprep.subr.bf16.mxu0 0
  %569 = vmatpush1.bf16.msra.mxu0 %v447
  %570 = vmatprep.subr.bf16.mxu0 0
  %571 = vmatpush1.bf16.msra.mxu0 %v448
  %572 = vmatprep.subr.bf16.mxu0 0
  %573 = vmatpush1.bf16.msra.mxu0 %v449
  %574 = vmatprep.subr.bf16.mxu0 0
  %575 = vmatpush1.bf16.msra.mxu0 %v450
  %576 = vmatprep.subr.bf16.mxu0 0
  %577 = vmatpush1.bf16.msra.mxu0 %v451
  %578 = vmatprep.subr.bf16.mxu0 0
  %579 = vmatpush1.bf16.msra.mxu0 %v452
  %580 = vmatprep.subr.bf16.mxu0 0
  %581 = vmatpush1.bf16.msra.mxu0 %v453
  %582 = vmatprep.subr.bf16.mxu0 0
  %583 = vmatpush1.bf16.msra.mxu0 %v454
  %584 = vmatprep.subr.bf16.mxu0 0
  %585 = vmatpush1.bf16.msra.mxu0 %v455
  %586 = vmatprep.subr.bf16.mxu0 0
  %587 = vmatpush1.bf16.msra.mxu0 %v456
  %588 = vmatprep.mubr.bf16.mxu0 %v200
  %589 = vmatmul.mubr.bf16.gmra.mrb[0].mxu0 %v199
  %v590 = vpop.f32.mrb[0].mxu0
  %v591 = vadd.f32 0.0, %v590
  %v592 = vpop.f32.mrb[0].mxu0
  %v593 = vpop.f32.mrb[0].mxu0
  %v594 = vadd.f32 0.0, %v593
  %v595 = vpop.f32.mrb[0].mxu0
  %596 = vmatprep.mubr.bf16.mxu0 %v207
  %597 = vmatmul.mubr.bf16.gmra.mrb[0].mxu0 %v206
  %v598 = vpop.f32.mrb[0].mxu0
  %v599 = vadd.f32 0.0, %v598
  %v600 = vpop.f32.mrb[0].mxu0
  %v601 = vpop.f32.mrb[0].mxu0
  %v602 = vadd.f32 0.0, %v601
  %v603 = vpop.f32.mrb[0].mxu0
  %604 = vdwg.mxu0
  %605 = vmatprep.subr.bf16.mxu0 0
  %606 = vmatpush1.bf16.msra.mxu0 %v457
  %607 = vmatprep.subr.bf16.mxu0 0
  %608 = vmatpush1.bf16.msra.mxu0 %v458
  %609 = vmatprep.subr.bf16.mxu0 0
  %610 = vmatpush1.bf16.msra.mxu0 %v459
  %611 = vmatprep.subr.bf16.mxu0 0
  %612 = vmatpush1.bf16.msra.mxu0 %v460
  %613 = vmatprep.subr.bf16.mxu0 0
  %614 = vmatpush1.bf16.msra.mxu0 %v461
  %615 = vmatprep.subr.bf16.mxu0 0
  %616 = vmatpush1.bf16.msra.mxu0 %v462
  %617 = vmatprep.subr.bf16.mxu0 0
  %618 = vmatpush1.bf16.msra.mxu0 %v463
  %619 = vmatprep.subr.bf16.mxu0 0
  %620 = vmatpush1.bf16.msra.mxu0 %v464
  %621 = vmatprep.subr.bf16.mxu0 0
  %622 = vmatpush1.bf16.msra.mxu0 %v465
  %623 = vmatprep.subr.bf16.mxu0 0
  %624 = vmatpush1.bf16.msra.mxu0 %v466
  %625 = vmatprep.subr.bf16.mxu0 0
  %626 = vmatpush1.bf16.msra.mxu0 %v467
  %627 = vmatprep.subr.bf16.mxu0 0
  %628 = vmatpush1.bf16.msra.mxu0 %v468
  %629 = vmatprep.subr.bf16.mxu0 0
  %630 = vmatpush1.bf16.msra.mxu0 %v469
  %631 = vmatprep.subr.bf16.mxu0 0
  %632 = vmatpush1.bf16.msra.mxu0 %v470
  %633 = vmatprep.subr.bf16.mxu0 0
  %634 = vmatpush1.bf16.msra.mxu0 %v471
  %635 = vmatprep.subr.bf16.mxu0 0
  %636 = vmatpush1.bf16.msra.mxu0 %v472
  %637 = vmatprep.mubr.bf16.mxu0 %v202
  %638 = vmatmul.mubr.bf16.gmra.mrb[0].mxu0 %v201
  %v639 = vpop.f32.mrb[0].mxu0
  %v640 = vadd.f32 %v591, %v639
  %v641 = vpop.f32.mrb[0].mxu0
  %v642 = vpop.f32.mrb[0].mxu0
  %v643 = vadd.f32 %v594, %v642
  %v644 = vpop.f32.mrb[0].mxu0
  %645 = vmatprep.mubr.bf16.mxu0 %v209
  %646 = vmatmul.mubr.bf16.gmra.mrb[0].mxu0 %v208
  %v647 = vpop.f32.mrb[0].mxu0
  %v648 = vadd.f32 %v599, %v647
  %v649 = vpop.f32.mrb[0].mxu0
  %v650 = vpop.f32.mrb[0].mxu0
  %v651 = vadd.f32 %v602, %v650
  %v652 = vpop.f32.mrb[0].mxu0
  %653 = vdwg.mxu0
  %654 = vmatprep.subr.bf16.mxu0 0
  %655 = vmatpush1.bf16.msra.mxu0 %v473
  %656 = vmatprep.subr.bf16.mxu0 0
  %657 = vmatpush1.bf16.msra.mxu0 %v474
  %658 = vmatprep.subr.bf16.mxu0 0
  %659 = vmatpush1.bf16.msra.mxu0 %v475
  %660 = vmatprep.subr.bf16.mxu0 0
  %661 = vmatpush1.bf16.msra.mxu0 %v476
  %662 = vmatprep.subr.bf16.mxu0 0
  %663 = vmatpush1.bf16.msra.mxu0 %v477
  %664 = vmatprep.subr.bf16.mxu0 0
  %665 = vmatpush1.bf16.msra.mxu0 %v478
  %666 = vmatprep.subr.bf16.mxu0 0
  %667 = vmatpush1.bf16.msra.mxu0 %v479
  %668 = vmatprep.subr.bf16.mxu0 0
  %669 = vmatpush1.bf16.msra.mxu0 %v480
  %670 = vmatprep.subr.bf16.mxu0 0
  %671 = vmatpush1.bf16.msra.mxu0 %v481
  %672 = vmatprep.subr.bf16.mxu0 0
  %673 = vmatpush1.bf16.msra.mxu0 %v482
  %674 = vmatprep.subr.bf16.mxu0 0
  %675 = vmatpush1.bf16.msra.mxu0 %v483
  %676 = vmatprep.subr.bf16.mxu0 0
  %677 = vmatpush1.bf16.msra.mxu0 %v484
  %678 = vmatprep.subr.bf16.mxu0 0
  %679 = vmatpush1.bf16.msra.mxu0 %v485
  %680 = vmatprep.subr.bf16.mxu0 0
  %681 = vmatpush1.bf16.msra.mxu0 %v486
  %682 = vmatprep.subr.bf16.mxu0 0
  %683 = vmatpush1.bf16.msra.mxu0 %v487
  %684 = vmatprep.subr.bf16.mxu0 0
  %685 = vmatpush1.bf16.msra.mxu0 %v488
  %686 = vmatprep.mubr.bf16.mxu0 %v204
  %687 = vmatmul.mubr.bf16.gmra.mrb[0].mxu0 %v203
  %v688 = vpop.f32.mrb[0].mxu0
  %v689 = vadd.f32 %v640, %v688
  %v690 = vpop.f32.mrb[0].mxu0
  %v691 = vpop.f32.mrb[0].mxu0
  %v692 = vadd.f32 %v643, %v691
  %v693 = vpop.f32.mrb[0].mxu0
  %694 = vmatprep.mubr.bf16.mxu0 %v211
  %695 = vmatmul.mubr.bf16.gmra.mrb[0].mxu0 %v210
  %v696 = vpop.f32.mrb[0].mxu0
  %v697 = vadd.f32 %v648, %v696
  %v698 = vpop.f32.mrb[0].mxu0
  %v699 = vpop.f32.mrb[0].mxu0
  %v700 = vadd.f32 %v651, %v699
  %v701 = vpop.f32.mrb[0].mxu0
  %702 = vdwg.mxu0
  %703 = vmatprep.subr.bf16.mxu0 0
  %704 = vmatpush1.bf16.msra.mxu0 %v489
  %705 = vmatprep.subr.bf16.mxu0 0
  %706 = vmatpush1.bf16.msra.mxu0 %v490
  %707 = vmatprep.subr.bf16.mxu0 0
  %708 = vmatpush1.bf16.msra.mxu0 %v491
  %709 = vmatprep.subr.bf16.mxu0 0
  %710 = vmatpush1.bf16.msra.mxu0 %v492
  %711 = vmatprep.subr.bf16.mxu0 0
  %712 = vmatpush1.bf16.msra.mxu0 %v493
  %713 = vmatprep.subr.bf16.mxu0 0
  %714 = vmatpush1.bf16.msra.mxu0 %v494
  %715 = vmatprep.subr.bf16.mxu0 0
  %716 = vmatpush1.bf16.msra.mxu0 0
  %717 = vmatprep.subr.bf16.mxu0 0
  %718 = vmatpush1.bf16.msra.mxu0 0
  %719 = vmatprep.subr.bf16.mxu0 0
  %720 = vmatpush1.bf16.msra.mxu0 0
  %721 = vmatprep.subr.bf16.mxu0 0
  %722 = vmatpush1.bf16.msra.mxu0 0
  %723 = vmatprep.subr.bf16.mxu0 0
  %724 = vmatpush1.bf16.msra.mxu0 0
  %725 = vmatprep.subr.bf16.mxu0 0
  %726 = vmatpush1.bf16.msra.mxu0 0
  %727 = vmatprep.subr.bf16.mxu0 0
  %728 = vmatpush1.bf16.msra.mxu0 0
  %729 = vmatprep.subr.bf16.mxu0 0
  %730 = vmatpush1.bf16.msra.mxu0 0
  %731 = vmatprep.subr.bf16.mxu0 0
  %732 = vmatpush1.bf16.msra.mxu0 0
  %733 = vmatprep.subr.bf16.mxu0 0
  %734 = vmatpush1.bf16.msra.mxu0 0
  %735 = vmatprep.mubr.bf16.mxu0 0
  %736 = vmatmul.mubr.bf16.gmra.mrb[0].mxu0 %v551
  %v737 = vpop.f32.mrb[0].mxu0
  %v738 = vadd.f32 %v689, %v737
  %v739 = vpop.f32.mrb[0].mxu0
  %v740 = vpop.f32.mrb[0].mxu0
  %v741 = vadd.f32 %v692, %v740
  %v742 = vpop.f32.mrb[0].mxu0
  %743 = vmatprep.mubr.bf16.mxu0 0
  %744 = vmatmul.mubr.bf16.gmra.mrb[0].mxu0 %v554
  %v745 = vpop.f32.mrb[0].mxu0
  %v746 = vadd.f32 %v697, %v745
  %v747 = vpop.f32.mrb[0].mxu0
  %v748 = vpop.f32.mrb[0].mxu0
  %v749 = vadd.f32 %v700, %v748
  %v750 = vpop.f32.mrb[0].mxu0
  %751 = vdwg.mxu0
  %v752 = vadd.f32 %v27, %v738
  %v753 = vadd.f32 %v28, %v741
  %v754 = vadd.f32 %v29, %v746
  %v755 = vadd.f32 %v30, %v749
  %756 = vst.msk [vmem:[#allocation2] sm:$0xff] %vm549, %v752
  %757 = vst.msk [vmem:[#allocation2 + $0x8] sm:$0xff] %vm549, %v753
  %758 = vst.msk [vmem:[#allocation2 + $0x10] sm:$0xff] %vm549, %v754
  %759 = vst.msk [vmem:[#allocation2 + $0x18] sm:$0xff] %vm549, %v755
  // Predicated region
  $region22: #{_lambda_.22} parent=0 // pred_check
    %p760 = pneg %p18
  $region23: #{_lambda_.22} parent=0 // pred_check_branch
    %762 = sbr.rel (%p760) target = $region25
  $region24: #{_lambda_.22} parent=0 // pred_region
    %v763 = vld [vmem:[#allocation2] sm:$0xff]
    %v764 = vld [vmem:[#allocation2 + $0x8] sm:$0xff]
    %v765 = vld [vmem:[#allocation2 + $0x10] sm:$0xff]
    %v766 = vld [vmem:[#allocation2 + $0x18] sm:$0xff]
    %v767 = vld [vmem:[%s2] sm:$0x1]
    %v769 = vlaneseq
    %v770 = vshrl.u32 %v769, 7
    %v771 = vsub.s32 0, %v770
    %v772 = vrot.slane %v767, %v771
    %v774 = vmul.f32 %v763, %v772
    %v775 = vmul.f32 %v764, %v772
    %v776 = vmul.f32 %v765, %v772
    %v777 = vmul.f32 %v766, %v772
    %v778 = vld [vmem:[%s3] sm:$0x1]
    %v780 = vlaneseq
    %v781 = vshrl.u32 %v780, 7
    %v782 = vsub.s32 0, %v781
    %v783 = vrot.slane %v778, %v782
    %v785 = vadd.f32 %v774, %v783
    %v786 = vadd.f32 %v775, %v783
    %v787 = vadd.f32 %v776, %v783
    %v788 = vadd.f32 %v777, %v783
    %v789 = vmax.f32 %v785, 0.0
    %v790 = vmax.f32 %v786, 0.0
    %v791 = vmax.f32 %v787, 0.0
    %v792 = vmax.f32 %v788, 0.0
    %v793 = vpack.c.bf16 %v790, %v789
    %v794 = vpack.c.bf16 %v792, %v791
    %v797 = vunpack.c.l.b16 %v793
    %v798 = vunpack.c.h.b16 %v793
    %v799 = vunpack.c.l.b16 %v794
    %v800 = vunpack.c.h.b16 %v794
    %v801 = vpack.c.b16 %v797, %v797
    %v802 = vpack.c.b16 %v798, %v798
    %v803 = vpack.c.b16 %v799, %v799
    %v804 = vpack.c.b16 %v800, %v800
    %vm809 = vcmask 781312
    %810 = vst.msk [vmem:[%s4] sm:$0xf] %vm809, %v801
    %811 = vst.msk [vmem:[%s4 + $0x4] sm:$0xf] %vm809, %v802
    %812 = vst.msk [vmem:[%s4 + $0x8] sm:$0xf] %vm809, %v803
    %813 = vst.msk [vmem:[%s4 + $0xc] sm:$0xf] %vm809, %v804
  $region25: #{_lambda_.22} parent=0 // pred_fallthru
    _
  // Predicated region
  $region26: #{_lambda_.22} parent=0 // pred_check
    _
  $region27: #{_lambda_.22} parent=0 // pred_check_branch
    %815 = sbr.rel (0) target = $region29
  $region28: #{_lambda_.22} parent=0 // pred_region
    _
  $region29: #{_lambda_.22} parent=0 // pred_fallthru
    _
  // Predicated region
  $region30: #{_lambda_.22} parent=0 // pred_check
    _
  $region31: #{_lambda_.22} parent=0 // pred_check_branch
    %817 = sbr.rel (0) target = $region33
  $region32: #{_lambda_.22} parent=0 // pred_region
    _
  $region33: #{_lambda_.22} parent=0 // pred_fallthru
    _

</llo_original>
